<compile_context>
chip_gen: v6e
topology: v6e:2x2x1
jax: 0.10.0
libtpu: 0.0.40
codegen_flags: <defaults>
</compile_context>

<pallas_src>
import jax
import jax.numpy as jnp
from jax.experimental import pallas as pl
from jax.experimental.pallas import tpu as pltpu

ENET_DIMS = [512, 128, 32]                        # ENet hidden/output sizes
PNET_DIMS = [1280, 1024, 512, 256, 128, 64, 32]   # PNet hidden sizes
N_PRELU = 2 + 7                                   # 2 in ENet, 7 in PNet
K4_SPLIT = PNET_DIMS[0] // 2                      # 640-row split of the 1280x1024 weight

# Indices (within the flat kernel_params list) of the int8 weights that stay in
# HBM (BlockSpec(memory_space=pl.ANY)) and are streamed with manual async
# copies inside the kernel body: w4a, w4b, w5.
HBM_PARAM_IDX = (10, 11, 14)


def mpnet_kernel(
    alpha_ref, pc_ref, st_ref,
    w0, b0, w1, b1, w2, b2,                 # ENet, bf16 weights
    w3a, w3b, s3, b3,                       # first PNet linear, int8 + f32 scale
    w4a_hbm, w4b_hbm, s4, b4,               # 1280x1024 int8, HBM-streamed (row-split)
    w5_hbm, s5, b5,                         # 1024x512  int8, HBM-streamed
    w6, s6, b6,                             # 512x256   int8, VMEM-resident
    w7, b7, w8, b8, w9, b9, w10, b10,       # small bf16 tail
    out_ref,
    w4a_vm, w4b_vm, w5_vm, dma_sem,         # scratch: DMA landing buffers + sems
):
    # Kick off the big weight streams immediately so ENet / first-PNet compute
    # and the earlier dequants hide under them.
    cp4a = pltpu.make_async_copy(w4a_hbm, w4a_vm, dma_sem.at[0])
    cp4b = pltpu.make_async_copy(w4b_hbm, w4b_vm, dma_sem.at[1])
    cp5 = pltpu.make_async_copy(w5_hbm, w5_vm, dma_sem.at[2])
    cp4a.start()
    cp4b.start()
    cp5.start()

    # Hoist the nine alpha scalar reads (SMEM) out of the layer chain.
    a = [alpha_ref[i] for i in range(N_PRELU)]

    def dot_bf16(x_f32, w_bf16):
        # bf16 operands on the MXU, f32 accumulation.
        return jnp.dot(x_f32.astype(jnp.bfloat16), w_bf16,
                       preferred_element_type=jnp.float32)

    def deq(w_i8_ref):
        # int8 -> bf16 on the VPU (integers up to 127 are exact in bf16).
        # The per-output-channel scale factors out of the matmul and is applied
        # to the f32 accumulator instead (cheaper: (B, out) vs (in, out)).
        return w_i8_ref[...].astype(jnp.float32).astype(jnp.bfloat16)

    def prelu(x, alpha):
        # f32 elementwise (keeps v5e off the nonexistent bf16 VPU path).
        return jnp.where(x > 0, x, alpha * x)

    # ---- ENet: Linear(pc,512) -> PReLU -> Linear(512,128) -> PReLU -> Linear(128,32)
    x = pc_ref[...]
    x = prelu(dot_bf16(x, w0[...]) + b0[...], a[0])
    x = prelu(dot_bf16(x, w1[...]) + b1[...], a[1])
    z = dot_bf16(x, w2[...]) + b2[...]

    # ---- torch.cat((z, states), dim=1) @ W3 fused as two dots into one
    # accumulator (no lane concat); shared per-output-channel scale s3.
    st = st_ref[...]
    s = (dot_bf16(z, deq(w3a)) + dot_bf16(st, deq(w3b))) * s3[...] + b3[...]
    s = prelu(s, a[2])

    # ---- PNet Linear(1280,1024): row-split so dequant(w4a) overlaps the w4b/w5
    # DMAs still in flight; the two halves accumulate (no concat needed).
    cp4a.wait()
    w4a_bf = deq(w4a_vm)
    cp4b.wait()
    w4b_bf = deq(w4b_vm)
    acc = dot_bf16(s[:, :K4_SPLIT], w4a_bf) + dot_bf16(s[:, K4_SPLIT:], w4b_bf)
    s = prelu(acc * s4[...] + b4[...], a[3])

    # ---- PNet Linear(1024,512), int8 streamed from HBM.
    cp5.wait()
    s = prelu(dot_bf16(s, deq(w5_vm)) * s5[...] + b5[...], a[4])

    # ---- PNet Linear(512,256), int8 resident in VMEM.
    s = prelu(dot_bf16(s, deq(w6)) * s6[...] + b6[...], a[5])

    # ---- Remaining small bf16 layers (Dropout = identity, inference).
    s = prelu(dot_bf16(s, w7[...]) + b7[...], a[6])
    s = prelu(dot_bf16(s, w8[...]) + b8[...], a[7])
    s = prelu(dot_bf16(s, w9[...]) + b9[...], a[8])
    y = dot_bf16(s, w10[...]) + b10[...]

    out_ref[...] = y.astype(out_ref.dtype)


def _quantize_per_col(w):
    """Symmetric per-output-channel int8 quantization. Returns (q_int8, scale_f32)."""
    amax = jnp.max(jnp.abs(w), axis=0, keepdims=True)            # (1, out)
    scale = jnp.maximum(amax, 1e-8) / 127.0
    q = jnp.clip(jnp.round(w / scale), -127.0, 127.0).astype(jnp.int8)
    return q, scale.astype(jnp.float32)


def init_params(key, pc_size, states_size, output_size):
    """Deterministic synthetic parameters matching MPNet's layer shapes.

    Returns:
      alphas:        (N_PRELU,) f32 PReLU parameters (default 0.25).
      kernel_params: flat list of kernel operands (bf16/int8 weights, f32
                     scales & biases) in kernel-argument order.
      layers_eff:    list of 11 (w, b) f32 tuples using the *effective* weights
                     the kernel consumes (dequantized int8 / rounded bf16) —
                     tight reference for kernel-math correctness.
      layers_f32:    list of 11 (w, b) original f32 tuples — loose reference
                     that also measures quantization error.
    """
    dims_e = [pc_size] + ENET_DIMS
    dims_p = [states_size + ENET_DIMS[-1]] + PNET_DIMS + [output_size]
    n_layers = (len(dims_e) - 1) + (len(dims_p) - 1)
    keys = jax.random.split(key, 2 * n_layers)

    layers_f32 = []
    ki = 0
    for dims in (dims_e, dims_p):
        for i in range(len(dims) - 1):
            fan_in, fan_out = dims[i], dims[i + 1]
            w = jax.random.normal(keys[ki], (fan_in, fan_out), jnp.float32)
            w = w * (1.0 / jnp.sqrt(jnp.float32(fan_in)))
            ki += 1
            b = jax.random.normal(keys[ki], (1, fan_out), jnp.float32) * 0.01
            ki += 1
            layers_f32.append((w, b))

    kernel_params = []
    layers_eff = []

    # ENet layers 0..2: bf16 weights (small).
    for li in range(3):
        w, b = layers_f32[li]
        w_bf = w.astype(jnp.bfloat16)
        kernel_params.extend([w_bf, b])
        layers_eff.append((w_bf.astype(jnp.float32), b))

    # First PNet layer: int8, row-split into (32, 1280) and (states_size, 1280)
    # so torch.cat((z, states), dim=1) becomes two accumulating dots.
    w3, b3 = layers_f32[3]
    q3, s3 = _quantize_per_col(w3)
    kernel_params.extend([q3[:ENET_DIMS[-1], :], q3[ENET_DIMS[-1]:, :], s3, b3])
    layers_eff.append((q3.astype(jnp.float32) * s3, b3))

    # PNet Linear(1280,1024): int8, row-split halves, HBM-streamed in-kernel.
    w4, b4 = layers_f32[4]
    q4, s4 = _quantize_per_col(w4)
    kernel_params.extend([q4[:K4_SPLIT, :], q4[K4_SPLIT:, :], s4, b4])
    layers_eff.append((q4.astype(jnp.float32) * s4, b4))

    # PNet Linear(1024,512): int8, HBM-streamed in-kernel.
    w5, b5 = layers_f32[5]
    q5, s5 = _quantize_per_col(w5)
    kernel_params.extend([q5, s5, b5])
    layers_eff.append((q5.astype(jnp.float32) * s5, b5))

    # PNet Linear(512,256): int8, VMEM-resident.
    w6, b6 = layers_f32[6]
    q6, s6 = _quantize_per_col(w6)
    kernel_params.extend([q6, s6, b6])
    layers_eff.append((q6.astype(jnp.float32) * s6, b6))

    # Remaining PNet layers 7..10: bf16 (small).
    for li in range(7, 11):
        w, b = layers_f32[li]
        w_bf = w.astype(jnp.bfloat16)
        kernel_params.extend([w_bf, b])
        layers_eff.append((w_bf.astype(jnp.float32), b))

    alphas = jnp.full((N_PRELU,), 0.25, dtype=jnp.float32)  # PReLU default init
    return alphas, kernel_params, layers_eff, layers_f32


def mpnet_forward(point_cloud, states, alphas, kernel_params, output_size):
    batch, pc_size = point_cloud.shape
    states_size = states.shape[1]

    in_specs = [
        pl.BlockSpec(memory_space=pltpu.MemorySpace.SMEM),   # alphas
        pl.BlockSpec(memory_space=pltpu.MemorySpace.VMEM),   # point_cloud
        pl.BlockSpec(memory_space=pltpu.MemorySpace.VMEM),   # states
    ]
    for i in range(len(kernel_params)):
        if i in HBM_PARAM_IDX:
            # Big int8 weights stay in HBM; the kernel DMAs them manually so the
            # transfer overlaps the ENet / early-PNet compute and dequants.
            in_specs.append(pl.BlockSpec(memory_space=pl.ANY))
        else:
            in_specs.append(pl.BlockSpec(memory_space=pltpu.MemorySpace.VMEM))

    scratch_shapes = [
        pltpu.VMEM(kernel_params[HBM_PARAM_IDX[0]].shape, jnp.int8),  # w4a landing
        pltpu.VMEM(kernel_params[HBM_PARAM_IDX[1]].shape, jnp.int8),  # w4b landing
        pltpu.VMEM(kernel_params[HBM_PARAM_IDX[2]].shape, jnp.int8),  # w5  landing
        pltpu.SemaphoreType.DMA((3,)),
    ]

    # Advisory cost estimate so XLA can schedule surrounding ops around the call.
    dims_e = [pc_size] + ENET_DIMS
    dims_p = [states_size + ENET_DIMS[-1]] + PNET_DIMS + [output_size]
    macs_per_row = (sum(a * b for a, b in zip(dims_e[:-1], dims_e[1:]))
                    + sum(a * b for a, b in zip(dims_p[:-1], dims_p[1:])))
    bytes_accessed = (int(point_cloud.nbytes) + int(states.nbytes) + int(alphas.nbytes)
                      + sum(int(p.nbytes) for p in kernel_params)
                      + batch * output_size * 4)
    cost = pl.CostEstimate(flops=2 * batch * macs_per_row, transcendentals=0,
                           bytes_accessed=bytes_accessed)

    return pl.pallas_call(
        mpnet_kernel,
        out_shape=jax.ShapeDtypeStruct((batch, output_size), jnp.float32),
        in_specs=in_specs,
        out_specs=pl.BlockSpec(memory_space=pltpu.MemorySpace.VMEM),
        scratch_shapes=scratch_shapes,
        # ~2.3 MB of weights + ~1.8 MB DMA scratch + dequant temporaries stays
        # far under 32 MiB, which also fits v7x's 64 MiB physical VMEM.
        compiler_params=pltpu.CompilerParams(vmem_limit_bytes=32 << 20),
        cost_estimate=cost,
    )(alphas, point_cloud, states, *kernel_params)


def mpnet_reference(point_cloud, states, alphas, layers):
    """Pure-JAX f32 reference matching the PyTorch module (dropout = identity)."""
    def prelu(x, a):
        return jnp.where(x > 0, x, a * x)

    x = point_cloud
    x = prelu(x @ layers[0][0] + layers[0][1], alphas[0])
    x = prelu(x @ layers[1][0] + layers[1][1], alphas[1])
    z = x @ layers[2][0] + layers[2][1]
    s = jnp.concatenate([z, states], axis=1)
    ai = 2
    for li in range(3, 10):
        w, b = layers[li]
        s = prelu(s @ w + b, alphas[ai])
        ai += 1
    w, b = layers[10]
    return s @ w + b


if __name__ == "__main__":
    # Small shapes consistent with the module's forward:
    #   point_cloud: (batch, pc_size), states: (batch, states_size)
    # batch=16 aligns with bf16 sublane packing; callers should batch many
    # queries per call to amortize the weight stream.
    batch, pc_size, states_size, output_size = 16, 128, 16, 8

    key = jax.random.PRNGKey(0)
    k_pc, k_st, k_params = jax.random.split(key, 3)

    point_cloud = jax.random.normal(k_pc, (batch, pc_size), jnp.float32)
    states = jax.random.normal(k_st, (batch, states_size), jnp.float32)
    alphas, kernel_params, layers_eff, layers_f32 = init_params(
        k_params, pc_size, states_size, output_size)

    out = mpnet_forward(point_cloud, states, alphas, kernel_params, output_size)
    jax.block_until_ready(out)
    assert out.shape == (batch, output_size)

    # Tight check: compare against a reference built from the *effective*
    # (dequantized int8 / rounded bf16) weights the kernel actually consumes.
    # This isolates kernel-math errors from intentional quantization error.
    ref_eff = mpnet_reference(point_cloud, states, alphas, layers_eff)
    jax.block_until_ready(ref_eff)
    err_eff = float(jnp.max(jnp.abs(out - ref_eff)) / (jnp.max(jnp.abs(ref_eff)) + 1e-6))
    assert err_eff < 0.05, f"kernel vs effective-weight reference error too large: {err_eff}"

    # Loose check: original f32 parameters (includes int8/bf16 quantization error).
    ref_f32 = mpnet_reference(point_cloud, states, alphas, layers_f32)
    jax.block_until_ready(ref_f32)
    err_f32 = float(jnp.max(jnp.abs(out - ref_f32)) / (jnp.max(jnp.abs(ref_f32)) + 1e-6))
    assert err_f32 < 0.2, f"quantization error vs f32 reference too large: {err_f32}"

    print("KERNEL_OK")
</pallas_src>

<mosaic_0001>
module attributes {stable_mosaic.version = 11 : i64} {
  func.func @mpnet_kernel(%arg0: memref<9xf32, #tpu.memory_space<smem>>, %arg1: memref<16x128xf32, #tpu.memory_space<vmem>>, %arg2: memref<16x16xf32, #tpu.memory_space<vmem>>, %arg3: memref<128x512xbf16, #tpu.memory_space<vmem>>, %arg4: memref<1x512xf32, #tpu.memory_space<vmem>>, %arg5: memref<512x128xbf16, #tpu.memory_space<vmem>>, %arg6: memref<1x128xf32, #tpu.memory_space<vmem>>, %arg7: memref<128x32xbf16, #tpu.memory_space<vmem>>, %arg8: memref<1x32xf32, #tpu.memory_space<vmem>>, %arg9: memref<32x1280xi8, #tpu.memory_space<vmem>>, %arg10: memref<16x1280xi8, #tpu.memory_space<vmem>>, %arg11: memref<1x1280xf32, #tpu.memory_space<vmem>>, %arg12: memref<1x1280xf32, #tpu.memory_space<vmem>>, %arg13: memref<640x1024xi8, #tpu.memory_space<any>>, %arg14: memref<640x1024xi8, #tpu.memory_space<any>>, %arg15: memref<1x1024xf32, #tpu.memory_space<vmem>>, %arg16: memref<1x1024xf32, #tpu.memory_space<vmem>>, %arg17: memref<1024x512xi8, #tpu.memory_space<any>>, %arg18: memref<1x512xf32, #tpu.memory_space<vmem>>, %arg19: memref<1x512xf32, #tpu.memory_space<vmem>>, %arg20: memref<512x256xi8, #tpu.memory_space<vmem>>, %arg21: memref<1x256xf32, #tpu.memory_space<vmem>>, %arg22: memref<1x256xf32, #tpu.memory_space<vmem>>, %arg23: memref<256x128xbf16, #tpu.memory_space<vmem>>, %arg24: memref<1x128xf32, #tpu.memory_space<vmem>>, %arg25: memref<128x64xbf16, #tpu.memory_space<vmem>>, %arg26: memref<1x64xf32, #tpu.memory_space<vmem>>, %arg27: memref<64x32xbf16, #tpu.memory_space<vmem>>, %arg28: memref<1x32xf32, #tpu.memory_space<vmem>>, %arg29: memref<32x8xbf16, #tpu.memory_space<vmem>>, %arg30: memref<1x8xf32, #tpu.memory_space<vmem>>, %arg31: memref<16x8xf32, #tpu.memory_space<vmem>>, %arg32: memref<640x1024xi8, #tpu.memory_space<vmem>>, %arg33: memref<640x1024xi8, #tpu.memory_space<vmem>>, %arg34: memref<1024x512xi8, #tpu.memory_space<vmem>>, %arg35: memref<3x!tpu.dma_semaphore, #tpu.memory_space<semaphore_mem>>) attributes {dimension_semantics = [], scalar_prefetch = 0 : i64, scratch_operands = 4 : i64, tpu.core_type = #tpu.core_type<tc>} {
    %c0_i32 = arith.constant 0 : i32
    %0 = tpu.memref_slice %arg35[%c0_i32] : memref<3x!tpu.dma_semaphore, #tpu.memory_space<semaphore_mem>> -> memref<1x!tpu.dma_semaphore, #tpu.memory_space<semaphore_mem>>
    %1 = tpu.memref_squeeze %0 : memref<1x!tpu.dma_semaphore, #tpu.memory_space<semaphore_mem>> -> memref<!tpu.dma_semaphore, #tpu.memory_space<semaphore_mem>>
    tpu.enqueue_dma source(%arg13 : memref<640x1024xi8, #tpu.memory_space<any>>) target(%arg32 : memref<640x1024xi8, #tpu.memory_space<vmem>>) target_semaphore(%1 : memref<!tpu.dma_semaphore, #tpu.memory_space<semaphore_mem>>)
    %c1_i32 = arith.constant 1 : i32
    %2 = tpu.memref_slice %arg35[%c1_i32] : memref<3x!tpu.dma_semaphore, #tpu.memory_space<semaphore_mem>> -> memref<1x!tpu.dma_semaphore, #tpu.memory_space<semaphore_mem>>
    %3 = tpu.memref_squeeze %2 : memref<1x!tpu.dma_semaphore, #tpu.memory_space<semaphore_mem>> -> memref<!tpu.dma_semaphore, #tpu.memory_space<semaphore_mem>>
    tpu.enqueue_dma source(%arg14 : memref<640x1024xi8, #tpu.memory_space<any>>) target(%arg33 : memref<640x1024xi8, #tpu.memory_space<vmem>>) target_semaphore(%3 : memref<!tpu.dma_semaphore, #tpu.memory_space<semaphore_mem>>)
    %c2_i32 = arith.constant 2 : i32
    %4 = tpu.memref_slice %arg35[%c2_i32] : memref<3x!tpu.dma_semaphore, #tpu.memory_space<semaphore_mem>> -> memref<1x!tpu.dma_semaphore, #tpu.memory_space<semaphore_mem>>
    %5 = tpu.memref_squeeze %4 : memref<1x!tpu.dma_semaphore, #tpu.memory_space<semaphore_mem>> -> memref<!tpu.dma_semaphore, #tpu.memory_space<semaphore_mem>>
    tpu.enqueue_dma source(%arg17 : memref<1024x512xi8, #tpu.memory_space<any>>) target(%arg34 : memref<1024x512xi8, #tpu.memory_space<vmem>>) target_semaphore(%5 : memref<!tpu.dma_semaphore, #tpu.memory_space<semaphore_mem>>)
    %c0 = arith.constant 0 : index
    %6 = memref.load %arg0[%c0] : memref<9xf32, #tpu.memory_space<smem>>
    %c1 = arith.constant 1 : index
    %7 = memref.load %arg0[%c1] : memref<9xf32, #tpu.memory_space<smem>>
    %c2 = arith.constant 2 : index
    %8 = memref.load %arg0[%c2] : memref<9xf32, #tpu.memory_space<smem>>
    %c3 = arith.constant 3 : index
    %9 = memref.load %arg0[%c3] : memref<9xf32, #tpu.memory_space<smem>>
    %c4 = arith.constant 4 : index
    %10 = memref.load %arg0[%c4] : memref<9xf32, #tpu.memory_space<smem>>
    %c5 = arith.constant 5 : index
    %11 = memref.load %arg0[%c5] : memref<9xf32, #tpu.memory_space<smem>>
    %c6 = arith.constant 6 : index
    %12 = memref.load %arg0[%c6] : memref<9xf32, #tpu.memory_space<smem>>
    %c7 = arith.constant 7 : index
    %13 = memref.load %arg0[%c7] : memref<9xf32, #tpu.memory_space<smem>>
    %c8 = arith.constant 8 : index
    %14 = memref.load %arg0[%c8] : memref<9xf32, #tpu.memory_space<smem>>
    %c0_0 = arith.constant 0 : index
    %c0_1 = arith.constant 0 : index
    %15 = vector.load %arg1[%c0_0, %c0_1] : memref<16x128xf32, #tpu.memory_space<vmem>>, vector<16x128xf32>
    %c0_2 = arith.constant 0 : index
    %c0_3 = arith.constant 0 : index
    %16 = vector.load %arg3[%c0_2, %c0_3] : memref<128x512xbf16, #tpu.memory_space<vmem>>, vector<128x512xbf16>
    %17 = arith.truncf %15 : vector<16x128xf32> to vector<16x128xbf16>
    %cst = arith.constant dense<0.000000e+00> : vector<16x512xf32>
    %18 = tpu.matmul %17, %16, %cst {dimension_numbers = #tpu.dot_dimension_numbers<[1], [0], [0], [1], [0, 0, 1, 1], [], []>} : vector<16x128xbf16>, vector<128x512xbf16>, vector<16x512xf32> -> vector<16x512xf32>
    %c0_4 = arith.constant 0 : index
    %c0_5 = arith.constant 0 : index
    %19 = vector.load %arg4[%c0_4, %c0_5] : memref<1x512xf32, #tpu.memory_space<vmem>>, vector<1x512xf32>
    %20 = vector.broadcast %19 : vector<1x512xf32> to vector<16x512xf32>
    %21 = arith.addf %18, %20 : vector<16x512xf32>
    %cst_6 = arith.constant 0.000000e+00 : f32
    %22 = vector.broadcast %cst_6 : f32 to vector<16x512xf32>
    %23 = arith.cmpf ogt, %21, %22 : vector<16x512xf32>
    %24 = vector.broadcast %6 : f32 to vector<16x512xf32>
    %25 = arith.mulf %24, %21 : vector<16x512xf32>
    %26 = arith.select %23, %21, %25 : vector<16x512xi1>, vector<16x512xf32>
    %c0_7 = arith.constant 0 : index
    %c0_8 = arith.constant 0 : index
    %27 = vector.load %arg5[%c0_7, %c0_8] : memref<512x128xbf16, #tpu.memory_space<vmem>>, vector<512x128xbf16>
    %28 = arith.truncf %26 : vector<16x512xf32> to vector<16x512xbf16>
    %cst_9 = arith.constant dense<0.000000e+00> : vector<16x128xf32>
    %29 = tpu.matmul %28, %27, %cst_9 {dimension_numbers = #tpu.dot_dimension_numbers<[1], [0], [0], [1], [0, 0, 1, 1], [], []>} : vector<16x512xbf16>, vector<512x128xbf16>, vector<16x128xf32> -> vector<16x128xf32>
    %c0_10 = arith.constant 0 : index
    %c0_11 = arith.constant 0 : index
    %30 = vector.load %arg6[%c0_10, %c0_11] : memref<1x128xf32, #tpu.memory_space<vmem>>, vector<1x128xf32>
    %31 = vector.broadcast %30 : vector<1x128xf32> to vector<16x128xf32>
    %32 = arith.addf %29, %31 : vector<16x128xf32>
    %cst_12 = arith.constant 0.000000e+00 : f32
    %33 = vector.broadcast %cst_12 : f32 to vector<16x128xf32>
    %34 = arith.cmpf ogt, %32, %33 : vector<16x128xf32>
    %35 = vector.broadcast %7 : f32 to vector<16x128xf32>
    %36 = arith.mulf %35, %32 : vector<16x128xf32>
    %37 = arith.select %34, %32, %36 : vector<16x128xi1>, vector<16x128xf32>
    %c0_13 = arith.constant 0 : index
    %c0_14 = arith.constant 0 : index
    %38 = vector.load %arg7[%c0_13, %c0_14] : memref<128x32xbf16, #tpu.memory_space<vmem>>, vector<128x32xbf16>
    %39 = arith.truncf %37 : vector<16x128xf32> to vector<16x128xbf16>
    %cst_15 = arith.constant dense<0.000000e+00> : vector<16x32xf32>
    %40 = tpu.matmul %39, %38, %cst_15 {dimension_numbers = #tpu.dot_dimension_numbers<[1], [0], [0], [1], [0, 0, 1, 1], [], []>} : vector<16x128xbf16>, vector<128x32xbf16>, vector<16x32xf32> -> vector<16x32xf32>
    %c0_16 = arith.constant 0 : index
    %c0_17 = arith.constant 0 : index
    %41 = vector.load %arg8[%c0_16, %c0_17] : memref<1x32xf32, #tpu.memory_space<vmem>>, vector<1x32xf32>
    %42 = vector.broadcast %41 : vector<1x32xf32> to vector<16x32xf32>
    %43 = arith.addf %40, %42 : vector<16x32xf32>
    %c0_18 = arith.constant 0 : index
    %c0_19 = arith.constant 0 : index
    %44 = vector.load %arg2[%c0_18, %c0_19] : memref<16x16xf32, #tpu.memory_space<vmem>>, vector<16x16xf32>
    %c0_20 = arith.constant 0 : index
    %c0_21 = arith.constant 0 : index
    %45 = vector.load %arg9[%c0_20, %c0_21] : memref<32x1280xi8, #tpu.memory_space<vmem>>, vector<32x1280xi8>
    %46 = arith.sitofp %45 : vector<32x1280xi8> to vector<32x1280xf32>
    %47 = arith.truncf %46 : vector<32x1280xf32> to vector<32x1280xbf16>
    %48 = arith.truncf %43 : vector<16x32xf32> to vector<16x32xbf16>
    %cst_22 = arith.constant dense<0.000000e+00> : vector<16x1280xf32>
    %49 = tpu.matmul %48, %47, %cst_22 {dimension_numbers = #tpu.dot_dimension_numbers<[1], [0], [0], [1], [0, 0, 1, 1], [], []>} : vector<16x32xbf16>, vector<32x1280xbf16>, vector<16x1280xf32> -> vector<16x1280xf32>
    %c0_23 = arith.constant 0 : index
    %c0_24 = arith.constant 0 : index
    %50 = vector.load %arg10[%c0_23, %c0_24] : memref<16x1280xi8, #tpu.memory_space<vmem>>, vector<16x1280xi8>
    %51 = arith.sitofp %50 : vector<16x1280xi8> to vector<16x1280xf32>
    %52 = arith.truncf %51 : vector<16x1280xf32> to vector<16x1280xbf16>
    %53 = arith.truncf %44 : vector<16x16xf32> to vector<16x16xbf16>
    %cst_25 = arith.constant dense<0.000000e+00> : vector<16x1280xf32>
    %54 = tpu.matmul %53, %52, %cst_25 {dimension_numbers = #tpu.dot_dimension_numbers<[1], [0], [0], [1], [0, 0, 1, 1], [], []>} : vector<16x16xbf16>, vector<16x1280xbf16>, vector<16x1280xf32> -> vector<16x1280xf32>
    %55 = arith.addf %49, %54 : vector<16x1280xf32>
    %c0_26 = arith.constant 0 : index
    %c0_27 = arith.constant 0 : index
    %56 = vector.load %arg11[%c0_26, %c0_27] : memref<1x1280xf32, #tpu.memory_space<vmem>>, vector<1x1280xf32>
    %57 = vector.broadcast %56 : vector<1x1280xf32> to vector<16x1280xf32>
    %58 = arith.mulf %55, %57 : vector<16x1280xf32>
    %c0_28 = arith.constant 0 : index
    %c0_29 = arith.constant 0 : index
    %59 = vector.load %arg12[%c0_28, %c0_29] : memref<1x1280xf32, #tpu.memory_space<vmem>>, vector<1x1280xf32>
    %60 = vector.broadcast %59 : vector<1x1280xf32> to vector<16x1280xf32>
    %61 = arith.addf %58, %60 : vector<16x1280xf32>
    %cst_30 = arith.constant 0.000000e+00 : f32
    %62 = vector.broadcast %cst_30 : f32 to vector<16x1280xf32>
    %63 = arith.cmpf ogt, %61, %62 : vector<16x1280xf32>
    %64 = vector.broadcast %8 : f32 to vector<16x1280xf32>
    %65 = arith.mulf %64, %61 : vector<16x1280xf32>
    %66 = arith.select %63, %61, %65 : vector<16x1280xi1>, vector<16x1280xf32>
    %c0_i32_31 = arith.constant 0 : i32
    %67 = tpu.memref_slice %arg35[%c0_i32_31] : memref<3x!tpu.dma_semaphore, #tpu.memory_space<semaphore_mem>> -> memref<1x!tpu.dma_semaphore, #tpu.memory_space<semaphore_mem>>
    %68 = tpu.memref_squeeze %67 : memref<1x!tpu.dma_semaphore, #tpu.memory_space<semaphore_mem>> -> memref<!tpu.dma_semaphore, #tpu.memory_space<semaphore_mem>>
    tpu.wait_dma2 semaphore(%68 : memref<!tpu.dma_semaphore, #tpu.memory_space<semaphore_mem>>) src(%arg13 : memref<640x1024xi8, #tpu.memory_space<any>>) dst(%arg32 : memref<640x1024xi8, #tpu.memory_space<vmem>>)
    %c0_32 = arith.constant 0 : index
    %c0_33 = arith.constant 0 : index
    %69 = vector.load %arg32[%c0_32, %c0_33] : memref<640x1024xi8, #tpu.memory_space<vmem>>, vector<640x1024xi8>
    %70 = arith.sitofp %69 : vector<640x1024xi8> to vector<640x1024xf32>
    %71 = arith.truncf %70 : vector<640x1024xf32> to vector<640x1024xbf16>
    %c1_i32_34 = arith.constant 1 : i32
    %72 = tpu.memref_slice %arg35[%c1_i32_34] : memref<3x!tpu.dma_semaphore, #tpu.memory_space<semaphore_mem>> -> memref<1x!tpu.dma_semaphore, #tpu.memory_space<semaphore_mem>>
    %73 = tpu.memref_squeeze %72 : memref<1x!tpu.dma_semaphore, #tpu.memory_space<semaphore_mem>> -> memref<!tpu.dma_semaphore, #tpu.memory_space<semaphore_mem>>
    tpu.wait_dma2 semaphore(%73 : memref<!tpu.dma_semaphore, #tpu.memory_space<semaphore_mem>>) src(%arg14 : memref<640x1024xi8, #tpu.memory_space<any>>) dst(%arg33 : memref<640x1024xi8, #tpu.memory_space<vmem>>)
    %c0_35 = arith.constant 0 : index
    %c0_36 = arith.constant 0 : index
    %74 = vector.load %arg33[%c0_35, %c0_36] : memref<640x1024xi8, #tpu.memory_space<vmem>>, vector<640x1024xi8>
    %75 = arith.sitofp %74 : vector<640x1024xi8> to vector<640x1024xf32>
    %76 = arith.truncf %75 : vector<640x1024xf32> to vector<640x1024xbf16>
    %77 = vector.extract_strided_slice %66 {offsets = [0, 0], sizes = [16, 640], strides = [1, 1]} : vector<16x1280xf32> to vector<16x640xf32>
    %78 = arith.truncf %77 : vector<16x640xf32> to vector<16x640xbf16>
    %cst_37 = arith.constant dense<0.000000e+00> : vector<16x1024xf32>
    %79 = tpu.matmul %78, %71, %cst_37 {dimension_numbers = #tpu.dot_dimension_numbers<[1], [0], [0], [1], [0, 0, 1, 1], [], []>} : vector<16x640xbf16>, vector<640x1024xbf16>, vector<16x1024xf32> -> vector<16x1024xf32>
    %80 = vector.extract_strided_slice %66 {offsets = [0, 640], sizes = [16, 640], strides = [1, 1]} : vector<16x1280xf32> to vector<16x640xf32>
    %81 = arith.truncf %80 : vector<16x640xf32> to vector<16x640xbf16>
    %cst_38 = arith.constant dense<0.000000e+00> : vector<16x1024xf32>
    %82 = tpu.matmul %81, %76, %cst_38 {dimension_numbers = #tpu.dot_dimension_numbers<[1], [0], [0], [1], [0, 0, 1, 1], [], []>} : vector<16x640xbf16>, vector<640x1024xbf16>, vector<16x1024xf32> -> vector<16x1024xf32>
    %83 = arith.addf %79, %82 : vector<16x1024xf32>
    %c0_39 = arith.constant 0 : index
    %c0_40 = arith.constant 0 : index
    %84 = vector.load %arg15[%c0_39, %c0_40] : memref<1x1024xf32, #tpu.memory_space<vmem>>, vector<1x1024xf32>
    %85 = vector.broadcast %84 : vector<1x1024xf32> to vector<16x1024xf32>
    %86 = arith.mulf %83, %85 : vector<16x1024xf32>
    %c0_41 = arith.constant 0 : index
    %c0_42 = arith.constant 0 : index
    %87 = vector.load %arg16[%c0_41, %c0_42] : memref<1x1024xf32, #tpu.memory_space<vmem>>, vector<1x1024xf32>
    %88 = vector.broadcast %87 : vector<1x1024xf32> to vector<16x1024xf32>
    %89 = arith.addf %86, %88 : vector<16x1024xf32>
    %cst_43 = arith.constant 0.000000e+00 : f32
    %90 = vector.broadcast %cst_43 : f32 to vector<16x1024xf32>
    %91 = arith.cmpf ogt, %89, %90 : vector<16x1024xf32>
    %92 = vector.broadcast %9 : f32 to vector<16x1024xf32>
    %93 = arith.mulf %92, %89 : vector<16x1024xf32>
    %94 = arith.select %91, %89, %93 : vector<16x1024xi1>, vector<16x1024xf32>
    %c2_i32_44 = arith.constant 2 : i32
    %95 = tpu.memref_slice %arg35[%c2_i32_44] : memref<3x!tpu.dma_semaphore, #tpu.memory_space<semaphore_mem>> -> memref<1x!tpu.dma_semaphore, #tpu.memory_space<semaphore_mem>>
    %96 = tpu.memref_squeeze %95 : memref<1x!tpu.dma_semaphore, #tpu.memory_space<semaphore_mem>> -> memref<!tpu.dma_semaphore, #tpu.memory_space<semaphore_mem>>
    tpu.wait_dma2 semaphore(%96 : memref<!tpu.dma_semaphore, #tpu.memory_space<semaphore_mem>>) src(%arg17 : memref<1024x512xi8, #tpu.memory_space<any>>) dst(%arg34 : memref<1024x512xi8, #tpu.memory_space<vmem>>)
    %c0_45 = arith.constant 0 : index
    %c0_46 = arith.constant 0 : index
    %97 = vector.load %arg34[%c0_45, %c0_46] : memref<1024x512xi8, #tpu.memory_space<vmem>>, vector<1024x512xi8>
    %98 = arith.sitofp %97 : vector<1024x512xi8> to vector<1024x512xf32>
    %99 = arith.truncf %98 : vector<1024x512xf32> to vector<1024x512xbf16>
    %100 = arith.truncf %94 : vector<16x1024xf32> to vector<16x1024xbf16>
    %cst_47 = arith.constant dense<0.000000e+00> : vector<16x512xf32>
    %101 = tpu.matmul %100, %99, %cst_47 {dimension_numbers = #tpu.dot_dimension_numbers<[1], [0], [0], [1], [0, 0, 1, 1], [], []>} : vector<16x1024xbf16>, vector<1024x512xbf16>, vector<16x512xf32> -> vector<16x512xf32>
    %c0_48 = arith.constant 0 : index
    %c0_49 = arith.constant 0 : index
    %102 = vector.load %arg18[%c0_48, %c0_49] : memref<1x512xf32, #tpu.memory_space<vmem>>, vector<1x512xf32>
    %103 = vector.broadcast %102 : vector<1x512xf32> to vector<16x512xf32>
    %104 = arith.mulf %101, %103 : vector<16x512xf32>
    %c0_50 = arith.constant 0 : index
    %c0_51 = arith.constant 0 : index
    %105 = vector.load %arg19[%c0_50, %c0_51] : memref<1x512xf32, #tpu.memory_space<vmem>>, vector<1x512xf32>
    %106 = vector.broadcast %105 : vector<1x512xf32> to vector<16x512xf32>
    %107 = arith.addf %104, %106 : vector<16x512xf32>
    %cst_52 = arith.constant 0.000000e+00 : f32
    %108 = vector.broadcast %cst_52 : f32 to vector<16x512xf32>
    %109 = arith.cmpf ogt, %107, %108 : vector<16x512xf32>
    %110 = vector.broadcast %10 : f32 to vector<16x512xf32>
    %111 = arith.mulf %110, %107 : vector<16x512xf32>
    %112 = arith.select %109, %107, %111 : vector<16x512xi1>, vector<16x512xf32>
    %c0_53 = arith.constant 0 : index
    %c0_54 = arith.constant 0 : index
    %113 = vector.load %arg20[%c0_53, %c0_54] : memref<512x256xi8, #tpu.memory_space<vmem>>, vector<512x256xi8>
    %114 = arith.sitofp %113 : vector<512x256xi8> to vector<512x256xf32>
    %115 = arith.truncf %114 : vector<512x256xf32> to vector<512x256xbf16>
    %116 = arith.truncf %112 : vector<16x512xf32> to vector<16x512xbf16>
    %cst_55 = arith.constant dense<0.000000e+00> : vector<16x256xf32>
    %117 = tpu.matmul %116, %115, %cst_55 {dimension_numbers = #tpu.dot_dimension_numbers<[1], [0], [0], [1], [0, 0, 1, 1], [], []>} : vector<16x512xbf16>, vector<512x256xbf16>, vector<16x256xf32> -> vector<16x256xf32>
    %c0_56 = arith.constant 0 : index
    %c0_57 = arith.constant 0 : index
    %118 = vector.load %arg21[%c0_56, %c0_57] : memref<1x256xf32, #tpu.memory_space<vmem>>, vector<1x256xf32>
    %119 = vector.broadcast %118 : vector<1x256xf32> to vector<16x256xf32>
    %120 = arith.mulf %117, %119 : vector<16x256xf32>
    %c0_58 = arith.constant 0 : index
    %c0_59 = arith.constant 0 : index
    %121 = vector.load %arg22[%c0_58, %c0_59] : memref<1x256xf32, #tpu.memory_space<vmem>>, vector<1x256xf32>
    %122 = vector.broadcast %121 : vector<1x256xf32> to vector<16x256xf32>
    %123 = arith.addf %120, %122 : vector<16x256xf32>
    %cst_60 = arith.constant 0.000000e+00 : f32
    %124 = vector.broadcast %cst_60 : f32 to vector<16x256xf32>
    %125 = arith.cmpf ogt, %123, %124 : vector<16x256xf32>
    %126 = vector.broadcast %11 : f32 to vector<16x256xf32>
    %127 = arith.mulf %126, %123 : vector<16x256xf32>
    %128 = arith.select %125, %123, %127 : vector<16x256xi1>, vector<16x256xf32>
    %c0_61 = arith.constant 0 : index
    %c0_62 = arith.constant 0 : index
    %129 = vector.load %arg23[%c0_61, %c0_62] : memref<256x128xbf16, #tpu.memory_space<vmem>>, vector<256x128xbf16>
    %130 = arith.truncf %128 : vector<16x256xf32> to vector<16x256xbf16>
    %cst_63 = arith.constant dense<0.000000e+00> : vector<16x128xf32>
    %131 = tpu.matmul %130, %129, %cst_63 {dimension_numbers = #tpu.dot_dimension_numbers<[1], [0], [0], [1], [0, 0, 1, 1], [], []>} : vector<16x256xbf16>, vector<256x128xbf16>, vector<16x128xf32> -> vector<16x128xf32>
    %c0_64 = arith.constant 0 : index
    %c0_65 = arith.constant 0 : index
    %132 = vector.load %arg24[%c0_64, %c0_65] : memref<1x128xf32, #tpu.memory_space<vmem>>, vector<1x128xf32>
    %133 = vector.broadcast %132 : vector<1x128xf32> to vector<16x128xf32>
    %134 = arith.addf %131, %133 : vector<16x128xf32>
    %cst_66 = arith.constant 0.000000e+00 : f32
    %135 = vector.broadcast %cst_66 : f32 to vector<16x128xf32>
    %136 = arith.cmpf ogt, %134, %135 : vector<16x128xf32>
    %137 = vector.broadcast %12 : f32 to vector<16x128xf32>
    %138 = arith.mulf %137, %134 : vector<16x128xf32>
    %139 = arith.select %136, %134, %138 : vector<16x128xi1>, vector<16x128xf32>
    %c0_67 = arith.constant 0 : index
    %c0_68 = arith.constant 0 : index
    %140 = vector.load %arg25[%c0_67, %c0_68] : memref<128x64xbf16, #tpu.memory_space<vmem>>, vector<128x64xbf16>
    %141 = arith.truncf %139 : vector<16x128xf32> to vector<16x128xbf16>
    %cst_69 = arith.constant dense<0.000000e+00> : vector<16x64xf32>
    %142 = tpu.matmul %141, %140, %cst_69 {dimension_numbers = #tpu.dot_dimension_numbers<[1], [0], [0], [1], [0, 0, 1, 1], [], []>} : vector<16x128xbf16>, vector<128x64xbf16>, vector<16x64xf32> -> vector<16x64xf32>
    %c0_70 = arith.constant 0 : index
    %c0_71 = arith.constant 0 : index
    %143 = vector.load %arg26[%c0_70, %c0_71] : memref<1x64xf32, #tpu.memory_space<vmem>>, vector<1x64xf32>
    %144 = vector.broadcast %143 : vector<1x64xf32> to vector<16x64xf32>
    %145 = arith.addf %142, %144 : vector<16x64xf32>
    %cst_72 = arith.constant 0.000000e+00 : f32
    %146 = vector.broadcast %cst_72 : f32 to vector<16x64xf32>
    %147 = arith.cmpf ogt, %145, %146 : vector<16x64xf32>
    %148 = vector.broadcast %13 : f32 to vector<16x64xf32>
    %149 = arith.mulf %148, %145 : vector<16x64xf32>
    %150 = arith.select %147, %145, %149 : vector<16x64xi1>, vector<16x64xf32>
    %c0_73 = arith.constant 0 : index
    %c0_74 = arith.constant 0 : index
    %151 = vector.load %arg27[%c0_73, %c0_74] : memref<64x32xbf16, #tpu.memory_space<vmem>>, vector<64x32xbf16>
    %152 = arith.truncf %150 : vector<16x64xf32> to vector<16x64xbf16>
    %cst_75 = arith.constant dense<0.000000e+00> : vector<16x32xf32>
    %153 = tpu.matmul %152, %151, %cst_75 {dimension_numbers = #tpu.dot_dimension_numbers<[1], [0], [0], [1], [0, 0, 1, 1], [], []>} : vector<16x64xbf16>, vector<64x32xbf16>, vector<16x32xf32> -> vector<16x32xf32>
    %c0_76 = arith.constant 0 : index
    %c0_77 = arith.constant 0 : index
    %154 = vector.load %arg28[%c0_76, %c0_77] : memref<1x32xf32, #tpu.memory_space<vmem>>, vector<1x32xf32>
    %155 = vector.broadcast %154 : vector<1x32xf32> to vector<16x32xf32>
    %156 = arith.addf %153, %155 : vector<16x32xf32>
    %cst_78 = arith.constant 0.000000e+00 : f32
    %157 = vector.broadcast %cst_78 : f32 to vector<16x32xf32>
    %158 = arith.cmpf ogt, %156, %157 : vector<16x32xf32>
    %159 = vector.broadcast %14 : f32 to vector<16x32xf32>
    %160 = arith.mulf %159, %156 : vector<16x32xf32>
    %161 = arith.select %158, %156, %160 : vector<16x32xi1>, vector<16x32xf32>
    %c0_79 = arith.constant 0 : index
    %c0_80 = arith.constant 0 : index
    %162 = vector.load %arg29[%c0_79, %c0_80] : memref<32x8xbf16, #tpu.memory_space<vmem>>, vector<32x8xbf16>
    %163 = arith.truncf %161 : vector<16x32xf32> to vector<16x32xbf16>
    %cst_81 = arith.constant dense<0.000000e+00> : vector<16x8xf32>
    %164 = tpu.matmul %163, %162, %cst_81 {dimension_numbers = #tpu.dot_dimension_numbers<[1], [0], [0], [1], [0, 0, 1, 1], [], []>} : vector<16x32xbf16>, vector<32x8xbf16>, vector<16x8xf32> -> vector<16x8xf32>
    %c0_82 = arith.constant 0 : index
    %c0_83 = arith.constant 0 : index
    %165 = vector.load %arg30[%c0_82, %c0_83] : memref<1x8xf32, #tpu.memory_space<vmem>>, vector<1x8xf32>
    %166 = vector.broadcast %165 : vector<1x8xf32> to vector<16x8xf32>
    %167 = arith.addf %164, %166 : vector<16x8xf32>
    %c0_84 = arith.constant 0 : index
    %c0_85 = arith.constant 0 : index
    %168 = vector.load %arg31[%c0_84, %c0_85] : memref<16x8xf32, #tpu.memory_space<vmem>>, vector<16x8xf32>
    tpu.vector_store %arg31[%c0_84, %c0_85], %167 {strides = array<i32>} : memref<16x8xf32, #tpu.memory_space<vmem>>, vector<16x8xf32>,
    return
  }
}

</mosaic_0001>

<llo_original>
// kernel: tpu_custom_call.1
$region0: #{tpu_custom_call.1}
  #allocation0 [shape = 'u32[]', space=smem, size = 0x4, offset = 0x4, fixed_abs, tag = 'smem constant byte address 0x4 - core index']
  #allocation1 [shape = 'u32[144,128]{1,0:T(1,128)}', space=vmem, size = 0x12000, scoped, tag = 'internal scratch']
  #allocation2 [shape = 's8[640,1024]{1,0:T(32,128)(4,1)}', space=vmem, size = 0xa0000, scoped, tag = 'scratch operand']
  #allocation3 [shape = 's8[640,1024]{1,0:T(32,128)(4,1)}', space=vmem, size = 0xa0000, scoped, tag = 'scratch operand']
  #allocation4 [shape = 's8[1024,512]{1,0:T(32,128)(4,1)}', space=vmem, size = 0x80000, scoped, tag = 'scratch operand']
  #allocation5 [shape = 's32[3]{0}', space=sflag, size = 0xc, scoped, tag = 'scratch operand']
  #allocation34 [shape = 's32[]', space=sflag, size = 0x4, offset = 0, fixed_abs, tag = 'sflag constant byte address 0x0 - dummy sync flag']
  #allocation35 [shape = 's32[]', space=sflag, size = 0x4, offset = 0, fixed_abs, tag = 'sflag constant byte address 0x0 - dummy sync flag']
  #allocation36 [shape = 'u32[]', space=smem, size = 0x4, offset = 0x44, fixed_abs, tag = 'smem constant byte address 0x44 - assertion arg 0']
  #allocation37 [shape = 'u32[]', space=smem, size = 0x4, offset = 0x48, fixed_abs, tag = 'smem constant byte address 0x48 - assertion arg 1']
  #allocation38 [shape = 's32[]', space=sflag, size = 0x4, offset = 0, fixed_abs, tag = 'sflag constant byte address 0x0 - dummy sync flag']
  #allocation39 [shape = 's32[]', space=sflag, size = 0x4, offset = 0, fixed_abs, tag = 'sflag constant byte address 0x0 - dummy sync flag']
  #allocation40 [shape = 's32[]', space=sflag, size = 0x4, offset = 0, fixed_abs, tag = 'sflag constant byte address 0x0 - dummy sync flag']
  #allocation41 [shape = 's32[]', space=sflag, size = 0x4, offset = 0, fixed_abs, tag = 'sflag constant byte address 0x0 - dummy sync flag']
  %s0 = inlined_call_operand.smem [shape: u32[32], index: -1, kind: input, shape index: {}]
  %s1 = sld [smem:[%s0]]
  %s2 = scalar_lea.smem %s0, 1
  %s3 = sld [smem:[%s2]]
  %s4 = scalar_lea.smem %s0, 2
  %s5 = sld [smem:[%s4]]
  %s6 = scalar_lea.smem %s0, 3
  %s7 = sld [smem:[%s6]]
  %s8 = scalar_lea.smem %s0, 4
  %s9 = sld [smem:[%s8]]
  %s10 = scalar_lea.smem %s0, 5
  %s11 = sld [smem:[%s10]]
  %s12 = scalar_lea.smem %s0, 6
  %s13 = sld [smem:[%s12]]
  %s14 = scalar_lea.smem %s0, 7
  %s15 = sld [smem:[%s14]]
  %s16 = scalar_lea.smem %s0, 8
  %s17 = sld [smem:[%s16]]
  %s18 = scalar_lea.smem %s0, 9
  %s19 = sld [smem:[%s18]]
  %s20 = scalar_lea.smem %s0, 10
  %s21 = sld [smem:[%s20]]
  %s22 = scalar_lea.smem %s0, 11
  %s23 = sld [smem:[%s22]]
  %s24 = scalar_lea.smem %s0, 12
  %s25 = sld [smem:[%s24]]
  %s26 = scalar_lea.smem %s0, 13
  %s27 = sld [smem:[%s26]]
  %s28 = scalar_lea.smem %s0, 14
  %s29 = sld [smem:[%s28]]
  %s30 = scalar_lea.smem %s0, 15
  %s31 = sld [smem:[%s30]]
  %s32 = scalar_lea.smem %s0, 16
  %s33 = sld [smem:[%s32]]
  %s34 = scalar_lea.smem %s0, 17
  %s35 = sld [smem:[%s34]]
  %s36 = scalar_lea.smem %s0, 18
  %s37 = sld [smem:[%s36]]
  %s38 = scalar_lea.smem %s0, 19
  %s39 = sld [smem:[%s38]]
  %s40 = scalar_lea.smem %s0, 20
  %s41 = sld [smem:[%s40]]
  %s42 = scalar_lea.smem %s0, 21
  %s43 = sld [smem:[%s42]]
  %s44 = scalar_lea.smem %s0, 22
  %s45 = sld [smem:[%s44]]
  %s46 = scalar_lea.smem %s0, 23
  %s47 = sld [smem:[%s46]]
  %s48 = scalar_lea.smem %s0, 24
  %s49 = sld [smem:[%s48]]
  %s50 = scalar_lea.smem %s0, 25
  %s51 = sld [smem:[%s50]]
  %s52 = scalar_lea.smem %s0, 26
  %s53 = sld [smem:[%s52]]
  %s54 = scalar_lea.smem %s0, 27
  %s55 = sld [smem:[%s54]]
  %s56 = scalar_lea.smem %s0, 28
  %s57 = sld [smem:[%s56]]
  %s58 = scalar_lea.smem %s0, 29
  %s59 = sld [smem:[%s58]]
  %s60 = scalar_lea.smem %s0, 30
  %s61 = sld [smem:[%s60]]
  %s62 = scalar_lea.smem %s0, 31
  %s63 = sld [smem:[%s62]]
  %s64 = sld [smem:[#allocation0]]
  $region206: #{tpu_custom_call.1} parent=0
    _
  %s66 = ssub.s32 1, %s64
  %s67 = scalar_select 0, %s66, %s64
  $region1: #{tpu_custom_call.1} parent=0
    #allocation6 [shape = 'u8[512]{0}', space=smem, size = 0x200, scoped, tag = 'input window, operand 0, single buffered']
    #allocation7 [shape = 's32[1]{0}', space=sflag, size = 0x4, scoped, tag = 'scoped memory for tpu_custom_call.1']
    #allocation8 [shape = 's32[1]{0}', space=sflag, size = 0x4, scoped, tag = 'scoped memory for tpu_custom_call.1']
    #allocation9 [shape = 'u8[8192]{0}', space=vmem, size = 0x2000, scoped, tag = 'input window, operand 1, single buffered']
    #allocation10 [shape = 'u8[8192]{0}', space=vmem, size = 0x2000, scoped, tag = 'input window, operand 2, single buffered']
    #allocation11 [shape = 's32[1]{0}', space=sflag, size = 0x4, scoped, tag = 'scoped memory for tpu_custom_call.1']
    #allocation12 [shape = 'u8[131072]{0}', space=vmem, size = 0x20000, scoped, tag = 'input window, operand 3, single buffered']
    #allocation13 [shape = 'u8[2048]{0}', space=vmem, size = 0x800, scoped, tag = 'input window, operand 4, single buffered']
    #allocation14 [shape = 's32[1]{0}', space=sflag, size = 0x4, scoped, tag = 'scoped memory for tpu_custom_call.1']
    #allocation15 [shape = 'u8[131072]{0}', space=vmem, size = 0x20000, scoped, tag = 'input window, operand 5, single buffered']
    #allocation16 [shape = 'u8[512]{0}', space=vmem, size = 0x400, scoped, tag = 'input window, operand 6, single buffered']
    #allocation17 [shape = 's32[1]{0}', space=sflag, size = 0x4, scoped, tag = 'scoped memory for tpu_custom_call.1']
    #allocation18 [shape = 'u8[512]{0}', space=vmem, size = 0x400, scoped, tag = 'input window, operand 8, single buffered']
    #allocation19 [shape = 'u8[40960]{0}', space=vmem, size = 0xa000, scoped, tag = 'input window, operand 9, single buffered']
    #allocation20 [shape = 's32[1]{0}', space=sflag, size = 0x4, scoped, tag = 'scoped memory for tpu_custom_call.1']
    #allocation21 [shape = 'u8[20480]{0}', space=vmem, size = 0x5000, scoped, tag = 'input window, operand 10, single buffered']
    #allocation22 [shape = 'u8[5120]{0}', space=vmem, size = 0x1400, scoped, tag = 'input window, operand 12, single buffered']
    #allocation23 [shape = 's32[1]{0}', space=sflag, size = 0x4, scoped, tag = 'scoped memory for tpu_custom_call.1']
    #allocation24 [shape = 'u8[4096]{0}', space=vmem, size = 0x1000, scoped, tag = 'input window, operand 15, single buffered']
    #allocation25 [shape = 'u8[4096]{0}', space=vmem, size = 0x1000, scoped, tag = 'input window, operand 16, single buffered']
    #allocation26 [shape = 's32[1]{0}', space=sflag, size = 0x4, scoped, tag = 'scoped memory for tpu_custom_call.1']
    #allocation27 [shape = 'u8[2048]{0}', space=vmem, size = 0x800, scoped, tag = 'input window, operand 18, single buffered']
    #allocation28 [shape = 'u8[2048]{0}', space=vmem, size = 0x800, scoped, tag = 'input window, operand 19, single buffered']
    #allocation29 [shape = 's32[1]{0}', space=sflag, size = 0x4, scoped, tag = 'scoped memory for tpu_custom_call.1']
    #allocation30 [shape = 'u8[1024]{0}', space=vmem, size = 0x400, scoped, tag = 'input window, operand 21, single buffered']
    #allocation31 [shape = 'u8[1024]{0}', space=vmem, size = 0x400, scoped, tag = 'input window, operand 22, single buffered']
    #allocation32 [shape = 's32[1]{0}', space=sflag, size = 0x4, scoped, tag = 'scoped memory for tpu_custom_call.1']
    #allocation33 [shape = 'u8[65536]{0}', space=vmem, size = 0x10000, scoped, tag = 'input window, operand 23, single buffered']
    %68 = vsyncpa [#allocation8], 0
    %69 = vsyncpa [#allocation7], 0
    %70 = vsyncpa [#allocation11], 0
    %71 = vsyncpa [#allocation14], 0
    %72 = vsyncpa [#allocation17], 0
    %73 = vsyncpa [#allocation20], 0
    %74 = vsyncpa [#allocation23], 0
    %75 = vsyncpa [#allocation26], 0
    %76 = vsyncpa [#allocation29], 0
    %77 = vsyncpa [#allocation32], 0
    // Predicated region
    $region2: #{tpu_custom_call.1} parent=1 // pred_check
      _
    $region3: #{tpu_custom_call.1} parent=1 // pred_check_branch
      %79 = sbr.rel (0) target = $region5
    $region4: #{tpu_custom_call.1} parent=1 // pred_region
      %s81 = ssub.s32 16, 16
      %82 = vsyncadd [#allocation8], %s81
      %85 = dma.hbm_to_smem %s1, 16, [#allocation6], [#allocation8]
    $region5: #{tpu_custom_call.1} parent=1 // pred_fallthru
      _
    // Predicated region
    $region6: #{tpu_custom_call.1} parent=1 // pred_check
      _
    $region7: #{tpu_custom_call.1} parent=1 // pred_check_branch
      %87 = sbr.rel (0) target = $region9
    $region8: #{tpu_custom_call.1} parent=1 // pred_region
      %s89 = ssub.s32 256, 256
      %90 = vsyncadd [#allocation7], %s89
      %s91 = sshll.u32 [#allocation9], 4
      %s92 = int_to_ptr.vmem [resolvable:$true] %s91
      %97 = dma.hbm_to_vmem [thread:$0]  %s3, 256, %s92, [#allocation7], 128, 128, 8
    $region9: #{tpu_custom_call.1} parent=1 // pred_fallthru
      _
    // Predicated region
    $region10: #{tpu_custom_call.1} parent=1 // pred_check
      _
    $region11: #{tpu_custom_call.1} parent=1 // pred_check_branch
      %99 = sbr.rel (0) target = $region13
    $region12: #{tpu_custom_call.1} parent=1 // pred_region
      %s101 = ssub.s32 256, 256
      %102 = vsyncadd [#allocation11], %s101
      %s103 = sshll.u32 [#allocation10], 4
      %s104 = int_to_ptr.vmem [resolvable:$true] %s103
      %109 = dma.hbm_to_vmem [thread:$0]  %s5, 256, %s104, [#allocation11], 128, 128, 8
    $region13: #{tpu_custom_call.1} parent=1 // pred_fallthru
      _
    // Predicated region
    $region14: #{tpu_custom_call.1} parent=1 // pred_check
      _
    $region15: #{tpu_custom_call.1} parent=1 // pred_check_branch
      %111 = sbr.rel (0) target = $region17
    $region16: #{tpu_custom_call.1} parent=1 // pred_region
      %s113 = ssub.s32 4096, 4096
      %114 = vsyncadd [#allocation11], %s113
      %s115 = sshll.u32 [#allocation12], 4
      %s116 = int_to_ptr.vmem [resolvable:$true] %s115
      %121 = dma.hbm_to_vmem [thread:$0]  %s7, 4096, %s116, [#allocation11], 256, 256, 16
    $region17: #{tpu_custom_call.1} parent=1 // pred_fallthru
      _
    // Predicated region
    $region18: #{tpu_custom_call.1} parent=1 // pred_check
      _
    $region19: #{tpu_custom_call.1} parent=1 // pred_check_branch
      %123 = sbr.rel (0) target = $region21
    $region20: #{tpu_custom_call.1} parent=1 // pred_region
      %s125 = ssub.s32 64, 64
      %126 = vsyncadd [#allocation14], %s125
      %s128 = sshll.u32 [#allocation13], 4
      %s129 = int_to_ptr.vmem [resolvable:$true] %s128
      %131 = dma.hbm_to_vmem [thread:$0]  %s9, 64, %s129, [#allocation14]
    $region21: #{tpu_custom_call.1} parent=1 // pred_fallthru
      _
    // Predicated region
    $region22: #{tpu_custom_call.1} parent=1 // pred_check
      _
    $region23: #{tpu_custom_call.1} parent=1 // pred_check_branch
      %133 = sbr.rel (0) target = $region25
    $region24: #{tpu_custom_call.1} parent=1 // pred_region
      %s135 = ssub.s32 4096, 4096
      %136 = vsyncadd [#allocation14], %s135
      %s137 = sshll.u32 [#allocation15], 4
      %s138 = int_to_ptr.vmem [resolvable:$true] %s137
      %143 = dma.hbm_to_vmem [thread:$0]  %s11, 4096, %s138, [#allocation14], 64, 64, 4
    $region25: #{tpu_custom_call.1} parent=1 // pred_fallthru
      _
    // Predicated region
    $region26: #{tpu_custom_call.1} parent=1 // pred_check
      _
    $region27: #{tpu_custom_call.1} parent=1 // pred_check_branch
      %145 = sbr.rel (0) target = $region29
    $region28: #{tpu_custom_call.1} parent=1 // pred_region
      %s147 = ssub.s32 16, 16
      %148 = vsyncadd [#allocation17], %s147
      %s150 = sshll.u32 [#allocation16], 4
      %s151 = int_to_ptr.vmem [resolvable:$true] %s150
      %153 = dma.hbm_to_vmem [thread:$0]  %s13, 16, %s151, [#allocation17]
    $region29: #{tpu_custom_call.1} parent=1 // pred_fallthru
      _
    // Predicated region
    $region30: #{tpu_custom_call.1} parent=1 // pred_check
      _
    $region31: #{tpu_custom_call.1} parent=1 // pred_check_branch
      %155 = sbr.rel (0) target = $region33
    $region32: #{tpu_custom_call.1} parent=1 // pred_region
      _
    $region33: #{tpu_custom_call.1} parent=1 // pred_fallthru
      _
    // Predicated region
    $region34: #{tpu_custom_call.1} parent=1 // pred_check
      _
    $region35: #{tpu_custom_call.1} parent=1 // pred_check_branch
      %157 = sbr.rel (0) target = $region37
    $region36: #{tpu_custom_call.1} parent=1 // pred_region
      %s159 = ssub.s32 16, 16
      %160 = vsyncadd [#allocation17], %s159
      %s162 = sshll.u32 [#allocation18], 4
      %s163 = int_to_ptr.vmem [resolvable:$true] %s162
      %165 = dma.hbm_to_vmem [thread:$0]  %s17, 16, %s163, [#allocation17]
    $region37: #{tpu_custom_call.1} parent=1 // pred_fallthru
      _
    // Predicated region
    $region38: #{tpu_custom_call.1} parent=1 // pred_check
      _
    $region39: #{tpu_custom_call.1} parent=1 // pred_check_branch
      %167 = sbr.rel (0) target = $region41
    $region40: #{tpu_custom_call.1} parent=1 // pred_region
      %s169 = ssub.s32 1280, 1280
      %170 = vsyncadd [#allocation20], %s169
      %s172 = sshll.u32 [#allocation19], 4
      %s173 = int_to_ptr.vmem [resolvable:$true] %s172
      %175 = dma.hbm_to_vmem [thread:$0]  %s19, 1280, %s173, [#allocation20]
    $region41: #{tpu_custom_call.1} parent=1 // pred_fallthru
      _
    // Predicated region
    $region42: #{tpu_custom_call.1} parent=1 // pred_check
      _
    $region43: #{tpu_custom_call.1} parent=1 // pred_check_branch
      %177 = sbr.rel (0) target = $region45
    $region44: #{tpu_custom_call.1} parent=1 // pred_region
      %s179 = ssub.s32 640, 640
      %180 = vsyncadd [#allocation20], %s179
      %s181 = sshll.u32 [#allocation21], 4
      %s182 = int_to_ptr.vmem [resolvable:$true] %s181
      %187 = dma.hbm_to_vmem [thread:$0]  %s21, 640, %s182, [#allocation20], 320, 320, 20
    $region45: #{tpu_custom_call.1} parent=1 // pred_fallthru
      _
    // Predicated region
    $region46: #{tpu_custom_call.1} parent=1 // pred_check
      _
    $region47: #{tpu_custom_call.1} parent=1 // pred_check_branch
      %189 = sbr.rel (0) target = $region49
    $region48: #{tpu_custom_call.1} parent=1 // pred_region
      _
    $region49: #{tpu_custom_call.1} parent=1 // pred_fallthru
      _
    // Predicated region
    $region50: #{tpu_custom_call.1} parent=1 // pred_check
      _
    $region51: #{tpu_custom_call.1} parent=1 // pred_check_branch
      %191 = sbr.rel (0) target = $region53
    $region52: #{tpu_custom_call.1} parent=1 // pred_region
      %s193 = ssub.s32 160, 160
      %194 = vsyncadd [#allocation23], %s193
      %s196 = sshll.u32 [#allocation22], 4
      %s197 = int_to_ptr.vmem [resolvable:$true] %s196
      %199 = dma.hbm_to_vmem [thread:$0]  %s25, 160, %s197, [#allocation23]
    $region53: #{tpu_custom_call.1} parent=1 // pred_fallthru
      _
    // Predicated region
    $region54: #{tpu_custom_call.1} parent=1 // pred_check
      _
    $region55: #{tpu_custom_call.1} parent=1 // pred_check_branch
      %201 = sbr.rel (0) target = $region57
    $region56: #{tpu_custom_call.1} parent=1 // pred_region
      %s203 = ssub.s32 128, 128
      %204 = vsyncadd [#allocation23], %s203
      %s206 = sshll.u32 [#allocation24], 4
      %s207 = int_to_ptr.vmem [resolvable:$true] %s206
      %209 = dma.hbm_to_vmem [thread:$0]  %s31, 128, %s207, [#allocation23]
    $region57: #{tpu_custom_call.1} parent=1 // pred_fallthru
      _
    // Predicated region
    $region58: #{tpu_custom_call.1} parent=1 // pred_check
      _
    $region59: #{tpu_custom_call.1} parent=1 // pred_check_branch
      %211 = sbr.rel (0) target = $region61
    $region60: #{tpu_custom_call.1} parent=1 // pred_region
      %s213 = ssub.s32 128, 128
      %214 = vsyncadd [#allocation26], %s213
      %s216 = sshll.u32 [#allocation25], 4
      %s217 = int_to_ptr.vmem [resolvable:$true] %s216
      %219 = dma.hbm_to_vmem [thread:$0]  %s33, 128, %s217, [#allocation26]
    $region61: #{tpu_custom_call.1} parent=1 // pred_fallthru
      _
    // Predicated region
    $region62: #{tpu_custom_call.1} parent=1 // pred_check
      _
    $region63: #{tpu_custom_call.1} parent=1 // pred_check_branch
      %221 = sbr.rel (0) target = $region65
    $region64: #{tpu_custom_call.1} parent=1 // pred_region
      %s223 = ssub.s32 64, 64
      %224 = vsyncadd [#allocation26], %s223
      %s226 = sshll.u32 [#allocation27], 4
      %s227 = int_to_ptr.vmem [resolvable:$true] %s226
      %229 = dma.hbm_to_vmem [thread:$0]  %s37, 64, %s227, [#allocation26]
    $region65: #{tpu_custom_call.1} parent=1 // pred_fallthru
      _
    // Predicated region
    $region66: #{tpu_custom_call.1} parent=1 // pred_check
      _
    $region67: #{tpu_custom_call.1} parent=1 // pred_check_branch
      %231 = sbr.rel (0) target = $region69
    $region68: #{tpu_custom_call.1} parent=1 // pred_region
      %s233 = ssub.s32 64, 64
      %234 = vsyncadd [#allocation29], %s233
      %s236 = sshll.u32 [#allocation28], 4
      %s237 = int_to_ptr.vmem [resolvable:$true] %s236
      %239 = dma.hbm_to_vmem [thread:$0]  %s39, 64, %s237, [#allocation29]
    $region69: #{tpu_custom_call.1} parent=1 // pred_fallthru
      _
    // Predicated region
    $region70: #{tpu_custom_call.1} parent=1 // pred_check
      _
    $region71: #{tpu_custom_call.1} parent=1 // pred_check_branch
      %241 = sbr.rel (0) target = $region73
    $region72: #{tpu_custom_call.1} parent=1 // pred_region
      _
    $region73: #{tpu_custom_call.1} parent=1 // pred_fallthru
      _
    // Predicated region
    $region74: #{tpu_custom_call.1} parent=1 // pred_check
      _
    $region75: #{tpu_custom_call.1} parent=1 // pred_check_branch
      %243 = sbr.rel (0) target = $region77
    $region76: #{tpu_custom_call.1} parent=1 // pred_region
      %s245 = ssub.s32 32, 32
      %246 = vsyncadd [#allocation29], %s245
      %s248 = sshll.u32 [#allocation30], 4
      %s249 = int_to_ptr.vmem [resolvable:$true] %s248
      %251 = dma.hbm_to_vmem [thread:$0]  %s43, 32, %s249, [#allocation29]
    $region77: #{tpu_custom_call.1} parent=1 // pred_fallthru
      _
    // Predicated region
    $region78: #{tpu_custom_call.1} parent=1 // pred_check
      _
    $region79: #{tpu_custom_call.1} parent=1 // pred_check_branch
      %253 = sbr.rel (0) target = $region81
    $region80: #{tpu_custom_call.1} parent=1 // pred_region
      %s255 = ssub.s32 32, 32
      %256 = vsyncadd [#allocation32], %s255
      %s258 = sshll.u32 [#allocation31], 4
      %s259 = int_to_ptr.vmem [resolvable:$true] %s258
      %261 = dma.hbm_to_vmem [thread:$0]  %s45, 32, %s259, [#allocation32]
    $region81: #{tpu_custom_call.1} parent=1 // pred_fallthru
      _
    // Predicated region
    $region82: #{tpu_custom_call.1} parent=1 // pred_check
      _
    $region83: #{tpu_custom_call.1} parent=1 // pred_check_branch
      %263 = sbr.rel (0) target = $region85
    $region84: #{tpu_custom_call.1} parent=1 // pred_region
      %s265 = ssub.s32 2048, 2048
      %266 = vsyncadd [#allocation32], %s265
      %s267 = sshll.u32 [#allocation33], 4
      %s268 = int_to_ptr.vmem [resolvable:$true] %s267
      %273 = dma.hbm_to_vmem [thread:$0]  %s47, 2048, %s268, [#allocation32], 64, 64, 4
    $region85: #{tpu_custom_call.1} parent=1 // pred_fallthru
      _
    // Predicated region
    $region86: #{tpu_custom_call.1} parent=1 // pred_check
      _
    $region87: #{tpu_custom_call.1} parent=1 // pred_check_branch
      %275 = sbr.rel (0) target = $region89
    $region88: #{tpu_custom_call.1} parent=1 // pred_region
      _
    $region89: #{tpu_custom_call.1} parent=1 // pred_fallthru
      _
    // Predicated region
    $region90: #{tpu_custom_call.1} parent=1 // pred_check
      _
    $region91: #{tpu_custom_call.1} parent=1 // pred_check_branch
      %277 = sbr.rel (0) target = $region93
    $region92: #{tpu_custom_call.1} parent=1 // pred_region
      _
    $region93: #{tpu_custom_call.1} parent=1 // pred_fallthru
      _
    // Predicated region
    $region94: #{tpu_custom_call.1} parent=1 // pred_check
      _
    $region95: #{tpu_custom_call.1} parent=1 // pred_check_branch
      %279 = sbr.rel (0) target = $region97
    $region96: #{tpu_custom_call.1} parent=1 // pred_region
      _
    $region97: #{tpu_custom_call.1} parent=1 // pred_fallthru
      _
    // Predicated region
    $region98: #{tpu_custom_call.1} parent=1 // pred_check
      _
    $region99: #{tpu_custom_call.1} parent=1 // pred_check_branch
      %281 = sbr.rel (0) target = $region101
    $region100: #{tpu_custom_call.1} parent=1 // pred_region
      _
    $region101: #{tpu_custom_call.1} parent=1 // pred_fallthru
      _
    // Predicated region
    $region102: #{tpu_custom_call.1} parent=1 // pred_check
      _
    $region103: #{tpu_custom_call.1} parent=1 // pred_check_branch
      %283 = sbr.rel (0) target = $region105
    $region104: #{tpu_custom_call.1} parent=1 // pred_region
      _
    $region105: #{tpu_custom_call.1} parent=1 // pred_fallthru
      _
    // Predicated region
    $region106: #{tpu_custom_call.1} parent=1 // pred_check
      _
    $region107: #{tpu_custom_call.1} parent=1 // pred_check_branch
      %285 = sbr.rel (0) target = $region109
    $region108: #{tpu_custom_call.1} parent=1 // pred_region
      _
    $region109: #{tpu_custom_call.1} parent=1 // pred_fallthru
      _
    // Predicated region
    $region110: #{tpu_custom_call.1} parent=1 // pred_check
      _
    $region111: #{tpu_custom_call.1} parent=1 // pred_check_branch
      %287 = sbr.rel (0) target = $region113
    $region112: #{tpu_custom_call.1} parent=1 // pred_region
      _
    $region113: #{tpu_custom_call.1} parent=1 // pred_fallthru
      _
    // Predicated region
    $region114: #{tpu_custom_call.1} parent=1 // pred_check
      _
    $region115: #{tpu_custom_call.1} parent=1 // pred_check_branch
      %289 = sbr.rel (0) target = $region117
    $region116: #{tpu_custom_call.1} parent=1 // pred_region
      %290 = dma.done [#allocation8], 16
    $region117: #{tpu_custom_call.1} parent=1 // pred_fallthru
      _
    // Predicated region
    $region118: #{tpu_custom_call.1} parent=1 // pred_check
      _
    $region119: #{tpu_custom_call.1} parent=1 // pred_check_branch
      %292 = sbr.rel (0) target = $region121
    $region120: #{tpu_custom_call.1} parent=1 // pred_region
      %293 = dma.done [#allocation7], 256
    $region121: #{tpu_custom_call.1} parent=1 // pred_fallthru
      _
    // Predicated region
    $region122: #{tpu_custom_call.1} parent=1 // pred_check
      _
    $region123: #{tpu_custom_call.1} parent=1 // pred_check_branch
      %295 = sbr.rel (0) target = $region125
    $region124: #{tpu_custom_call.1} parent=1 // pred_region
      %296 = dma.done [#allocation11], 256
    $region125: #{tpu_custom_call.1} parent=1 // pred_fallthru
      _
    // Predicated region
    $region126: #{tpu_custom_call.1} parent=1 // pred_check
      _
    $region127: #{tpu_custom_call.1} parent=1 // pred_check_branch
      %298 = sbr.rel (0) target = $region129
    $region128: #{tpu_custom_call.1} parent=1 // pred_region
      %299 = dma.done [#allocation11], 4096
    $region129: #{tpu_custom_call.1} parent=1 // pred_fallthru
      _
    // Predicated region
    $region130: #{tpu_custom_call.1} parent=1 // pred_check
      _
    $region131: #{tpu_custom_call.1} parent=1 // pred_check_branch
      %301 = sbr.rel (0) target = $region133
    $region132: #{tpu_custom_call.1} parent=1 // pred_region
      %302 = dma.done [#allocation14], 64
    $region133: #{tpu_custom_call.1} parent=1 // pred_fallthru
      _
    // Predicated region
    $region134: #{tpu_custom_call.1} parent=1 // pred_check
      _
    $region135: #{tpu_custom_call.1} parent=1 // pred_check_branch
      %304 = sbr.rel (0) target = $region137
    $region136: #{tpu_custom_call.1} parent=1 // pred_region
      %305 = dma.done [#allocation14], 4096
    $region137: #{tpu_custom_call.1} parent=1 // pred_fallthru
      _
    // Predicated region
    $region138: #{tpu_custom_call.1} parent=1 // pred_check
      _
    $region139: #{tpu_custom_call.1} parent=1 // pred_check_branch
      %307 = sbr.rel (0) target = $region141
    $region140: #{tpu_custom_call.1} parent=1 // pred_region
      %308 = dma.done [#allocation17], 16
    $region141: #{tpu_custom_call.1} parent=1 // pred_fallthru
      _
    // Predicated region
    $region142: #{tpu_custom_call.1} parent=1 // pred_check
      _
    $region143: #{tpu_custom_call.1} parent=1 // pred_check_branch
      %310 = sbr.rel (0) target = $region145
    $region144: #{tpu_custom_call.1} parent=1 // pred_region
      %311 = dma.done [#allocation17], 16
    $region145: #{tpu_custom_call.1} parent=1 // pred_fallthru
      _
    // Predicated region
    $region146: #{tpu_custom_call.1} parent=1 // pred_check
      _
    $region147: #{tpu_custom_call.1} parent=1 // pred_check_branch
      %313 = sbr.rel (0) target = $region149
    $region148: #{tpu_custom_call.1} parent=1 // pred_region
      %314 = dma.done [#allocation20], 1280
    $region149: #{tpu_custom_call.1} parent=1 // pred_fallthru
      _
    // Predicated region
    $region150: #{tpu_custom_call.1} parent=1 // pred_check
      _
    $region151: #{tpu_custom_call.1} parent=1 // pred_check_branch
      %316 = sbr.rel (0) target = $region153
    $region152: #{tpu_custom_call.1} parent=1 // pred_region
      %317 = dma.done [#allocation20], 640
    $region153: #{tpu_custom_call.1} parent=1 // pred_fallthru
      _
    // Predicated region
    $region154: #{tpu_custom_call.1} parent=1 // pred_check
      _
    $region155: #{tpu_custom_call.1} parent=1 // pred_check_branch
      %319 = sbr.rel (0) target = $region157
    $region156: #{tpu_custom_call.1} parent=1 // pred_region
      %320 = dma.done [#allocation23], 160
    $region157: #{tpu_custom_call.1} parent=1 // pred_fallthru
      _
    // Predicated region
    $region158: #{tpu_custom_call.1} parent=1 // pred_check
      _
    $region159: #{tpu_custom_call.1} parent=1 // pred_check_branch
      %322 = sbr.rel (0) target = $region161
    $region160: #{tpu_custom_call.1} parent=1 // pred_region
      %323 = dma.done [#allocation23], 128
    $region161: #{tpu_custom_call.1} parent=1 // pred_fallthru
      _
    // Predicated region
    $region162: #{tpu_custom_call.1} parent=1 // pred_check
      _
    $region163: #{tpu_custom_call.1} parent=1 // pred_check_branch
      %325 = sbr.rel (0) target = $region165
    $region164: #{tpu_custom_call.1} parent=1 // pred_region
      %326 = dma.done [#allocation26], 128
    $region165: #{tpu_custom_call.1} parent=1 // pred_fallthru
      _
    // Predicated region
    $region166: #{tpu_custom_call.1} parent=1 // pred_check
      _
    $region167: #{tpu_custom_call.1} parent=1 // pred_check_branch
      %328 = sbr.rel (0) target = $region169
    $region168: #{tpu_custom_call.1} parent=1 // pred_region
      %329 = dma.done [#allocation26], 64
    $region169: #{tpu_custom_call.1} parent=1 // pred_fallthru
      _
    // Predicated region
    $region170: #{tpu_custom_call.1} parent=1 // pred_check
      _
    $region171: #{tpu_custom_call.1} parent=1 // pred_check_branch
      %331 = sbr.rel (0) target = $region173
    $region172: #{tpu_custom_call.1} parent=1 // pred_region
      %332 = dma.done [#allocation29], 64
    $region173: #{tpu_custom_call.1} parent=1 // pred_fallthru
      _
    // Predicated region
    $region174: #{tpu_custom_call.1} parent=1 // pred_check
      _
    $region175: #{tpu_custom_call.1} parent=1 // pred_check_branch
      %334 = sbr.rel (0) target = $region177
    $region176: #{tpu_custom_call.1} parent=1 // pred_region
      %335 = dma.done [#allocation29], 32
    $region177: #{tpu_custom_call.1} parent=1 // pred_fallthru
      _
    // Predicated region
    $region178: #{tpu_custom_call.1} parent=1 // pred_check
      _
    $region179: #{tpu_custom_call.1} parent=1 // pred_check_branch
      %337 = sbr.rel (0) target = $region181
    $region180: #{tpu_custom_call.1} parent=1 // pred_region
      %338 = dma.done [#allocation32], 32
    $region181: #{tpu_custom_call.1} parent=1 // pred_fallthru
      _
    // Predicated region
    $region182: #{tpu_custom_call.1} parent=1 // pred_check
      _
    $region183: #{tpu_custom_call.1} parent=1 // pred_check_branch
      %340 = sbr.rel (0) target = $region185
    $region184: #{tpu_custom_call.1} parent=1 // pred_region
      %341 = dma.done [#allocation32], 2048
    $region185: #{tpu_custom_call.1} parent=1 // pred_fallthru
      _
    %342 = sfence
    // Predicated region
    $region186: #{tpu_custom_call.1} parent=1 // pred_check
      _
    $region187: #{tpu_custom_call.1} parent=1 // pred_check_branch
      %345 = sbr.rel target = $region189
    $region188: #{tpu_custom_call.1} parent=1 // pred_region
      %346 = sst [smem:[#allocation36]] [#allocation35]
      %347 = sst [smem:[#allocation37]] [#allocation34]
    $region189: #{tpu_custom_call.1} parent=1 // pred_fallthru
      _
    %349 = shalt.err (0)
    %s351 = sshll.u32 [#allocation2], 4
    %s352 = int_to_ptr.vmem [resolvable:$true] %s351
    %354 = dma.hbm_to_vmem [thread:$0]  %s27, 20480, %s352, [#allocation5]
    %s355 = scalar_lea.sflag [#allocation5], 1
    // Predicated region
    $region190: #{tpu_custom_call.1} parent=1 // pred_check
      _
    $region191: #{tpu_custom_call.1} parent=1 // pred_check_branch
      %357 = sbr.rel target = $region193
    $region192: #{tpu_custom_call.1} parent=1 // pred_region
      %358 = sst [smem:[#allocation36]] [#allocation39]
      %359 = sst [smem:[#allocation37]] [#allocation38]
    $region193: #{tpu_custom_call.1} parent=1 // pred_fallthru
      _
    %361 = shalt.err (0)
    %s363 = sshll.u32 [#allocation3], 4
    %s364 = int_to_ptr.vmem [resolvable:$true] %s363
    %366 = dma.hbm_to_vmem [thread:$0]  %s29, 20480, %s364, %s355
    %s367 = scalar_lea.sflag [#allocation5], 2
    // Predicated region
    $region194: #{tpu_custom_call.1} parent=1 // pred_check
      _
    $region195: #{tpu_custom_call.1} parent=1 // pred_check_branch
      %369 = sbr.rel target = $region197
    $region196: #{tpu_custom_call.1} parent=1 // pred_region
      %370 = sst [smem:[#allocation36]] [#allocation41]
      %371 = sst [smem:[#allocation37]] [#allocation40]
    $region197: #{tpu_custom_call.1} parent=1 // pred_fallthru
      _
    %373 = shalt.err (0)
    %s375 = sshll.u32 [#allocation4], 4
    %s376 = int_to_ptr.vmem [resolvable:$true] %s375
    %378 = dma.hbm_to_vmem [thread:$0]  %s35, 16384, %s376, %s367
    %s379 = sld [smem:[#allocation6]]
    %s380 = sld [smem:[#allocation6 + $0x1]]
    %s381 = sld [smem:[#allocation6 + $0x2]]
    %s382 = sld [smem:[#allocation6 + $0x3]]
    %s383 = sld [smem:[#allocation6 + $0x4]]
    %s384 = sld [smem:[#allocation6 + $0x5]]
    %s385 = sld [smem:[#allocation6 + $0x6]]
    %s386 = sld [smem:[#allocation6 + $0x7]]
    %s387 = sld [smem:[#allocation6 + $0x8]]
    %v388 = vld [vmem:[#allocation9] sm:$0xff]
    %v389 = vld [vmem:[#allocation9 + $0x8] sm:$0xff]
    %v390 = vld [vmem:[#allocation12] sm:$0xff]
    %v391 = vld [vmem:[#allocation12 + $0x8] sm:$0xff]
    %v392 = vld [vmem:[#allocation12 + $0x10] sm:$0xff]
    %v393 = vld [vmem:[#allocation12 + $0x18] sm:$0xff]
    %v394 = vld [vmem:[#allocation12 + $0x20] sm:$0xff]
    %v395 = vld [vmem:[#allocation12 + $0x28] sm:$0xff]
    %v396 = vld [vmem:[#allocation12 + $0x30] sm:$0xff]
    %v397 = vld [vmem:[#allocation12 + $0x38] sm:$0xff]
    %v398 = vld [vmem:[#allocation12 + $0x40] sm:$0xff]
    %v399 = vld [vmem:[#allocation12 + $0x48] sm:$0xff]
    %v400 = vld [vmem:[#allocation12 + $0x50] sm:$0xff]
    %v401 = vld [vmem:[#allocation12 + $0x58] sm:$0xff]
    %v402 = vld [vmem:[#allocation12 + $0x60] sm:$0xff]
    %v403 = vld [vmem:[#allocation12 + $0x68] sm:$0xff]
    %v404 = vld [vmem:[#allocation12 + $0x70] sm:$0xff]
    %v405 = vld [vmem:[#allocation12 + $0x78] sm:$0xff]
    %v406 = vld [vmem:[#allocation12 + $0x80] sm:$0xff]
    %v407 = vld [vmem:[#allocation12 + $0x88] sm:$0xff]
    %v408 = vld [vmem:[#allocation12 + $0x90] sm:$0xff]
    %v409 = vld [vmem:[#allocation12 + $0x98] sm:$0xff]
    %v410 = vld [vmem:[#allocation12 + $0xa0] sm:$0xff]
    %v411 = vld [vmem:[#allocation12 + $0xa8] sm:$0xff]
    %v412 = vld [vmem:[#allocation12 + $0xb0] sm:$0xff]
    %v413 = vld [vmem:[#allocation12 + $0xb8] sm:$0xff]
    %v414 = vld [vmem:[#allocation12 + $0xc0] sm:$0xff]
    %v415 = vld [vmem:[#allocation12 + $0xc8] sm:$0xff]
    %v416 = vld [vmem:[#allocation12 + $0xd0] sm:$0xff]
    %v417 = vld [vmem:[#allocation12 + $0xd8] sm:$0xff]
    %v418 = vld [vmem:[#allocation12 + $0xe0] sm:$0xff]
    %v419 = vld [vmem:[#allocation12 + $0xe8] sm:$0xff]
    %v420 = vld [vmem:[#allocation12 + $0xf0] sm:$0xff]
    %v421 = vld [vmem:[#allocation12 + $0xf8] sm:$0xff]
    %v422 = vpack.c.bf16 %v389, %v388
    %v423 = vld [vmem:[#allocation13] sm:$0xf]
    %v425 = vlaneseq
    %v426 = vshrl.u32 %v425, 7
    %v427 = vsub.s32 0, %v426
    %v428 = vrot.slane %v423, %v427
    %v429 = vlaneseq
    %v430 = vshrl.u32 %v429, 7
    %v431 = vsub.s32 1, %v430
    %v432 = vrot.slane %v423, %v431
    %v433 = vlaneseq
    %v434 = vshrl.u32 %v433, 7
    %v435 = vsub.s32 2, %v434
    %v436 = vrot.slane %v423, %v435
    %v437 = vlaneseq
    %v438 = vshrl.u32 %v437, 7
    %v439 = vsub.s32 3, %v438
    %v440 = vrot.slane %v423, %v439
    %v477 = vunpack.c.l.b16 %v390
    %v478 = vunpack.c.h.b16 %v390
    %v479 = vunpack.c.l.b16 %v391
    %v480 = vunpack.c.h.b16 %v391
    %v481 = vunpack.c.l.b16 %v392
    %v482 = vunpack.c.h.b16 %v392
    %v483 = vunpack.c.l.b16 %v393
    %v484 = vunpack.c.h.b16 %v393
    %v485 = vunpack.c.l.b16 %v394
    %v486 = vunpack.c.h.b16 %v394
    %v487 = vunpack.c.l.b16 %v395
    %v488 = vunpack.c.h.b16 %v395
    %v489 = vunpack.c.l.b16 %v396
    %v490 = vunpack.c.h.b16 %v396
    %v491 = vunpack.c.l.b16 %v397
    %v492 = vunpack.c.h.b16 %v397
    %v493 = vunpack.c.l.b16 %v398
    %v494 = vunpack.c.h.b16 %v398
    %v495 = vunpack.c.l.b16 %v399
    %v496 = vunpack.c.h.b16 %v399
    %v497 = vunpack.c.l.b16 %v400
    %v498 = vunpack.c.h.b16 %v400
    %v499 = vunpack.c.l.b16 %v401
    %v500 = vunpack.c.h.b16 %v401
    %v501 = vunpack.c.l.b16 %v402
    %v502 = vunpack.c.h.b16 %v402
    %v503 = vunpack.c.l.b16 %v403
    %v504 = vunpack.c.h.b16 %v403
    %v505 = vunpack.c.l.b16 %v404
    %v506 = vunpack.c.h.b16 %v404
    %v507 = vunpack.c.l.b16 %v405
    %v508 = vunpack.c.h.b16 %v405
    %v509 = vunpack.c.l.b16 %v406
    %v510 = vunpack.c.h.b16 %v406
    %v511 = vunpack.c.l.b16 %v407
    %v512 = vunpack.c.h.b16 %v407
    %v513 = vunpack.c.l.b16 %v408
    %v514 = vunpack.c.h.b16 %v408
    %v515 = vunpack.c.l.b16 %v409
    %v516 = vunpack.c.h.b16 %v409
    %v517 = vunpack.c.l.b16 %v410
    %v518 = vunpack.c.h.b16 %v410
    %v519 = vunpack.c.l.b16 %v411
    %v520 = vunpack.c.h.b16 %v411
    %v521 = vunpack.c.l.b16 %v412
    %v522 = vunpack.c.h.b16 %v412
    %v523 = vunpack.c.l.b16 %v413
    %v524 = vunpack.c.h.b16 %v413
    %v525 = vunpack.c.l.b16 %v414
    %v526 = vunpack.c.h.b16 %v414
    %v527 = vunpack.c.l.b16 %v415
    %v528 = vunpack.c.h.b16 %v415
    %v529 = vunpack.c.l.b16 %v416
    %v530 = vunpack.c.h.b16 %v416
    %v531 = vunpack.c.l.b16 %v417
    %v532 = vunpack.c.h.b16 %v417
    %v533 = vunpack.c.l.b16 %v418
    %v534 = vunpack.c.h.b16 %v418
    %v535 = vunpack.c.l.b16 %v419
    %v536 = vunpack.c.h.b16 %v419
    %v537 = vunpack.c.l.b16 %v420
    %v538 = vunpack.c.h.b16 %v420
    %v539 = vunpack.c.l.b16 %v421
    %v540 = vunpack.c.h.b16 %v421
    %v541 = vpack.c.b16 %v481, %v477
    %v542 = vpack.c.b16 %v482, %v478
    %v543 = vpack.c.b16 %v483, %v479
    %v544 = vpack.c.b16 %v484, %v480
    %v545 = vpack.c.b16 %v489, %v485
    %v546 = vpack.c.b16 %v490, %v486
    %v547 = vpack.c.b16 %v491, %v487
    %v548 = vpack.c.b16 %v492, %v488
    %v549 = vpack.c.b16 %v497, %v493
    %v550 = vpack.c.b16 %v498, %v494
    %v551 = vpack.c.b16 %v499, %v495
    %v552 = vpack.c.b16 %v500, %v496
    %v553 = vpack.c.b16 %v505, %v501
    %v554 = vpack.c.b16 %v506, %v502
    %v555 = vpack.c.b16 %v507, %v503
    %v556 = vpack.c.b16 %v508, %v504
    %v557 = vpack.c.b16 %v513, %v509
    %v558 = vpack.c.b16 %v514, %v510
    %v559 = vpack.c.b16 %v515, %v511
    %v560 = vpack.c.b16 %v516, %v512
    %v561 = vpack.c.b16 %v521, %v517
    %v562 = vpack.c.b16 %v522, %v518
    %v563 = vpack.c.b16 %v523, %v519
    %v564 = vpack.c.b16 %v524, %v520
    %v565 = vpack.c.b16 %v529, %v525
    %v566 = vpack.c.b16 %v530, %v526
    %v567 = vpack.c.b16 %v531, %v527
    %v568 = vpack.c.b16 %v532, %v528
    %v569 = vpack.c.b16 %v537, %v533
    %v570 = vpack.c.b16 %v538, %v534
    %v571 = vpack.c.b16 %v539, %v535
    %v572 = vpack.c.b16 %v540, %v536
    %605 = vmatprep.subr.bf16.mxu0 %v570
    %606 = vmatpush1.bf16.msra.mxu0 %v569
    %607 = vmatprep.subr.bf16.mxu0 %v566
    %608 = vmatpush1.bf16.msra.mxu0 %v565
    %609 = vmatprep.subr.bf16.mxu0 %v562
    %610 = vmatpush1.bf16.msra.mxu0 %v561
    %611 = vmatprep.subr.bf16.mxu0 %v558
    %612 = vmatpush1.bf16.msra.mxu0 %v557
    %613 = vmatprep.subr.bf16.mxu0 %v554
    %614 = vmatpush1.bf16.msra.mxu0 %v553
    %615 = vmatprep.subr.bf16.mxu0 %v550
    %616 = vmatpush1.bf16.msra.mxu0 %v549
    %617 = vmatprep.subr.bf16.mxu0 %v546
    %618 = vmatpush1.bf16.msra.mxu0 %v545
    %619 = vmatprep.subr.bf16.mxu0 %v542
    %620 = vmatpush1.bf16.msra.mxu0 %v541
    %621 = vmatprep.subr.bf16.mxu0 0
    %622 = vmatpush2.bf16.msra.mxu0 0
    %623 = vmatprep.subr.bf16.mxu0 0
    %624 = vmatpush2.bf16.msra.mxu0 0
    %625 = vmatprep.subr.bf16.mxu0 0
    %626 = vmatpush2.bf16.msra.mxu0 0
    %627 = vmatprep.subr.bf16.mxu0 0
    %628 = vmatpush2.bf16.msra.mxu0 0
    %629 = vmatprep.subr.bf16.mxu0 0
    %630 = vmatpush2.bf16.msra.mxu0 0
    %631 = vmatprep.subr.bf16.mxu0 0
    %632 = vmatpush2.bf16.msra.mxu0 0
    %633 = vmatprep.subr.bf16.mxu0 0
    %634 = vmatpush2.bf16.msra.mxu0 0
    %635 = vmatprep.subr.bf16.mxu0 0
    %636 = vmatpush2.bf16.msra.mxu0 0
    %637 = vmatprep.mubr.bf16.mxu0 0
    %638 = vmatmul.mubr.bf16.gmra.mxu0 %v422
    %v639 = vpop.f32.mrf.mxu0
    %v640 = vadd.f32 %v428, %v639
    %v641 = vpop.f32.mrf.mxu0
    %v642 = vadd.f32 %v432, %v641
    %v643 = vpop.f32.mrf.mxu0
    %v644 = vadd.f32 %v428, %v643
    %v645 = vpop.f32.mrf.mxu0
    %v646 = vadd.f32 %v432, %v645
    %647 = vdwg.mxu0
    %648 = vmatprep.subr.bf16.mxu0 %v572
    %649 = vmatpush1.bf16.msra.mxu0 %v571
    %650 = vmatprep.subr.bf16.mxu0 %v568
    %651 = vmatpush1.bf16.msra.mxu0 %v567
    %652 = vmatprep.subr.bf16.mxu0 %v564
    %653 = vmatpush1.bf16.msra.mxu0 %v563
    %654 = vmatprep.subr.bf16.mxu0 %v560
    %655 = vmatpush1.bf16.msra.mxu0 %v559
    %656 = vmatprep.subr.bf16.mxu0 %v556
    %657 = vmatpush1.bf16.msra.mxu0 %v555
    %658 = vmatprep.subr.bf16.mxu0 %v552
    %659 = vmatpush1.bf16.msra.mxu0 %v551
    %660 = vmatprep.subr.bf16.mxu0 %v548
    %661 = vmatpush1.bf16.msra.mxu0 %v547
    %662 = vmatprep.subr.bf16.mxu0 %v544
    %663 = vmatpush1.bf16.msra.mxu0 %v543
    %664 = vmatprep.subr.bf16.mxu0 0
    %665 = vmatpush2.bf16.msra.mxu0 0
    %666 = vmatprep.subr.bf16.mxu0 0
    %667 = vmatpush2.bf16.msra.mxu0 0
    %668 = vmatprep.subr.bf16.mxu0 0
    %669 = vmatpush2.bf16.msra.mxu0 0
    %670 = vmatprep.subr.bf16.mxu0 0
    %671 = vmatpush2.bf16.msra.mxu0 0
    %672 = vmatprep.subr.bf16.mxu0 0
    %673 = vmatpush2.bf16.msra.mxu0 0
    %674 = vmatprep.subr.bf16.mxu0 0
    %675 = vmatpush2.bf16.msra.mxu0 0
    %676 = vmatprep.subr.bf16.mxu0 0
    %677 = vmatpush2.bf16.msra.mxu0 0
    %678 = vmatprep.subr.bf16.mxu0 0
    %679 = vmatpush2.bf16.msra.mxu0 0
    %680 = vmatprep.mubr.bf16.mxu0 0
    %681 = vmatmul.mubr.bf16.gmra.mxu0 %v422
    %v682 = vpop.f32.mrf.mxu0
    %v683 = vadd.f32 %v436, %v682
    %v684 = vpop.f32.mrf.mxu0
    %v685 = vadd.f32 %v440, %v684
    %v686 = vpop.f32.mrf.mxu0
    %v687 = vadd.f32 %v436, %v686
    %v688 = vpop.f32.mrf.mxu0
    %v689 = vadd.f32 %v440, %v688
    %690 = vdwg.mxu0
    %vm691 = vcmp.gt.f32.partialorder %v640, 0.0
    %vm692 = vcmp.gt.f32.partialorder %v642, 0.0
    %vm693 = vcmp.gt.f32.partialorder %v683, 0.0
    %vm694 = vcmp.gt.f32.partialorder %v685, 0.0
    %vm695 = vcmp.gt.f32.partialorder %v644, 0.0
    %vm696 = vcmp.gt.f32.partialorder %v646, 0.0
    %vm697 = vcmp.gt.f32.partialorder %v687, 0.0
    %vm698 = vcmp.gt.f32.partialorder %v689, 0.0
    %v699 = vstv %s379
    %v700 = vmul.f32 %v699, %v640
    %v701 = vmul.f32 %v699, %v642
    %v702 = vmul.f32 %v699, %v683
    %v703 = vmul.f32 %v699, %v685
    %v704 = vmul.f32 %v699, %v644
    %v705 = vmul.f32 %v699, %v646
    %v706 = vmul.f32 %v699, %v687
    %v707 = vmul.f32 %v699, %v689
    %v708 = vsel %vm691, %v640, %v700
    %v709 = vsel %vm692, %v642, %v701
    %v710 = vsel %vm693, %v683, %v702
    %v711 = vsel %vm694, %v685, %v703
    %v712 = vsel %vm695, %v644, %v704
    %v713 = vsel %vm696, %v646, %v705
    %v714 = vsel %vm697, %v687, %v706
    %v715 = vsel %vm698, %v689, %v707
    %v716 = vld [vmem:[#allocation15] sm:$0xf]
    %v717 = vld [vmem:[#allocation15 + $0x4] sm:$0xf]
    %v718 = vld [vmem:[#allocation15 + $0x8] sm:$0xf]
    %v719 = vld [vmem:[#allocation15 + $0xc] sm:$0xf]
    %v720 = vld [vmem:[#allocation15 + $0x10] sm:$0xf]
    %v721 = vld [vmem:[#allocation15 + $0x14] sm:$0xf]
    %v722 = vld [vmem:[#allocation15 + $0x18] sm:$0xf]
    %v723 = vld [vmem:[#allocation15 + $0x1c] sm:$0xf]
    %v724 = vld [vmem:[#allocation15 + $0x20] sm:$0xf]
    %v725 = vld [vmem:[#allocation15 + $0x24] sm:$0xf]
    %v726 = vld [vmem:[#allocation15 + $0x28] sm:$0xf]
    %v727 = vld [vmem:[#allocation15 + $0x2c] sm:$0xf]
    %v728 = vld [vmem:[#allocation15 + $0x30] sm:$0xf]
    %v729 = vld [vmem:[#allocation15 + $0x34] sm:$0xf]
    %v730 = vld [vmem:[#allocation15 + $0x38] sm:$0xf]
    %v731 = vld [vmem:[#allocation15 + $0x3c] sm:$0xf]
    %v732 = vld [vmem:[#allocation15 + $0x40] sm:$0xf]
    %v733 = vld [vmem:[#allocation15 + $0x44] sm:$0xf]
    %v734 = vld [vmem:[#allocation15 + $0x48] sm:$0xf]
    %v735 = vld [vmem:[#allocation15 + $0x4c] sm:$0xf]
    %v736 = vld [vmem:[#allocation15 + $0x50] sm:$0xf]
    %v737 = vld [vmem:[#allocation15 + $0x54] sm:$0xf]
    %v738 = vld [vmem:[#allocation15 + $0x58] sm:$0xf]
    %v739 = vld [vmem:[#allocation15 + $0x5c] sm:$0xf]
    %v740 = vld [vmem:[#allocation15 + $0x60] sm:$0xf]
    %v741 = vld [vmem:[#allocation15 + $0x64] sm:$0xf]
    %v742 = vld [vmem:[#allocation15 + $0x68] sm:$0xf]
    %v743 = vld [vmem:[#allocation15 + $0x6c] sm:$0xf]
    %v744 = vld [vmem:[#allocation15 + $0x70] sm:$0xf]
    %v745 = vld [vmem:[#allocation15 + $0x74] sm:$0xf]
    %v746 = vld [vmem:[#allocation15 + $0x78] sm:$0xf]
    %v747 = vld [vmem:[#allocation15 + $0x7c] sm:$0xf]
    %v748 = vld [vmem:[#allocation15 + $0x80] sm:$0xf]
    %v749 = vld [vmem:[#allocation15 + $0x84] sm:$0xf]
    %v750 = vld [vmem:[#allocation15 + $0x88] sm:$0xf]
    %v751 = vld [vmem:[#allocation15 + $0x8c] sm:$0xf]
    %v752 = vld [vmem:[#allocation15 + $0x90] sm:$0xf]
    %v753 = vld [vmem:[#allocation15 + $0x94] sm:$0xf]
    %v754 = vld [vmem:[#allocation15 + $0x98] sm:$0xf]
    %v755 = vld [vmem:[#allocation15 + $0x9c] sm:$0xf]
    %v756 = vld [vmem:[#allocation15 + $0xa0] sm:$0xf]
    %v757 = vld [vmem:[#allocation15 + $0xa4] sm:$0xf]
    %v758 = vld [vmem:[#allocation15 + $0xa8] sm:$0xf]
    %v759 = vld [vmem:[#allocation15 + $0xac] sm:$0xf]
    %v760 = vld [vmem:[#allocation15 + $0xb0] sm:$0xf]
    %v761 = vld [vmem:[#allocation15 + $0xb4] sm:$0xf]
    %v762 = vld [vmem:[#allocation15 + $0xb8] sm:$0xf]
    %v763 = vld [vmem:[#allocation15 + $0xbc] sm:$0xf]
    %v764 = vld [vmem:[#allocation15 + $0xc0] sm:$0xf]
    %v765 = vld [vmem:[#allocation15 + $0xc4] sm:$0xf]
    %v766 = vld [vmem:[#allocation15 + $0xc8] sm:$0xf]
    %v767 = vld [vmem:[#allocation15 + $0xcc] sm:$0xf]
    %v768 = vld [vmem:[#allocation15 + $0xd0] sm:$0xf]
    %v769 = vld [vmem:[#allocation15 + $0xd4] sm:$0xf]
    %v770 = vld [vmem:[#allocation15 + $0xd8] sm:$0xf]
    %v771 = vld [vmem:[#allocation15 + $0xdc] sm:$0xf]
    %v772 = vld [vmem:[#allocation15 + $0xe0] sm:$0xf]
    %v773 = vld [vmem:[#allocation15 + $0xe4] sm:$0xf]
    %v774 = vld [vmem:[#allocation15 + $0xe8] sm:$0xf]
    %v775 = vld [vmem:[#allocation15 + $0xec] sm:$0xf]
    %v776 = vld [vmem:[#allocation15 + $0xf0] sm:$0xf]
    %v777 = vld [vmem:[#allocation15 + $0xf4] sm:$0xf]
    %v778 = vld [vmem:[#allocation15 + $0xf8] sm:$0xf]
    %v779 = vld [vmem:[#allocation15 + $0xfc] sm:$0xf]
    %v780 = vpack.c.bf16 %v712, %v708
    %v781 = vpack.c.bf16 %v713, %v709
    %v782 = vpack.c.bf16 %v714, %v710
    %v783 = vpack.c.bf16 %v715, %v711
    %v784 = vld [vmem:[#allocation16] sm:$0x1]
    %v786 = vlaneseq
    %v787 = vshrl.u32 %v786, 7
    %v788 = vsub.s32 0, %v787
    %v789 = vrot.slane %v784, %v788
    %v855 = vunpack.c.l.b16 %v716
    %v856 = vunpack.c.l.b16 %v717
    %v857 = vunpack.c.l.b16 %v718
    %v858 = vunpack.c.l.b16 %v719
    %v859 = vunpack.c.l.b16 %v720
    %v860 = vunpack.c.l.b16 %v721
    %v861 = vunpack.c.l.b16 %v722
    %v862 = vunpack.c.l.b16 %v723
    %v863 = vunpack.c.l.b16 %v724
    %v864 = vunpack.c.l.b16 %v725
    %v865 = vunpack.c.l.b16 %v726
    %v866 = vunpack.c.l.b16 %v727
    %v867 = vunpack.c.l.b16 %v728
    %v868 = vunpack.c.l.b16 %v729
    %v869 = vunpack.c.l.b16 %v730
    %v870 = vunpack.c.l.b16 %v731
    %v871 = vunpack.c.l.b16 %v732
    %v872 = vunpack.c.l.b16 %v733
    %v873 = vunpack.c.l.b16 %v734
    %v874 = vunpack.c.l.b16 %v735
    %v875 = vunpack.c.l.b16 %v736
    %v876 = vunpack.c.l.b16 %v737
    %v877 = vunpack.c.l.b16 %v738
    %v878 = vunpack.c.l.b16 %v739
    %v879 = vunpack.c.l.b16 %v740
    %v880 = vunpack.c.l.b16 %v741
    %v881 = vunpack.c.l.b16 %v742
    %v882 = vunpack.c.l.b16 %v743
    %v883 = vunpack.c.l.b16 %v744
    %v884 = vunpack.c.l.b16 %v745
    %v885 = vunpack.c.l.b16 %v746
    %v886 = vunpack.c.l.b16 %v747
    %v887 = vunpack.c.l.b16 %v748
    %v888 = vunpack.c.l.b16 %v749
    %v889 = vunpack.c.l.b16 %v750
    %v890 = vunpack.c.l.b16 %v751
    %v891 = vunpack.c.l.b16 %v752
    %v892 = vunpack.c.l.b16 %v753
    %v893 = vunpack.c.l.b16 %v754
    %v894 = vunpack.c.l.b16 %v755
    %v895 = vunpack.c.l.b16 %v756
    %v896 = vunpack.c.l.b16 %v757
    %v897 = vunpack.c.l.b16 %v758
    %v898 = vunpack.c.l.b16 %v759
    %v899 = vunpack.c.l.b16 %v760
    %v900 = vunpack.c.l.b16 %v761
    %v901 = vunpack.c.l.b16 %v762
    %v902 = vunpack.c.l.b16 %v763
    %v903 = vunpack.c.l.b16 %v764
    %v904 = vunpack.c.l.b16 %v765
    %v905 = vunpack.c.l.b16 %v766
    %v906 = vunpack.c.l.b16 %v767
    %v907 = vunpack.c.l.b16 %v768
    %v908 = vunpack.c.l.b16 %v769
    %v909 = vunpack.c.l.b16 %v770
    %v910 = vunpack.c.l.b16 %v771
    %v911 = vunpack.c.l.b16 %v772
    %v912 = vunpack.c.l.b16 %v773
    %v913 = vunpack.c.l.b16 %v774
    %v914 = vunpack.c.l.b16 %v775
    %v915 = vunpack.c.l.b16 %v776
    %v916 = vunpack.c.l.b16 %v777
    %v917 = vunpack.c.l.b16 %v778
    %v918 = vunpack.c.l.b16 %v779
    %v919 = vpack.c.b16 %v856, %v855
    %v920 = vpack.c.b16 %v858, %v857
    %v921 = vpack.c.b16 %v860, %v859
    %v922 = vpack.c.b16 %v862, %v861
    %v923 = vpack.c.b16 %v864, %v863
    %v924 = vpack.c.b16 %v866, %v865
    %v925 = vpack.c.b16 %v868, %v867
    %v926 = vpack.c.b16 %v870, %v869
    %v927 = vpack.c.b16 %v872, %v871
    %v928 = vpack.c.b16 %v874, %v873
    %v929 = vpack.c.b16 %v876, %v875
    %v930 = vpack.c.b16 %v878, %v877
    %v931 = vpack.c.b16 %v880, %v879
    %v932 = vpack.c.b16 %v882, %v881
    %v933 = vpack.c.b16 %v884, %v883
    %v934 = vpack.c.b16 %v886, %v885
    %v935 = vpack.c.b16 %v888, %v887
    %v936 = vpack.c.b16 %v890, %v889
    %v937 = vpack.c.b16 %v892, %v891
    %v938 = vpack.c.b16 %v894, %v893
    %v939 = vpack.c.b16 %v896, %v895
    %v940 = vpack.c.b16 %v898, %v897
    %v941 = vpack.c.b16 %v900, %v899
    %v942 = vpack.c.b16 %v902, %v901
    %v943 = vpack.c.b16 %v904, %v903
    %v944 = vpack.c.b16 %v906, %v905
    %v945 = vpack.c.b16 %v908, %v907
    %v946 = vpack.c.b16 %v910, %v909
    %v947 = vpack.c.b16 %v912, %v911
    %v948 = vpack.c.b16 %v914, %v913
    %v949 = vpack.c.b16 %v916, %v915
    %v950 = vpack.c.b16 %v918, %v917
    %983 = vmatprep.subr.bf16.mxu0 0
    %984 = vmatpush1.bf16.msra.mxu0 %v926
    %985 = vmatprep.subr.bf16.mxu0 0
    %986 = vmatpush1.bf16.msra.mxu0 %v925
    %987 = vmatprep.subr.bf16.mxu0 0
    %988 = vmatpush1.bf16.msra.mxu0 %v924
    %989 = vmatprep.subr.bf16.mxu0 0
    %990 = vmatpush1.bf16.msra.mxu0 %v923
    %991 = vmatprep.subr.bf16.mxu0 0
    %992 = vmatpush1.bf16.msra.mxu0 %v922
    %993 = vmatprep.subr.bf16.mxu0 0
    %994 = vmatpush1.bf16.msra.mxu0 %v921
    %995 = vmatprep.subr.bf16.mxu0 0
    %996 = vmatpush1.bf16.msra.mxu0 %v920
    %997 = vmatprep.subr.bf16.mxu0 0
    %998 = vmatpush1.bf16.msra.mxu0 %v919
    %999 = vmatprep.subr.bf16.mxu0 0
    %1000 = vmatpush2.bf16.msra.mxu0 %v934
    %1001 = vmatprep.subr.bf16.mxu0 0
    %1002 = vmatpush2.bf16.msra.mxu0 %v933
    %1003 = vmatprep.subr.bf16.mxu0 0
    %1004 = vmatpush2.bf16.msra.mxu0 %v932
    %1005 = vmatprep.subr.bf16.mxu0 0
    %1006 = vmatpush2.bf16.msra.mxu0 %v931
    %1007 = vmatprep.subr.bf16.mxu0 0
    %1008 = vmatpush2.bf16.msra.mxu0 %v930
    %1009 = vmatprep.subr.bf16.mxu0 0
    %1010 = vmatpush2.bf16.msra.mxu0 %v929
    %1011 = vmatprep.subr.bf16.mxu0 0
    %1012 = vmatpush2.bf16.msra.mxu0 %v928
    %1013 = vmatprep.subr.bf16.mxu0 0
    %1014 = vmatpush2.bf16.msra.mxu0 %v927
    %1015 = vmatprep.mubr.bf16.mxu0 %v781
    %1016 = vmatmul.mubr.bf16.gmra.mxu0 %v780
    %v1017 = vpop.f32.mrf.mxu0
    %v1018 = vadd.f32 %v789, %v1017
    %v1019 = vpop.f32.mrf.mxu0
    %v1020 = vpop.f32.mrf.mxu0
    %v1021 = vadd.f32 %v789, %v1020
    %v1022 = vpop.f32.mrf.mxu0
    %1023 = vdwg.mxu0
    %1024 = vmatprep.subr.bf16.mxu0 0
    %1025 = vmatpush1.bf16.msra.mxu0 %v942
    %1026 = vmatprep.subr.bf16.mxu0 0
    %1027 = vmatpush1.bf16.msra.mxu0 %v941
    %1028 = vmatprep.subr.bf16.mxu0 0
    %1029 = vmatpush1.bf16.msra.mxu0 %v940
    %1030 = vmatprep.subr.bf16.mxu0 0
    %1031 = vmatpush1.bf16.msra.mxu0 %v939
    %1032 = vmatprep.subr.bf16.mxu0 0
    %1033 = vmatpush1.bf16.msra.mxu0 %v938
    %1034 = vmatprep.subr.bf16.mxu0 0
    %1035 = vmatpush1.bf16.msra.mxu0 %v937
    %1036 = vmatprep.subr.bf16.mxu0 0
    %1037 = vmatpush1.bf16.msra.mxu0 %v936
    %1038 = vmatprep.subr.bf16.mxu0 0
    %1039 = vmatpush1.bf16.msra.mxu0 %v935
    %1040 = vmatprep.subr.bf16.mxu0 0
    %1041 = vmatpush2.bf16.msra.mxu0 %v950
    %1042 = vmatprep.subr.bf16.mxu0 0
    %1043 = vmatpush2.bf16.msra.mxu0 %v949
    %1044 = vmatprep.subr.bf16.mxu0 0
    %1045 = vmatpush2.bf16.msra.mxu0 %v948
    %1046 = vmatprep.subr.bf16.mxu0 0
    %1047 = vmatpush2.bf16.msra.mxu0 %v947
    %1048 = vmatprep.subr.bf16.mxu0 0
    %1049 = vmatpush2.bf16.msra.mxu0 %v946
    %1050 = vmatprep.subr.bf16.mxu0 0
    %1051 = vmatpush2.bf16.msra.mxu0 %v945
    %1052 = vmatprep.subr.bf16.mxu0 0
    %1053 = vmatpush2.bf16.msra.mxu0 %v944
    %1054 = vmatprep.subr.bf16.mxu0 0
    %1055 = vmatpush2.bf16.msra.mxu0 %v943
    %1056 = vmatprep.mubr.bf16.mxu0 %v783
    %1057 = vmatmul.mubr.bf16.gmra.mxu0 %v782
    %v1058 = vpop.f32.mrf.mxu0
    %v1059 = vadd.f32 %v1018, %v1058
    %v1060 = vpop.f32.mrf.mxu0
    %v1061 = vpop.f32.mrf.mxu0
    %v1062 = vadd.f32 %v1021, %v1061
    %v1063 = vpop.f32.mrf.mxu0
    %1064 = vdwg.mxu0
    %vm1065 = vcmp.gt.f32.partialorder %v1059, 0.0
    %vm1066 = vcmp.gt.f32.partialorder %v1062, 0.0
    %v1067 = vstv %s380
    %v1068 = vmul.f32 %v1067, %v1059
    %v1069 = vmul.f32 %v1067, %v1062
    %v1070 = vsel %vm1065, %v1059, %v1068
    %v1071 = vsel %vm1066, %v1062, %v1069
    %v1072 = vld [vmem:[%s15] sm:$0xf]
    %v1073 = vld [vmem:[%s15 + $0x4] sm:$0xf]
    %v1074 = vld [vmem:[%s15 + $0x8] sm:$0xf]
    %v1075 = vld [vmem:[%s15 + $0xc] sm:$0xf]
    %v1076 = vld [vmem:[%s15 + $0x10] sm:$0xf]
    %v1077 = vld [vmem:[%s15 + $0x14] sm:$0xf]
    %v1078 = vld [vmem:[%s15 + $0x18] sm:$0xf]
    %v1079 = vld [vmem:[%s15 + $0x1c] sm:$0xf]
    %v1080 = vld [vmem:[%s15 + $0x20] sm:$0xf]
    %v1081 = vld [vmem:[%s15 + $0x24] sm:$0xf]
    %v1082 = vld [vmem:[%s15 + $0x28] sm:$0xf]
    %v1083 = vld [vmem:[%s15 + $0x2c] sm:$0xf]
    %v1084 = vld [vmem:[%s15 + $0x30] sm:$0xf]
    %v1085 = vld [vmem:[%s15 + $0x34] sm:$0xf]
    %v1086 = vld [vmem:[%s15 + $0x38] sm:$0xf]
    %v1087 = vld [vmem:[%s15 + $0x3c] sm:$0xf]
    %v1088 = vpack.c.bf16 %v1071, %v1070
    %v1089 = vld [vmem:[#allocation18] sm:$0x1]
    %v1091 = vlaneseq
    %v1092 = vshrl.u32 %v1091, 7
    %v1093 = vsub.s32 0, %v1092
    %v1094 = vrot.slane %v1089, %v1093
    %v1112 = vunpack.c.l.b16 %v1072
    %v1113 = vunpack.c.l.b16 %v1073
    %v1114 = vunpack.c.l.b16 %v1074
    %v1115 = vunpack.c.l.b16 %v1075
    %v1116 = vunpack.c.l.b16 %v1076
    %v1117 = vunpack.c.l.b16 %v1077
    %v1118 = vunpack.c.l.b16 %v1078
    %v1119 = vunpack.c.l.b16 %v1079
    %v1120 = vunpack.c.l.b16 %v1080
    %v1121 = vunpack.c.l.b16 %v1081
    %v1122 = vunpack.c.l.b16 %v1082
    %v1123 = vunpack.c.l.b16 %v1083
    %v1124 = vunpack.c.l.b16 %v1084
    %v1125 = vunpack.c.l.b16 %v1085
    %v1126 = vunpack.c.l.b16 %v1086
    %v1127 = vunpack.c.l.b16 %v1087
    %v1128 = vpack.c.b16 %v1113, %v1112
    %v1129 = vpack.c.b16 %v1115, %v1114
    %v1130 = vpack.c.b16 %v1117, %v1116
    %v1131 = vpack.c.b16 %v1119, %v1118
    %v1132 = vpack.c.b16 %v1121, %v1120
    %v1133 = vpack.c.b16 %v1123, %v1122
    %v1134 = vpack.c.b16 %v1125, %v1124
    %v1135 = vpack.c.b16 %v1127, %v1126
    %1144 = vmatprep.subr.bf16.mxu0 0
    %1145 = vmatpush1.bf16.msra.mxu0 %v1135
    %1146 = vmatprep.subr.bf16.mxu0 0
    %1147 = vmatpush1.bf16.msra.mxu0 %v1134
    %1148 = vmatprep.subr.bf16.mxu0 0
    %1149 = vmatpush1.bf16.msra.mxu0 %v1133
    %1150 = vmatprep.subr.bf16.mxu0 0
    %1151 = vmatpush1.bf16.msra.mxu0 %v1132
    %1152 = vmatprep.subr.bf16.mxu0 0
    %1153 = vmatpush1.bf16.msra.mxu0 %v1131
    %1154 = vmatprep.subr.bf16.mxu0 0
    %1155 = vmatpush1.bf16.msra.mxu0 %v1130
    %1156 = vmatprep.subr.bf16.mxu0 0
    %1157 = vmatpush1.bf16.msra.mxu0 %v1129
    %1158 = vmatprep.subr.bf16.mxu0 0
    %1159 = vmatpush1.bf16.msra.mxu0 %v1128
    %1160 = vmatprep.subr.bf16.mxu0 0
    %1161 = vmatpush2.bf16.msra.mxu0 0
    %1162 = vmatprep.subr.bf16.mxu0 0
    %1163 = vmatpush2.bf16.msra.mxu0 0
    %1164 = vmatprep.subr.bf16.mxu0 0
    %1165 = vmatpush2.bf16.msra.mxu0 0
    %1166 = vmatprep.subr.bf16.mxu0 0
    %1167 = vmatpush2.bf16.msra.mxu0 0
    %1168 = vmatprep.subr.bf16.mxu0 0
    %1169 = vmatpush2.bf16.msra.mxu0 0
    %1170 = vmatprep.subr.bf16.mxu0 0
    %1171 = vmatpush2.bf16.msra.mxu0 0
    %1172 = vmatprep.subr.bf16.mxu0 0
    %1173 = vmatpush2.bf16.msra.mxu0 0
    %1174 = vmatprep.subr.bf16.mxu0 0
    %1175 = vmatpush2.bf16.msra.mxu0 0
    %1176 = vmatprep.mubr.bf16.mxu0 0
    %1177 = vmatmul.mubr.bf16.gmra.mxu0 %v1088
    %v1178 = vpop.f32.mrf.mxu0
    %v1179 = vadd.f32 %v1094, %v1178
    %v1180 = vpop.f32.mrf.mxu0
    %v1181 = vpop.f32.mrf.mxu0
    %v1182 = vadd.f32 %v1094, %v1181
    %v1183 = vpop.f32.mrf.mxu0
    %1184 = vdwg.mxu0
    %v1185 = vld [vmem:[#allocation10] sm:$0xff]
    %v1186 = vld [vmem:[#allocation10 + $0x8] sm:$0xff]
    %v1187 = vld [vmem:[#allocation19] sm:$0xff]
    %v1188 = vld [vmem:[#allocation19 + $0x8] sm:$0xff]
    %v1189 = vld [vmem:[#allocation19 + $0x10] sm:$0xff]
    %v1190 = vld [vmem:[#allocation19 + $0x18] sm:$0xff]
    %v1191 = vld [vmem:[#allocation19 + $0x20] sm:$0xff]
    %v1192 = vld [vmem:[#allocation19 + $0x28] sm:$0xff]
    %v1193 = vld [vmem:[#allocation19 + $0x30] sm:$0xff]
    %v1194 = vld [vmem:[#allocation19 + $0x38] sm:$0xff]
    %v1195 = vld [vmem:[#allocation19 + $0x40] sm:$0xff]
    %v1196 = vld [vmem:[#allocation19 + $0x48] sm:$0xff]
    %v1197 = vunpack.c.l.s8.bf16 %v1187
    %v1198 = vunpack.c.l.s8.bf16 %v1188
    %v1199 = vunpack.c.l.s8.bf16 %v1189
    %v1200 = vunpack.c.l.s8.bf16 %v1190
    %v1201 = vunpack.c.l.s8.bf16 %v1191
    %v1202 = vunpack.c.l.s8.bf16 %v1192
    %v1203 = vunpack.c.l.s8.bf16 %v1193
    %v1204 = vunpack.c.l.s8.bf16 %v1194
    %v1205 = vunpack.c.l.s8.bf16 %v1195
    %v1206 = vunpack.c.l.s8.bf16 %v1196
    %v1207 = vunpack.c.h.s8.bf16 %v1187
    %v1208 = vunpack.c.h.s8.bf16 %v1188
    %v1209 = vunpack.c.h.s8.bf16 %v1189
    %v1210 = vunpack.c.h.s8.bf16 %v1190
    %v1211 = vunpack.c.h.s8.bf16 %v1191
    %v1212 = vunpack.c.h.s8.bf16 %v1192
    %v1213 = vunpack.c.h.s8.bf16 %v1193
    %v1214 = vunpack.c.h.s8.bf16 %v1194
    %v1215 = vunpack.c.h.s8.bf16 %v1195
    %v1216 = vunpack.c.h.s8.bf16 %v1196
    %v1217 = vpack.c.bf16 %v1182, %v1179
    %v1218 = vld [vmem:[#allocation21] sm:$0xff]
    %v1219 = vld [vmem:[#allocation21 + $0x8] sm:$0xff]
    %v1220 = vld [vmem:[#allocation21 + $0x10] sm:$0xf]
    %v1221 = vld [vmem:[#allocation21 + $0x14] sm:$0xff]
    %v1222 = vld [vmem:[#allocation21 + $0x1c] sm:$0xff]
    %v1223 = vld [vmem:[#allocation21 + $0x24] sm:$0xf]
    %v1224 = vunpack.c.l.s8.bf16 %v1218
    %v1225 = vunpack.c.h.s8.bf16 %v1218
    %v1226 = vunpack.c.l.s8.bf16 %v1219
    %v1227 = vunpack.c.h.s8.bf16 %v1219
    %v1228 = vunpack.c.l.s8.bf16 %v1220
    %v1229 = vunpack.c.l.s8.bf16 %v1221
    %v1230 = vunpack.c.h.s8.bf16 %v1221
    %v1231 = vunpack.c.l.s8.bf16 %v1222
    %v1232 = vunpack.c.h.s8.bf16 %v1222
    %v1233 = vunpack.c.l.s8.bf16 %v1223
    %v1234 = vpack.c.bf16 %v1186, %v1185
    %v1245 = vunpack.c.l.b16 %v1224
    %v1246 = vunpack.c.h.b16 %v1224
    %v1247 = vunpack.c.l.b16 %v1225
    %v1248 = vunpack.c.h.b16 %v1225
    %v1249 = vunpack.c.l.b16 %v1226
    %v1250 = vunpack.c.h.b16 %v1226
    %v1251 = vunpack.c.l.b16 %v1227
    %v1252 = vunpack.c.h.b16 %v1227
    %v1253 = vunpack.c.l.b16 %v1228
    %v1254 = vunpack.c.h.b16 %v1228
    %v1255 = vunpack.c.l.b16 %v1229
    %v1256 = vunpack.c.h.b16 %v1229
    %v1257 = vunpack.c.l.b16 %v1230
    %v1258 = vunpack.c.h.b16 %v1230
    %v1259 = vunpack.c.l.b16 %v1231
    %v1260 = vunpack.c.h.b16 %v1231
    %v1261 = vunpack.c.l.b16 %v1232
    %v1262 = vunpack.c.h.b16 %v1232
    %v1263 = vunpack.c.l.b16 %v1233
    %v1264 = vunpack.c.h.b16 %v1233
    %v1265 = vpack.c.b16 %v1255, %v1245
    %v1266 = vpack.c.b16 %v1256, %v1246
    %v1267 = vpack.c.b16 %v1257, %v1247
    %v1268 = vpack.c.b16 %v1258, %v1248
    %v1269 = vpack.c.b16 %v1259, %v1249
    %v1270 = vpack.c.b16 %v1260, %v1250
    %v1271 = vpack.c.b16 %v1261, %v1251
    %v1272 = vpack.c.b16 %v1262, %v1252
    %v1273 = vpack.c.b16 %v1263, %v1253
    %v1274 = vpack.c.b16 %v1264, %v1254
    %vm1285 = vcmask 130048
    %v1287 = vsel %vm1285, %v1234, 0
    %1289 = vmatprep.subr.bf16.mxu0 0
    %1290 = vmatpush1.bf16.msra.mxu0 0
    %1291 = vmatprep.subr.bf16.mxu0 0
    %1292 = vmatpush1.bf16.msra.mxu0 0
    %1293 = vmatprep.subr.bf16.mxu0 0
    %1294 = vmatpush1.bf16.msra.mxu0 0
    %1295 = vmatprep.subr.bf16.mxu0 0
    %1296 = vmatpush1.bf16.msra.mxu0 0
    %1297 = vmatprep.subr.bf16.mxu0 0
    %1298 = vmatpush1.bf16.msra.mxu0 0
    %1299 = vmatprep.subr.bf16.mxu0 0
    %1300 = vmatpush1.bf16.msra.mxu0 0
    %1301 = vmatprep.subr.bf16.mxu0 0
    %1302 = vmatpush1.bf16.msra.mxu0 0
    %1303 = vmatprep.subr.bf16.mxu0 %v1266
    %1304 = vmatpush1.bf16.msra.mxu0 %v1265
    %1305 = vmatprep.subr.bf16.mxu0 0
    %1306 = vmatpush2.bf16.msra.mxu0 0
    %1307 = vmatprep.subr.bf16.mxu0 0
    %1308 = vmatpush2.bf16.msra.mxu0 0
    %1309 = vmatprep.subr.bf16.mxu0 0
    %1310 = vmatpush2.bf16.msra.mxu0 0
    %1311 = vmatprep.subr.bf16.mxu0 0
    %1312 = vmatpush2.bf16.msra.mxu0 0
    %1313 = vmatprep.subr.bf16.mxu0 0
    %1314 = vmatpush2.bf16.msra.mxu0 0
    %1315 = vmatprep.subr.bf16.mxu0 0
    %1316 = vmatpush2.bf16.msra.mxu0 0
    %1317 = vmatprep.subr.bf16.mxu0 0
    %1318 = vmatpush2.bf16.msra.mxu0 0
    %1319 = vmatprep.subr.bf16.mxu0 0
    %1320 = vmatpush2.bf16.msra.mxu0 0
    %1321 = vmatprep.mubr.bf16.mxu0 0
    %1322 = vmatmul.mubr.bf16.gmra.mxu0 %v1287
    %v1323 = vpop.f32.mrf.mxu0
    %v1324 = vadd.f32 0.0, %v1323
    %v1325 = vpop.f32.mrf.mxu0
    %v1326 = vadd.f32 0.0, %v1325
    %v1327 = vpop.f32.mrf.mxu0
    %v1328 = vadd.f32 0.0, %v1327
    %v1329 = vpop.f32.mrf.mxu0
    %v1330 = vadd.f32 0.0, %v1329
    %1331 = vdwg.mxu0
    %1332 = vmatprep.subr.bf16.mxu0 0
    %1333 = vmatpush1.bf16.msra.mxu0 0
    %1334 = vmatprep.subr.bf16.mxu0 0
    %1335 = vmatpush1.bf16.msra.mxu0 0
    %1336 = vmatprep.subr.bf16.mxu0 0
    %1337 = vmatpush1.bf16.msra.mxu0 0
    %1338 = vmatprep.subr.bf16.mxu0 0
    %1339 = vmatpush1.bf16.msra.mxu0 0
    %1340 = vmatprep.subr.bf16.mxu0 0
    %1341 = vmatpush1.bf16.msra.mxu0 0
    %1342 = vmatprep.subr.bf16.mxu0 0
    %1343 = vmatpush1.bf16.msra.mxu0 0
    %1344 = vmatprep.subr.bf16.mxu0 0
    %1345 = vmatpush1.bf16.msra.mxu0 0
    %1346 = vmatprep.subr.bf16.mxu0 %v1268
    %1347 = vmatpush1.bf16.msra.mxu0 %v1267
    %1348 = vmatprep.subr.bf16.mxu0 0
    %1349 = vmatpush2.bf16.msra.mxu0 0
    %1350 = vmatprep.subr.bf16.mxu0 0
    %1351 = vmatpush2.bf16.msra.mxu0 0
    %1352 = vmatprep.subr.bf16.mxu0 0
    %1353 = vmatpush2.bf16.msra.mxu0 0
    %1354 = vmatprep.subr.bf16.mxu0 0
    %1355 = vmatpush2.bf16.msra.mxu0 0
    %1356 = vmatprep.subr.bf16.mxu0 0
    %1357 = vmatpush2.bf16.msra.mxu0 0
    %1358 = vmatprep.subr.bf16.mxu0 0
    %1359 = vmatpush2.bf16.msra.mxu0 0
    %1360 = vmatprep.subr.bf16.mxu0 0
    %1361 = vmatpush2.bf16.msra.mxu0 0
    %1362 = vmatprep.subr.bf16.mxu0 0
    %1363 = vmatpush2.bf16.msra.mxu0 0
    %1364 = vmatprep.mubr.bf16.mxu0 0
    %1365 = vmatmul.mubr.bf16.gmra.mxu0 %v1287
    %v1366 = vpop.f32.mrf.mxu0
    %v1367 = vadd.f32 0.0, %v1366
    %v1368 = vpop.f32.mrf.mxu0
    %v1369 = vadd.f32 0.0, %v1368
    %v1370 = vpop.f32.mrf.mxu0
    %v1371 = vadd.f32 0.0, %v1370
    %v1372 = vpop.f32.mrf.mxu0
    %v1373 = vadd.f32 0.0, %v1372
    %1374 = vdwg.mxu0
    %1375 = vmatprep.subr.bf16.mxu0 0
    %1376 = vmatpush1.bf16.msra.mxu0 0
    %1377 = vmatprep.subr.bf16.mxu0 0
    %1378 = vmatpush1.bf16.msra.mxu0 0
    %1379 = vmatprep.subr.bf16.mxu0 0
    %1380 = vmatpush1.bf16.msra.mxu0 0
    %1381 = vmatprep.subr.bf16.mxu0 0
    %1382 = vmatpush1.bf16.msra.mxu0 0
    %1383 = vmatprep.subr.bf16.mxu0 0
    %1384 = vmatpush1.bf16.msra.mxu0 0
    %1385 = vmatprep.subr.bf16.mxu0 0
    %1386 = vmatpush1.bf16.msra.mxu0 0
    %1387 = vmatprep.subr.bf16.mxu0 0
    %1388 = vmatpush1.bf16.msra.mxu0 0
    %1389 = vmatprep.subr.bf16.mxu0 %v1270
    %1390 = vmatpush1.bf16.msra.mxu0 %v1269
    %1391 = vmatprep.subr.bf16.mxu0 0
    %1392 = vmatpush2.bf16.msra.mxu0 0
    %1393 = vmatprep.subr.bf16.mxu0 0
    %1394 = vmatpush2.bf16.msra.mxu0 0
    %1395 = vmatprep.subr.bf16.mxu0 0
    %1396 = vmatpush2.bf16.msra.mxu0 0
    %1397 = vmatprep.subr.bf16.mxu0 0
    %1398 = vmatpush2.bf16.msra.mxu0 0
    %1399 = vmatprep.subr.bf16.mxu0 0
    %1400 = vmatpush2.bf16.msra.mxu0 0
    %1401 = vmatprep.subr.bf16.mxu0 0
    %1402 = vmatpush2.bf16.msra.mxu0 0
    %1403 = vmatprep.subr.bf16.mxu0 0
    %1404 = vmatpush2.bf16.msra.mxu0 0
    %1405 = vmatprep.subr.bf16.mxu0 0
    %1406 = vmatpush2.bf16.msra.mxu0 0
    %1407 = vmatprep.mubr.bf16.mxu0 0
    %1408 = vmatmul.mubr.bf16.gmra.mxu0 %v1287
    %v1409 = vpop.f32.mrf.mxu0
    %v1410 = vadd.f32 0.0, %v1409
    %v1411 = vpop.f32.mrf.mxu0
    %v1412 = vadd.f32 0.0, %v1411
    %v1413 = vpop.f32.mrf.mxu0
    %v1414 = vadd.f32 0.0, %v1413
    %v1415 = vpop.f32.mrf.mxu0
    %v1416 = vadd.f32 0.0, %v1415
    %1417 = vdwg.mxu0
    %1418 = vmatprep.subr.bf16.mxu0 0
    %1419 = vmatpush1.bf16.msra.mxu0 0
    %1420 = vmatprep.subr.bf16.mxu0 0
    %1421 = vmatpush1.bf16.msra.mxu0 0
    %1422 = vmatprep.subr.bf16.mxu0 0
    %1423 = vmatpush1.bf16.msra.mxu0 0
    %1424 = vmatprep.subr.bf16.mxu0 0
    %1425 = vmatpush1.bf16.msra.mxu0 0
    %1426 = vmatprep.subr.bf16.mxu0 0
    %1427 = vmatpush1.bf16.msra.mxu0 0
    %1428 = vmatprep.subr.bf16.mxu0 0
    %1429 = vmatpush1.bf16.msra.mxu0 0
    %1430 = vmatprep.subr.bf16.mxu0 0
    %1431 = vmatpush1.bf16.msra.mxu0 0
    %1432 = vmatprep.subr.bf16.mxu0 %v1272
    %1433 = vmatpush1.bf16.msra.mxu0 %v1271
    %1434 = vmatprep.subr.bf16.mxu0 0
    %1435 = vmatpush2.bf16.msra.mxu0 0
    %1436 = vmatprep.subr.bf16.mxu0 0
    %1437 = vmatpush2.bf16.msra.mxu0 0
    %1438 = vmatprep.subr.bf16.mxu0 0
    %1439 = vmatpush2.bf16.msra.mxu0 0
    %1440 = vmatprep.subr.bf16.mxu0 0
    %1441 = vmatpush2.bf16.msra.mxu0 0
    %1442 = vmatprep.subr.bf16.mxu0 0
    %1443 = vmatpush2.bf16.msra.mxu0 0
    %1444 = vmatprep.subr.bf16.mxu0 0
    %1445 = vmatpush2.bf16.msra.mxu0 0
    %1446 = vmatprep.subr.bf16.mxu0 0
    %1447 = vmatpush2.bf16.msra.mxu0 0
    %1448 = vmatprep.subr.bf16.mxu0 0
    %1449 = vmatpush2.bf16.msra.mxu0 0
    %1450 = vmatprep.mubr.bf16.mxu0 0
    %1451 = vmatmul.mubr.bf16.gmra.mxu0 %v1287
    %v1452 = vpop.f32.mrf.mxu0
    %v1453 = vadd.f32 0.0, %v1452
    %v1454 = vpop.f32.mrf.mxu0
    %v1455 = vadd.f32 0.0, %v1454
    %v1456 = vpop.f32.mrf.mxu0
    %v1457 = vadd.f32 0.0, %v1456
    %v1458 = vpop.f32.mrf.mxu0
    %v1459 = vadd.f32 0.0, %v1458
    %1460 = vdwg.mxu0
    %1461 = vmatprep.subr.bf16.mxu0 0
    %1462 = vmatpush1.bf16.msra.mxu0 0
    %1463 = vmatprep.subr.bf16.mxu0 0
    %1464 = vmatpush1.bf16.msra.mxu0 0
    %1465 = vmatprep.subr.bf16.mxu0 0
    %1466 = vmatpush1.bf16.msra.mxu0 0
    %1467 = vmatprep.subr.bf16.mxu0 0
    %1468 = vmatpush1.bf16.msra.mxu0 0
    %1469 = vmatprep.subr.bf16.mxu0 0
    %1470 = vmatpush1.bf16.msra.mxu0 0
    %1471 = vmatprep.subr.bf16.mxu0 0
    %1472 = vmatpush1.bf16.msra.mxu0 0
    %1473 = vmatprep.subr.bf16.mxu0 0
    %1474 = vmatpush1.bf16.msra.mxu0 0
    %1475 = vmatprep.subr.bf16.mxu0 %v1274
    %1476 = vmatpush1.bf16.msra.mxu0 %v1273
    %1477 = vmatprep.subr.bf16.mxu0 0
    %1478 = vmatpush2.bf16.msra.mxu0 0
    %1479 = vmatprep.subr.bf16.mxu0 0
    %1480 = vmatpush2.bf16.msra.mxu0 0
    %1481 = vmatprep.subr.bf16.mxu0 0
    %1482 = vmatpush2.bf16.msra.mxu0 0
    %1483 = vmatprep.subr.bf16.mxu0 0
    %1484 = vmatpush2.bf16.msra.mxu0 0
    %1485 = vmatprep.subr.bf16.mxu0 0
    %1486 = vmatpush2.bf16.msra.mxu0 0
    %1487 = vmatprep.subr.bf16.mxu0 0
    %1488 = vmatpush2.bf16.msra.mxu0 0
    %1489 = vmatprep.subr.bf16.mxu0 0
    %1490 = vmatpush2.bf16.msra.mxu0 0
    %1491 = vmatprep.subr.bf16.mxu0 0
    %1492 = vmatpush2.bf16.msra.mxu0 0
    %1493 = vmatprep.mubr.bf16.mxu0 0
    %1494 = vmatmul.mubr.bf16.gmra.mxu0 %v1287
    %v1495 = vpop.f32.mrf.mxu0
    %v1496 = vadd.f32 0.0, %v1495
    %v1497 = vpop.f32.mrf.mxu0
    %v1498 = vadd.f32 0.0, %v1497
    %v1499 = vpop.f32.mrf.mxu0
    %v1500 = vadd.f32 0.0, %v1499
    %v1501 = vpop.f32.mrf.mxu0
    %v1502 = vadd.f32 0.0, %v1501
    %1503 = vdwg.mxu0
    %vm1504 = vcmask 261120
    %v1506 = vsel %vm1504, %v1217, 0
    %1508 = vmatprep.subr.bf16.mxu0 0
    %1509 = vmatpush1.bf16.msra.mxu0 0
    %1510 = vmatprep.subr.bf16.mxu0 0
    %1511 = vmatpush1.bf16.msra.mxu0 0
    %1512 = vmatprep.subr.bf16.mxu0 0
    %1513 = vmatpush1.bf16.msra.mxu0 0
    %1514 = vmatprep.subr.bf16.mxu0 0
    %1515 = vmatpush1.bf16.msra.mxu0 0
    %1516 = vmatprep.subr.bf16.mxu0 0
    %1517 = vmatpush1.bf16.msra.mxu0 0
    %1518 = vmatprep.subr.bf16.mxu0 0
    %1519 = vmatpush1.bf16.msra.mxu0 0
    %1520 = vmatprep.subr.bf16.mxu0 %v1208
    %1521 = vmatpush1.bf16.msra.mxu0 %v1207
    %1522 = vmatprep.subr.bf16.mxu0 %v1198
    %1523 = vmatpush1.bf16.msra.mxu0 %v1197
    %1524 = vmatprep.subr.bf16.mxu0 0
    %1525 = vmatpush2.bf16.msra.mxu0 0
    %1526 = vmatprep.subr.bf16.mxu0 0
    %1527 = vmatpush2.bf16.msra.mxu0 0
    %1528 = vmatprep.subr.bf16.mxu0 0
    %1529 = vmatpush2.bf16.msra.mxu0 0
    %1530 = vmatprep.subr.bf16.mxu0 0
    %1531 = vmatpush2.bf16.msra.mxu0 0
    %1532 = vmatprep.subr.bf16.mxu0 0
    %1533 = vmatpush2.bf16.msra.mxu0 0
    %1534 = vmatprep.subr.bf16.mxu0 0
    %1535 = vmatpush2.bf16.msra.mxu0 0
    %1536 = vmatprep.subr.bf16.mxu0 0
    %1537 = vmatpush2.bf16.msra.mxu0 0
    %1538 = vmatprep.subr.bf16.mxu0 0
    %1539 = vmatpush2.bf16.msra.mxu0 0
    %1540 = vmatprep.mubr.bf16.mxu0 0
    %1541 = vmatmul.mubr.bf16.gmra.mxu0 %v1506
    %v1542 = vpop.f32.mrf.mxu0
    %v1543 = vadd.f32 %v1324, %v1542
    %v1544 = vpop.f32.mrf.mxu0
    %v1545 = vadd.f32 %v1326, %v1544
    %v1546 = vpop.f32.mrf.mxu0
    %v1547 = vadd.f32 %v1328, %v1546
    %v1548 = vpop.f32.mrf.mxu0
    %v1549 = vadd.f32 %v1330, %v1548
    %1550 = vdwg.mxu0
    %1551 = vmatprep.subr.bf16.mxu0 0
    %1552 = vmatpush1.bf16.msra.mxu0 0
    %1553 = vmatprep.subr.bf16.mxu0 0
    %1554 = vmatpush1.bf16.msra.mxu0 0
    %1555 = vmatprep.subr.bf16.mxu0 0
    %1556 = vmatpush1.bf16.msra.mxu0 0
    %1557 = vmatprep.subr.bf16.mxu0 0
    %1558 = vmatpush1.bf16.msra.mxu0 0
    %1559 = vmatprep.subr.bf16.mxu0 0
    %1560 = vmatpush1.bf16.msra.mxu0 0
    %1561 = vmatprep.subr.bf16.mxu0 0
    %1562 = vmatpush1.bf16.msra.mxu0 0
    %1563 = vmatprep.subr.bf16.mxu0 %v1210
    %1564 = vmatpush1.bf16.msra.mxu0 %v1209
    %1565 = vmatprep.subr.bf16.mxu0 %v1200
    %1566 = vmatpush1.bf16.msra.mxu0 %v1199
    %1567 = vmatprep.subr.bf16.mxu0 0
    %1568 = vmatpush2.bf16.msra.mxu0 0
    %1569 = vmatprep.subr.bf16.mxu0 0
    %1570 = vmatpush2.bf16.msra.mxu0 0
    %1571 = vmatprep.subr.bf16.mxu0 0
    %1572 = vmatpush2.bf16.msra.mxu0 0
    %1573 = vmatprep.subr.bf16.mxu0 0
    %1574 = vmatpush2.bf16.msra.mxu0 0
    %1575 = vmatprep.subr.bf16.mxu0 0
    %1576 = vmatpush2.bf16.msra.mxu0 0
    %1577 = vmatprep.subr.bf16.mxu0 0
    %1578 = vmatpush2.bf16.msra.mxu0 0
    %1579 = vmatprep.subr.bf16.mxu0 0
    %1580 = vmatpush2.bf16.msra.mxu0 0
    %1581 = vmatprep.subr.bf16.mxu0 0
    %1582 = vmatpush2.bf16.msra.mxu0 0
    %1583 = vmatprep.mubr.bf16.mxu0 0
    %1584 = vmatmul.mubr.bf16.gmra.mxu0 %v1506
    %v1585 = vpop.f32.mrf.mxu0
    %v1586 = vadd.f32 %v1367, %v1585
    %v1587 = vpop.f32.mrf.mxu0
    %v1588 = vadd.f32 %v1369, %v1587
    %v1589 = vpop.f32.mrf.mxu0
    %v1590 = vadd.f32 %v1371, %v1589
    %v1591 = vpop.f32.mrf.mxu0
    %v1592 = vadd.f32 %v1373, %v1591
    %1593 = vdwg.mxu0
    %1594 = vmatprep.subr.bf16.mxu0 0
    %1595 = vmatpush1.bf16.msra.mxu0 0
    %1596 = vmatprep.subr.bf16.mxu0 0
    %1597 = vmatpush1.bf16.msra.mxu0 0
    %1598 = vmatprep.subr.bf16.mxu0 0
    %1599 = vmatpush1.bf16.msra.mxu0 0
    %1600 = vmatprep.subr.bf16.mxu0 0
    %1601 = vmatpush1.bf16.msra.mxu0 0
    %1602 = vmatprep.subr.bf16.mxu0 0
    %1603 = vmatpush1.bf16.msra.mxu0 0
    %1604 = vmatprep.subr.bf16.mxu0 0
    %1605 = vmatpush1.bf16.msra.mxu0 0
    %1606 = vmatprep.subr.bf16.mxu0 %v1212
    %1607 = vmatpush1.bf16.msra.mxu0 %v1211
    %1608 = vmatprep.subr.bf16.mxu0 %v1202
    %1609 = vmatpush1.bf16.msra.mxu0 %v1201
    %1610 = vmatprep.subr.bf16.mxu0 0
    %1611 = vmatpush2.bf16.msra.mxu0 0
    %1612 = vmatprep.subr.bf16.mxu0 0
    %1613 = vmatpush2.bf16.msra.mxu0 0
    %1614 = vmatprep.subr.bf16.mxu0 0
    %1615 = vmatpush2.bf16.msra.mxu0 0
    %1616 = vmatprep.subr.bf16.mxu0 0
    %1617 = vmatpush2.bf16.msra.mxu0 0
    %1618 = vmatprep.subr.bf16.mxu0 0
    %1619 = vmatpush2.bf16.msra.mxu0 0
    %1620 = vmatprep.subr.bf16.mxu0 0
    %1621 = vmatpush2.bf16.msra.mxu0 0
    %1622 = vmatprep.subr.bf16.mxu0 0
    %1623 = vmatpush2.bf16.msra.mxu0 0
    %1624 = vmatprep.subr.bf16.mxu0 0
    %1625 = vmatpush2.bf16.msra.mxu0 0
    %1626 = vmatprep.mubr.bf16.mxu0 0
    %1627 = vmatmul.mubr.bf16.gmra.mxu0 %v1506
    %v1628 = vpop.f32.mrf.mxu0
    %v1629 = vadd.f32 %v1410, %v1628
    %v1630 = vpop.f32.mrf.mxu0
    %v1631 = vadd.f32 %v1412, %v1630
    %v1632 = vpop.f32.mrf.mxu0
    %v1633 = vadd.f32 %v1414, %v1632
    %v1634 = vpop.f32.mrf.mxu0
    %v1635 = vadd.f32 %v1416, %v1634
    %1636 = vdwg.mxu0
    %1637 = vmatprep.subr.bf16.mxu0 0
    %1638 = vmatpush1.bf16.msra.mxu0 0
    %1639 = vmatprep.subr.bf16.mxu0 0
    %1640 = vmatpush1.bf16.msra.mxu0 0
    %1641 = vmatprep.subr.bf16.mxu0 0
    %1642 = vmatpush1.bf16.msra.mxu0 0
    %1643 = vmatprep.subr.bf16.mxu0 0
    %1644 = vmatpush1.bf16.msra.mxu0 0
    %1645 = vmatprep.subr.bf16.mxu0 0
    %1646 = vmatpush1.bf16.msra.mxu0 0
    %1647 = vmatprep.subr.bf16.mxu0 0
    %1648 = vmatpush1.bf16.msra.mxu0 0
    %1649 = vmatprep.subr.bf16.mxu0 %v1214
    %1650 = vmatpush1.bf16.msra.mxu0 %v1213
    %1651 = vmatprep.subr.bf16.mxu0 %v1204
    %1652 = vmatpush1.bf16.msra.mxu0 %v1203
    %1653 = vmatprep.subr.bf16.mxu0 0
    %1654 = vmatpush2.bf16.msra.mxu0 0
    %1655 = vmatprep.subr.bf16.mxu0 0
    %1656 = vmatpush2.bf16.msra.mxu0 0
    %1657 = vmatprep.subr.bf16.mxu0 0
    %1658 = vmatpush2.bf16.msra.mxu0 0
    %1659 = vmatprep.subr.bf16.mxu0 0
    %1660 = vmatpush2.bf16.msra.mxu0 0
    %1661 = vmatprep.subr.bf16.mxu0 0
    %1662 = vmatpush2.bf16.msra.mxu0 0
    %1663 = vmatprep.subr.bf16.mxu0 0
    %1664 = vmatpush2.bf16.msra.mxu0 0
    %1665 = vmatprep.subr.bf16.mxu0 0
    %1666 = vmatpush2.bf16.msra.mxu0 0
    %1667 = vmatprep.subr.bf16.mxu0 0
    %1668 = vmatpush2.bf16.msra.mxu0 0
    %1669 = vmatprep.mubr.bf16.mxu0 0
    %1670 = vmatmul.mubr.bf16.gmra.mxu0 %v1506
    %v1671 = vpop.f32.mrf.mxu0
    %v1672 = vadd.f32 %v1453, %v1671
    %v1673 = vpop.f32.mrf.mxu0
    %v1674 = vadd.f32 %v1455, %v1673
    %v1675 = vpop.f32.mrf.mxu0
    %v1676 = vadd.f32 %v1457, %v1675
    %v1677 = vpop.f32.mrf.mxu0
    %v1678 = vadd.f32 %v1459, %v1677
    %1679 = vdwg.mxu0
    %1680 = vmatprep.subr.bf16.mxu0 0
    %1681 = vmatpush1.bf16.msra.mxu0 0
    %1682 = vmatprep.subr.bf16.mxu0 0
    %1683 = vmatpush1.bf16.msra.mxu0 0
    %1684 = vmatprep.subr.bf16.mxu0 0
    %1685 = vmatpush1.bf16.msra.mxu0 0
    %1686 = vmatprep.subr.bf16.mxu0 0
    %1687 = vmatpush1.bf16.msra.mxu0 0
    %1688 = vmatprep.subr.bf16.mxu0 0
    %1689 = vmatpush1.bf16.msra.mxu0 0
    %1690 = vmatprep.subr.bf16.mxu0 0
    %1691 = vmatpush1.bf16.msra.mxu0 0
    %1692 = vmatprep.subr.bf16.mxu0 %v1216
    %1693 = vmatpush1.bf16.msra.mxu0 %v1215
    %1694 = vmatprep.subr.bf16.mxu0 %v1206
    %1695 = vmatpush1.bf16.msra.mxu0 %v1205
    %1696 = vmatprep.subr.bf16.mxu0 0
    %1697 = vmatpush2.bf16.msra.mxu0 0
    %1698 = vmatprep.subr.bf16.mxu0 0
    %1699 = vmatpush2.bf16.msra.mxu0 0
    %1700 = vmatprep.subr.bf16.mxu0 0
    %1701 = vmatpush2.bf16.msra.mxu0 0
    %1702 = vmatprep.subr.bf16.mxu0 0
    %1703 = vmatpush2.bf16.msra.mxu0 0
    %1704 = vmatprep.subr.bf16.mxu0 0
    %1705 = vmatpush2.bf16.msra.mxu0 0
    %1706 = vmatprep.subr.bf16.mxu0 0
    %1707 = vmatpush2.bf16.msra.mxu0 0
    %1708 = vmatprep.subr.bf16.mxu0 0
    %1709 = vmatpush2.bf16.msra.mxu0 0
    %1710 = vmatprep.subr.bf16.mxu0 0
    %1711 = vmatpush2.bf16.msra.mxu0 0
    %1712 = vmatprep.mubr.bf16.mxu0 0
    %1713 = vmatmul.mubr.bf16.gmra.mxu0 %v1506
    %v1714 = vpop.f32.mrf.mxu0
    %v1715 = vadd.f32 %v1496, %v1714
    %v1716 = vpop.f32.mrf.mxu0
    %v1717 = vadd.f32 %v1498, %v1716
    %v1718 = vpop.f32.mrf.mxu0
    %v1719 = vadd.f32 %v1500, %v1718
    %v1720 = vpop.f32.mrf.mxu0
    %v1721 = vadd.f32 %v1502, %v1720
    %1722 = vdwg.mxu0
    %v1723 = vld [vmem:[%s23] sm:$0xff]
    %v1724 = vld [vmem:[%s23 + $0x8] sm:$0x3]
    %v1727 = vlaneseq
    %v1728 = vshrl.u32 %v1727, 7
    %v1729 = vsub.s32 0, %v1728
    %v1730 = vrot.slane %v1723, %v1729
    %v1731 = vlaneseq
    %v1732 = vshrl.u32 %v1731, 7
    %v1733 = vsub.s32 1, %v1732
    %v1734 = vrot.slane %v1723, %v1733
    %v1735 = vlaneseq
    %v1736 = vshrl.u32 %v1735, 7
    %v1737 = vsub.s32 2, %v1736
    %v1738 = vrot.slane %v1723, %v1737
    %v1739 = vlaneseq
    %v1740 = vshrl.u32 %v1739, 7
    %v1741 = vsub.s32 3, %v1740
    %v1742 = vrot.slane %v1723, %v1741
    %v1743 = vlaneseq
    %v1744 = vshrl.u32 %v1743, 7
    %v1745 = vsub.s32 4, %v1744
    %v1746 = vrot.slane %v1723, %v1745
    %v1747 = vlaneseq
    %v1748 = vshrl.u32 %v1747, 7
    %v1749 = vsub.s32 5, %v1748
    %v1750 = vrot.slane %v1723, %v1749
    %v1751 = vlaneseq
    %v1752 = vshrl.u32 %v1751, 7
    %v1753 = vsub.s32 6, %v1752
    %v1754 = vrot.slane %v1723, %v1753
    %v1755 = vlaneseq
    %v1756 = vshrl.u32 %v1755, 7
    %v1757 = vsub.s32 7, %v1756
    %v1758 = vrot.slane %v1723, %v1757
    %v1759 = vlaneseq
    %v1760 = vshrl.u32 %v1759, 7
    %v1761 = vsub.s32 0, %v1760
    %v1762 = vrot.slane %v1724, %v1761
    %v1763 = vlaneseq
    %v1764 = vshrl.u32 %v1763, 7
    %v1765 = vsub.s32 1, %v1764
    %v1766 = vrot.slane %v1724, %v1765
    %v1777 = vmul.f32 %v1543, %v1730
    %v1778 = vmul.f32 %v1545, %v1734
    %v1779 = vmul.f32 %v1586, %v1738
    %v1780 = vmul.f32 %v1588, %v1742
    %v1781 = vmul.f32 %v1629, %v1746
    %v1782 = vmul.f32 %v1631, %v1750
    %v1783 = vmul.f32 %v1672, %v1754
    %v1784 = vmul.f32 %v1674, %v1758
    %v1785 = vmul.f32 %v1715, %v1762
    %v1786 = vmul.f32 %v1717, %v1766
    %v1787 = vmul.f32 %v1547, %v1730
    %v1788 = vmul.f32 %v1549, %v1734
    %v1789 = vmul.f32 %v1590, %v1738
    %v1790 = vmul.f32 %v1592, %v1742
    %v1791 = vmul.f32 %v1633, %v1746
    %v1792 = vmul.f32 %v1635, %v1750
    %v1793 = vmul.f32 %v1676, %v1754
    %v1794 = vmul.f32 %v1678, %v1758
    %v1795 = vmul.f32 %v1719, %v1762
    %v1796 = vmul.f32 %v1721, %v1766
    %v1797 = vld [vmem:[#allocation22] sm:$0xff]
    %v1798 = vld [vmem:[#allocation22 + $0x8] sm:$0x3]
    %v1801 = vlaneseq
    %v1802 = vshrl.u32 %v1801, 7
    %v1803 = vsub.s32 0, %v1802
    %v1804 = vrot.slane %v1797, %v1803
    %v1805 = vlaneseq
    %v1806 = vshrl.u32 %v1805, 7
    %v1807 = vsub.s32 1, %v1806
    %v1808 = vrot.slane %v1797, %v1807
    %v1809 = vlaneseq
    %v1810 = vshrl.u32 %v1809, 7
    %v1811 = vsub.s32 2, %v1810
    %v1812 = vrot.slane %v1797, %v1811
    %v1813 = vlaneseq
    %v1814 = vshrl.u32 %v1813, 7
    %v1815 = vsub.s32 3, %v1814
    %v1816 = vrot.slane %v1797, %v1815
    %v1817 = vlaneseq
    %v1818 = vshrl.u32 %v1817, 7
    %v1819 = vsub.s32 4, %v1818
    %v1820 = vrot.slane %v1797, %v1819
    %v1821 = vlaneseq
    %v1822 = vshrl.u32 %v1821, 7
    %v1823 = vsub.s32 5, %v1822
    %v1824 = vrot.slane %v1797, %v1823
    %v1825 = vlaneseq
    %v1826 = vshrl.u32 %v1825, 7
    %v1827 = vsub.s32 6, %v1826
    %v1828 = vrot.slane %v1797, %v1827
    %v1829 = vlaneseq
    %v1830 = vshrl.u32 %v1829, 7
    %v1831 = vsub.s32 7, %v1830
    %v1832 = vrot.slane %v1797, %v1831
    %v1833 = vlaneseq
    %v1834 = vshrl.u32 %v1833, 7
    %v1835 = vsub.s32 0, %v1834
    %v1836 = vrot.slane %v1798, %v1835
    %v1837 = vlaneseq
    %v1838 = vshrl.u32 %v1837, 7
    %v1839 = vsub.s32 1, %v1838
    %v1840 = vrot.slane %v1798, %v1839
    %v1851 = vadd.f32 %v1777, %v1804
    %v1852 = vadd.f32 %v1778, %v1808
    %v1853 = vadd.f32 %v1779, %v1812
    %v1854 = vadd.f32 %v1780, %v1816
    %v1855 = vadd.f32 %v1781, %v1820
    %v1856 = vadd.f32 %v1782, %v1824
    %v1857 = vadd.f32 %v1783, %v1828
    %v1858 = vadd.f32 %v1784, %v1832
    %v1859 = vadd.f32 %v1785, %v1836
    %v1860 = vadd.f32 %v1786, %v1840
    %v1861 = vadd.f32 %v1787, %v1804
    %v1862 = vadd.f32 %v1788, %v1808
    %v1863 = vadd.f32 %v1789, %v1812
    %v1864 = vadd.f32 %v1790, %v1816
    %v1865 = vadd.f32 %v1791, %v1820
    %v1866 = vadd.f32 %v1792, %v1824
    %v1867 = vadd.f32 %v1793, %v1828
    %v1868 = vadd.f32 %v1794, %v1832
    %v1869 = vadd.f32 %v1795, %v1836
    %v1870 = vadd.f32 %v1796, %v1840
    %vm1871 = vcmp.gt.f32.partialorder %v1851, 0.0
    %vm1872 = vcmp.gt.f32.partialorder %v1852, 0.0
    %vm1873 = vcmp.gt.f32.partialorder %v1853, 0.0
    %vm1874 = vcmp.gt.f32.partialorder %v1854, 0.0
    %vm1875 = vcmp.gt.f32.partialorder %v1855, 0.0
    %vm1876 = vcmp.gt.f32.partialorder %v1856, 0.0
    %vm1877 = vcmp.gt.f32.partialorder %v1857, 0.0
    %vm1878 = vcmp.gt.f32.partialorder %v1858, 0.0
    %vm1879 = vcmp.gt.f32.partialorder %v1859, 0.0
    %vm1880 = vcmp.gt.f32.partialorder %v1860, 0.0
    %vm1881 = vcmp.gt.f32.partialorder %v1861, 0.0
    %vm1882 = vcmp.gt.f32.partialorder %v1862, 0.0
    %vm1883 = vcmp.gt.f32.partialorder %v1863, 0.0
    %vm1884 = vcmp.gt.f32.partialorder %v1864, 0.0
    %vm1885 = vcmp.gt.f32.partialorder %v1865, 0.0
    %vm1886 = vcmp.gt.f32.partialorder %v1866, 0.0
    %vm1887 = vcmp.gt.f32.partialorder %v1867, 0.0
    %vm1888 = vcmp.gt.f32.partialorder %v1868, 0.0
    %vm1889 = vcmp.gt.f32.partialorder %v1869, 0.0
    %vm1890 = vcmp.gt.f32.partialorder %v1870, 0.0
    %v1891 = vstv %s381
    %v1892 = vmul.f32 %v1891, %v1851
    %v1893 = vmul.f32 %v1891, %v1852
    %v1894 = vmul.f32 %v1891, %v1853
    %v1895 = vmul.f32 %v1891, %v1854
    %v1896 = vmul.f32 %v1891, %v1855
    %v1897 = vmul.f32 %v1891, %v1856
    %v1898 = vmul.f32 %v1891, %v1857
    %v1899 = vmul.f32 %v1891, %v1858
    %v1900 = vmul.f32 %v1891, %v1859
    %v1901 = vmul.f32 %v1891, %v1860
    %v1902 = vmul.f32 %v1891, %v1861
    %v1903 = vmul.f32 %v1891, %v1862
    %v1904 = vmul.f32 %v1891, %v1863
    %v1905 = vmul.f32 %v1891, %v1864
    %v1906 = vmul.f32 %v1891, %v1865
    %v1907 = vmul.f32 %v1891, %v1866
    %v1908 = vmul.f32 %v1891, %v1867
    %v1909 = vmul.f32 %v1891, %v1868
    %v1910 = vmul.f32 %v1891, %v1869
    %v1911 = vmul.f32 %v1891, %v1870
    %v1912 = vsel %vm1871, %v1851, %v1892
    %v1913 = vsel %vm1872, %v1852, %v1893
    %v1914 = vsel %vm1873, %v1853, %v1894
    %v1915 = vsel %vm1874, %v1854, %v1895
    %v1916 = vsel %vm1875, %v1855, %v1896
    %v1917 = vsel %vm1876, %v1856, %v1897
    %v1918 = vsel %vm1877, %v1857, %v1898
    %v1919 = vsel %vm1878, %v1858, %v1899
    %v1920 = vsel %vm1879, %v1859, %v1900
    %v1921 = vsel %vm1880, %v1860, %v1901
    %v1922 = vsel %vm1881, %v1861, %v1902
    %v1923 = vsel %vm1882, %v1862, %v1903
    %v1924 = vsel %vm1883, %v1863, %v1904
    %v1925 = vsel %vm1884, %v1864, %v1905
    %v1926 = vsel %vm1885, %v1865, %v1906
    %v1927 = vsel %vm1886, %v1866, %v1907
    %v1928 = vsel %vm1887, %v1867, %v1908
    %v1929 = vsel %vm1888, %v1868, %v1909
    %v1930 = vsel %vm1889, %v1869, %v1910
    %v1931 = vsel %vm1890, %v1870, %v1911
    %s1932 = smul.u32 2, 80
    %s1933 = smul.u32 %s1932, 8
    %s1934 = sshll.u32 %s1933, 4
    %1935 = dma.done [#allocation5], %s1934
    %v1936 = vld [vmem:[#allocation2] sm:$0xff]
    %v1937 = vld [vmem:[#allocation2 + $0x8] sm:$0xff]
    %v1938 = vld [vmem:[#allocation2 + $0x10] sm:$0xff]
    %v1939 = vld [vmem:[#allocation2 + $0x18] sm:$0xff]
    %v1940 = vld [vmem:[#allocation2 + $0x20] sm:$0xff]
    %v1941 = vld [vmem:[#allocation2 + $0x28] sm:$0xff]
    %v1942 = vld [vmem:[#allocation2 + $0x30] sm:$0xff]
    %v1943 = vld [vmem:[#allocation2 + $0x38] sm:$0xff]
    %v1944 = vld [vmem:[#allocation2 + $0x40] sm:$0xff]
    %v1945 = vld [vmem:[#allocation2 + $0x48] sm:$0xff]
    %v1946 = vld [vmem:[#allocation2 + $0x50] sm:$0xff]
    %v1947 = vld [vmem:[#allocation2 + $0x58] sm:$0xff]
    %v1948 = vld [vmem:[#allocation2 + $0x60] sm:$0xff]
    %v1949 = vld [vmem:[#allocation2 + $0x68] sm:$0xff]
    %v1950 = vld [vmem:[#allocation2 + $0x70] sm:$0xff]
    %v1951 = vld [vmem:[#allocation2 + $0x78] sm:$0xff]
    %v1952 = vld [vmem:[#allocation2 + $0x80] sm:$0xff]
    %v1953 = vld [vmem:[#allocation2 + $0x88] sm:$0xff]
    %v1954 = vld [vmem:[#allocation2 + $0x90] sm:$0xff]
    %v1955 = vld [vmem:[#allocation2 + $0x98] sm:$0xff]
    %v1956 = vld [vmem:[#allocation2 + $0xa0] sm:$0xff]
    %v1957 = vld [vmem:[#allocation2 + $0xa8] sm:$0xff]
    %v1958 = vld [vmem:[#allocation2 + $0xb0] sm:$0xff]
    %v1959 = vld [vmem:[#allocation2 + $0xb8] sm:$0xff]
    %v1960 = vld [vmem:[#allocation2 + $0xc0] sm:$0xff]
    %v1961 = vld [vmem:[#allocation2 + $0xc8] sm:$0xff]
    %v1962 = vld [vmem:[#allocation2 + $0xd0] sm:$0xff]
    %v1963 = vld [vmem:[#allocation2 + $0xd8] sm:$0xff]
    %v1964 = vld [vmem:[#allocation2 + $0xe0] sm:$0xff]
    %v1965 = vld [vmem:[#allocation2 + $0xe8] sm:$0xff]
    %v1966 = vld [vmem:[#allocation2 + $0xf0] sm:$0xff]
    %v1967 = vld [vmem:[#allocation2 + $0xf8] sm:$0xff]
    %v1968 = vld [vmem:[#allocation2 + $0x100] sm:$0xff]
    %v1969 = vld [vmem:[#allocation2 + $0x108] sm:$0xff]
    %v1970 = vld [vmem:[#allocation2 + $0x110] sm:$0xff]
    %v1971 = vld [vmem:[#allocation2 + $0x118] sm:$0xff]
    %v1972 = vld [vmem:[#allocation2 + $0x120] sm:$0xff]
    %v1973 = vld [vmem:[#allocation2 + $0x128] sm:$0xff]
    %v1974 = vld [vmem:[#allocation2 + $0x130] sm:$0xff]
    %v1975 = vld [vmem:[#allocation2 + $0x138] sm:$0xff]
    %v1976 = vld [vmem:[#allocation2 + $0x140] sm:$0xff]
    %v1977 = vld [vmem:[#allocation2 + $0x148] sm:$0xff]
    %v1978 = vld [vmem:[#allocation2 + $0x150] sm:$0xff]
    %v1979 = vld [vmem:[#allocation2 + $0x158] sm:$0xff]
    %v1980 = vld [vmem:[#allocation2 + $0x160] sm:$0xff]
    %v1981 = vld [vmem:[#allocation2 + $0x168] sm:$0xff]
    %v1982 = vld [vmem:[#allocation2 + $0x170] sm:$0xff]
    %v1983 = vld [vmem:[#allocation2 + $0x178] sm:$0xff]
    %v1984 = vld [vmem:[#allocation2 + $0x180] sm:$0xff]
    %v1985 = vld [vmem:[#allocation2 + $0x188] sm:$0xff]
    %v1986 = vld [vmem:[#allocation2 + $0x190] sm:$0xff]
    %v1987 = vld [vmem:[#allocation2 + $0x198] sm:$0xff]
    %v1988 = vld [vmem:[#allocation2 + $0x1a0] sm:$0xff]
    %v1989 = vld [vmem:[#allocation2 + $0x1a8] sm:$0xff]
    %v1990 = vld [vmem:[#allocation2 + $0x1b0] sm:$0xff]
    %v1991 = vld [vmem:[#allocation2 + $0x1b8] sm:$0xff]
    %v1992 = vld [vmem:[#allocation2 + $0x1c0] sm:$0xff]
    %v1993 = vld [vmem:[#allocation2 + $0x1c8] sm:$0xff]
    %v1994 = vld [vmem:[#allocation2 + $0x1d0] sm:$0xff]
    %v1995 = vld [vmem:[#allocation2 + $0x1d8] sm:$0xff]
    %v1996 = vld [vmem:[#allocation2 + $0x1e0] sm:$0xff]
    %v1997 = vld [vmem:[#allocation2 + $0x1e8] sm:$0xff]
    %v1998 = vld [vmem:[#allocation2 + $0x1f0] sm:$0xff]
    %v1999 = vld [vmem:[#allocation2 + $0x1f8] sm:$0xff]
    %v2000 = vld [vmem:[#allocation2 + $0x200] sm:$0xff]
    %v2001 = vld [vmem:[#allocation2 + $0x208] sm:$0xff]
    %v2002 = vld [vmem:[#allocation2 + $0x210] sm:$0xff]
    %v2003 = vld [vmem:[#allocation2 + $0x218] sm:$0xff]
    %v2004 = vld [vmem:[#allocation2 + $0x220] sm:$0xff]
    %v2005 = vld [vmem:[#allocation2 + $0x228] sm:$0xff]
    %v2006 = vld [vmem:[#allocation2 + $0x230] sm:$0xff]
    %v2007 = vld [vmem:[#allocation2 + $0x238] sm:$0xff]
    %v2008 = vld [vmem:[#allocation2 + $0x240] sm:$0xff]
    %v2009 = vld [vmem:[#allocation2 + $0x248] sm:$0xff]
    %v2010 = vld [vmem:[#allocation2 + $0x250] sm:$0xff]
    %v2011 = vld [vmem:[#allocation2 + $0x258] sm:$0xff]
    %v2012 = vld [vmem:[#allocation2 + $0x260] sm:$0xff]
    %v2013 = vld [vmem:[#allocation2 + $0x268] sm:$0xff]
    %v2014 = vld [vmem:[#allocation2 + $0x270] sm:$0xff]
    %v2015 = vld [vmem:[#allocation2 + $0x278] sm:$0xff]
    %v2016 = vld [vmem:[#allocation2 + $0x280] sm:$0xff]
    %v2017 = vld [vmem:[#allocation2 + $0x288] sm:$0xff]
    %v2018 = vld [vmem:[#allocation2 + $0x290] sm:$0xff]
    %v2019 = vld [vmem:[#allocation2 + $0x298] sm:$0xff]
    %v2020 = vld [vmem:[#allocation2 + $0x2a0] sm:$0xff]
    %v2021 = vld [vmem:[#allocation2 + $0x2a8] sm:$0xff]
    %v2022 = vld [vmem:[#allocation2 + $0x2b0] sm:$0xff]
    %v2023 = vld [vmem:[#allocation2 + $0x2b8] sm:$0xff]
    %v2024 = vld [vmem:[#allocation2 + $0x2c0] sm:$0xff]
    %v2025 = vld [vmem:[#allocation2 + $0x2c8] sm:$0xff]
    %v2026 = vld [vmem:[#allocation2 + $0x2d0] sm:$0xff]
    %v2027 = vld [vmem:[#allocation2 + $0x2d8] sm:$0xff]
    %v2028 = vld [vmem:[#allocation2 + $0x2e0] sm:$0xff]
    %v2029 = vld [vmem:[#allocation2 + $0x2e8] sm:$0xff]
    %v2030 = vld [vmem:[#allocation2 + $0x2f0] sm:$0xff]
    %v2031 = vld [vmem:[#allocation2 + $0x2f8] sm:$0xff]
    %v2032 = vld [vmem:[#allocation2 + $0x300] sm:$0xff]
    %v2033 = vld [vmem:[#allocation2 + $0x308] sm:$0xff]
    %v2034 = vld [vmem:[#allocation2 + $0x310] sm:$0xff]
    %v2035 = vld [vmem:[#allocation2 + $0x318] sm:$0xff]
    %v2036 = vld [vmem:[#allocation2 + $0x320] sm:$0xff]
    %v2037 = vld [vmem:[#allocation2 + $0x328] sm:$0xff]
    %v2038 = vld [vmem:[#allocation2 + $0x330] sm:$0xff]
    %v2039 = vld [vmem:[#allocation2 + $0x338] sm:$0xff]
    %v2040 = vld [vmem:[#allocation2 + $0x340] sm:$0xff]
    %v2041 = vld [vmem:[#allocation2 + $0x348] sm:$0xff]
    %v2042 = vld [vmem:[#allocation2 + $0x350] sm:$0xff]
    %v2043 = vld [vmem:[#allocation2 + $0x358] sm:$0xff]
    %v2044 = vld [vmem:[#allocation2 + $0x360] sm:$0xff]
    %v2045 = vld [vmem:[#allocation2 + $0x368] sm:$0xff]
    %v2046 = vld [vmem:[#allocation2 + $0x370] sm:$0xff]
    %v2047 = vld [vmem:[#allocation2 + $0x378] sm:$0xff]
    %v2048 = vld [vmem:[#allocation2 + $0x380] sm:$0xff]
    %v2049 = vld [vmem:[#allocation2 + $0x388] sm:$0xff]
    %v2050 = vld [vmem:[#allocation2 + $0x390] sm:$0xff]
    %v2051 = vld [vmem:[#allocation2 + $0x398] sm:$0xff]
    %v2052 = vld [vmem:[#allocation2 + $0x3a0] sm:$0xff]
    %v2053 = vld [vmem:[#allocation2 + $0x3a8] sm:$0xff]
    %v2054 = vld [vmem:[#allocation2 + $0x3b0] sm:$0xff]
    %v2055 = vld [vmem:[#allocation2 + $0x3b8] sm:$0xff]
    %v2056 = vld [vmem:[#allocation2 + $0x3c0] sm:$0xff]
    %v2057 = vld [vmem:[#allocation2 + $0x3c8] sm:$0xff]
    %v2058 = vld [vmem:[#allocation2 + $0x3d0] sm:$0xff]
    %v2059 = vld [vmem:[#allocation2 + $0x3d8] sm:$0xff]
    %v2060 = vld [vmem:[#allocation2 + $0x3e0] sm:$0xff]
    %v2061 = vld [vmem:[#allocation2 + $0x3e8] sm:$0xff]
    %v2062 = vld [vmem:[#allocation2 + $0x3f0] sm:$0xff]
    %v2063 = vld [vmem:[#allocation2 + $0x3f8] sm:$0xff]
    %v2064 = vld [vmem:[#allocation2 + $0x400] sm:$0xff]
    %v2065 = vld [vmem:[#allocation2 + $0x408] sm:$0xff]
    %v2066 = vld [vmem:[#allocation2 + $0x410] sm:$0xff]
    %v2067 = vld [vmem:[#allocation2 + $0x418] sm:$0xff]
    %v2068 = vld [vmem:[#allocation2 + $0x420] sm:$0xff]
    %v2069 = vld [vmem:[#allocation2 + $0x428] sm:$0xff]
    %v2070 = vld [vmem:[#allocation2 + $0x430] sm:$0xff]
    %v2071 = vld [vmem:[#allocation2 + $0x438] sm:$0xff]
    %v2072 = vld [vmem:[#allocation2 + $0x440] sm:$0xff]
    %v2073 = vld [vmem:[#allocation2 + $0x448] sm:$0xff]
    %v2074 = vld [vmem:[#allocation2 + $0x450] sm:$0xff]
    %v2075 = vld [vmem:[#allocation2 + $0x458] sm:$0xff]
    %v2076 = vld [vmem:[#allocation2 + $0x460] sm:$0xff]
    %v2077 = vld [vmem:[#allocation2 + $0x468] sm:$0xff]
    %v2078 = vld [vmem:[#allocation2 + $0x470] sm:$0xff]
    %v2079 = vld [vmem:[#allocation2 + $0x478] sm:$0xff]
    %v2080 = vld [vmem:[#allocation2 + $0x480] sm:$0xff]
    %v2081 = vld [vmem:[#allocation2 + $0x488] sm:$0xff]
    %v2082 = vld [vmem:[#allocation2 + $0x490] sm:$0xff]
    %v2083 = vld [vmem:[#allocation2 + $0x498] sm:$0xff]
    %v2084 = vld [vmem:[#allocation2 + $0x4a0] sm:$0xff]
    %v2085 = vld [vmem:[#allocation2 + $0x4a8] sm:$0xff]
    %v2086 = vld [vmem:[#allocation2 + $0x4b0] sm:$0xff]
    %v2087 = vld [vmem:[#allocation2 + $0x4b8] sm:$0xff]
    %v2088 = vld [vmem:[#allocation2 + $0x4c0] sm:$0xff]
    %v2089 = vld [vmem:[#allocation2 + $0x4c8] sm:$0xff]
    %v2090 = vld [vmem:[#allocation2 + $0x4d0] sm:$0xff]
    %v2091 = vld [vmem:[#allocation2 + $0x4d8] sm:$0xff]
    %v2092 = vld [vmem:[#allocation2 + $0x4e0] sm:$0xff]
    %v2093 = vld [vmem:[#allocation2 + $0x4e8] sm:$0xff]
    %v2094 = vld [vmem:[#allocation2 + $0x4f0] sm:$0xff]
    %v2095 = vld [vmem:[#allocation2 + $0x4f8] sm:$0xff]
    %v2096 = vunpack.c.l.s8.bf16 %v1936
    %v2097 = vunpack.c.l.s8.bf16 %v1937
    %v2098 = vunpack.c.l.s8.bf16 %v1938
    %v2099 = vunpack.c.l.s8.bf16 %v1939
    %v2100 = vunpack.c.l.s8.bf16 %v1940
    %v2101 = vunpack.c.l.s8.bf16 %v1941
    %v2102 = vunpack.c.l.s8.bf16 %v1942
    %v2103 = vunpack.c.l.s8.bf16 %v1943
    %v2104 = vunpack.c.h.s8.bf16 %v1936
    %v2105 = vunpack.c.h.s8.bf16 %v1937
    %v2106 = vunpack.c.h.s8.bf16 %v1938
    %v2107 = vunpack.c.h.s8.bf16 %v1939
    %v2108 = vunpack.c.h.s8.bf16 %v1940
    %v2109 = vunpack.c.h.s8.bf16 %v1941
    %v2110 = vunpack.c.h.s8.bf16 %v1942
    %v2111 = vunpack.c.h.s8.bf16 %v1943
    %v2112 = vunpack.c.l.s8.bf16 %v1944
    %v2113 = vunpack.c.l.s8.bf16 %v1945
    %v2114 = vunpack.c.l.s8.bf16 %v1946
    %v2115 = vunpack.c.l.s8.bf16 %v1947
    %v2116 = vunpack.c.l.s8.bf16 %v1948
    %v2117 = vunpack.c.l.s8.bf16 %v1949
    %v2118 = vunpack.c.l.s8.bf16 %v1950
    %v2119 = vunpack.c.l.s8.bf16 %v1951
    %v2120 = vunpack.c.h.s8.bf16 %v1944
    %v2121 = vunpack.c.h.s8.bf16 %v1945
    %v2122 = vunpack.c.h.s8.bf16 %v1946
    %v2123 = vunpack.c.h.s8.bf16 %v1947
    %v2124 = vunpack.c.h.s8.bf16 %v1948
    %v2125 = vunpack.c.h.s8.bf16 %v1949
    %v2126 = vunpack.c.h.s8.bf16 %v1950
    %v2127 = vunpack.c.h.s8.bf16 %v1951
    %v2128 = vunpack.c.l.s8.bf16 %v1952
    %v2129 = vunpack.c.l.s8.bf16 %v1953
    %v2130 = vunpack.c.l.s8.bf16 %v1954
    %v2131 = vunpack.c.l.s8.bf16 %v1955
    %v2132 = vunpack.c.l.s8.bf16 %v1956
    %v2133 = vunpack.c.l.s8.bf16 %v1957
    %v2134 = vunpack.c.l.s8.bf16 %v1958
    %v2135 = vunpack.c.l.s8.bf16 %v1959
    %v2136 = vunpack.c.h.s8.bf16 %v1952
    %v2137 = vunpack.c.h.s8.bf16 %v1953
    %v2138 = vunpack.c.h.s8.bf16 %v1954
    %v2139 = vunpack.c.h.s8.bf16 %v1955
    %v2140 = vunpack.c.h.s8.bf16 %v1956
    %v2141 = vunpack.c.h.s8.bf16 %v1957
    %v2142 = vunpack.c.h.s8.bf16 %v1958
    %v2143 = vunpack.c.h.s8.bf16 %v1959
    %v2144 = vunpack.c.l.s8.bf16 %v1960
    %v2145 = vunpack.c.l.s8.bf16 %v1961
    %v2146 = vunpack.c.l.s8.bf16 %v1962
    %v2147 = vunpack.c.l.s8.bf16 %v1963
    %v2148 = vunpack.c.l.s8.bf16 %v1964
    %v2149 = vunpack.c.l.s8.bf16 %v1965
    %v2150 = vunpack.c.l.s8.bf16 %v1966
    %v2151 = vunpack.c.l.s8.bf16 %v1967
    %v2152 = vunpack.c.h.s8.bf16 %v1960
    %v2153 = vunpack.c.h.s8.bf16 %v1961
    %v2154 = vunpack.c.h.s8.bf16 %v1962
    %v2155 = vunpack.c.h.s8.bf16 %v1963
    %v2156 = vunpack.c.h.s8.bf16 %v1964
    %v2157 = vunpack.c.h.s8.bf16 %v1965
    %v2158 = vunpack.c.h.s8.bf16 %v1966
    %v2159 = vunpack.c.h.s8.bf16 %v1967
    %v2160 = vunpack.c.l.s8.bf16 %v1968
    %v2161 = vunpack.c.l.s8.bf16 %v1969
    %v2162 = vunpack.c.l.s8.bf16 %v1970
    %v2163 = vunpack.c.l.s8.bf16 %v1971
    %v2164 = vunpack.c.l.s8.bf16 %v1972
    %v2165 = vunpack.c.l.s8.bf16 %v1973
    %v2166 = vunpack.c.l.s8.bf16 %v1974
    %v2167 = vunpack.c.l.s8.bf16 %v1975
    %v2168 = vunpack.c.h.s8.bf16 %v1968
    %v2169 = vunpack.c.h.s8.bf16 %v1969
    %v2170 = vunpack.c.h.s8.bf16 %v1970
    %v2171 = vunpack.c.h.s8.bf16 %v1971
    %v2172 = vunpack.c.h.s8.bf16 %v1972
    %v2173 = vunpack.c.h.s8.bf16 %v1973
    %v2174 = vunpack.c.h.s8.bf16 %v1974
    %v2175 = vunpack.c.h.s8.bf16 %v1975
    %v2176 = vunpack.c.l.s8.bf16 %v1976
    %v2177 = vunpack.c.l.s8.bf16 %v1977
    %v2178 = vunpack.c.l.s8.bf16 %v1978
    %v2179 = vunpack.c.l.s8.bf16 %v1979
    %v2180 = vunpack.c.l.s8.bf16 %v1980
    %v2181 = vunpack.c.l.s8.bf16 %v1981
    %v2182 = vunpack.c.l.s8.bf16 %v1982
    %v2183 = vunpack.c.l.s8.bf16 %v1983
    %v2184 = vunpack.c.h.s8.bf16 %v1976
    %v2185 = vunpack.c.h.s8.bf16 %v1977
    %v2186 = vunpack.c.h.s8.bf16 %v1978
    %v2187 = vunpack.c.h.s8.bf16 %v1979
    %v2188 = vunpack.c.h.s8.bf16 %v1980
    %v2189 = vunpack.c.h.s8.bf16 %v1981
    %v2190 = vunpack.c.h.s8.bf16 %v1982
    %v2191 = vunpack.c.h.s8.bf16 %v1983
    %v2192 = vunpack.c.l.s8.bf16 %v1984
    %v2193 = vunpack.c.l.s8.bf16 %v1985
    %v2194 = vunpack.c.l.s8.bf16 %v1986
    %v2195 = vunpack.c.l.s8.bf16 %v1987
    %v2196 = vunpack.c.l.s8.bf16 %v1988
    %v2197 = vunpack.c.l.s8.bf16 %v1989
    %v2198 = vunpack.c.l.s8.bf16 %v1990
    %v2199 = vunpack.c.l.s8.bf16 %v1991
    %v2200 = vunpack.c.h.s8.bf16 %v1984
    %v2201 = vunpack.c.h.s8.bf16 %v1985
    %v2202 = vunpack.c.h.s8.bf16 %v1986
    %v2203 = vunpack.c.h.s8.bf16 %v1987
    %v2204 = vunpack.c.h.s8.bf16 %v1988
    %v2205 = vunpack.c.h.s8.bf16 %v1989
    %v2206 = vunpack.c.h.s8.bf16 %v1990
    %v2207 = vunpack.c.h.s8.bf16 %v1991
    %v2208 = vunpack.c.l.s8.bf16 %v1992
    %v2209 = vunpack.c.l.s8.bf16 %v1993
    %v2210 = vunpack.c.l.s8.bf16 %v1994
    %v2211 = vunpack.c.l.s8.bf16 %v1995
    %v2212 = vunpack.c.l.s8.bf16 %v1996
    %v2213 = vunpack.c.l.s8.bf16 %v1997
    %v2214 = vunpack.c.l.s8.bf16 %v1998
    %v2215 = vunpack.c.l.s8.bf16 %v1999
    %v2216 = vunpack.c.h.s8.bf16 %v1992
    %v2217 = vunpack.c.h.s8.bf16 %v1993
    %v2218 = vunpack.c.h.s8.bf16 %v1994
    %v2219 = vunpack.c.h.s8.bf16 %v1995
    %v2220 = vunpack.c.h.s8.bf16 %v1996
    %v2221 = vunpack.c.h.s8.bf16 %v1997
    %v2222 = vunpack.c.h.s8.bf16 %v1998
    %v2223 = vunpack.c.h.s8.bf16 %v1999
    %v2224 = vunpack.c.l.s8.bf16 %v2000
    %v2225 = vunpack.c.l.s8.bf16 %v2001
    %v2226 = vunpack.c.l.s8.bf16 %v2002
    %v2227 = vunpack.c.l.s8.bf16 %v2003
    %v2228 = vunpack.c.l.s8.bf16 %v2004
    %v2229 = vunpack.c.l.s8.bf16 %v2005
    %v2230 = vunpack.c.l.s8.bf16 %v2006
    %v2231 = vunpack.c.l.s8.bf16 %v2007
    %v2232 = vunpack.c.h.s8.bf16 %v2000
    %v2233 = vunpack.c.h.s8.bf16 %v2001
    %v2234 = vunpack.c.h.s8.bf16 %v2002
    %v2235 = vunpack.c.h.s8.bf16 %v2003
    %v2236 = vunpack.c.h.s8.bf16 %v2004
    %v2237 = vunpack.c.h.s8.bf16 %v2005
    %v2238 = vunpack.c.h.s8.bf16 %v2006
    %v2239 = vunpack.c.h.s8.bf16 %v2007
    %v2240 = vunpack.c.l.s8.bf16 %v2008
    %v2241 = vunpack.c.l.s8.bf16 %v2009
    %v2242 = vunpack.c.l.s8.bf16 %v2010
    %v2243 = vunpack.c.l.s8.bf16 %v2011
    %v2244 = vunpack.c.l.s8.bf16 %v2012
    %v2245 = vunpack.c.l.s8.bf16 %v2013
    %v2246 = vunpack.c.l.s8.bf16 %v2014
    %v2247 = vunpack.c.l.s8.bf16 %v2015
    %v2248 = vunpack.c.h.s8.bf16 %v2008
    %v2249 = vunpack.c.h.s8.bf16 %v2009
    %v2250 = vunpack.c.h.s8.bf16 %v2010
    %v2251 = vunpack.c.h.s8.bf16 %v2011
    %v2252 = vunpack.c.h.s8.bf16 %v2012
    %v2253 = vunpack.c.h.s8.bf16 %v2013
    %v2254 = vunpack.c.h.s8.bf16 %v2014
    %v2255 = vunpack.c.h.s8.bf16 %v2015
    %v2256 = vunpack.c.l.s8.bf16 %v2016
    %v2257 = vunpack.c.l.s8.bf16 %v2017
    %v2258 = vunpack.c.l.s8.bf16 %v2018
    %v2259 = vunpack.c.l.s8.bf16 %v2019
    %v2260 = vunpack.c.l.s8.bf16 %v2020
    %v2261 = vunpack.c.l.s8.bf16 %v2021
    %v2262 = vunpack.c.l.s8.bf16 %v2022
    %v2263 = vunpack.c.l.s8.bf16 %v2023
    %v2264 = vunpack.c.h.s8.bf16 %v2016
    %v2265 = vunpack.c.h.s8.bf16 %v2017
    %v2266 = vunpack.c.h.s8.bf16 %v2018
    %v2267 = vunpack.c.h.s8.bf16 %v2019
    %v2268 = vunpack.c.h.s8.bf16 %v2020
    %v2269 = vunpack.c.h.s8.bf16 %v2021
    %v2270 = vunpack.c.h.s8.bf16 %v2022
    %v2271 = vunpack.c.h.s8.bf16 %v2023
    %v2272 = vunpack.c.l.s8.bf16 %v2024
    %v2273 = vunpack.c.l.s8.bf16 %v2025
    %v2274 = vunpack.c.l.s8.bf16 %v2026
    %v2275 = vunpack.c.l.s8.bf16 %v2027
    %v2276 = vunpack.c.l.s8.bf16 %v2028
    %v2277 = vunpack.c.l.s8.bf16 %v2029
    %v2278 = vunpack.c.l.s8.bf16 %v2030
    %v2279 = vunpack.c.l.s8.bf16 %v2031
    %v2280 = vunpack.c.h.s8.bf16 %v2024
    %v2281 = vunpack.c.h.s8.bf16 %v2025
    %v2282 = vunpack.c.h.s8.bf16 %v2026
    %v2283 = vunpack.c.h.s8.bf16 %v2027
    %v2284 = vunpack.c.h.s8.bf16 %v2028
    %v2285 = vunpack.c.h.s8.bf16 %v2029
    %v2286 = vunpack.c.h.s8.bf16 %v2030
    %v2287 = vunpack.c.h.s8.bf16 %v2031
    %v2288 = vunpack.c.l.s8.bf16 %v2032
    %v2289 = vunpack.c.l.s8.bf16 %v2033
    %v2290 = vunpack.c.l.s8.bf16 %v2034
    %v2291 = vunpack.c.l.s8.bf16 %v2035
    %v2292 = vunpack.c.l.s8.bf16 %v2036
    %v2293 = vunpack.c.l.s8.bf16 %v2037
    %v2294 = vunpack.c.l.s8.bf16 %v2038
    %v2295 = vunpack.c.l.s8.bf16 %v2039
    %v2296 = vunpack.c.h.s8.bf16 %v2032
    %v2297 = vunpack.c.h.s8.bf16 %v2033
    %v2298 = vunpack.c.h.s8.bf16 %v2034
    %v2299 = vunpack.c.h.s8.bf16 %v2035
    %v2300 = vunpack.c.h.s8.bf16 %v2036
    %v2301 = vunpack.c.h.s8.bf16 %v2037
    %v2302 = vunpack.c.h.s8.bf16 %v2038
    %v2303 = vunpack.c.h.s8.bf16 %v2039
    %v2304 = vunpack.c.l.s8.bf16 %v2040
    %v2305 = vunpack.c.l.s8.bf16 %v2041
    %v2306 = vunpack.c.l.s8.bf16 %v2042
    %v2307 = vunpack.c.l.s8.bf16 %v2043
    %v2308 = vunpack.c.l.s8.bf16 %v2044
    %v2309 = vunpack.c.l.s8.bf16 %v2045
    %v2310 = vunpack.c.l.s8.bf16 %v2046
    %v2311 = vunpack.c.l.s8.bf16 %v2047
    %v2312 = vunpack.c.h.s8.bf16 %v2040
    %v2313 = vunpack.c.h.s8.bf16 %v2041
    %v2314 = vunpack.c.h.s8.bf16 %v2042
    %v2315 = vunpack.c.h.s8.bf16 %v2043
    %v2316 = vunpack.c.h.s8.bf16 %v2044
    %v2317 = vunpack.c.h.s8.bf16 %v2045
    %v2318 = vunpack.c.h.s8.bf16 %v2046
    %v2319 = vunpack.c.h.s8.bf16 %v2047
    %v2320 = vunpack.c.l.s8.bf16 %v2048
    %v2321 = vunpack.c.l.s8.bf16 %v2049
    %v2322 = vunpack.c.l.s8.bf16 %v2050
    %v2323 = vunpack.c.l.s8.bf16 %v2051
    %v2324 = vunpack.c.l.s8.bf16 %v2052
    %v2325 = vunpack.c.l.s8.bf16 %v2053
    %v2326 = vunpack.c.l.s8.bf16 %v2054
    %v2327 = vunpack.c.l.s8.bf16 %v2055
    %v2328 = vunpack.c.h.s8.bf16 %v2048
    %v2329 = vunpack.c.h.s8.bf16 %v2049
    %v2330 = vunpack.c.h.s8.bf16 %v2050
    %v2331 = vunpack.c.h.s8.bf16 %v2051
    %v2332 = vunpack.c.h.s8.bf16 %v2052
    %v2333 = vunpack.c.h.s8.bf16 %v2053
    %v2334 = vunpack.c.h.s8.bf16 %v2054
    %v2335 = vunpack.c.h.s8.bf16 %v2055
    %v2336 = vunpack.c.l.s8.bf16 %v2056
    %v2337 = vunpack.c.l.s8.bf16 %v2057
    %v2338 = vunpack.c.l.s8.bf16 %v2058
    %v2339 = vunpack.c.l.s8.bf16 %v2059
    %v2340 = vunpack.c.l.s8.bf16 %v2060
    %v2341 = vunpack.c.l.s8.bf16 %v2061
    %v2342 = vunpack.c.l.s8.bf16 %v2062
    %v2343 = vunpack.c.l.s8.bf16 %v2063
    %v2344 = vunpack.c.h.s8.bf16 %v2056
    %v2345 = vunpack.c.h.s8.bf16 %v2057
    %v2346 = vunpack.c.h.s8.bf16 %v2058
    %v2347 = vunpack.c.h.s8.bf16 %v2059
    %v2348 = vunpack.c.h.s8.bf16 %v2060
    %v2349 = vunpack.c.h.s8.bf16 %v2061
    %v2350 = vunpack.c.h.s8.bf16 %v2062
    %v2351 = vunpack.c.h.s8.bf16 %v2063
    %v2352 = vunpack.c.l.s8.bf16 %v2064
    %v2353 = vunpack.c.l.s8.bf16 %v2065
    %v2354 = vunpack.c.l.s8.bf16 %v2066
    %v2355 = vunpack.c.l.s8.bf16 %v2067
    %v2356 = vunpack.c.l.s8.bf16 %v2068
    %v2357 = vunpack.c.l.s8.bf16 %v2069
    %v2358 = vunpack.c.l.s8.bf16 %v2070
    %v2359 = vunpack.c.l.s8.bf16 %v2071
    %v2360 = vunpack.c.h.s8.bf16 %v2064
    %v2361 = vunpack.c.h.s8.bf16 %v2065
    %v2362 = vunpack.c.h.s8.bf16 %v2066
    %v2363 = vunpack.c.h.s8.bf16 %v2067
    %v2364 = vunpack.c.h.s8.bf16 %v2068
    %v2365 = vunpack.c.h.s8.bf16 %v2069
    %v2366 = vunpack.c.h.s8.bf16 %v2070
    %v2367 = vunpack.c.h.s8.bf16 %v2071
    %v2368 = vunpack.c.l.s8.bf16 %v2072
    %v2369 = vunpack.c.l.s8.bf16 %v2073
    %v2370 = vunpack.c.l.s8.bf16 %v2074
    %v2371 = vunpack.c.l.s8.bf16 %v2075
    %v2372 = vunpack.c.l.s8.bf16 %v2076
    %v2373 = vunpack.c.l.s8.bf16 %v2077
    %v2374 = vunpack.c.l.s8.bf16 %v2078
    %v2375 = vunpack.c.l.s8.bf16 %v2079
    %v2376 = vunpack.c.h.s8.bf16 %v2072
    %v2377 = vunpack.c.h.s8.bf16 %v2073
    %v2378 = vunpack.c.h.s8.bf16 %v2074
    %v2379 = vunpack.c.h.s8.bf16 %v2075
    %v2380 = vunpack.c.h.s8.bf16 %v2076
    %v2381 = vunpack.c.h.s8.bf16 %v2077
    %v2382 = vunpack.c.h.s8.bf16 %v2078
    %v2383 = vunpack.c.h.s8.bf16 %v2079
    %v2384 = vunpack.c.l.s8.bf16 %v2080
    %v2385 = vunpack.c.l.s8.bf16 %v2081
    %v2386 = vunpack.c.l.s8.bf16 %v2082
    %v2387 = vunpack.c.l.s8.bf16 %v2083
    %v2388 = vunpack.c.l.s8.bf16 %v2084
    %v2389 = vunpack.c.l.s8.bf16 %v2085
    %v2390 = vunpack.c.l.s8.bf16 %v2086
    %v2391 = vunpack.c.l.s8.bf16 %v2087
    %v2392 = vunpack.c.h.s8.bf16 %v2080
    %v2393 = vunpack.c.h.s8.bf16 %v2081
    %v2394 = vunpack.c.h.s8.bf16 %v2082
    %v2395 = vunpack.c.h.s8.bf16 %v2083
    %v2396 = vunpack.c.h.s8.bf16 %v2084
    %v2397 = vunpack.c.h.s8.bf16 %v2085
    %v2398 = vunpack.c.h.s8.bf16 %v2086
    %v2399 = vunpack.c.h.s8.bf16 %v2087
    %v2400 = vunpack.c.l.s8.bf16 %v2088
    %v2401 = vunpack.c.l.s8.bf16 %v2089
    %v2402 = vunpack.c.l.s8.bf16 %v2090
    %v2403 = vunpack.c.l.s8.bf16 %v2091
    %v2404 = vunpack.c.l.s8.bf16 %v2092
    %v2405 = vunpack.c.l.s8.bf16 %v2093
    %v2406 = vunpack.c.l.s8.bf16 %v2094
    %v2407 = vunpack.c.l.s8.bf16 %v2095
    %v2408 = vunpack.c.h.s8.bf16 %v2088
    %v2409 = vunpack.c.h.s8.bf16 %v2089
    %v2410 = vunpack.c.h.s8.bf16 %v2090
    %v2411 = vunpack.c.h.s8.bf16 %v2091
    %v2412 = vunpack.c.h.s8.bf16 %v2092
    %v2413 = vunpack.c.h.s8.bf16 %v2093
    %v2414 = vunpack.c.h.s8.bf16 %v2094
    %v2415 = vunpack.c.h.s8.bf16 %v2095
    %s2416 = sshll.u32 %s1933, 4
    %2417 = dma.done %s355, %s2416
    %v2418 = vld [vmem:[#allocation3] sm:$0xff]
    %v2419 = vld [vmem:[#allocation3 + $0x8] sm:$0xff]
    %v2420 = vld [vmem:[#allocation3 + $0x10] sm:$0xff]
    %v2421 = vld [vmem:[#allocation3 + $0x18] sm:$0xff]
    %v2422 = vld [vmem:[#allocation3 + $0x20] sm:$0xff]
    %v2423 = vld [vmem:[#allocation3 + $0x28] sm:$0xff]
    %v2424 = vld [vmem:[#allocation3 + $0x30] sm:$0xff]
    %v2425 = vld [vmem:[#allocation3 + $0x38] sm:$0xff]
    %v2426 = vld [vmem:[#allocation3 + $0x40] sm:$0xff]
    %v2427 = vld [vmem:[#allocation3 + $0x48] sm:$0xff]
    %v2428 = vld [vmem:[#allocation3 + $0x50] sm:$0xff]
    %v2429 = vld [vmem:[#allocation3 + $0x58] sm:$0xff]
    %v2430 = vld [vmem:[#allocation3 + $0x60] sm:$0xff]
    %v2431 = vld [vmem:[#allocation3 + $0x68] sm:$0xff]
    %v2432 = vld [vmem:[#allocation3 + $0x70] sm:$0xff]
    %v2433 = vld [vmem:[#allocation3 + $0x78] sm:$0xff]
    %v2434 = vld [vmem:[#allocation3 + $0x80] sm:$0xff]
    %v2435 = vld [vmem:[#allocation3 + $0x88] sm:$0xff]
    %v2436 = vld [vmem:[#allocation3 + $0x90] sm:$0xff]
    %v2437 = vld [vmem:[#allocation3 + $0x98] sm:$0xff]
    %v2438 = vld [vmem:[#allocation3 + $0xa0] sm:$0xff]
    %v2439 = vld [vmem:[#allocation3 + $0xa8] sm:$0xff]
    %v2440 = vld [vmem:[#allocation3 + $0xb0] sm:$0xff]
    %v2441 = vld [vmem:[#allocation3 + $0xb8] sm:$0xff]
    %v2442 = vld [vmem:[#allocation3 + $0xc0] sm:$0xff]
    %v2443 = vld [vmem:[#allocation3 + $0xc8] sm:$0xff]
    %v2444 = vld [vmem:[#allocation3 + $0xd0] sm:$0xff]
    %v2445 = vld [vmem:[#allocation3 + $0xd8] sm:$0xff]
    %v2446 = vld [vmem:[#allocation3 + $0xe0] sm:$0xff]
    %v2447 = vld [vmem:[#allocation3 + $0xe8] sm:$0xff]
    %v2448 = vld [vmem:[#allocation3 + $0xf0] sm:$0xff]
    %v2449 = vld [vmem:[#allocation3 + $0xf8] sm:$0xff]
    %v2450 = vld [vmem:[#allocation3 + $0x100] sm:$0xff]
    %v2451 = vld [vmem:[#allocation3 + $0x108] sm:$0xff]
    %v2452 = vld [vmem:[#allocation3 + $0x110] sm:$0xff]
    %v2453 = vld [vmem:[#allocation3 + $0x118] sm:$0xff]
    %v2454 = vld [vmem:[#allocation3 + $0x120] sm:$0xff]
    %v2455 = vld [vmem:[#allocation3 + $0x128] sm:$0xff]
    %v2456 = vld [vmem:[#allocation3 + $0x130] sm:$0xff]
    %v2457 = vld [vmem:[#allocation3 + $0x138] sm:$0xff]
    %v2458 = vld [vmem:[#allocation3 + $0x140] sm:$0xff]
    %v2459 = vld [vmem:[#allocation3 + $0x148] sm:$0xff]
    %v2460 = vld [vmem:[#allocation3 + $0x150] sm:$0xff]
    %v2461 = vld [vmem:[#allocation3 + $0x158] sm:$0xff]
    %v2462 = vld [vmem:[#allocation3 + $0x160] sm:$0xff]
    %v2463 = vld [vmem:[#allocation3 + $0x168] sm:$0xff]
    %v2464 = vld [vmem:[#allocation3 + $0x170] sm:$0xff]
    %v2465 = vld [vmem:[#allocation3 + $0x178] sm:$0xff]
    %v2466 = vld [vmem:[#allocation3 + $0x180] sm:$0xff]
    %v2467 = vld [vmem:[#allocation3 + $0x188] sm:$0xff]
    %v2468 = vld [vmem:[#allocation3 + $0x190] sm:$0xff]
    %v2469 = vld [vmem:[#allocation3 + $0x198] sm:$0xff]
    %v2470 = vld [vmem:[#allocation3 + $0x1a0] sm:$0xff]
    %v2471 = vld [vmem:[#allocation3 + $0x1a8] sm:$0xff]
    %v2472 = vld [vmem:[#allocation3 + $0x1b0] sm:$0xff]
    %v2473 = vld [vmem:[#allocation3 + $0x1b8] sm:$0xff]
    %v2474 = vld [vmem:[#allocation3 + $0x1c0] sm:$0xff]
    %v2475 = vld [vmem:[#allocation3 + $0x1c8] sm:$0xff]
    %v2476 = vld [vmem:[#allocation3 + $0x1d0] sm:$0xff]
    %v2477 = vld [vmem:[#allocation3 + $0x1d8] sm:$0xff]
    %v2478 = vld [vmem:[#allocation3 + $0x1e0] sm:$0xff]
    %v2479 = vld [vmem:[#allocation3 + $0x1e8] sm:$0xff]
    %v2480 = vld [vmem:[#allocation3 + $0x1f0] sm:$0xff]
    %v2481 = vld [vmem:[#allocation3 + $0x1f8] sm:$0xff]
    %v2482 = vld [vmem:[#allocation3 + $0x200] sm:$0xff]
    %v2483 = vld [vmem:[#allocation3 + $0x208] sm:$0xff]
    %v2484 = vld [vmem:[#allocation3 + $0x210] sm:$0xff]
    %v2485 = vld [vmem:[#allocation3 + $0x218] sm:$0xff]
    %v2486 = vld [vmem:[#allocation3 + $0x220] sm:$0xff]
    %v2487 = vld [vmem:[#allocation3 + $0x228] sm:$0xff]
    %v2488 = vld [vmem:[#allocation3 + $0x230] sm:$0xff]
    %v2489 = vld [vmem:[#allocation3 + $0x238] sm:$0xff]
    %v2490 = vld [vmem:[#allocation3 + $0x240] sm:$0xff]
    %v2491 = vld [vmem:[#allocation3 + $0x248] sm:$0xff]
    %v2492 = vld [vmem:[#allocation3 + $0x250] sm:$0xff]
    %v2493 = vld [vmem:[#allocation3 + $0x258] sm:$0xff]
    %v2494 = vld [vmem:[#allocation3 + $0x260] sm:$0xff]
    %v2495 = vld [vmem:[#allocation3 + $0x268] sm:$0xff]
    %v2496 = vld [vmem:[#allocation3 + $0x270] sm:$0xff]
    %v2497 = vld [vmem:[#allocation3 + $0x278] sm:$0xff]
    %v2498 = vld [vmem:[#allocation3 + $0x280] sm:$0xff]
    %v2499 = vld [vmem:[#allocation3 + $0x288] sm:$0xff]
    %v2500 = vld [vmem:[#allocation3 + $0x290] sm:$0xff]
    %v2501 = vld [vmem:[#allocation3 + $0x298] sm:$0xff]
    %v2502 = vld [vmem:[#allocation3 + $0x2a0] sm:$0xff]
    %v2503 = vld [vmem:[#allocation3 + $0x2a8] sm:$0xff]
    %v2504 = vld [vmem:[#allocation3 + $0x2b0] sm:$0xff]
    %v2505 = vld [vmem:[#allocation3 + $0x2b8] sm:$0xff]
    %v2506 = vld [vmem:[#allocation3 + $0x2c0] sm:$0xff]
    %v2507 = vld [vmem:[#allocation3 + $0x2c8] sm:$0xff]
    %v2508 = vld [vmem:[#allocation3 + $0x2d0] sm:$0xff]
    %v2509 = vld [vmem:[#allocation3 + $0x2d8] sm:$0xff]
    %v2510 = vld [vmem:[#allocation3 + $0x2e0] sm:$0xff]
    %v2511 = vld [vmem:[#allocation3 + $0x2e8] sm:$0xff]
    %v2512 = vld [vmem:[#allocation3 + $0x2f0] sm:$0xff]
    %v2513 = vld [vmem:[#allocation3 + $0x2f8] sm:$0xff]
    %v2514 = vld [vmem:[#allocation3 + $0x300] sm:$0xff]
    %v2515 = vld [vmem:[#allocation3 + $0x308] sm:$0xff]
    %v2516 = vld [vmem:[#allocation3 + $0x310] sm:$0xff]
    %v2517 = vld [vmem:[#allocation3 + $0x318] sm:$0xff]
    %v2518 = vld [vmem:[#allocation3 + $0x320] sm:$0xff]
    %v2519 = vld [vmem:[#allocation3 + $0x328] sm:$0xff]
    %v2520 = vld [vmem:[#allocation3 + $0x330] sm:$0xff]
    %v2521 = vld [vmem:[#allocation3 + $0x338] sm:$0xff]
    %v2522 = vld [vmem:[#allocation3 + $0x340] sm:$0xff]
    %v2523 = vld [vmem:[#allocation3 + $0x348] sm:$0xff]
    %v2524 = vld [vmem:[#allocation3 + $0x350] sm:$0xff]
    %v2525 = vld [vmem:[#allocation3 + $0x358] sm:$0xff]
    %v2526 = vld [vmem:[#allocation3 + $0x360] sm:$0xff]
    %v2527 = vld [vmem:[#allocation3 + $0x368] sm:$0xff]
    %v2528 = vld [vmem:[#allocation3 + $0x370] sm:$0xff]
    %v2529 = vld [vmem:[#allocation3 + $0x378] sm:$0xff]
    %v2530 = vld [vmem:[#allocation3 + $0x380] sm:$0xff]
    %v2531 = vld [vmem:[#allocation3 + $0x388] sm:$0xff]
    %v2532 = vld [vmem:[#allocation3 + $0x390] sm:$0xff]
    %v2533 = vld [vmem:[#allocation3 + $0x398] sm:$0xff]
    %v2534 = vld [vmem:[#allocation3 + $0x3a0] sm:$0xff]
    %v2535 = vld [vmem:[#allocation3 + $0x3a8] sm:$0xff]
    %v2536 = vld [vmem:[#allocation3 + $0x3b0] sm:$0xff]
    %v2537 = vld [vmem:[#allocation3 + $0x3b8] sm:$0xff]
    %v2538 = vld [vmem:[#allocation3 + $0x3c0] sm:$0xff]
    %v2539 = vld [vmem:[#allocation3 + $0x3c8] sm:$0xff]
    %v2540 = vld [vmem:[#allocation3 + $0x3d0] sm:$0xff]
    %v2541 = vld [vmem:[#allocation3 + $0x3d8] sm:$0xff]
    %v2542 = vld [vmem:[#allocation3 + $0x3e0] sm:$0xff]
    %v2543 = vld [vmem:[#allocation3 + $0x3e8] sm:$0xff]
    %v2544 = vld [vmem:[#allocation3 + $0x3f0] sm:$0xff]
    %v2545 = vld [vmem:[#allocation3 + $0x3f8] sm:$0xff]
    %v2546 = vld [vmem:[#allocation3 + $0x400] sm:$0xff]
    %v2547 = vld [vmem:[#allocation3 + $0x408] sm:$0xff]
    %v2548 = vld [vmem:[#allocation3 + $0x410] sm:$0xff]
    %v2549 = vld [vmem:[#allocation3 + $0x418] sm:$0xff]
    %v2550 = vld [vmem:[#allocation3 + $0x420] sm:$0xff]
    %v2551 = vld [vmem:[#allocation3 + $0x428] sm:$0xff]
    %v2552 = vld [vmem:[#allocation3 + $0x430] sm:$0xff]
    %v2553 = vld [vmem:[#allocation3 + $0x438] sm:$0xff]
    %v2554 = vld [vmem:[#allocation3 + $0x440] sm:$0xff]
    %v2555 = vld [vmem:[#allocation3 + $0x448] sm:$0xff]
    %v2556 = vld [vmem:[#allocation3 + $0x450] sm:$0xff]
    %v2557 = vld [vmem:[#allocation3 + $0x458] sm:$0xff]
    %v2558 = vld [vmem:[#allocation3 + $0x460] sm:$0xff]
    %v2559 = vld [vmem:[#allocation3 + $0x468] sm:$0xff]
    %v2560 = vld [vmem:[#allocation3 + $0x470] sm:$0xff]
    %v2561 = vld [vmem:[#allocation3 + $0x478] sm:$0xff]
    %v2562 = vld [vmem:[#allocation3 + $0x480] sm:$0xff]
    %v2563 = vld [vmem:[#allocation3 + $0x488] sm:$0xff]
    %v2564 = vld [vmem:[#allocation3 + $0x490] sm:$0xff]
    %v2565 = vld [vmem:[#allocation3 + $0x498] sm:$0xff]
    %v2566 = vld [vmem:[#allocation3 + $0x4a0] sm:$0xff]
    %v2567 = vld [vmem:[#allocation3 + $0x4a8] sm:$0xff]
    %v2568 = vld [vmem:[#allocation3 + $0x4b0] sm:$0xff]
    %v2569 = vld [vmem:[#allocation3 + $0x4b8] sm:$0xff]
    %v2570 = vld [vmem:[#allocation3 + $0x4c0] sm:$0xff]
    %v2571 = vld [vmem:[#allocation3 + $0x4c8] sm:$0xff]
    %v2572 = vld [vmem:[#allocation3 + $0x4d0] sm:$0xff]
    %v2573 = vld [vmem:[#allocation3 + $0x4d8] sm:$0xff]
    %v2574 = vld [vmem:[#allocation3 + $0x4e0] sm:$0xff]
    %v2575 = vld [vmem:[#allocation3 + $0x4e8] sm:$0xff]
    %v2576 = vld [vmem:[#allocation3 + $0x4f0] sm:$0xff]
    %v2577 = vld [vmem:[#allocation3 + $0x4f8] sm:$0xff]
    %v2578 = vunpack.c.l.s8.bf16 %v2418
    %v2579 = vunpack.c.l.s8.bf16 %v2419
    %v2580 = vunpack.c.l.s8.bf16 %v2420
    %v2581 = vunpack.c.l.s8.bf16 %v2421
    %v2582 = vunpack.c.l.s8.bf16 %v2422
    %v2583 = vunpack.c.l.s8.bf16 %v2423
    %v2584 = vunpack.c.l.s8.bf16 %v2424
    %v2585 = vunpack.c.l.s8.bf16 %v2425
    %v2586 = vunpack.c.h.s8.bf16 %v2418
    %v2587 = vunpack.c.h.s8.bf16 %v2419
    %v2588 = vunpack.c.h.s8.bf16 %v2420
    %v2589 = vunpack.c.h.s8.bf16 %v2421
    %v2590 = vunpack.c.h.s8.bf16 %v2422
    %v2591 = vunpack.c.h.s8.bf16 %v2423
    %v2592 = vunpack.c.h.s8.bf16 %v2424
    %v2593 = vunpack.c.h.s8.bf16 %v2425
    %v2594 = vunpack.c.l.s8.bf16 %v2426
    %v2595 = vunpack.c.l.s8.bf16 %v2427
    %v2596 = vunpack.c.l.s8.bf16 %v2428
    %v2597 = vunpack.c.l.s8.bf16 %v2429
    %v2598 = vunpack.c.l.s8.bf16 %v2430
    %v2599 = vunpack.c.l.s8.bf16 %v2431
    %v2600 = vunpack.c.l.s8.bf16 %v2432
    %v2601 = vunpack.c.l.s8.bf16 %v2433
    %v2602 = vunpack.c.h.s8.bf16 %v2426
    %v2603 = vunpack.c.h.s8.bf16 %v2427
    %v2604 = vunpack.c.h.s8.bf16 %v2428
    %v2605 = vunpack.c.h.s8.bf16 %v2429
    %v2606 = vunpack.c.h.s8.bf16 %v2430
    %v2607 = vunpack.c.h.s8.bf16 %v2431
    %v2608 = vunpack.c.h.s8.bf16 %v2432
    %v2609 = vunpack.c.h.s8.bf16 %v2433
    %v2610 = vunpack.c.l.s8.bf16 %v2434
    %v2611 = vunpack.c.l.s8.bf16 %v2435
    %v2612 = vunpack.c.l.s8.bf16 %v2436
    %v2613 = vunpack.c.l.s8.bf16 %v2437
    %v2614 = vunpack.c.l.s8.bf16 %v2438
    %v2615 = vunpack.c.l.s8.bf16 %v2439
    %v2616 = vunpack.c.l.s8.bf16 %v2440
    %v2617 = vunpack.c.l.s8.bf16 %v2441
    %v2618 = vunpack.c.h.s8.bf16 %v2434
    %v2619 = vunpack.c.h.s8.bf16 %v2435
    %v2620 = vunpack.c.h.s8.bf16 %v2436
    %v2621 = vunpack.c.h.s8.bf16 %v2437
    %v2622 = vunpack.c.h.s8.bf16 %v2438
    %v2623 = vunpack.c.h.s8.bf16 %v2439
    %v2624 = vunpack.c.h.s8.bf16 %v2440
    %v2625 = vunpack.c.h.s8.bf16 %v2441
    %v2626 = vunpack.c.l.s8.bf16 %v2442
    %v2627 = vunpack.c.l.s8.bf16 %v2443
    %v2628 = vunpack.c.l.s8.bf16 %v2444
    %v2629 = vunpack.c.l.s8.bf16 %v2445
    %v2630 = vunpack.c.l.s8.bf16 %v2446
    %v2631 = vunpack.c.l.s8.bf16 %v2447
    %v2632 = vunpack.c.l.s8.bf16 %v2448
    %v2633 = vunpack.c.l.s8.bf16 %v2449
    %v2634 = vunpack.c.h.s8.bf16 %v2442
    %v2635 = vunpack.c.h.s8.bf16 %v2443
    %v2636 = vunpack.c.h.s8.bf16 %v2444
    %v2637 = vunpack.c.h.s8.bf16 %v2445
    %v2638 = vunpack.c.h.s8.bf16 %v2446
    %v2639 = vunpack.c.h.s8.bf16 %v2447
    %v2640 = vunpack.c.h.s8.bf16 %v2448
    %v2641 = vunpack.c.h.s8.bf16 %v2449
    %v2642 = vunpack.c.l.s8.bf16 %v2450
    %v2643 = vunpack.c.l.s8.bf16 %v2451
    %v2644 = vunpack.c.l.s8.bf16 %v2452
    %v2645 = vunpack.c.l.s8.bf16 %v2453
    %v2646 = vunpack.c.l.s8.bf16 %v2454
    %v2647 = vunpack.c.l.s8.bf16 %v2455
    %v2648 = vunpack.c.l.s8.bf16 %v2456
    %v2649 = vunpack.c.l.s8.bf16 %v2457
    %v2650 = vunpack.c.h.s8.bf16 %v2450
    %v2651 = vunpack.c.h.s8.bf16 %v2451
    %v2652 = vunpack.c.h.s8.bf16 %v2452
    %v2653 = vunpack.c.h.s8.bf16 %v2453
    %v2654 = vunpack.c.h.s8.bf16 %v2454
    %v2655 = vunpack.c.h.s8.bf16 %v2455
    %v2656 = vunpack.c.h.s8.bf16 %v2456
    %v2657 = vunpack.c.h.s8.bf16 %v2457
    %v2658 = vunpack.c.l.s8.bf16 %v2458
    %v2659 = vunpack.c.l.s8.bf16 %v2459
    %v2660 = vunpack.c.l.s8.bf16 %v2460
    %v2661 = vunpack.c.l.s8.bf16 %v2461
    %v2662 = vunpack.c.l.s8.bf16 %v2462
    %v2663 = vunpack.c.l.s8.bf16 %v2463
    %v2664 = vunpack.c.l.s8.bf16 %v2464
    %v2665 = vunpack.c.l.s8.bf16 %v2465
    %v2666 = vunpack.c.h.s8.bf16 %v2458
    %v2667 = vunpack.c.h.s8.bf16 %v2459
    %v2668 = vunpack.c.h.s8.bf16 %v2460
    %v2669 = vunpack.c.h.s8.bf16 %v2461
    %v2670 = vunpack.c.h.s8.bf16 %v2462
    %v2671 = vunpack.c.h.s8.bf16 %v2463
    %v2672 = vunpack.c.h.s8.bf16 %v2464
    %v2673 = vunpack.c.h.s8.bf16 %v2465
    %v2674 = vunpack.c.l.s8.bf16 %v2466
    %v2675 = vunpack.c.l.s8.bf16 %v2467
    %v2676 = vunpack.c.l.s8.bf16 %v2468
    %v2677 = vunpack.c.l.s8.bf16 %v2469
    %v2678 = vunpack.c.l.s8.bf16 %v2470
    %v2679 = vunpack.c.l.s8.bf16 %v2471
    %v2680 = vunpack.c.l.s8.bf16 %v2472
    %v2681 = vunpack.c.l.s8.bf16 %v2473
    %v2682 = vunpack.c.h.s8.bf16 %v2466
    %v2683 = vunpack.c.h.s8.bf16 %v2467
    %v2684 = vunpack.c.h.s8.bf16 %v2468
    %v2685 = vunpack.c.h.s8.bf16 %v2469
    %v2686 = vunpack.c.h.s8.bf16 %v2470
    %v2687 = vunpack.c.h.s8.bf16 %v2471
    %v2688 = vunpack.c.h.s8.bf16 %v2472
    %v2689 = vunpack.c.h.s8.bf16 %v2473
    %v2690 = vunpack.c.l.s8.bf16 %v2474
    %v2691 = vunpack.c.l.s8.bf16 %v2475
    %v2692 = vunpack.c.l.s8.bf16 %v2476
    %v2693 = vunpack.c.l.s8.bf16 %v2477
    %v2694 = vunpack.c.l.s8.bf16 %v2478
    %v2695 = vunpack.c.l.s8.bf16 %v2479
    %v2696 = vunpack.c.l.s8.bf16 %v2480
    %v2697 = vunpack.c.l.s8.bf16 %v2481
    %v2698 = vunpack.c.h.s8.bf16 %v2474
    %v2699 = vunpack.c.h.s8.bf16 %v2475
    %v2700 = vunpack.c.h.s8.bf16 %v2476
    %v2701 = vunpack.c.h.s8.bf16 %v2477
    %v2702 = vunpack.c.h.s8.bf16 %v2478
    %v2703 = vunpack.c.h.s8.bf16 %v2479
    %v2704 = vunpack.c.h.s8.bf16 %v2480
    %v2705 = vunpack.c.h.s8.bf16 %v2481
    %v2706 = vunpack.c.l.s8.bf16 %v2482
    %v2707 = vunpack.c.l.s8.bf16 %v2483
    %v2708 = vunpack.c.l.s8.bf16 %v2484
    %v2709 = vunpack.c.l.s8.bf16 %v2485
    %v2710 = vunpack.c.l.s8.bf16 %v2486
    %v2711 = vunpack.c.l.s8.bf16 %v2487
    %v2712 = vunpack.c.l.s8.bf16 %v2488
    %v2713 = vunpack.c.l.s8.bf16 %v2489
    %v2714 = vunpack.c.h.s8.bf16 %v2482
    %v2715 = vunpack.c.h.s8.bf16 %v2483
    %v2716 = vunpack.c.h.s8.bf16 %v2484
    %v2717 = vunpack.c.h.s8.bf16 %v2485
    %v2718 = vunpack.c.h.s8.bf16 %v2486
    %v2719 = vunpack.c.h.s8.bf16 %v2487
    %v2720 = vunpack.c.h.s8.bf16 %v2488
    %v2721 = vunpack.c.h.s8.bf16 %v2489
    %v2722 = vunpack.c.l.s8.bf16 %v2490
    %v2723 = vunpack.c.l.s8.bf16 %v2491
    %v2724 = vunpack.c.l.s8.bf16 %v2492
    %v2725 = vunpack.c.l.s8.bf16 %v2493
    %v2726 = vunpack.c.l.s8.bf16 %v2494
    %v2727 = vunpack.c.l.s8.bf16 %v2495
    %v2728 = vunpack.c.l.s8.bf16 %v2496
    %v2729 = vunpack.c.l.s8.bf16 %v2497
    %v2730 = vunpack.c.h.s8.bf16 %v2490
    %v2731 = vunpack.c.h.s8.bf16 %v2491
    %v2732 = vunpack.c.h.s8.bf16 %v2492
    %v2733 = vunpack.c.h.s8.bf16 %v2493
    %v2734 = vunpack.c.h.s8.bf16 %v2494
    %v2735 = vunpack.c.h.s8.bf16 %v2495
    %v2736 = vunpack.c.h.s8.bf16 %v2496
    %v2737 = vunpack.c.h.s8.bf16 %v2497
    %v2738 = vunpack.c.l.s8.bf16 %v2498
    %v2739 = vunpack.c.l.s8.bf16 %v2499
    %v2740 = vunpack.c.l.s8.bf16 %v2500
    %v2741 = vunpack.c.l.s8.bf16 %v2501
    %v2742 = vunpack.c.l.s8.bf16 %v2502
    %v2743 = vunpack.c.l.s8.bf16 %v2503
    %v2744 = vunpack.c.l.s8.bf16 %v2504
    %v2745 = vunpack.c.l.s8.bf16 %v2505
    %v2746 = vunpack.c.h.s8.bf16 %v2498
    %v2747 = vunpack.c.h.s8.bf16 %v2499
    %v2748 = vunpack.c.h.s8.bf16 %v2500
    %v2749 = vunpack.c.h.s8.bf16 %v2501
    %v2750 = vunpack.c.h.s8.bf16 %v2502
    %v2751 = vunpack.c.h.s8.bf16 %v2503
    %v2752 = vunpack.c.h.s8.bf16 %v2504
    %v2753 = vunpack.c.h.s8.bf16 %v2505
    %v2754 = vunpack.c.l.s8.bf16 %v2506
    %v2755 = vunpack.c.l.s8.bf16 %v2507
    %v2756 = vunpack.c.l.s8.bf16 %v2508
    %v2757 = vunpack.c.l.s8.bf16 %v2509
    %v2758 = vunpack.c.l.s8.bf16 %v2510
    %v2759 = vunpack.c.l.s8.bf16 %v2511
    %v2760 = vunpack.c.l.s8.bf16 %v2512
    %v2761 = vunpack.c.l.s8.bf16 %v2513
    %v2762 = vunpack.c.h.s8.bf16 %v2506
    %v2763 = vunpack.c.h.s8.bf16 %v2507
    %v2764 = vunpack.c.h.s8.bf16 %v2508
    %v2765 = vunpack.c.h.s8.bf16 %v2509
    %v2766 = vunpack.c.h.s8.bf16 %v2510
    %v2767 = vunpack.c.h.s8.bf16 %v2511
    %v2768 = vunpack.c.h.s8.bf16 %v2512
    %v2769 = vunpack.c.h.s8.bf16 %v2513
    %v2770 = vunpack.c.l.s8.bf16 %v2514
    %v2771 = vunpack.c.l.s8.bf16 %v2515
    %v2772 = vunpack.c.l.s8.bf16 %v2516
    %v2773 = vunpack.c.l.s8.bf16 %v2517
    %v2774 = vunpack.c.l.s8.bf16 %v2518
    %v2775 = vunpack.c.l.s8.bf16 %v2519
    %v2776 = vunpack.c.l.s8.bf16 %v2520
    %v2777 = vunpack.c.l.s8.bf16 %v2521
    %v2778 = vunpack.c.h.s8.bf16 %v2514
    %v2779 = vunpack.c.h.s8.bf16 %v2515
    %v2780 = vunpack.c.h.s8.bf16 %v2516
    %v2781 = vunpack.c.h.s8.bf16 %v2517
    %v2782 = vunpack.c.h.s8.bf16 %v2518
    %v2783 = vunpack.c.h.s8.bf16 %v2519
    %v2784 = vunpack.c.h.s8.bf16 %v2520
    %v2785 = vunpack.c.h.s8.bf16 %v2521
    %v2786 = vunpack.c.l.s8.bf16 %v2522
    %v2787 = vunpack.c.l.s8.bf16 %v2523
    %v2788 = vunpack.c.l.s8.bf16 %v2524
    %v2789 = vunpack.c.l.s8.bf16 %v2525
    %v2790 = vunpack.c.l.s8.bf16 %v2526
    %v2791 = vunpack.c.l.s8.bf16 %v2527
    %v2792 = vunpack.c.l.s8.bf16 %v2528
    %v2793 = vunpack.c.l.s8.bf16 %v2529
    %v2794 = vunpack.c.h.s8.bf16 %v2522
    %v2795 = vunpack.c.h.s8.bf16 %v2523
    %v2796 = vunpack.c.h.s8.bf16 %v2524
    %v2797 = vunpack.c.h.s8.bf16 %v2525
    %v2798 = vunpack.c.h.s8.bf16 %v2526
    %v2799 = vunpack.c.h.s8.bf16 %v2527
    %v2800 = vunpack.c.h.s8.bf16 %v2528
    %v2801 = vunpack.c.h.s8.bf16 %v2529
    %v2802 = vunpack.c.l.s8.bf16 %v2530
    %v2803 = vunpack.c.l.s8.bf16 %v2531
    %v2804 = vunpack.c.l.s8.bf16 %v2532
    %v2805 = vunpack.c.l.s8.bf16 %v2533
    %v2806 = vunpack.c.l.s8.bf16 %v2534
    %v2807 = vunpack.c.l.s8.bf16 %v2535
    %v2808 = vunpack.c.l.s8.bf16 %v2536
    %v2809 = vunpack.c.l.s8.bf16 %v2537
    %v2810 = vunpack.c.h.s8.bf16 %v2530
    %v2811 = vunpack.c.h.s8.bf16 %v2531
    %v2812 = vunpack.c.h.s8.bf16 %v2532
    %v2813 = vunpack.c.h.s8.bf16 %v2533
    %v2814 = vunpack.c.h.s8.bf16 %v2534
    %v2815 = vunpack.c.h.s8.bf16 %v2535
    %v2816 = vunpack.c.h.s8.bf16 %v2536
    %v2817 = vunpack.c.h.s8.bf16 %v2537
    %v2818 = vunpack.c.l.s8.bf16 %v2538
    %v2819 = vunpack.c.l.s8.bf16 %v2539
    %v2820 = vunpack.c.l.s8.bf16 %v2540
    %v2821 = vunpack.c.l.s8.bf16 %v2541
    %v2822 = vunpack.c.l.s8.bf16 %v2542
    %v2823 = vunpack.c.l.s8.bf16 %v2543
    %v2824 = vunpack.c.l.s8.bf16 %v2544
    %v2825 = vunpack.c.l.s8.bf16 %v2545
    %v2826 = vunpack.c.h.s8.bf16 %v2538
    %v2827 = vunpack.c.h.s8.bf16 %v2539
    %v2828 = vunpack.c.h.s8.bf16 %v2540
    %v2829 = vunpack.c.h.s8.bf16 %v2541
    %v2830 = vunpack.c.h.s8.bf16 %v2542
    %v2831 = vunpack.c.h.s8.bf16 %v2543
    %v2832 = vunpack.c.h.s8.bf16 %v2544
    %v2833 = vunpack.c.h.s8.bf16 %v2545
    %v2834 = vunpack.c.l.s8.bf16 %v2546
    %v2835 = vunpack.c.l.s8.bf16 %v2547
    %v2836 = vunpack.c.l.s8.bf16 %v2548
    %v2837 = vunpack.c.l.s8.bf16 %v2549
    %v2838 = vunpack.c.l.s8.bf16 %v2550
    %v2839 = vunpack.c.l.s8.bf16 %v2551
    %v2840 = vunpack.c.l.s8.bf16 %v2552
    %v2841 = vunpack.c.l.s8.bf16 %v2553
    %v2842 = vunpack.c.h.s8.bf16 %v2546
    %v2843 = vunpack.c.h.s8.bf16 %v2547
    %v2844 = vunpack.c.h.s8.bf16 %v2548
    %v2845 = vunpack.c.h.s8.bf16 %v2549
    %v2846 = vunpack.c.h.s8.bf16 %v2550
    %v2847 = vunpack.c.h.s8.bf16 %v2551
    %v2848 = vunpack.c.h.s8.bf16 %v2552
    %v2849 = vunpack.c.h.s8.bf16 %v2553
    %v2850 = vunpack.c.l.s8.bf16 %v2554
    %v2851 = vunpack.c.l.s8.bf16 %v2555
    %v2852 = vunpack.c.l.s8.bf16 %v2556
    %v2853 = vunpack.c.l.s8.bf16 %v2557
    %v2854 = vunpack.c.l.s8.bf16 %v2558
    %v2855 = vunpack.c.l.s8.bf16 %v2559
    %v2856 = vunpack.c.l.s8.bf16 %v2560
    %v2857 = vunpack.c.l.s8.bf16 %v2561
    %v2858 = vunpack.c.h.s8.bf16 %v2554
    %v2859 = vunpack.c.h.s8.bf16 %v2555
    %v2860 = vunpack.c.h.s8.bf16 %v2556
    %v2861 = vunpack.c.h.s8.bf16 %v2557
    %v2862 = vunpack.c.h.s8.bf16 %v2558
    %v2863 = vunpack.c.h.s8.bf16 %v2559
    %v2864 = vunpack.c.h.s8.bf16 %v2560
    %v2865 = vunpack.c.h.s8.bf16 %v2561
    %v2866 = vunpack.c.l.s8.bf16 %v2562
    %v2867 = vunpack.c.l.s8.bf16 %v2563
    %v2868 = vunpack.c.l.s8.bf16 %v2564
    %v2869 = vunpack.c.l.s8.bf16 %v2565
    %v2870 = vunpack.c.l.s8.bf16 %v2566
    %v2871 = vunpack.c.l.s8.bf16 %v2567
    %v2872 = vunpack.c.l.s8.bf16 %v2568
    %v2873 = vunpack.c.l.s8.bf16 %v2569
    %v2874 = vunpack.c.h.s8.bf16 %v2562
    %v2875 = vunpack.c.h.s8.bf16 %v2563
    %v2876 = vunpack.c.h.s8.bf16 %v2564
    %v2877 = vunpack.c.h.s8.bf16 %v2565
    %v2878 = vunpack.c.h.s8.bf16 %v2566
    %v2879 = vunpack.c.h.s8.bf16 %v2567
    %v2880 = vunpack.c.h.s8.bf16 %v2568
    %v2881 = vunpack.c.h.s8.bf16 %v2569
    %v2882 = vunpack.c.l.s8.bf16 %v2570
    %v2883 = vunpack.c.l.s8.bf16 %v2571
    %v2884 = vunpack.c.l.s8.bf16 %v2572
    %v2885 = vunpack.c.l.s8.bf16 %v2573
    %v2886 = vunpack.c.l.s8.bf16 %v2574
    %v2887 = vunpack.c.l.s8.bf16 %v2575
    %v2888 = vunpack.c.l.s8.bf16 %v2576
    %v2889 = vunpack.c.l.s8.bf16 %v2577
    %v2890 = vunpack.c.h.s8.bf16 %v2570
    %v2891 = vunpack.c.h.s8.bf16 %v2571
    %v2892 = vunpack.c.h.s8.bf16 %v2572
    %v2893 = vunpack.c.h.s8.bf16 %v2573
    %v2894 = vunpack.c.h.s8.bf16 %v2574
    %v2895 = vunpack.c.h.s8.bf16 %v2575
    %v2896 = vunpack.c.h.s8.bf16 %v2576
    %v2897 = vunpack.c.h.s8.bf16 %v2577
    %v2898 = vpack.c.bf16 %v1922, %v1912
    %v2899 = vpack.c.bf16 %v1923, %v1913
    %v2900 = vpack.c.bf16 %v1924, %v1914
    %v2901 = vpack.c.bf16 %v1925, %v1915
    %v2902 = vpack.c.bf16 %v1926, %v1916
    %v2903 = vpack.c.bf16 %v1927, %v1917
    %v2904 = vpack.c.bf16 %v1928, %v1918
    %v2905 = vpack.c.bf16 %v1929, %v1919
    %v2906 = vpack.c.bf16 %v1930, %v1920
    %v2907 = vpack.c.bf16 %v1931, %v1921
    %2908 = vmatprep.subr.bf16.mxu0 %v2635
    %2909 = vmatpush1.bf16.msra.mxu0 %v2634
    %2910 = vmatprep.subr.bf16.mxu0 %v2627
    %2911 = vmatpush1.bf16.msra.mxu0 %v2626
    %2912 = vmatprep.subr.bf16.mxu0 %v2619
    %2913 = vmatpush1.bf16.msra.mxu0 %v2618
    %2914 = vmatprep.subr.bf16.mxu0 %v2611
    %2915 = vmatpush1.bf16.msra.mxu0 %v2610
    %2916 = vmatprep.subr.bf16.mxu0 %v2603
    %2917 = vmatpush1.bf16.msra.mxu0 %v2602
    %2918 = vmatprep.subr.bf16.mxu0 %v2595
    %2919 = vmatpush1.bf16.msra.mxu0 %v2594
    %2920 = vmatprep.subr.bf16.mxu0 %v2587
    %2921 = vmatpush1.bf16.msra.mxu0 %v2586
    %2922 = vmatprep.subr.bf16.mxu0 %v2579
    %2923 = vmatpush1.bf16.msra.mxu0 %v2578
    %2924 = vmatprep.subr.bf16.mxu0 %v2699
    %2925 = vmatpush2.bf16.msra.mxu0 %v2698
    %2926 = vmatprep.subr.bf16.mxu0 %v2691
    %2927 = vmatpush2.bf16.msra.mxu0 %v2690
    %2928 = vmatprep.subr.bf16.mxu0 %v2683
    %2929 = vmatpush2.bf16.msra.mxu0 %v2682
    %2930 = vmatprep.subr.bf16.mxu0 %v2675
    %2931 = vmatpush2.bf16.msra.mxu0 %v2674
    %2932 = vmatprep.subr.bf16.mxu0 %v2667
    %2933 = vmatpush2.bf16.msra.mxu0 %v2666
    %2934 = vmatprep.subr.bf16.mxu0 %v2659
    %2935 = vmatpush2.bf16.msra.mxu0 %v2658
    %2936 = vmatprep.subr.bf16.mxu0 %v2651
    %2937 = vmatpush2.bf16.msra.mxu0 %v2650
    %2938 = vmatprep.subr.bf16.mxu0 %v2643
    %2939 = vmatpush2.bf16.msra.mxu0 %v2642
    %2940 = vmatprep.mubr.bf16.mxu0 %v2904
    %2941 = vmatmul.mubr.bf16.gmra.mxu0 %v2903
    %v2942 = vpop.f32.mrf.mxu0
    %v2943 = vadd.f32 0.0, %v2942
    %v2944 = vpop.f32.mrf.mxu0
    %v2945 = vadd.f32 0.0, %v2944
    %v2946 = vpop.f32.mrf.mxu0
    %v2947 = vadd.f32 0.0, %v2946
    %v2948 = vpop.f32.mrf.mxu0
    %v2949 = vadd.f32 0.0, %v2948
    %2950 = vdwg.mxu0
    %2951 = vmatprep.subr.bf16.mxu0 %v2763
    %2952 = vmatpush1.bf16.msra.mxu0 %v2762
    %2953 = vmatprep.subr.bf16.mxu0 %v2755
    %2954 = vmatpush1.bf16.msra.mxu0 %v2754
    %2955 = vmatprep.subr.bf16.mxu0 %v2747
    %2956 = vmatpush1.bf16.msra.mxu0 %v2746
    %2957 = vmatprep.subr.bf16.mxu0 %v2739
    %2958 = vmatpush1.bf16.msra.mxu0 %v2738
    %2959 = vmatprep.subr.bf16.mxu0 %v2731
    %2960 = vmatpush1.bf16.msra.mxu0 %v2730
    %2961 = vmatprep.subr.bf16.mxu0 %v2723
    %2962 = vmatpush1.bf16.msra.mxu0 %v2722
    %2963 = vmatprep.subr.bf16.mxu0 %v2715
    %2964 = vmatpush1.bf16.msra.mxu0 %v2714
    %2965 = vmatprep.subr.bf16.mxu0 %v2707
    %2966 = vmatpush1.bf16.msra.mxu0 %v2706
    %2967 = vmatprep.subr.bf16.mxu0 %v2827
    %2968 = vmatpush2.bf16.msra.mxu0 %v2826
    %2969 = vmatprep.subr.bf16.mxu0 %v2819
    %2970 = vmatpush2.bf16.msra.mxu0 %v2818
    %2971 = vmatprep.subr.bf16.mxu0 %v2811
    %2972 = vmatpush2.bf16.msra.mxu0 %v2810
    %2973 = vmatprep.subr.bf16.mxu0 %v2803
    %2974 = vmatpush2.bf16.msra.mxu0 %v2802
    %2975 = vmatprep.subr.bf16.mxu0 %v2795
    %2976 = vmatpush2.bf16.msra.mxu0 %v2794
    %2977 = vmatprep.subr.bf16.mxu0 %v2787
    %2978 = vmatpush2.bf16.msra.mxu0 %v2786
    %2979 = vmatprep.subr.bf16.mxu0 %v2779
    %2980 = vmatpush2.bf16.msra.mxu0 %v2778
    %2981 = vmatprep.subr.bf16.mxu0 %v2771
    %2982 = vmatpush2.bf16.msra.mxu0 %v2770
    %2983 = vmatprep.mubr.bf16.mxu0 %v2906
    %2984 = vmatmul.mubr.bf16.gmra.mxu0 %v2905
    %v2985 = vpop.f32.mrf.mxu0
    %v2986 = vadd.f32 %v2943, %v2985
    %v2987 = vpop.f32.mrf.mxu0
    %v2988 = vadd.f32 %v2945, %v2987
    %v2989 = vpop.f32.mrf.mxu0
    %v2990 = vadd.f32 %v2947, %v2989
    %v2991 = vpop.f32.mrf.mxu0
    %v2992 = vadd.f32 %v2949, %v2991
    %2993 = vdwg.mxu0
    %2994 = vmatprep.subr.bf16.mxu0 %v2891
    %2995 = vmatpush1.bf16.msra.mxu0 %v2890
    %2996 = vmatprep.subr.bf16.mxu0 %v2883
    %2997 = vmatpush1.bf16.msra.mxu0 %v2882
    %2998 = vmatprep.subr.bf16.mxu0 %v2875
    %2999 = vmatpush1.bf16.msra.mxu0 %v2874
    %3000 = vmatprep.subr.bf16.mxu0 %v2867
    %3001 = vmatpush1.bf16.msra.mxu0 %v2866
    %3002 = vmatprep.subr.bf16.mxu0 %v2859
    %3003 = vmatpush1.bf16.msra.mxu0 %v2858
    %3004 = vmatprep.subr.bf16.mxu0 %v2851
    %3005 = vmatpush1.bf16.msra.mxu0 %v2850
    %3006 = vmatprep.subr.bf16.mxu0 %v2843
    %3007 = vmatpush1.bf16.msra.mxu0 %v2842
    %3008 = vmatprep.subr.bf16.mxu0 %v2835
    %3009 = vmatpush1.bf16.msra.mxu0 %v2834
    %3010 = vmatprep.subr.bf16.mxu0 0
    %3011 = vmatpush2.bf16.msra.mxu0 0
    %3012 = vmatprep.subr.bf16.mxu0 0
    %3013 = vmatpush2.bf16.msra.mxu0 0
    %3014 = vmatprep.subr.bf16.mxu0 0
    %3015 = vmatpush2.bf16.msra.mxu0 0
    %3016 = vmatprep.subr.bf16.mxu0 0
    %3017 = vmatpush2.bf16.msra.mxu0 0
    %3018 = vmatprep.subr.bf16.mxu0 0
    %3019 = vmatpush2.bf16.msra.mxu0 0
    %3020 = vmatprep.subr.bf16.mxu0 0
    %3021 = vmatpush2.bf16.msra.mxu0 0
    %3022 = vmatprep.subr.bf16.mxu0 0
    %3023 = vmatpush2.bf16.msra.mxu0 0
    %3024 = vmatprep.subr.bf16.mxu0 0
    %3025 = vmatpush2.bf16.msra.mxu0 0
    %3026 = vmatprep.mubr.bf16.mxu0 0
    %3027 = vmatmul.mubr.bf16.gmra.mxu0 %v2907
    %v3028 = vpop.f32.mrf.mxu0
    %v3029 = vadd.f32 %v2986, %v3028
    %v3030 = vpop.f32.mrf.mxu0
    %v3031 = vadd.f32 %v2988, %v3030
    %v3032 = vpop.f32.mrf.mxu0
    %v3033 = vadd.f32 %v2990, %v3032
    %v3034 = vpop.f32.mrf.mxu0
    %v3035 = vadd.f32 %v2992, %v3034
    %3036 = vdwg.mxu0
    %3037 = vmatprep.subr.bf16.mxu0 %v2637
    %3038 = vmatpush1.bf16.msra.mxu0 %v2636
    %3039 = vmatprep.subr.bf16.mxu0 %v2629
    %3040 = vmatpush1.bf16.msra.mxu0 %v2628
    %3041 = vmatprep.subr.bf16.mxu0 %v2621
    %3042 = vmatpush1.bf16.msra.mxu0 %v2620
    %3043 = vmatprep.subr.bf16.mxu0 %v2613
    %3044 = vmatpush1.bf16.msra.mxu0 %v2612
    %3045 = vmatprep.subr.bf16.mxu0 %v2605
    %3046 = vmatpush1.bf16.msra.mxu0 %v2604
    %3047 = vmatprep.subr.bf16.mxu0 %v2597
    %3048 = vmatpush1.bf16.msra.mxu0 %v2596
    %3049 = vmatprep.subr.bf16.mxu0 %v2589
    %3050 = vmatpush1.bf16.msra.mxu0 %v2588
    %3051 = vmatprep.subr.bf16.mxu0 %v2581
    %3052 = vmatpush1.bf16.msra.mxu0 %v2580
    %3053 = vmatprep.subr.bf16.mxu0 %v2701
    %3054 = vmatpush2.bf16.msra.mxu0 %v2700
    %3055 = vmatprep.subr.bf16.mxu0 %v2693
    %3056 = vmatpush2.bf16.msra.mxu0 %v2692
    %3057 = vmatprep.subr.bf16.mxu0 %v2685
    %3058 = vmatpush2.bf16.msra.mxu0 %v2684
    %3059 = vmatprep.subr.bf16.mxu0 %v2677
    %3060 = vmatpush2.bf16.msra.mxu0 %v2676
    %3061 = vmatprep.subr.bf16.mxu0 %v2669
    %3062 = vmatpush2.bf16.msra.mxu0 %v2668
    %3063 = vmatprep.subr.bf16.mxu0 %v2661
    %3064 = vmatpush2.bf16.msra.mxu0 %v2660
    %3065 = vmatprep.subr.bf16.mxu0 %v2653
    %3066 = vmatpush2.bf16.msra.mxu0 %v2652
    %3067 = vmatprep.subr.bf16.mxu0 %v2645
    %3068 = vmatpush2.bf16.msra.mxu0 %v2644
    %3069 = vmatprep.mubr.bf16.mxu0 %v2904
    %3070 = vmatmul.mubr.bf16.gmra.mxu0 %v2903
    %v3071 = vpop.f32.mrf.mxu0
    %v3072 = vadd.f32 0.0, %v3071
    %v3073 = vpop.f32.mrf.mxu0
    %v3074 = vadd.f32 0.0, %v3073
    %v3075 = vpop.f32.mrf.mxu0
    %v3076 = vadd.f32 0.0, %v3075
    %v3077 = vpop.f32.mrf.mxu0
    %v3078 = vadd.f32 0.0, %v3077
    %3079 = vdwg.mxu0
    %3080 = vmatprep.subr.bf16.mxu0 %v2765
    %3081 = vmatpush1.bf16.msra.mxu0 %v2764
    %3082 = vmatprep.subr.bf16.mxu0 %v2757
    %3083 = vmatpush1.bf16.msra.mxu0 %v2756
    %3084 = vmatprep.subr.bf16.mxu0 %v2749
    %3085 = vmatpush1.bf16.msra.mxu0 %v2748
    %3086 = vmatprep.subr.bf16.mxu0 %v2741
    %3087 = vmatpush1.bf16.msra.mxu0 %v2740
    %3088 = vmatprep.subr.bf16.mxu0 %v2733
    %3089 = vmatpush1.bf16.msra.mxu0 %v2732
    %3090 = vmatprep.subr.bf16.mxu0 %v2725
    %3091 = vmatpush1.bf16.msra.mxu0 %v2724
    %3092 = vmatprep.subr.bf16.mxu0 %v2717
    %3093 = vmatpush1.bf16.msra.mxu0 %v2716
    %3094 = vmatprep.subr.bf16.mxu0 %v2709
    %3095 = vmatpush1.bf16.msra.mxu0 %v2708
    %3096 = vmatprep.subr.bf16.mxu0 %v2829
    %3097 = vmatpush2.bf16.msra.mxu0 %v2828
    %3098 = vmatprep.subr.bf16.mxu0 %v2821
    %3099 = vmatpush2.bf16.msra.mxu0 %v2820
    %3100 = vmatprep.subr.bf16.mxu0 %v2813
    %3101 = vmatpush2.bf16.msra.mxu0 %v2812
    %3102 = vmatprep.subr.bf16.mxu0 %v2805
    %3103 = vmatpush2.bf16.msra.mxu0 %v2804
    %3104 = vmatprep.subr.bf16.mxu0 %v2797
    %3105 = vmatpush2.bf16.msra.mxu0 %v2796
    %3106 = vmatprep.subr.bf16.mxu0 %v2789
    %3107 = vmatpush2.bf16.msra.mxu0 %v2788
    %3108 = vmatprep.subr.bf16.mxu0 %v2781
    %3109 = vmatpush2.bf16.msra.mxu0 %v2780
    %3110 = vmatprep.subr.bf16.mxu0 %v2773
    %3111 = vmatpush2.bf16.msra.mxu0 %v2772
    %3112 = vmatprep.mubr.bf16.mxu0 %v2906
    %3113 = vmatmul.mubr.bf16.gmra.mxu0 %v2905
    %v3114 = vpop.f32.mrf.mxu0
    %v3115 = vadd.f32 %v3072, %v3114
    %v3116 = vpop.f32.mrf.mxu0
    %v3117 = vadd.f32 %v3074, %v3116
    %v3118 = vpop.f32.mrf.mxu0
    %v3119 = vadd.f32 %v3076, %v3118
    %v3120 = vpop.f32.mrf.mxu0
    %v3121 = vadd.f32 %v3078, %v3120
    %3122 = vdwg.mxu0
    %3123 = vmatprep.subr.bf16.mxu0 %v2893
    %3124 = vmatpush1.bf16.msra.mxu0 %v2892
    %3125 = vmatprep.subr.bf16.mxu0 %v2885
    %3126 = vmatpush1.bf16.msra.mxu0 %v2884
    %3127 = vmatprep.subr.bf16.mxu0 %v2877
    %3128 = vmatpush1.bf16.msra.mxu0 %v2876
    %3129 = vmatprep.subr.bf16.mxu0 %v2869
    %3130 = vmatpush1.bf16.msra.mxu0 %v2868
    %3131 = vmatprep.subr.bf16.mxu0 %v2861
    %3132 = vmatpush1.bf16.msra.mxu0 %v2860
    %3133 = vmatprep.subr.bf16.mxu0 %v2853
    %3134 = vmatpush1.bf16.msra.mxu0 %v2852
    %3135 = vmatprep.subr.bf16.mxu0 %v2845
    %3136 = vmatpush1.bf16.msra.mxu0 %v2844
    %3137 = vmatprep.subr.bf16.mxu0 %v2837
    %3138 = vmatpush1.bf16.msra.mxu0 %v2836
    %3139 = vmatprep.subr.bf16.mxu0 0
    %3140 = vmatpush2.bf16.msra.mxu0 0
    %3141 = vmatprep.subr.bf16.mxu0 0
    %3142 = vmatpush2.bf16.msra.mxu0 0
    %3143 = vmatprep.subr.bf16.mxu0 0
    %3144 = vmatpush2.bf16.msra.mxu0 0
    %3145 = vmatprep.subr.bf16.mxu0 0
    %3146 = vmatpush2.bf16.msra.mxu0 0
    %3147 = vmatprep.subr.bf16.mxu0 0
    %3148 = vmatpush2.bf16.msra.mxu0 0
    %3149 = vmatprep.subr.bf16.mxu0 0
    %3150 = vmatpush2.bf16.msra.mxu0 0
    %3151 = vmatprep.subr.bf16.mxu0 0
    %3152 = vmatpush2.bf16.msra.mxu0 0
    %3153 = vmatprep.subr.bf16.mxu0 0
    %3154 = vmatpush2.bf16.msra.mxu0 0
    %3155 = vmatprep.mubr.bf16.mxu0 0
    %3156 = vmatmul.mubr.bf16.gmra.mxu0 %v2907
    %v3157 = vpop.f32.mrf.mxu0
    %v3158 = vadd.f32 %v3115, %v3157
    %v3159 = vpop.f32.mrf.mxu0
    %v3160 = vadd.f32 %v3117, %v3159
    %v3161 = vpop.f32.mrf.mxu0
    %v3162 = vadd.f32 %v3119, %v3161
    %v3163 = vpop.f32.mrf.mxu0
    %v3164 = vadd.f32 %v3121, %v3163
    %3165 = vdwg.mxu0
    %3166 = vmatprep.subr.bf16.mxu0 %v2639
    %3167 = vmatpush1.bf16.msra.mxu0 %v2638
    %3168 = vmatprep.subr.bf16.mxu0 %v2631
    %3169 = vmatpush1.bf16.msra.mxu0 %v2630
    %3170 = vmatprep.subr.bf16.mxu0 %v2623
    %3171 = vmatpush1.bf16.msra.mxu0 %v2622
    %3172 = vmatprep.subr.bf16.mxu0 %v2615
    %3173 = vmatpush1.bf16.msra.mxu0 %v2614
    %3174 = vmatprep.subr.bf16.mxu0 %v2607
    %3175 = vmatpush1.bf16.msra.mxu0 %v2606
    %3176 = vmatprep.subr.bf16.mxu0 %v2599
    %3177 = vmatpush1.bf16.msra.mxu0 %v2598
    %3178 = vmatprep.subr.bf16.mxu0 %v2591
    %3179 = vmatpush1.bf16.msra.mxu0 %v2590
    %3180 = vmatprep.subr.bf16.mxu0 %v2583
    %3181 = vmatpush1.bf16.msra.mxu0 %v2582
    %3182 = vmatprep.subr.bf16.mxu0 %v2703
    %3183 = vmatpush2.bf16.msra.mxu0 %v2702
    %3184 = vmatprep.subr.bf16.mxu0 %v2695
    %3185 = vmatpush2.bf16.msra.mxu0 %v2694
    %3186 = vmatprep.subr.bf16.mxu0 %v2687
    %3187 = vmatpush2.bf16.msra.mxu0 %v2686
    %3188 = vmatprep.subr.bf16.mxu0 %v2679
    %3189 = vmatpush2.bf16.msra.mxu0 %v2678
    %3190 = vmatprep.subr.bf16.mxu0 %v2671
    %3191 = vmatpush2.bf16.msra.mxu0 %v2670
    %3192 = vmatprep.subr.bf16.mxu0 %v2663
    %3193 = vmatpush2.bf16.msra.mxu0 %v2662
    %3194 = vmatprep.subr.bf16.mxu0 %v2655
    %3195 = vmatpush2.bf16.msra.mxu0 %v2654
    %3196 = vmatprep.subr.bf16.mxu0 %v2647
    %3197 = vmatpush2.bf16.msra.mxu0 %v2646
    %3198 = vmatprep.mubr.bf16.mxu0 %v2904
    %3199 = vmatmul.mubr.bf16.gmra.mxu0 %v2903
    %v3200 = vpop.f32.mrf.mxu0
    %v3201 = vadd.f32 0.0, %v3200
    %v3202 = vpop.f32.mrf.mxu0
    %v3203 = vadd.f32 0.0, %v3202
    %v3204 = vpop.f32.mrf.mxu0
    %v3205 = vadd.f32 0.0, %v3204
    %v3206 = vpop.f32.mrf.mxu0
    %v3207 = vadd.f32 0.0, %v3206
    %3208 = vdwg.mxu0
    %3209 = vmatprep.subr.bf16.mxu0 %v2767
    %3210 = vmatpush1.bf16.msra.mxu0 %v2766
    %3211 = vmatprep.subr.bf16.mxu0 %v2759
    %3212 = vmatpush1.bf16.msra.mxu0 %v2758
    %3213 = vmatprep.subr.bf16.mxu0 %v2751
    %3214 = vmatpush1.bf16.msra.mxu0 %v2750
    %3215 = vmatprep.subr.bf16.mxu0 %v2743
    %3216 = vmatpush1.bf16.msra.mxu0 %v2742
    %3217 = vmatprep.subr.bf16.mxu0 %v2735
    %3218 = vmatpush1.bf16.msra.mxu0 %v2734
    %3219 = vmatprep.subr.bf16.mxu0 %v2727
    %3220 = vmatpush1.bf16.msra.mxu0 %v2726
    %3221 = vmatprep.subr.bf16.mxu0 %v2719
    %3222 = vmatpush1.bf16.msra.mxu0 %v2718
    %3223 = vmatprep.subr.bf16.mxu0 %v2711
    %3224 = vmatpush1.bf16.msra.mxu0 %v2710
    %3225 = vmatprep.subr.bf16.mxu0 %v2831
    %3226 = vmatpush2.bf16.msra.mxu0 %v2830
    %3227 = vmatprep.subr.bf16.mxu0 %v2823
    %3228 = vmatpush2.bf16.msra.mxu0 %v2822
    %3229 = vmatprep.subr.bf16.mxu0 %v2815
    %3230 = vmatpush2.bf16.msra.mxu0 %v2814
    %3231 = vmatprep.subr.bf16.mxu0 %v2807
    %3232 = vmatpush2.bf16.msra.mxu0 %v2806
    %3233 = vmatprep.subr.bf16.mxu0 %v2799
    %3234 = vmatpush2.bf16.msra.mxu0 %v2798
    %3235 = vmatprep.subr.bf16.mxu0 %v2791
    %3236 = vmatpush2.bf16.msra.mxu0 %v2790
    %3237 = vmatprep.subr.bf16.mxu0 %v2783
    %3238 = vmatpush2.bf16.msra.mxu0 %v2782
    %3239 = vmatprep.subr.bf16.mxu0 %v2775
    %3240 = vmatpush2.bf16.msra.mxu0 %v2774
    %3241 = vmatprep.mubr.bf16.mxu0 %v2906
    %3242 = vmatmul.mubr.bf16.gmra.mxu0 %v2905
    %v3243 = vpop.f32.mrf.mxu0
    %v3244 = vadd.f32 %v3201, %v3243
    %v3245 = vpop.f32.mrf.mxu0
    %v3246 = vadd.f32 %v3203, %v3245
    %v3247 = vpop.f32.mrf.mxu0
    %v3248 = vadd.f32 %v3205, %v3247
    %v3249 = vpop.f32.mrf.mxu0
    %v3250 = vadd.f32 %v3207, %v3249
    %3251 = vdwg.mxu0
    %3252 = vmatprep.subr.bf16.mxu0 %v2895
    %3253 = vmatpush1.bf16.msra.mxu0 %v2894
    %3254 = vmatprep.subr.bf16.mxu0 %v2887
    %3255 = vmatpush1.bf16.msra.mxu0 %v2886
    %3256 = vmatprep.subr.bf16.mxu0 %v2879
    %3257 = vmatpush1.bf16.msra.mxu0 %v2878
    %3258 = vmatprep.subr.bf16.mxu0 %v2871
    %3259 = vmatpush1.bf16.msra.mxu0 %v2870
    %3260 = vmatprep.subr.bf16.mxu0 %v2863
    %3261 = vmatpush1.bf16.msra.mxu0 %v2862
    %3262 = vmatprep.subr.bf16.mxu0 %v2855
    %3263 = vmatpush1.bf16.msra.mxu0 %v2854
    %3264 = vmatprep.subr.bf16.mxu0 %v2847
    %3265 = vmatpush1.bf16.msra.mxu0 %v2846
    %3266 = vmatprep.subr.bf16.mxu0 %v2839
    %3267 = vmatpush1.bf16.msra.mxu0 %v2838
    %3268 = vmatprep.subr.bf16.mxu0 0
    %3269 = vmatpush2.bf16.msra.mxu0 0
    %3270 = vmatprep.subr.bf16.mxu0 0
    %3271 = vmatpush2.bf16.msra.mxu0 0
    %3272 = vmatprep.subr.bf16.mxu0 0
    %3273 = vmatpush2.bf16.msra.mxu0 0
    %3274 = vmatprep.subr.bf16.mxu0 0
    %3275 = vmatpush2.bf16.msra.mxu0 0
    %3276 = vmatprep.subr.bf16.mxu0 0
    %3277 = vmatpush2.bf16.msra.mxu0 0
    %3278 = vmatprep.subr.bf16.mxu0 0
    %3279 = vmatpush2.bf16.msra.mxu0 0
    %3280 = vmatprep.subr.bf16.mxu0 0
    %3281 = vmatpush2.bf16.msra.mxu0 0
    %3282 = vmatprep.subr.bf16.mxu0 0
    %3283 = vmatpush2.bf16.msra.mxu0 0
    %3284 = vmatprep.mubr.bf16.mxu0 0
    %3285 = vmatmul.mubr.bf16.gmra.mxu0 %v2907
    %v3286 = vpop.f32.mrf.mxu0
    %v3287 = vadd.f32 %v3244, %v3286
    %v3288 = vpop.f32.mrf.mxu0
    %v3289 = vadd.f32 %v3246, %v3288
    %v3290 = vpop.f32.mrf.mxu0
    %v3291 = vadd.f32 %v3248, %v3290
    %v3292 = vpop.f32.mrf.mxu0
    %v3293 = vadd.f32 %v3250, %v3292
    %3294 = vdwg.mxu0
    %3295 = vmatprep.subr.bf16.mxu0 %v2641
    %3296 = vmatpush1.bf16.msra.mxu0 %v2640
    %3297 = vmatprep.subr.bf16.mxu0 %v2633
    %3298 = vmatpush1.bf16.msra.mxu0 %v2632
    %3299 = vmatprep.subr.bf16.mxu0 %v2625
    %3300 = vmatpush1.bf16.msra.mxu0 %v2624
    %3301 = vmatprep.subr.bf16.mxu0 %v2617
    %3302 = vmatpush1.bf16.msra.mxu0 %v2616
    %3303 = vmatprep.subr.bf16.mxu0 %v2609
    %3304 = vmatpush1.bf16.msra.mxu0 %v2608
    %3305 = vmatprep.subr.bf16.mxu0 %v2601
    %3306 = vmatpush1.bf16.msra.mxu0 %v2600
    %3307 = vmatprep.subr.bf16.mxu0 %v2593
    %3308 = vmatpush1.bf16.msra.mxu0 %v2592
    %3309 = vmatprep.subr.bf16.mxu0 %v2585
    %3310 = vmatpush1.bf16.msra.mxu0 %v2584
    %3311 = vmatprep.subr.bf16.mxu0 %v2705
    %3312 = vmatpush2.bf16.msra.mxu0 %v2704
    %3313 = vmatprep.subr.bf16.mxu0 %v2697
    %3314 = vmatpush2.bf16.msra.mxu0 %v2696
    %3315 = vmatprep.subr.bf16.mxu0 %v2689
    %3316 = vmatpush2.bf16.msra.mxu0 %v2688
    %3317 = vmatprep.subr.bf16.mxu0 %v2681
    %3318 = vmatpush2.bf16.msra.mxu0 %v2680
    %3319 = vmatprep.subr.bf16.mxu0 %v2673
    %3320 = vmatpush2.bf16.msra.mxu0 %v2672
    %3321 = vmatprep.subr.bf16.mxu0 %v2665
    %3322 = vmatpush2.bf16.msra.mxu0 %v2664
    %3323 = vmatprep.subr.bf16.mxu0 %v2657
    %3324 = vmatpush2.bf16.msra.mxu0 %v2656
    %3325 = vmatprep.subr.bf16.mxu0 %v2649
    %3326 = vmatpush2.bf16.msra.mxu0 %v2648
    %3327 = vmatprep.mubr.bf16.mxu0 %v2904
    %3328 = vmatmul.mubr.bf16.gmra.mxu0 %v2903
    %v3329 = vpop.f32.mrf.mxu0
    %v3330 = vadd.f32 0.0, %v3329
    %v3331 = vpop.f32.mrf.mxu0
    %v3332 = vadd.f32 0.0, %v3331
    %v3333 = vpop.f32.mrf.mxu0
    %v3334 = vadd.f32 0.0, %v3333
    %v3335 = vpop.f32.mrf.mxu0
    %v3336 = vadd.f32 0.0, %v3335
    %3337 = vdwg.mxu0
    %3338 = vmatprep.subr.bf16.mxu0 %v2769
    %3339 = vmatpush1.bf16.msra.mxu0 %v2768
    %3340 = vmatprep.subr.bf16.mxu0 %v2761
    %3341 = vmatpush1.bf16.msra.mxu0 %v2760
    %3342 = vmatprep.subr.bf16.mxu0 %v2753
    %3343 = vmatpush1.bf16.msra.mxu0 %v2752
    %3344 = vmatprep.subr.bf16.mxu0 %v2745
    %3345 = vmatpush1.bf16.msra.mxu0 %v2744
    %3346 = vmatprep.subr.bf16.mxu0 %v2737
    %3347 = vmatpush1.bf16.msra.mxu0 %v2736
    %3348 = vmatprep.subr.bf16.mxu0 %v2729
    %3349 = vmatpush1.bf16.msra.mxu0 %v2728
    %3350 = vmatprep.subr.bf16.mxu0 %v2721
    %3351 = vmatpush1.bf16.msra.mxu0 %v2720
    %3352 = vmatprep.subr.bf16.mxu0 %v2713
    %3353 = vmatpush1.bf16.msra.mxu0 %v2712
    %3354 = vmatprep.subr.bf16.mxu0 %v2833
    %3355 = vmatpush2.bf16.msra.mxu0 %v2832
    %3356 = vmatprep.subr.bf16.mxu0 %v2825
    %3357 = vmatpush2.bf16.msra.mxu0 %v2824
    %3358 = vmatprep.subr.bf16.mxu0 %v2817
    %3359 = vmatpush2.bf16.msra.mxu0 %v2816
    %3360 = vmatprep.subr.bf16.mxu0 %v2809
    %3361 = vmatpush2.bf16.msra.mxu0 %v2808
    %3362 = vmatprep.subr.bf16.mxu0 %v2801
    %3363 = vmatpush2.bf16.msra.mxu0 %v2800
    %3364 = vmatprep.subr.bf16.mxu0 %v2793
    %3365 = vmatpush2.bf16.msra.mxu0 %v2792
    %3366 = vmatprep.subr.bf16.mxu0 %v2785
    %3367 = vmatpush2.bf16.msra.mxu0 %v2784
    %3368 = vmatprep.subr.bf16.mxu0 %v2777
    %3369 = vmatpush2.bf16.msra.mxu0 %v2776
    %3370 = vmatprep.mubr.bf16.mxu0 %v2906
    %3371 = vmatmul.mubr.bf16.gmra.mxu0 %v2905
    %v3372 = vpop.f32.mrf.mxu0
    %v3373 = vadd.f32 %v3330, %v3372
    %v3374 = vpop.f32.mrf.mxu0
    %v3375 = vadd.f32 %v3332, %v3374
    %v3376 = vpop.f32.mrf.mxu0
    %v3377 = vadd.f32 %v3334, %v3376
    %v3378 = vpop.f32.mrf.mxu0
    %v3379 = vadd.f32 %v3336, %v3378
    %3380 = vdwg.mxu0
    %3381 = vmatprep.subr.bf16.mxu0 %v2897
    %3382 = vmatpush1.bf16.msra.mxu0 %v2896
    %3383 = vmatprep.subr.bf16.mxu0 %v2889
    %3384 = vmatpush1.bf16.msra.mxu0 %v2888
    %3385 = vmatprep.subr.bf16.mxu0 %v2881
    %3386 = vmatpush1.bf16.msra.mxu0 %v2880
    %3387 = vmatprep.subr.bf16.mxu0 %v2873
    %3388 = vmatpush1.bf16.msra.mxu0 %v2872
    %3389 = vmatprep.subr.bf16.mxu0 %v2865
    %3390 = vmatpush1.bf16.msra.mxu0 %v2864
    %3391 = vmatprep.subr.bf16.mxu0 %v2857
    %3392 = vmatpush1.bf16.msra.mxu0 %v2856
    %3393 = vmatprep.subr.bf16.mxu0 %v2849
    %3394 = vmatpush1.bf16.msra.mxu0 %v2848
    %3395 = vmatprep.subr.bf16.mxu0 %v2841
    %3396 = vmatpush1.bf16.msra.mxu0 %v2840
    %3397 = vmatprep.subr.bf16.mxu0 0
    %3398 = vmatpush2.bf16.msra.mxu0 0
    %3399 = vmatprep.subr.bf16.mxu0 0
    %3400 = vmatpush2.bf16.msra.mxu0 0
    %3401 = vmatprep.subr.bf16.mxu0 0
    %3402 = vmatpush2.bf16.msra.mxu0 0
    %3403 = vmatprep.subr.bf16.mxu0 0
    %3404 = vmatpush2.bf16.msra.mxu0 0
    %3405 = vmatprep.subr.bf16.mxu0 0
    %3406 = vmatpush2.bf16.msra.mxu0 0
    %3407 = vmatprep.subr.bf16.mxu0 0
    %3408 = vmatpush2.bf16.msra.mxu0 0
    %3409 = vmatprep.subr.bf16.mxu0 0
    %3410 = vmatpush2.bf16.msra.mxu0 0
    %3411 = vmatprep.subr.bf16.mxu0 0
    %3412 = vmatpush2.bf16.msra.mxu0 0
    %3413 = vmatprep.mubr.bf16.mxu0 0
    %3414 = vmatmul.mubr.bf16.gmra.mxu0 %v2907
    %v3415 = vpop.f32.mrf.mxu0
    %v3416 = vadd.f32 %v3373, %v3415
    %v3417 = vpop.f32.mrf.mxu0
    %v3418 = vadd.f32 %v3375, %v3417
    %v3419 = vpop.f32.mrf.mxu0
    %v3420 = vadd.f32 %v3377, %v3419
    %v3421 = vpop.f32.mrf.mxu0
    %v3422 = vadd.f32 %v3379, %v3421
    %3423 = vdwg.mxu0
    %3424 = vmatprep.subr.bf16.mxu0 %v2153
    %3425 = vmatpush1.bf16.msra.mxu0 %v2152
    %3426 = vmatprep.subr.bf16.mxu0 %v2145
    %3427 = vmatpush1.bf16.msra.mxu0 %v2144
    %3428 = vmatprep.subr.bf16.mxu0 %v2137
    %3429 = vmatpush1.bf16.msra.mxu0 %v2136
    %3430 = vmatprep.subr.bf16.mxu0 %v2129
    %3431 = vmatpush1.bf16.msra.mxu0 %v2128
    %3432 = vmatprep.subr.bf16.mxu0 %v2121
    %3433 = vmatpush1.bf16.msra.mxu0 %v2120
    %3434 = vmatprep.subr.bf16.mxu0 %v2113
    %3435 = vmatpush1.bf16.msra.mxu0 %v2112
    %3436 = vmatprep.subr.bf16.mxu0 %v2105
    %3437 = vmatpush1.bf16.msra.mxu0 %v2104
    %3438 = vmatprep.subr.bf16.mxu0 %v2097
    %3439 = vmatpush1.bf16.msra.mxu0 %v2096
    %3440 = vmatprep.subr.bf16.mxu0 %v2217
    %3441 = vmatpush2.bf16.msra.mxu0 %v2216
    %3442 = vmatprep.subr.bf16.mxu0 %v2209
    %3443 = vmatpush2.bf16.msra.mxu0 %v2208
    %3444 = vmatprep.subr.bf16.mxu0 %v2201
    %3445 = vmatpush2.bf16.msra.mxu0 %v2200
    %3446 = vmatprep.subr.bf16.mxu0 %v2193
    %3447 = vmatpush2.bf16.msra.mxu0 %v2192
    %3448 = vmatprep.subr.bf16.mxu0 %v2185
    %3449 = vmatpush2.bf16.msra.mxu0 %v2184
    %3450 = vmatprep.subr.bf16.mxu0 %v2177
    %3451 = vmatpush2.bf16.msra.mxu0 %v2176
    %3452 = vmatprep.subr.bf16.mxu0 %v2169
    %3453 = vmatpush2.bf16.msra.mxu0 %v2168
    %3454 = vmatprep.subr.bf16.mxu0 %v2161
    %3455 = vmatpush2.bf16.msra.mxu0 %v2160
    %3456 = vmatprep.mubr.bf16.mxu0 %v2899
    %3457 = vmatmul.mubr.bf16.gmra.mxu0 %v2898
    %v3458 = vpop.f32.mrf.mxu0
    %v3459 = vadd.f32 %v3029, %v3458
    %v3460 = vpop.f32.mrf.mxu0
    %v3461 = vadd.f32 %v3031, %v3460
    %v3462 = vpop.f32.mrf.mxu0
    %v3463 = vadd.f32 %v3033, %v3462
    %v3464 = vpop.f32.mrf.mxu0
    %v3465 = vadd.f32 %v3035, %v3464
    %3466 = vdwg.mxu0
    %3467 = vmatprep.subr.bf16.mxu0 %v2281
    %3468 = vmatpush1.bf16.msra.mxu0 %v2280
    %3469 = vmatprep.subr.bf16.mxu0 %v2273
    %3470 = vmatpush1.bf16.msra.mxu0 %v2272
    %3471 = vmatprep.subr.bf16.mxu0 %v2265
    %3472 = vmatpush1.bf16.msra.mxu0 %v2264
    %3473 = vmatprep.subr.bf16.mxu0 %v2257
    %3474 = vmatpush1.bf16.msra.mxu0 %v2256
    %3475 = vmatprep.subr.bf16.mxu0 %v2249
    %3476 = vmatpush1.bf16.msra.mxu0 %v2248
    %3477 = vmatprep.subr.bf16.mxu0 %v2241
    %3478 = vmatpush1.bf16.msra.mxu0 %v2240
    %3479 = vmatprep.subr.bf16.mxu0 %v2233
    %3480 = vmatpush1.bf16.msra.mxu0 %v2232
    %3481 = vmatprep.subr.bf16.mxu0 %v2225
    %3482 = vmatpush1.bf16.msra.mxu0 %v2224
    %3483 = vmatprep.subr.bf16.mxu0 %v2345
    %3484 = vmatpush2.bf16.msra.mxu0 %v2344
    %3485 = vmatprep.subr.bf16.mxu0 %v2337
    %3486 = vmatpush2.bf16.msra.mxu0 %v2336
    %3487 = vmatprep.subr.bf16.mxu0 %v2329
    %3488 = vmatpush2.bf16.msra.mxu0 %v2328
    %3489 = vmatprep.subr.bf16.mxu0 %v2321
    %3490 = vmatpush2.bf16.msra.mxu0 %v2320
    %3491 = vmatprep.subr.bf16.mxu0 %v2313
    %3492 = vmatpush2.bf16.msra.mxu0 %v2312
    %3493 = vmatprep.subr.bf16.mxu0 %v2305
    %3494 = vmatpush2.bf16.msra.mxu0 %v2304
    %3495 = vmatprep.subr.bf16.mxu0 %v2297
    %3496 = vmatpush2.bf16.msra.mxu0 %v2296
    %3497 = vmatprep.subr.bf16.mxu0 %v2289
    %3498 = vmatpush2.bf16.msra.mxu0 %v2288
    %3499 = vmatprep.mubr.bf16.mxu0 %v2901
    %3500 = vmatmul.mubr.bf16.gmra.mxu0 %v2900
    %v3501 = vpop.f32.mrf.mxu0
    %v3502 = vadd.f32 %v3459, %v3501
    %v3503 = vpop.f32.mrf.mxu0
    %v3504 = vadd.f32 %v3461, %v3503
    %v3505 = vpop.f32.mrf.mxu0
    %v3506 = vadd.f32 %v3463, %v3505
    %v3507 = vpop.f32.mrf.mxu0
    %v3508 = vadd.f32 %v3465, %v3507
    %3509 = vdwg.mxu0
    %3510 = vmatprep.subr.bf16.mxu0 %v2409
    %3511 = vmatpush1.bf16.msra.mxu0 %v2408
    %3512 = vmatprep.subr.bf16.mxu0 %v2401
    %3513 = vmatpush1.bf16.msra.mxu0 %v2400
    %3514 = vmatprep.subr.bf16.mxu0 %v2393
    %3515 = vmatpush1.bf16.msra.mxu0 %v2392
    %3516 = vmatprep.subr.bf16.mxu0 %v2385
    %3517 = vmatpush1.bf16.msra.mxu0 %v2384
    %3518 = vmatprep.subr.bf16.mxu0 %v2377
    %3519 = vmatpush1.bf16.msra.mxu0 %v2376
    %3520 = vmatprep.subr.bf16.mxu0 %v2369
    %3521 = vmatpush1.bf16.msra.mxu0 %v2368
    %3522 = vmatprep.subr.bf16.mxu0 %v2361
    %3523 = vmatpush1.bf16.msra.mxu0 %v2360
    %3524 = vmatprep.subr.bf16.mxu0 %v2353
    %3525 = vmatpush1.bf16.msra.mxu0 %v2352
    %3526 = vmatprep.subr.bf16.mxu0 0
    %3527 = vmatpush2.bf16.msra.mxu0 0
    %3528 = vmatprep.subr.bf16.mxu0 0
    %3529 = vmatpush2.bf16.msra.mxu0 0
    %3530 = vmatprep.subr.bf16.mxu0 0
    %3531 = vmatpush2.bf16.msra.mxu0 0
    %3532 = vmatprep.subr.bf16.mxu0 0
    %3533 = vmatpush2.bf16.msra.mxu0 0
    %3534 = vmatprep.subr.bf16.mxu0 0
    %3535 = vmatpush2.bf16.msra.mxu0 0
    %3536 = vmatprep.subr.bf16.mxu0 0
    %3537 = vmatpush2.bf16.msra.mxu0 0
    %3538 = vmatprep.subr.bf16.mxu0 0
    %3539 = vmatpush2.bf16.msra.mxu0 0
    %3540 = vmatprep.subr.bf16.mxu0 0
    %3541 = vmatpush2.bf16.msra.mxu0 0
    %3542 = vmatprep.mubr.bf16.mxu0 0
    %3543 = vmatmul.mubr.bf16.gmra.mxu0 %v2902
    %v3544 = vpop.f32.mrf.mxu0
    %v3545 = vadd.f32 %v3502, %v3544
    %v3546 = vpop.f32.mrf.mxu0
    %v3547 = vadd.f32 %v3504, %v3546
    %v3548 = vpop.f32.mrf.mxu0
    %v3549 = vadd.f32 %v3506, %v3548
    %v3550 = vpop.f32.mrf.mxu0
    %v3551 = vadd.f32 %v3508, %v3550
    %3552 = vdwg.mxu0
    %3553 = vmatprep.subr.bf16.mxu0 %v2155
    %3554 = vmatpush1.bf16.msra.mxu0 %v2154
    %3555 = vmatprep.subr.bf16.mxu0 %v2147
    %3556 = vmatpush1.bf16.msra.mxu0 %v2146
    %3557 = vmatprep.subr.bf16.mxu0 %v2139
    %3558 = vmatpush1.bf16.msra.mxu0 %v2138
    %3559 = vmatprep.subr.bf16.mxu0 %v2131
    %3560 = vmatpush1.bf16.msra.mxu0 %v2130
    %3561 = vmatprep.subr.bf16.mxu0 %v2123
    %3562 = vmatpush1.bf16.msra.mxu0 %v2122
    %3563 = vmatprep.subr.bf16.mxu0 %v2115
    %3564 = vmatpush1.bf16.msra.mxu0 %v2114
    %3565 = vmatprep.subr.bf16.mxu0 %v2107
    %3566 = vmatpush1.bf16.msra.mxu0 %v2106
    %3567 = vmatprep.subr.bf16.mxu0 %v2099
    %3568 = vmatpush1.bf16.msra.mxu0 %v2098
    %3569 = vmatprep.subr.bf16.mxu0 %v2219
    %3570 = vmatpush2.bf16.msra.mxu0 %v2218
    %3571 = vmatprep.subr.bf16.mxu0 %v2211
    %3572 = vmatpush2.bf16.msra.mxu0 %v2210
    %3573 = vmatprep.subr.bf16.mxu0 %v2203
    %3574 = vmatpush2.bf16.msra.mxu0 %v2202
    %3575 = vmatprep.subr.bf16.mxu0 %v2195
    %3576 = vmatpush2.bf16.msra.mxu0 %v2194
    %3577 = vmatprep.subr.bf16.mxu0 %v2187
    %3578 = vmatpush2.bf16.msra.mxu0 %v2186
    %3579 = vmatprep.subr.bf16.mxu0 %v2179
    %3580 = vmatpush2.bf16.msra.mxu0 %v2178
    %3581 = vmatprep.subr.bf16.mxu0 %v2171
    %3582 = vmatpush2.bf16.msra.mxu0 %v2170
    %3583 = vmatprep.subr.bf16.mxu0 %v2163
    %3584 = vmatpush2.bf16.msra.mxu0 %v2162
    %3585 = vmatprep.mubr.bf16.mxu0 %v2899
    %3586 = vmatmul.mubr.bf16.gmra.mxu0 %v2898
    %v3587 = vpop.f32.mrf.mxu0
    %v3588 = vadd.f32 %v3158, %v3587
    %v3589 = vpop.f32.mrf.mxu0
    %v3590 = vadd.f32 %v3160, %v3589
    %v3591 = vpop.f32.mrf.mxu0
    %v3592 = vadd.f32 %v3162, %v3591
    %v3593 = vpop.f32.mrf.mxu0
    %v3594 = vadd.f32 %v3164, %v3593
    %3595 = vdwg.mxu0
    %3596 = vmatprep.subr.bf16.mxu0 %v2283
    %3597 = vmatpush1.bf16.msra.mxu0 %v2282
    %3598 = vmatprep.subr.bf16.mxu0 %v2275
    %3599 = vmatpush1.bf16.msra.mxu0 %v2274
    %3600 = vmatprep.subr.bf16.mxu0 %v2267
    %3601 = vmatpush1.bf16.msra.mxu0 %v2266
    %3602 = vmatprep.subr.bf16.mxu0 %v2259
    %3603 = vmatpush1.bf16.msra.mxu0 %v2258
    %3604 = vmatprep.subr.bf16.mxu0 %v2251
    %3605 = vmatpush1.bf16.msra.mxu0 %v2250
    %3606 = vmatprep.subr.bf16.mxu0 %v2243
    %3607 = vmatpush1.bf16.msra.mxu0 %v2242
    %3608 = vmatprep.subr.bf16.mxu0 %v2235
    %3609 = vmatpush1.bf16.msra.mxu0 %v2234
    %3610 = vmatprep.subr.bf16.mxu0 %v2227
    %3611 = vmatpush1.bf16.msra.mxu0 %v2226
    %3612 = vmatprep.subr.bf16.mxu0 %v2347
    %3613 = vmatpush2.bf16.msra.mxu0 %v2346
    %3614 = vmatprep.subr.bf16.mxu0 %v2339
    %3615 = vmatpush2.bf16.msra.mxu0 %v2338
    %3616 = vmatprep.subr.bf16.mxu0 %v2331
    %3617 = vmatpush2.bf16.msra.mxu0 %v2330
    %3618 = vmatprep.subr.bf16.mxu0 %v2323
    %3619 = vmatpush2.bf16.msra.mxu0 %v2322
    %3620 = vmatprep.subr.bf16.mxu0 %v2315
    %3621 = vmatpush2.bf16.msra.mxu0 %v2314
    %3622 = vmatprep.subr.bf16.mxu0 %v2307
    %3623 = vmatpush2.bf16.msra.mxu0 %v2306
    %3624 = vmatprep.subr.bf16.mxu0 %v2299
    %3625 = vmatpush2.bf16.msra.mxu0 %v2298
    %3626 = vmatprep.subr.bf16.mxu0 %v2291
    %3627 = vmatpush2.bf16.msra.mxu0 %v2290
    %3628 = vmatprep.mubr.bf16.mxu0 %v2901
    %3629 = vmatmul.mubr.bf16.gmra.mxu0 %v2900
    %v3630 = vpop.f32.mrf.mxu0
    %v3631 = vadd.f32 %v3588, %v3630
    %v3632 = vpop.f32.mrf.mxu0
    %v3633 = vadd.f32 %v3590, %v3632
    %v3634 = vpop.f32.mrf.mxu0
    %v3635 = vadd.f32 %v3592, %v3634
    %v3636 = vpop.f32.mrf.mxu0
    %v3637 = vadd.f32 %v3594, %v3636
    %3638 = vdwg.mxu0
    %3639 = vmatprep.subr.bf16.mxu0 %v2411
    %3640 = vmatpush1.bf16.msra.mxu0 %v2410
    %3641 = vmatprep.subr.bf16.mxu0 %v2403
    %3642 = vmatpush1.bf16.msra.mxu0 %v2402
    %3643 = vmatprep.subr.bf16.mxu0 %v2395
    %3644 = vmatpush1.bf16.msra.mxu0 %v2394
    %3645 = vmatprep.subr.bf16.mxu0 %v2387
    %3646 = vmatpush1.bf16.msra.mxu0 %v2386
    %3647 = vmatprep.subr.bf16.mxu0 %v2379
    %3648 = vmatpush1.bf16.msra.mxu0 %v2378
    %3649 = vmatprep.subr.bf16.mxu0 %v2371
    %3650 = vmatpush1.bf16.msra.mxu0 %v2370
    %3651 = vmatprep.subr.bf16.mxu0 %v2363
    %3652 = vmatpush1.bf16.msra.mxu0 %v2362
    %3653 = vmatprep.subr.bf16.mxu0 %v2355
    %3654 = vmatpush1.bf16.msra.mxu0 %v2354
    %3655 = vmatprep.subr.bf16.mxu0 0
    %3656 = vmatpush2.bf16.msra.mxu0 0
    %3657 = vmatprep.subr.bf16.mxu0 0
    %3658 = vmatpush2.bf16.msra.mxu0 0
    %3659 = vmatprep.subr.bf16.mxu0 0
    %3660 = vmatpush2.bf16.msra.mxu0 0
    %3661 = vmatprep.subr.bf16.mxu0 0
    %3662 = vmatpush2.bf16.msra.mxu0 0
    %3663 = vmatprep.subr.bf16.mxu0 0
    %3664 = vmatpush2.bf16.msra.mxu0 0
    %3665 = vmatprep.subr.bf16.mxu0 0
    %3666 = vmatpush2.bf16.msra.mxu0 0
    %3667 = vmatprep.subr.bf16.mxu0 0
    %3668 = vmatpush2.bf16.msra.mxu0 0
    %3669 = vmatprep.subr.bf16.mxu0 0
    %3670 = vmatpush2.bf16.msra.mxu0 0
    %3671 = vmatprep.mubr.bf16.mxu0 0
    %3672 = vmatmul.mubr.bf16.gmra.mxu0 %v2902
    %v3673 = vpop.f32.mrf.mxu0
    %v3674 = vadd.f32 %v3631, %v3673
    %v3675 = vpop.f32.mrf.mxu0
    %v3676 = vadd.f32 %v3633, %v3675
    %v3677 = vpop.f32.mrf.mxu0
    %v3678 = vadd.f32 %v3635, %v3677
    %v3679 = vpop.f32.mrf.mxu0
    %v3680 = vadd.f32 %v3637, %v3679
    %3681 = vdwg.mxu0
    %3682 = vmatprep.subr.bf16.mxu0 %v2157
    %3683 = vmatpush1.bf16.msra.mxu0 %v2156
    %3684 = vmatprep.subr.bf16.mxu0 %v2149
    %3685 = vmatpush1.bf16.msra.mxu0 %v2148
    %3686 = vmatprep.subr.bf16.mxu0 %v2141
    %3687 = vmatpush1.bf16.msra.mxu0 %v2140
    %3688 = vmatprep.subr.bf16.mxu0 %v2133
    %3689 = vmatpush1.bf16.msra.mxu0 %v2132
    %3690 = vmatprep.subr.bf16.mxu0 %v2125
    %3691 = vmatpush1.bf16.msra.mxu0 %v2124
    %3692 = vmatprep.subr.bf16.mxu0 %v2117
    %3693 = vmatpush1.bf16.msra.mxu0 %v2116
    %3694 = vmatprep.subr.bf16.mxu0 %v2109
    %3695 = vmatpush1.bf16.msra.mxu0 %v2108
    %3696 = vmatprep.subr.bf16.mxu0 %v2101
    %3697 = vmatpush1.bf16.msra.mxu0 %v2100
    %3698 = vmatprep.subr.bf16.mxu0 %v2221
    %3699 = vmatpush2.bf16.msra.mxu0 %v2220
    %3700 = vmatprep.subr.bf16.mxu0 %v2213
    %3701 = vmatpush2.bf16.msra.mxu0 %v2212
    %3702 = vmatprep.subr.bf16.mxu0 %v2205
    %3703 = vmatpush2.bf16.msra.mxu0 %v2204
    %3704 = vmatprep.subr.bf16.mxu0 %v2197
    %3705 = vmatpush2.bf16.msra.mxu0 %v2196
    %3706 = vmatprep.subr.bf16.mxu0 %v2189
    %3707 = vmatpush2.bf16.msra.mxu0 %v2188
    %3708 = vmatprep.subr.bf16.mxu0 %v2181
    %3709 = vmatpush2.bf16.msra.mxu0 %v2180
    %3710 = vmatprep.subr.bf16.mxu0 %v2173
    %3711 = vmatpush2.bf16.msra.mxu0 %v2172
    %3712 = vmatprep.subr.bf16.mxu0 %v2165
    %3713 = vmatpush2.bf16.msra.mxu0 %v2164
    %3714 = vmatprep.mubr.bf16.mxu0 %v2899
    %3715 = vmatmul.mubr.bf16.gmra.mxu0 %v2898
    %v3716 = vpop.f32.mrf.mxu0
    %v3717 = vadd.f32 %v3287, %v3716
    %v3718 = vpop.f32.mrf.mxu0
    %v3719 = vadd.f32 %v3289, %v3718
    %v3720 = vpop.f32.mrf.mxu0
    %v3721 = vadd.f32 %v3291, %v3720
    %v3722 = vpop.f32.mrf.mxu0
    %v3723 = vadd.f32 %v3293, %v3722
    %3724 = vdwg.mxu0
    %3725 = vmatprep.subr.bf16.mxu0 %v2285
    %3726 = vmatpush1.bf16.msra.mxu0 %v2284
    %3727 = vmatprep.subr.bf16.mxu0 %v2277
    %3728 = vmatpush1.bf16.msra.mxu0 %v2276
    %3729 = vmatprep.subr.bf16.mxu0 %v2269
    %3730 = vmatpush1.bf16.msra.mxu0 %v2268
    %3731 = vmatprep.subr.bf16.mxu0 %v2261
    %3732 = vmatpush1.bf16.msra.mxu0 %v2260
    %3733 = vmatprep.subr.bf16.mxu0 %v2253
    %3734 = vmatpush1.bf16.msra.mxu0 %v2252
    %3735 = vmatprep.subr.bf16.mxu0 %v2245
    %3736 = vmatpush1.bf16.msra.mxu0 %v2244
    %3737 = vmatprep.subr.bf16.mxu0 %v2237
    %3738 = vmatpush1.bf16.msra.mxu0 %v2236
    %3739 = vmatprep.subr.bf16.mxu0 %v2229
    %3740 = vmatpush1.bf16.msra.mxu0 %v2228
    %3741 = vmatprep.subr.bf16.mxu0 %v2349
    %3742 = vmatpush2.bf16.msra.mxu0 %v2348
    %3743 = vmatprep.subr.bf16.mxu0 %v2341
    %3744 = vmatpush2.bf16.msra.mxu0 %v2340
    %3745 = vmatprep.subr.bf16.mxu0 %v2333
    %3746 = vmatpush2.bf16.msra.mxu0 %v2332
    %3747 = vmatprep.subr.bf16.mxu0 %v2325
    %3748 = vmatpush2.bf16.msra.mxu0 %v2324
    %3749 = vmatprep.subr.bf16.mxu0 %v2317
    %3750 = vmatpush2.bf16.msra.mxu0 %v2316
    %3751 = vmatprep.subr.bf16.mxu0 %v2309
    %3752 = vmatpush2.bf16.msra.mxu0 %v2308
    %3753 = vmatprep.subr.bf16.mxu0 %v2301
    %3754 = vmatpush2.bf16.msra.mxu0 %v2300
    %3755 = vmatprep.subr.bf16.mxu0 %v2293
    %3756 = vmatpush2.bf16.msra.mxu0 %v2292
    %3757 = vmatprep.mubr.bf16.mxu0 %v2901
    %3758 = vmatmul.mubr.bf16.gmra.mxu0 %v2900
    %v3759 = vpop.f32.mrf.mxu0
    %v3760 = vadd.f32 %v3717, %v3759
    %v3761 = vpop.f32.mrf.mxu0
    %v3762 = vadd.f32 %v3719, %v3761
    %v3763 = vpop.f32.mrf.mxu0
    %v3764 = vadd.f32 %v3721, %v3763
    %v3765 = vpop.f32.mrf.mxu0
    %v3766 = vadd.f32 %v3723, %v3765
    %3767 = vdwg.mxu0
    %3768 = vmatprep.subr.bf16.mxu0 %v2413
    %3769 = vmatpush1.bf16.msra.mxu0 %v2412
    %3770 = vmatprep.subr.bf16.mxu0 %v2405
    %3771 = vmatpush1.bf16.msra.mxu0 %v2404
    %3772 = vmatprep.subr.bf16.mxu0 %v2397
    %3773 = vmatpush1.bf16.msra.mxu0 %v2396
    %3774 = vmatprep.subr.bf16.mxu0 %v2389
    %3775 = vmatpush1.bf16.msra.mxu0 %v2388
    %3776 = vmatprep.subr.bf16.mxu0 %v2381
    %3777 = vmatpush1.bf16.msra.mxu0 %v2380
    %3778 = vmatprep.subr.bf16.mxu0 %v2373
    %3779 = vmatpush1.bf16.msra.mxu0 %v2372
    %3780 = vmatprep.subr.bf16.mxu0 %v2365
    %3781 = vmatpush1.bf16.msra.mxu0 %v2364
    %3782 = vmatprep.subr.bf16.mxu0 %v2357
    %3783 = vmatpush1.bf16.msra.mxu0 %v2356
    %3784 = vmatprep.subr.bf16.mxu0 0
    %3785 = vmatpush2.bf16.msra.mxu0 0
    %3786 = vmatprep.subr.bf16.mxu0 0
    %3787 = vmatpush2.bf16.msra.mxu0 0
    %3788 = vmatprep.subr.bf16.mxu0 0
    %3789 = vmatpush2.bf16.msra.mxu0 0
    %3790 = vmatprep.subr.bf16.mxu0 0
    %3791 = vmatpush2.bf16.msra.mxu0 0
    %3792 = vmatprep.subr.bf16.mxu0 0
    %3793 = vmatpush2.bf16.msra.mxu0 0
    %3794 = vmatprep.subr.bf16.mxu0 0
    %3795 = vmatpush2.bf16.msra.mxu0 0
    %3796 = vmatprep.subr.bf16.mxu0 0
    %3797 = vmatpush2.bf16.msra.mxu0 0
    %3798 = vmatprep.subr.bf16.mxu0 0
    %3799 = vmatpush2.bf16.msra.mxu0 0
    %3800 = vmatprep.mubr.bf16.mxu0 0
    %3801 = vmatmul.mubr.bf16.gmra.mxu0 %v2902
    %v3802 = vpop.f32.mrf.mxu0
    %v3803 = vadd.f32 %v3760, %v3802
    %v3804 = vpop.f32.mrf.mxu0
    %v3805 = vadd.f32 %v3762, %v3804
    %v3806 = vpop.f32.mrf.mxu0
    %v3807 = vadd.f32 %v3764, %v3806
    %v3808 = vpop.f32.mrf.mxu0
    %v3809 = vadd.f32 %v3766, %v3808
    %3810 = vdwg.mxu0
    %3811 = vmatprep.subr.bf16.mxu0 %v2159
    %3812 = vmatpush1.bf16.msra.mxu0 %v2158
    %3813 = vmatprep.subr.bf16.mxu0 %v2151
    %3814 = vmatpush1.bf16.msra.mxu0 %v2150
    %3815 = vmatprep.subr.bf16.mxu0 %v2143
    %3816 = vmatpush1.bf16.msra.mxu0 %v2142
    %3817 = vmatprep.subr.bf16.mxu0 %v2135
    %3818 = vmatpush1.bf16.msra.mxu0 %v2134
    %3819 = vmatprep.subr.bf16.mxu0 %v2127
    %3820 = vmatpush1.bf16.msra.mxu0 %v2126
    %3821 = vmatprep.subr.bf16.mxu0 %v2119
    %3822 = vmatpush1.bf16.msra.mxu0 %v2118
    %3823 = vmatprep.subr.bf16.mxu0 %v2111
    %3824 = vmatpush1.bf16.msra.mxu0 %v2110
    %3825 = vmatprep.subr.bf16.mxu0 %v2103
    %3826 = vmatpush1.bf16.msra.mxu0 %v2102
    %3827 = vmatprep.subr.bf16.mxu0 %v2223
    %3828 = vmatpush2.bf16.msra.mxu0 %v2222
    %3829 = vmatprep.subr.bf16.mxu0 %v2215
    %3830 = vmatpush2.bf16.msra.mxu0 %v2214
    %3831 = vmatprep.subr.bf16.mxu0 %v2207
    %3832 = vmatpush2.bf16.msra.mxu0 %v2206
    %3833 = vmatprep.subr.bf16.mxu0 %v2199
    %3834 = vmatpush2.bf16.msra.mxu0 %v2198
    %3835 = vmatprep.subr.bf16.mxu0 %v2191
    %3836 = vmatpush2.bf16.msra.mxu0 %v2190
    %3837 = vmatprep.subr.bf16.mxu0 %v2183
    %3838 = vmatpush2.bf16.msra.mxu0 %v2182
    %3839 = vmatprep.subr.bf16.mxu0 %v2175
    %3840 = vmatpush2.bf16.msra.mxu0 %v2174
    %3841 = vmatprep.subr.bf16.mxu0 %v2167
    %3842 = vmatpush2.bf16.msra.mxu0 %v2166
    %3843 = vmatprep.mubr.bf16.mxu0 %v2899
    %3844 = vmatmul.mubr.bf16.gmra.mxu0 %v2898
    %v3845 = vpop.f32.mrf.mxu0
    %v3846 = vadd.f32 %v3416, %v3845
    %v3847 = vpop.f32.mrf.mxu0
    %v3848 = vadd.f32 %v3418, %v3847
    %v3849 = vpop.f32.mrf.mxu0
    %v3850 = vadd.f32 %v3420, %v3849
    %v3851 = vpop.f32.mrf.mxu0
    %v3852 = vadd.f32 %v3422, %v3851
    %3853 = vdwg.mxu0
    %3854 = vmatprep.subr.bf16.mxu0 %v2287
    %3855 = vmatpush1.bf16.msra.mxu0 %v2286
    %3856 = vmatprep.subr.bf16.mxu0 %v2279
    %3857 = vmatpush1.bf16.msra.mxu0 %v2278
    %3858 = vmatprep.subr.bf16.mxu0 %v2271
    %3859 = vmatpush1.bf16.msra.mxu0 %v2270
    %3860 = vmatprep.subr.bf16.mxu0 %v2263
    %3861 = vmatpush1.bf16.msra.mxu0 %v2262
    %3862 = vmatprep.subr.bf16.mxu0 %v2255
    %3863 = vmatpush1.bf16.msra.mxu0 %v2254
    %3864 = vmatprep.subr.bf16.mxu0 %v2247
    %3865 = vmatpush1.bf16.msra.mxu0 %v2246
    %3866 = vmatprep.subr.bf16.mxu0 %v2239
    %3867 = vmatpush1.bf16.msra.mxu0 %v2238
    %3868 = vmatprep.subr.bf16.mxu0 %v2231
    %3869 = vmatpush1.bf16.msra.mxu0 %v2230
    %3870 = vmatprep.subr.bf16.mxu0 %v2351
    %3871 = vmatpush2.bf16.msra.mxu0 %v2350
    %3872 = vmatprep.subr.bf16.mxu0 %v2343
    %3873 = vmatpush2.bf16.msra.mxu0 %v2342
    %3874 = vmatprep.subr.bf16.mxu0 %v2335
    %3875 = vmatpush2.bf16.msra.mxu0 %v2334
    %3876 = vmatprep.subr.bf16.mxu0 %v2327
    %3877 = vmatpush2.bf16.msra.mxu0 %v2326
    %3878 = vmatprep.subr.bf16.mxu0 %v2319
    %3879 = vmatpush2.bf16.msra.mxu0 %v2318
    %3880 = vmatprep.subr.bf16.mxu0 %v2311
    %3881 = vmatpush2.bf16.msra.mxu0 %v2310
    %3882 = vmatprep.subr.bf16.mxu0 %v2303
    %3883 = vmatpush2.bf16.msra.mxu0 %v2302
    %3884 = vmatprep.subr.bf16.mxu0 %v2295
    %3885 = vmatpush2.bf16.msra.mxu0 %v2294
    %3886 = vmatprep.mubr.bf16.mxu0 %v2901
    %3887 = vmatmul.mubr.bf16.gmra.mxu0 %v2900
    %v3888 = vpop.f32.mrf.mxu0
    %v3889 = vadd.f32 %v3846, %v3888
    %v3890 = vpop.f32.mrf.mxu0
    %v3891 = vadd.f32 %v3848, %v3890
    %v3892 = vpop.f32.mrf.mxu0
    %v3893 = vadd.f32 %v3850, %v3892
    %v3894 = vpop.f32.mrf.mxu0
    %v3895 = vadd.f32 %v3852, %v3894
    %3896 = vdwg.mxu0
    %3897 = vmatprep.subr.bf16.mxu0 %v2415
    %3898 = vmatpush1.bf16.msra.mxu0 %v2414
    %3899 = vmatprep.subr.bf16.mxu0 %v2407
    %3900 = vmatpush1.bf16.msra.mxu0 %v2406
    %3901 = vmatprep.subr.bf16.mxu0 %v2399
    %3902 = vmatpush1.bf16.msra.mxu0 %v2398
    %3903 = vmatprep.subr.bf16.mxu0 %v2391
    %3904 = vmatpush1.bf16.msra.mxu0 %v2390
    %3905 = vmatprep.subr.bf16.mxu0 %v2383
    %3906 = vmatpush1.bf16.msra.mxu0 %v2382
    %3907 = vmatprep.subr.bf16.mxu0 %v2375
    %3908 = vmatpush1.bf16.msra.mxu0 %v2374
    %3909 = vmatprep.subr.bf16.mxu0 %v2367
    %3910 = vmatpush1.bf16.msra.mxu0 %v2366
    %3911 = vmatprep.subr.bf16.mxu0 %v2359
    %3912 = vmatpush1.bf16.msra.mxu0 %v2358
    %3913 = vmatprep.subr.bf16.mxu0 0
    %3914 = vmatpush2.bf16.msra.mxu0 0
    %3915 = vmatprep.subr.bf16.mxu0 0
    %3916 = vmatpush2.bf16.msra.mxu0 0
    %3917 = vmatprep.subr.bf16.mxu0 0
    %3918 = vmatpush2.bf16.msra.mxu0 0
    %3919 = vmatprep.subr.bf16.mxu0 0
    %3920 = vmatpush2.bf16.msra.mxu0 0
    %3921 = vmatprep.subr.bf16.mxu0 0
    %3922 = vmatpush2.bf16.msra.mxu0 0
    %3923 = vmatprep.subr.bf16.mxu0 0
    %3924 = vmatpush2.bf16.msra.mxu0 0
    %3925 = vmatprep.subr.bf16.mxu0 0
    %3926 = vmatpush2.bf16.msra.mxu0 0
    %3927 = vmatprep.subr.bf16.mxu0 0
    %3928 = vmatpush2.bf16.msra.mxu0 0
    %3929 = vmatprep.mubr.bf16.mxu0 0
    %3930 = vmatmul.mubr.bf16.gmra.mxu0 %v2902
    %v3931 = vpop.f32.mrf.mxu0
    %v3932 = vadd.f32 %v3889, %v3931
    %v3933 = vpop.f32.mrf.mxu0
    %v3934 = vadd.f32 %v3891, %v3933
    %v3935 = vpop.f32.mrf.mxu0
    %v3936 = vadd.f32 %v3893, %v3935
    %v3937 = vpop.f32.mrf.mxu0
    %v3938 = vadd.f32 %v3895, %v3937
    %3939 = vdwg.mxu0
    %v3940 = vld [vmem:[#allocation24] sm:$0xff]
    %v3942 = vlaneseq
    %v3943 = vshrl.u32 %v3942, 7
    %v3944 = vsub.s32 0, %v3943
    %v3945 = vrot.slane %v3940, %v3944
    %v3946 = vlaneseq
    %v3947 = vshrl.u32 %v3946, 7
    %v3948 = vsub.s32 1, %v3947
    %v3949 = vrot.slane %v3940, %v3948
    %v3950 = vlaneseq
    %v3951 = vshrl.u32 %v3950, 7
    %v3952 = vsub.s32 2, %v3951
    %v3953 = vrot.slane %v3940, %v3952
    %v3954 = vlaneseq
    %v3955 = vshrl.u32 %v3954, 7
    %v3956 = vsub.s32 3, %v3955
    %v3957 = vrot.slane %v3940, %v3956
    %v3958 = vlaneseq
    %v3959 = vshrl.u32 %v3958, 7
    %v3960 = vsub.s32 4, %v3959
    %v3961 = vrot.slane %v3940, %v3960
    %v3962 = vlaneseq
    %v3963 = vshrl.u32 %v3962, 7
    %v3964 = vsub.s32 5, %v3963
    %v3965 = vrot.slane %v3940, %v3964
    %v3966 = vlaneseq
    %v3967 = vshrl.u32 %v3966, 7
    %v3968 = vsub.s32 6, %v3967
    %v3969 = vrot.slane %v3940, %v3968
    %v3970 = vlaneseq
    %v3971 = vshrl.u32 %v3970, 7
    %v3972 = vsub.s32 7, %v3971
    %v3973 = vrot.slane %v3940, %v3972
    %v3982 = vmul.f32 %v3545, %v3945
    %v3983 = vmul.f32 %v3547, %v3949
    %v3984 = vmul.f32 %v3674, %v3953
    %v3985 = vmul.f32 %v3676, %v3957
    %v3986 = vmul.f32 %v3803, %v3961
    %v3987 = vmul.f32 %v3805, %v3965
    %v3988 = vmul.f32 %v3932, %v3969
    %v3989 = vmul.f32 %v3934, %v3973
    %v3990 = vmul.f32 %v3549, %v3945
    %v3991 = vmul.f32 %v3551, %v3949
    %v3992 = vmul.f32 %v3678, %v3953
    %v3993 = vmul.f32 %v3680, %v3957
    %v3994 = vmul.f32 %v3807, %v3961
    %v3995 = vmul.f32 %v3809, %v3965
    %v3996 = vmul.f32 %v3936, %v3969
    %v3997 = vmul.f32 %v3938, %v3973
    %v3998 = vld [vmem:[#allocation25] sm:$0xff]
    %v4000 = vlaneseq
    %v4001 = vshrl.u32 %v4000, 7
    %v4002 = vsub.s32 0, %v4001
    %v4003 = vrot.slane %v3998, %v4002
    %v4004 = vlaneseq
    %v4005 = vshrl.u32 %v4004, 7
    %v4006 = vsub.s32 1, %v4005
    %v4007 = vrot.slane %v3998, %v4006
    %v4008 = vlaneseq
    %v4009 = vshrl.u32 %v4008, 7
    %v4010 = vsub.s32 2, %v4009
    %v4011 = vrot.slane %v3998, %v4010
    %v4012 = vlaneseq
    %v4013 = vshrl.u32 %v4012, 7
    %v4014 = vsub.s32 3, %v4013
    %v4015 = vrot.slane %v3998, %v4014
    %v4016 = vlaneseq
    %v4017 = vshrl.u32 %v4016, 7
    %v4018 = vsub.s32 4, %v4017
    %v4019 = vrot.slane %v3998, %v4018
    %v4020 = vlaneseq
    %v4021 = vshrl.u32 %v4020, 7
    %v4022 = vsub.s32 5, %v4021
    %v4023 = vrot.slane %v3998, %v4022
    %v4024 = vlaneseq
    %v4025 = vshrl.u32 %v4024, 7
    %v4026 = vsub.s32 6, %v4025
    %v4027 = vrot.slane %v3998, %v4026
    %v4028 = vlaneseq
    %v4029 = vshrl.u32 %v4028, 7
    %v4030 = vsub.s32 7, %v4029
    %v4031 = vrot.slane %v3998, %v4030
    %v4040 = vadd.f32 %v3982, %v4003
    %v4041 = vadd.f32 %v3983, %v4007
    %v4042 = vadd.f32 %v3984, %v4011
    %v4043 = vadd.f32 %v3985, %v4015
    %v4044 = vadd.f32 %v3986, %v4019
    %v4045 = vadd.f32 %v3987, %v4023
    %v4046 = vadd.f32 %v3988, %v4027
    %v4047 = vadd.f32 %v3989, %v4031
    %v4048 = vadd.f32 %v3990, %v4003
    %v4049 = vadd.f32 %v3991, %v4007
    %v4050 = vadd.f32 %v3992, %v4011
    %v4051 = vadd.f32 %v3993, %v4015
    %v4052 = vadd.f32 %v3994, %v4019
    %v4053 = vadd.f32 %v3995, %v4023
    %v4054 = vadd.f32 %v3996, %v4027
    %v4055 = vadd.f32 %v3997, %v4031
    %vm4056 = vcmp.gt.f32.partialorder %v4040, 0.0
    %vm4057 = vcmp.gt.f32.partialorder %v4041, 0.0
    %vm4058 = vcmp.gt.f32.partialorder %v4042, 0.0
    %vm4059 = vcmp.gt.f32.partialorder %v4043, 0.0
    %vm4060 = vcmp.gt.f32.partialorder %v4044, 0.0
    %vm4061 = vcmp.gt.f32.partialorder %v4045, 0.0
    %vm4062 = vcmp.gt.f32.partialorder %v4046, 0.0
    %vm4063 = vcmp.gt.f32.partialorder %v4047, 0.0
    %vm4064 = vcmp.gt.f32.partialorder %v4048, 0.0
    %vm4065 = vcmp.gt.f32.partialorder %v4049, 0.0
    %vm4066 = vcmp.gt.f32.partialorder %v4050, 0.0
    %vm4067 = vcmp.gt.f32.partialorder %v4051, 0.0
    %vm4068 = vcmp.gt.f32.partialorder %v4052, 0.0
    %vm4069 = vcmp.gt.f32.partialorder %v4053, 0.0
    %vm4070 = vcmp.gt.f32.partialorder %v4054, 0.0
    %vm4071 = vcmp.gt.f32.partialorder %v4055, 0.0
    %v4072 = vstv %s382
    %v4073 = vmul.f32 %v4072, %v4040
    %v4074 = vmul.f32 %v4072, %v4041
    %v4075 = vmul.f32 %v4072, %v4042
    %v4076 = vmul.f32 %v4072, %v4043
    %v4077 = vmul.f32 %v4072, %v4044
    %v4078 = vmul.f32 %v4072, %v4045
    %v4079 = vmul.f32 %v4072, %v4046
    %v4080 = vmul.f32 %v4072, %v4047
    %v4081 = vmul.f32 %v4072, %v4048
    %v4082 = vmul.f32 %v4072, %v4049
    %v4083 = vmul.f32 %v4072, %v4050
    %v4084 = vmul.f32 %v4072, %v4051
    %v4085 = vmul.f32 %v4072, %v4052
    %v4086 = vmul.f32 %v4072, %v4053
    %v4087 = vmul.f32 %v4072, %v4054
    %v4088 = vmul.f32 %v4072, %v4055
    %v4089 = vsel %vm4056, %v4040, %v4073
    %v4090 = vsel %vm4057, %v4041, %v4074
    %v4091 = vsel %vm4058, %v4042, %v4075
    %v4092 = vsel %vm4059, %v4043, %v4076
    %v4093 = vsel %vm4060, %v4044, %v4077
    %v4094 = vsel %vm4061, %v4045, %v4078
    %v4095 = vsel %vm4062, %v4046, %v4079
    %v4096 = vsel %vm4063, %v4047, %v4080
    %v4097 = vsel %vm4064, %v4048, %v4081
    %v4098 = vsel %vm4065, %v4049, %v4082
    %v4099 = vsel %vm4066, %v4050, %v4083
    %v4100 = vsel %vm4067, %v4051, %v4084
    %v4101 = vsel %vm4068, %v4052, %v4085
    %v4102 = vsel %vm4069, %v4053, %v4086
    %v4103 = vsel %vm4070, %v4054, %v4087
    %v4104 = vsel %vm4071, %v4055, %v4088
    %s4105 = smul.u32 2, 128
    %s4106 = smul.u32 %s4105, 4
    %s4107 = sshll.u32 %s4106, 4
    %4108 = dma.done %s367, %s4107
    %v4109 = vld [vmem:[#allocation4] sm:$0xff]
    %v4110 = vld [vmem:[#allocation4 + $0x8] sm:$0xff]
    %v4111 = vld [vmem:[#allocation4 + $0x10] sm:$0xff]
    %v4112 = vld [vmem:[#allocation4 + $0x18] sm:$0xff]
    %v4113 = vld [vmem:[#allocation4 + $0x20] sm:$0xff]
    %v4114 = vld [vmem:[#allocation4 + $0x28] sm:$0xff]
    %v4115 = vld [vmem:[#allocation4 + $0x30] sm:$0xff]
    %v4116 = vld [vmem:[#allocation4 + $0x38] sm:$0xff]
    %v4117 = vld [vmem:[#allocation4 + $0x40] sm:$0xff]
    %v4118 = vld [vmem:[#allocation4 + $0x48] sm:$0xff]
    %v4119 = vld [vmem:[#allocation4 + $0x50] sm:$0xff]
    %v4120 = vld [vmem:[#allocation4 + $0x58] sm:$0xff]
    %v4121 = vld [vmem:[#allocation4 + $0x60] sm:$0xff]
    %v4122 = vld [vmem:[#allocation4 + $0x68] sm:$0xff]
    %v4123 = vld [vmem:[#allocation4 + $0x70] sm:$0xff]
    %v4124 = vld [vmem:[#allocation4 + $0x78] sm:$0xff]
    %v4125 = vld [vmem:[#allocation4 + $0x80] sm:$0xff]
    %v4126 = vld [vmem:[#allocation4 + $0x88] sm:$0xff]
    %v4127 = vld [vmem:[#allocation4 + $0x90] sm:$0xff]
    %v4128 = vld [vmem:[#allocation4 + $0x98] sm:$0xff]
    %v4129 = vld [vmem:[#allocation4 + $0xa0] sm:$0xff]
    %v4130 = vld [vmem:[#allocation4 + $0xa8] sm:$0xff]
    %v4131 = vld [vmem:[#allocation4 + $0xb0] sm:$0xff]
    %v4132 = vld [vmem:[#allocation4 + $0xb8] sm:$0xff]
    %v4133 = vld [vmem:[#allocation4 + $0xc0] sm:$0xff]
    %v4134 = vld [vmem:[#allocation4 + $0xc8] sm:$0xff]
    %v4135 = vld [vmem:[#allocation4 + $0xd0] sm:$0xff]
    %v4136 = vld [vmem:[#allocation4 + $0xd8] sm:$0xff]
    %v4137 = vld [vmem:[#allocation4 + $0xe0] sm:$0xff]
    %v4138 = vld [vmem:[#allocation4 + $0xe8] sm:$0xff]
    %v4139 = vld [vmem:[#allocation4 + $0xf0] sm:$0xff]
    %v4140 = vld [vmem:[#allocation4 + $0xf8] sm:$0xff]
    %v4141 = vld [vmem:[#allocation4 + $0x100] sm:$0xff]
    %v4142 = vld [vmem:[#allocation4 + $0x108] sm:$0xff]
    %v4143 = vld [vmem:[#allocation4 + $0x110] sm:$0xff]
    %v4144 = vld [vmem:[#allocation4 + $0x118] sm:$0xff]
    %v4145 = vld [vmem:[#allocation4 + $0x120] sm:$0xff]
    %v4146 = vld [vmem:[#allocation4 + $0x128] sm:$0xff]
    %v4147 = vld [vmem:[#allocation4 + $0x130] sm:$0xff]
    %v4148 = vld [vmem:[#allocation4 + $0x138] sm:$0xff]
    %v4149 = vld [vmem:[#allocation4 + $0x140] sm:$0xff]
    %v4150 = vld [vmem:[#allocation4 + $0x148] sm:$0xff]
    %v4151 = vld [vmem:[#allocation4 + $0x150] sm:$0xff]
    %v4152 = vld [vmem:[#allocation4 + $0x158] sm:$0xff]
    %v4153 = vld [vmem:[#allocation4 + $0x160] sm:$0xff]
    %v4154 = vld [vmem:[#allocation4 + $0x168] sm:$0xff]
    %v4155 = vld [vmem:[#allocation4 + $0x170] sm:$0xff]
    %v4156 = vld [vmem:[#allocation4 + $0x178] sm:$0xff]
    %v4157 = vld [vmem:[#allocation4 + $0x180] sm:$0xff]
    %v4158 = vld [vmem:[#allocation4 + $0x188] sm:$0xff]
    %v4159 = vld [vmem:[#allocation4 + $0x190] sm:$0xff]
    %v4160 = vld [vmem:[#allocation4 + $0x198] sm:$0xff]
    %v4161 = vld [vmem:[#allocation4 + $0x1a0] sm:$0xff]
    %v4162 = vld [vmem:[#allocation4 + $0x1a8] sm:$0xff]
    %v4163 = vld [vmem:[#allocation4 + $0x1b0] sm:$0xff]
    %v4164 = vld [vmem:[#allocation4 + $0x1b8] sm:$0xff]
    %v4165 = vld [vmem:[#allocation4 + $0x1c0] sm:$0xff]
    %v4166 = vld [vmem:[#allocation4 + $0x1c8] sm:$0xff]
    %v4167 = vld [vmem:[#allocation4 + $0x1d0] sm:$0xff]
    %v4168 = vld [vmem:[#allocation4 + $0x1d8] sm:$0xff]
    %v4169 = vld [vmem:[#allocation4 + $0x1e0] sm:$0xff]
    %v4170 = vld [vmem:[#allocation4 + $0x1e8] sm:$0xff]
    %v4171 = vld [vmem:[#allocation4 + $0x1f0] sm:$0xff]
    %v4172 = vld [vmem:[#allocation4 + $0x1f8] sm:$0xff]
    %v4173 = vld [vmem:[#allocation4 + $0x200] sm:$0xff]
    %v4174 = vld [vmem:[#allocation4 + $0x208] sm:$0xff]
    %v4175 = vld [vmem:[#allocation4 + $0x210] sm:$0xff]
    %v4176 = vld [vmem:[#allocation4 + $0x218] sm:$0xff]
    %v4177 = vld [vmem:[#allocation4 + $0x220] sm:$0xff]
    %v4178 = vld [vmem:[#allocation4 + $0x228] sm:$0xff]
    %v4179 = vld [vmem:[#allocation4 + $0x230] sm:$0xff]
    %v4180 = vld [vmem:[#allocation4 + $0x238] sm:$0xff]
    %v4181 = vld [vmem:[#allocation4 + $0x240] sm:$0xff]
    %v4182 = vld [vmem:[#allocation4 + $0x248] sm:$0xff]
    %v4183 = vld [vmem:[#allocation4 + $0x250] sm:$0xff]
    %v4184 = vld [vmem:[#allocation4 + $0x258] sm:$0xff]
    %v4185 = vld [vmem:[#allocation4 + $0x260] sm:$0xff]
    %v4186 = vld [vmem:[#allocation4 + $0x268] sm:$0xff]
    %v4187 = vld [vmem:[#allocation4 + $0x270] sm:$0xff]
    %v4188 = vld [vmem:[#allocation4 + $0x278] sm:$0xff]
    %v4189 = vld [vmem:[#allocation4 + $0x280] sm:$0xff]
    %v4190 = vld [vmem:[#allocation4 + $0x288] sm:$0xff]
    %v4191 = vld [vmem:[#allocation4 + $0x290] sm:$0xff]
    %v4192 = vld [vmem:[#allocation4 + $0x298] sm:$0xff]
    %v4193 = vld [vmem:[#allocation4 + $0x2a0] sm:$0xff]
    %v4194 = vld [vmem:[#allocation4 + $0x2a8] sm:$0xff]
    %v4195 = vld [vmem:[#allocation4 + $0x2b0] sm:$0xff]
    %v4196 = vld [vmem:[#allocation4 + $0x2b8] sm:$0xff]
    %v4197 = vld [vmem:[#allocation4 + $0x2c0] sm:$0xff]
    %v4198 = vld [vmem:[#allocation4 + $0x2c8] sm:$0xff]
    %v4199 = vld [vmem:[#allocation4 + $0x2d0] sm:$0xff]
    %v4200 = vld [vmem:[#allocation4 + $0x2d8] sm:$0xff]
    %v4201 = vld [vmem:[#allocation4 + $0x2e0] sm:$0xff]
    %v4202 = vld [vmem:[#allocation4 + $0x2e8] sm:$0xff]
    %v4203 = vld [vmem:[#allocation4 + $0x2f0] sm:$0xff]
    %v4204 = vld [vmem:[#allocation4 + $0x2f8] sm:$0xff]
    %v4205 = vld [vmem:[#allocation4 + $0x300] sm:$0xff]
    %v4206 = vld [vmem:[#allocation4 + $0x308] sm:$0xff]
    %v4207 = vld [vmem:[#allocation4 + $0x310] sm:$0xff]
    %v4208 = vld [vmem:[#allocation4 + $0x318] sm:$0xff]
    %v4209 = vld [vmem:[#allocation4 + $0x320] sm:$0xff]
    %v4210 = vld [vmem:[#allocation4 + $0x328] sm:$0xff]
    %v4211 = vld [vmem:[#allocation4 + $0x330] sm:$0xff]
    %v4212 = vld [vmem:[#allocation4 + $0x338] sm:$0xff]
    %v4213 = vld [vmem:[#allocation4 + $0x340] sm:$0xff]
    %v4214 = vld [vmem:[#allocation4 + $0x348] sm:$0xff]
    %v4215 = vld [vmem:[#allocation4 + $0x350] sm:$0xff]
    %v4216 = vld [vmem:[#allocation4 + $0x358] sm:$0xff]
    %v4217 = vld [vmem:[#allocation4 + $0x360] sm:$0xff]
    %v4218 = vld [vmem:[#allocation4 + $0x368] sm:$0xff]
    %v4219 = vld [vmem:[#allocation4 + $0x370] sm:$0xff]
    %v4220 = vld [vmem:[#allocation4 + $0x378] sm:$0xff]
    %v4221 = vld [vmem:[#allocation4 + $0x380] sm:$0xff]
    %v4222 = vld [vmem:[#allocation4 + $0x388] sm:$0xff]
    %v4223 = vld [vmem:[#allocation4 + $0x390] sm:$0xff]
    %v4224 = vld [vmem:[#allocation4 + $0x398] sm:$0xff]
    %v4225 = vld [vmem:[#allocation4 + $0x3a0] sm:$0xff]
    %v4226 = vld [vmem:[#allocation4 + $0x3a8] sm:$0xff]
    %v4227 = vld [vmem:[#allocation4 + $0x3b0] sm:$0xff]
    %v4228 = vld [vmem:[#allocation4 + $0x3b8] sm:$0xff]
    %v4229 = vld [vmem:[#allocation4 + $0x3c0] sm:$0xff]
    %v4230 = vld [vmem:[#allocation4 + $0x3c8] sm:$0xff]
    %v4231 = vld [vmem:[#allocation4 + $0x3d0] sm:$0xff]
    %v4232 = vld [vmem:[#allocation4 + $0x3d8] sm:$0xff]
    %v4233 = vld [vmem:[#allocation4 + $0x3e0] sm:$0xff]
    %v4234 = vld [vmem:[#allocation4 + $0x3e8] sm:$0xff]
    %v4235 = vld [vmem:[#allocation4 + $0x3f0] sm:$0xff]
    %v4236 = vld [vmem:[#allocation4 + $0x3f8] sm:$0xff]
    %v4237 = vunpack.c.l.s8.bf16 %v4109
    %v4238 = vunpack.c.l.s8.bf16 %v4110
    %v4239 = vunpack.c.l.s8.bf16 %v4111
    %v4240 = vunpack.c.l.s8.bf16 %v4112
    %v4241 = vunpack.c.h.s8.bf16 %v4109
    %v4242 = vunpack.c.h.s8.bf16 %v4110
    %v4243 = vunpack.c.h.s8.bf16 %v4111
    %v4244 = vunpack.c.h.s8.bf16 %v4112
    %v4245 = vunpack.c.l.s8.bf16 %v4113
    %v4246 = vunpack.c.l.s8.bf16 %v4114
    %v4247 = vunpack.c.l.s8.bf16 %v4115
    %v4248 = vunpack.c.l.s8.bf16 %v4116
    %v4249 = vunpack.c.h.s8.bf16 %v4113
    %v4250 = vunpack.c.h.s8.bf16 %v4114
    %v4251 = vunpack.c.h.s8.bf16 %v4115
    %v4252 = vunpack.c.h.s8.bf16 %v4116
    %v4253 = vunpack.c.l.s8.bf16 %v4117
    %v4254 = vunpack.c.l.s8.bf16 %v4118
    %v4255 = vunpack.c.l.s8.bf16 %v4119
    %v4256 = vunpack.c.l.s8.bf16 %v4120
    %v4257 = vunpack.c.h.s8.bf16 %v4117
    %v4258 = vunpack.c.h.s8.bf16 %v4118
    %v4259 = vunpack.c.h.s8.bf16 %v4119
    %v4260 = vunpack.c.h.s8.bf16 %v4120
    %v4261 = vunpack.c.l.s8.bf16 %v4121
    %v4262 = vunpack.c.l.s8.bf16 %v4122
    %v4263 = vunpack.c.l.s8.bf16 %v4123
    %v4264 = vunpack.c.l.s8.bf16 %v4124
    %v4265 = vunpack.c.h.s8.bf16 %v4121
    %v4266 = vunpack.c.h.s8.bf16 %v4122
    %v4267 = vunpack.c.h.s8.bf16 %v4123
    %v4268 = vunpack.c.h.s8.bf16 %v4124
    %v4269 = vunpack.c.l.s8.bf16 %v4125
    %v4270 = vunpack.c.l.s8.bf16 %v4126
    %v4271 = vunpack.c.l.s8.bf16 %v4127
    %v4272 = vunpack.c.l.s8.bf16 %v4128
    %v4273 = vunpack.c.h.s8.bf16 %v4125
    %v4274 = vunpack.c.h.s8.bf16 %v4126
    %v4275 = vunpack.c.h.s8.bf16 %v4127
    %v4276 = vunpack.c.h.s8.bf16 %v4128
    %v4277 = vunpack.c.l.s8.bf16 %v4129
    %v4278 = vunpack.c.l.s8.bf16 %v4130
    %v4279 = vunpack.c.l.s8.bf16 %v4131
    %v4280 = vunpack.c.l.s8.bf16 %v4132
    %v4281 = vunpack.c.h.s8.bf16 %v4129
    %v4282 = vunpack.c.h.s8.bf16 %v4130
    %v4283 = vunpack.c.h.s8.bf16 %v4131
    %v4284 = vunpack.c.h.s8.bf16 %v4132
    %v4285 = vunpack.c.l.s8.bf16 %v4133
    %v4286 = vunpack.c.l.s8.bf16 %v4134
    %v4287 = vunpack.c.l.s8.bf16 %v4135
    %v4288 = vunpack.c.l.s8.bf16 %v4136
    %v4289 = vunpack.c.h.s8.bf16 %v4133
    %v4290 = vunpack.c.h.s8.bf16 %v4134
    %v4291 = vunpack.c.h.s8.bf16 %v4135
    %v4292 = vunpack.c.h.s8.bf16 %v4136
    %v4293 = vunpack.c.l.s8.bf16 %v4137
    %v4294 = vunpack.c.l.s8.bf16 %v4138
    %v4295 = vunpack.c.l.s8.bf16 %v4139
    %v4296 = vunpack.c.l.s8.bf16 %v4140
    %v4297 = vunpack.c.h.s8.bf16 %v4137
    %v4298 = vunpack.c.h.s8.bf16 %v4138
    %v4299 = vunpack.c.h.s8.bf16 %v4139
    %v4300 = vunpack.c.h.s8.bf16 %v4140
    %v4301 = vunpack.c.l.s8.bf16 %v4141
    %v4302 = vunpack.c.l.s8.bf16 %v4142
    %v4303 = vunpack.c.l.s8.bf16 %v4143
    %v4304 = vunpack.c.l.s8.bf16 %v4144
    %v4305 = vunpack.c.h.s8.bf16 %v4141
    %v4306 = vunpack.c.h.s8.bf16 %v4142
    %v4307 = vunpack.c.h.s8.bf16 %v4143
    %v4308 = vunpack.c.h.s8.bf16 %v4144
    %v4309 = vunpack.c.l.s8.bf16 %v4145
    %v4310 = vunpack.c.l.s8.bf16 %v4146
    %v4311 = vunpack.c.l.s8.bf16 %v4147
    %v4312 = vunpack.c.l.s8.bf16 %v4148
    %v4313 = vunpack.c.h.s8.bf16 %v4145
    %v4314 = vunpack.c.h.s8.bf16 %v4146
    %v4315 = vunpack.c.h.s8.bf16 %v4147
    %v4316 = vunpack.c.h.s8.bf16 %v4148
    %v4317 = vunpack.c.l.s8.bf16 %v4149
    %v4318 = vunpack.c.l.s8.bf16 %v4150
    %v4319 = vunpack.c.l.s8.bf16 %v4151
    %v4320 = vunpack.c.l.s8.bf16 %v4152
    %v4321 = vunpack.c.h.s8.bf16 %v4149
    %v4322 = vunpack.c.h.s8.bf16 %v4150
    %v4323 = vunpack.c.h.s8.bf16 %v4151
    %v4324 = vunpack.c.h.s8.bf16 %v4152
    %v4325 = vunpack.c.l.s8.bf16 %v4153
    %v4326 = vunpack.c.l.s8.bf16 %v4154
    %v4327 = vunpack.c.l.s8.bf16 %v4155
    %v4328 = vunpack.c.l.s8.bf16 %v4156
    %v4329 = vunpack.c.h.s8.bf16 %v4153
    %v4330 = vunpack.c.h.s8.bf16 %v4154
    %v4331 = vunpack.c.h.s8.bf16 %v4155
    %v4332 = vunpack.c.h.s8.bf16 %v4156
    %v4333 = vunpack.c.l.s8.bf16 %v4157
    %v4334 = vunpack.c.l.s8.bf16 %v4158
    %v4335 = vunpack.c.l.s8.bf16 %v4159
    %v4336 = vunpack.c.l.s8.bf16 %v4160
    %v4337 = vunpack.c.h.s8.bf16 %v4157
    %v4338 = vunpack.c.h.s8.bf16 %v4158
    %v4339 = vunpack.c.h.s8.bf16 %v4159
    %v4340 = vunpack.c.h.s8.bf16 %v4160
    %v4341 = vunpack.c.l.s8.bf16 %v4161
    %v4342 = vunpack.c.l.s8.bf16 %v4162
    %v4343 = vunpack.c.l.s8.bf16 %v4163
    %v4344 = vunpack.c.l.s8.bf16 %v4164
    %v4345 = vunpack.c.h.s8.bf16 %v4161
    %v4346 = vunpack.c.h.s8.bf16 %v4162
    %v4347 = vunpack.c.h.s8.bf16 %v4163
    %v4348 = vunpack.c.h.s8.bf16 %v4164
    %v4349 = vunpack.c.l.s8.bf16 %v4165
    %v4350 = vunpack.c.l.s8.bf16 %v4166
    %v4351 = vunpack.c.l.s8.bf16 %v4167
    %v4352 = vunpack.c.l.s8.bf16 %v4168
    %v4353 = vunpack.c.h.s8.bf16 %v4165
    %v4354 = vunpack.c.h.s8.bf16 %v4166
    %v4355 = vunpack.c.h.s8.bf16 %v4167
    %v4356 = vunpack.c.h.s8.bf16 %v4168
    %v4357 = vunpack.c.l.s8.bf16 %v4169
    %v4358 = vunpack.c.l.s8.bf16 %v4170
    %v4359 = vunpack.c.l.s8.bf16 %v4171
    %v4360 = vunpack.c.l.s8.bf16 %v4172
    %v4361 = vunpack.c.h.s8.bf16 %v4169
    %v4362 = vunpack.c.h.s8.bf16 %v4170
    %v4363 = vunpack.c.h.s8.bf16 %v4171
    %v4364 = vunpack.c.h.s8.bf16 %v4172
    %v4365 = vunpack.c.l.s8.bf16 %v4173
    %v4366 = vunpack.c.l.s8.bf16 %v4174
    %v4367 = vunpack.c.l.s8.bf16 %v4175
    %v4368 = vunpack.c.l.s8.bf16 %v4176
    %v4369 = vunpack.c.h.s8.bf16 %v4173
    %v4370 = vunpack.c.h.s8.bf16 %v4174
    %v4371 = vunpack.c.h.s8.bf16 %v4175
    %v4372 = vunpack.c.h.s8.bf16 %v4176
    %v4373 = vunpack.c.l.s8.bf16 %v4177
    %v4374 = vunpack.c.l.s8.bf16 %v4178
    %v4375 = vunpack.c.l.s8.bf16 %v4179
    %v4376 = vunpack.c.l.s8.bf16 %v4180
    %v4377 = vunpack.c.h.s8.bf16 %v4177
    %v4378 = vunpack.c.h.s8.bf16 %v4178
    %v4379 = vunpack.c.h.s8.bf16 %v4179
    %v4380 = vunpack.c.h.s8.bf16 %v4180
    %v4381 = vunpack.c.l.s8.bf16 %v4181
    %v4382 = vunpack.c.l.s8.bf16 %v4182
    %v4383 = vunpack.c.l.s8.bf16 %v4183
    %v4384 = vunpack.c.l.s8.bf16 %v4184
    %v4385 = vunpack.c.h.s8.bf16 %v4181
    %v4386 = vunpack.c.h.s8.bf16 %v4182
    %v4387 = vunpack.c.h.s8.bf16 %v4183
    %v4388 = vunpack.c.h.s8.bf16 %v4184
    %v4389 = vunpack.c.l.s8.bf16 %v4185
    %v4390 = vunpack.c.l.s8.bf16 %v4186
    %v4391 = vunpack.c.l.s8.bf16 %v4187
    %v4392 = vunpack.c.l.s8.bf16 %v4188
    %v4393 = vunpack.c.h.s8.bf16 %v4185
    %v4394 = vunpack.c.h.s8.bf16 %v4186
    %v4395 = vunpack.c.h.s8.bf16 %v4187
    %v4396 = vunpack.c.h.s8.bf16 %v4188
    %v4397 = vunpack.c.l.s8.bf16 %v4189
    %v4398 = vunpack.c.l.s8.bf16 %v4190
    %v4399 = vunpack.c.l.s8.bf16 %v4191
    %v4400 = vunpack.c.l.s8.bf16 %v4192
    %v4401 = vunpack.c.h.s8.bf16 %v4189
    %v4402 = vunpack.c.h.s8.bf16 %v4190
    %v4403 = vunpack.c.h.s8.bf16 %v4191
    %v4404 = vunpack.c.h.s8.bf16 %v4192
    %v4405 = vunpack.c.l.s8.bf16 %v4193
    %v4406 = vunpack.c.l.s8.bf16 %v4194
    %v4407 = vunpack.c.l.s8.bf16 %v4195
    %v4408 = vunpack.c.l.s8.bf16 %v4196
    %v4409 = vunpack.c.h.s8.bf16 %v4193
    %v4410 = vunpack.c.h.s8.bf16 %v4194
    %v4411 = vunpack.c.h.s8.bf16 %v4195
    %v4412 = vunpack.c.h.s8.bf16 %v4196
    %v4413 = vunpack.c.l.s8.bf16 %v4197
    %v4414 = vunpack.c.l.s8.bf16 %v4198
    %v4415 = vunpack.c.l.s8.bf16 %v4199
    %v4416 = vunpack.c.l.s8.bf16 %v4200
    %v4417 = vunpack.c.h.s8.bf16 %v4197
    %v4418 = vunpack.c.h.s8.bf16 %v4198
    %v4419 = vunpack.c.h.s8.bf16 %v4199
    %v4420 = vunpack.c.h.s8.bf16 %v4200
    %v4421 = vunpack.c.l.s8.bf16 %v4201
    %v4422 = vunpack.c.l.s8.bf16 %v4202
    %v4423 = vunpack.c.l.s8.bf16 %v4203
    %v4424 = vunpack.c.l.s8.bf16 %v4204
    %v4425 = vunpack.c.h.s8.bf16 %v4201
    %v4426 = vunpack.c.h.s8.bf16 %v4202
    %v4427 = vunpack.c.h.s8.bf16 %v4203
    %v4428 = vunpack.c.h.s8.bf16 %v4204
    %v4429 = vunpack.c.l.s8.bf16 %v4205
    %v4430 = vunpack.c.l.s8.bf16 %v4206
    %v4431 = vunpack.c.l.s8.bf16 %v4207
    %v4432 = vunpack.c.l.s8.bf16 %v4208
    %v4433 = vunpack.c.h.s8.bf16 %v4205
    %v4434 = vunpack.c.h.s8.bf16 %v4206
    %v4435 = vunpack.c.h.s8.bf16 %v4207
    %v4436 = vunpack.c.h.s8.bf16 %v4208
    %v4437 = vunpack.c.l.s8.bf16 %v4209
    %v4438 = vunpack.c.l.s8.bf16 %v4210
    %v4439 = vunpack.c.l.s8.bf16 %v4211
    %v4440 = vunpack.c.l.s8.bf16 %v4212
    %v4441 = vunpack.c.h.s8.bf16 %v4209
    %v4442 = vunpack.c.h.s8.bf16 %v4210
    %v4443 = vunpack.c.h.s8.bf16 %v4211
    %v4444 = vunpack.c.h.s8.bf16 %v4212
    %v4445 = vunpack.c.l.s8.bf16 %v4213
    %v4446 = vunpack.c.l.s8.bf16 %v4214
    %v4447 = vunpack.c.l.s8.bf16 %v4215
    %v4448 = vunpack.c.l.s8.bf16 %v4216
    %v4449 = vunpack.c.h.s8.bf16 %v4213
    %v4450 = vunpack.c.h.s8.bf16 %v4214
    %v4451 = vunpack.c.h.s8.bf16 %v4215
    %v4452 = vunpack.c.h.s8.bf16 %v4216
    %v4453 = vunpack.c.l.s8.bf16 %v4217
    %v4454 = vunpack.c.l.s8.bf16 %v4218
    %v4455 = vunpack.c.l.s8.bf16 %v4219
    %v4456 = vunpack.c.l.s8.bf16 %v4220
    %v4457 = vunpack.c.h.s8.bf16 %v4217
    %v4458 = vunpack.c.h.s8.bf16 %v4218
    %v4459 = vunpack.c.h.s8.bf16 %v4219
    %v4460 = vunpack.c.h.s8.bf16 %v4220
    %v4461 = vunpack.c.l.s8.bf16 %v4221
    %v4462 = vunpack.c.l.s8.bf16 %v4222
    %v4463 = vunpack.c.l.s8.bf16 %v4223
    %v4464 = vunpack.c.l.s8.bf16 %v4224
    %v4465 = vunpack.c.h.s8.bf16 %v4221
    %v4466 = vunpack.c.h.s8.bf16 %v4222
    %v4467 = vunpack.c.h.s8.bf16 %v4223
    %v4468 = vunpack.c.h.s8.bf16 %v4224
    %v4469 = vunpack.c.l.s8.bf16 %v4225
    %v4470 = vunpack.c.l.s8.bf16 %v4226
    %v4471 = vunpack.c.l.s8.bf16 %v4227
    %v4472 = vunpack.c.l.s8.bf16 %v4228
    %v4473 = vunpack.c.h.s8.bf16 %v4225
    %v4474 = vunpack.c.h.s8.bf16 %v4226
    %v4475 = vunpack.c.h.s8.bf16 %v4227
    %v4476 = vunpack.c.h.s8.bf16 %v4228
    %v4477 = vunpack.c.l.s8.bf16 %v4229
    %v4478 = vunpack.c.l.s8.bf16 %v4230
    %v4479 = vunpack.c.l.s8.bf16 %v4231
    %v4480 = vunpack.c.l.s8.bf16 %v4232
    %v4481 = vunpack.c.h.s8.bf16 %v4229
    %v4482 = vunpack.c.h.s8.bf16 %v4230
    %v4483 = vunpack.c.h.s8.bf16 %v4231
    %v4484 = vunpack.c.h.s8.bf16 %v4232
    %v4485 = vunpack.c.l.s8.bf16 %v4233
    %v4486 = vunpack.c.l.s8.bf16 %v4234
    %v4487 = vunpack.c.l.s8.bf16 %v4235
    %v4488 = vunpack.c.l.s8.bf16 %v4236
    %v4489 = vunpack.c.h.s8.bf16 %v4233
    %v4490 = vunpack.c.h.s8.bf16 %v4234
    %v4491 = vunpack.c.h.s8.bf16 %v4235
    %v4492 = vunpack.c.h.s8.bf16 %v4236
    %v4493 = vpack.c.bf16 %v4097, %v4089
    %v4494 = vpack.c.bf16 %v4098, %v4090
    %v4495 = vpack.c.bf16 %v4099, %v4091
    %v4496 = vpack.c.bf16 %v4100, %v4092
    %v4497 = vpack.c.bf16 %v4101, %v4093
    %v4498 = vpack.c.bf16 %v4102, %v4094
    %v4499 = vpack.c.bf16 %v4103, %v4095
    %v4500 = vpack.c.bf16 %v4104, %v4096
    %4501 = vmatprep.subr.bf16.mxu0 %v4266
    %4502 = vmatpush1.bf16.msra.mxu0 %v4265
    %4503 = vmatprep.subr.bf16.mxu0 %v4262
    %4504 = vmatpush1.bf16.msra.mxu0 %v4261
    %4505 = vmatprep.subr.bf16.mxu0 %v4258
    %4506 = vmatpush1.bf16.msra.mxu0 %v4257
    %4507 = vmatprep.subr.bf16.mxu0 %v4254
    %4508 = vmatpush1.bf16.msra.mxu0 %v4253
    %4509 = vmatprep.subr.bf16.mxu0 %v4250
    %4510 = vmatpush1.bf16.msra.mxu0 %v4249
    %4511 = vmatprep.subr.bf16.mxu0 %v4246
    %4512 = vmatpush1.bf16.msra.mxu0 %v4245
    %4513 = vmatprep.subr.bf16.mxu0 %v4242
    %4514 = vmatpush1.bf16.msra.mxu0 %v4241
    %4515 = vmatprep.subr.bf16.mxu0 %v4238
    %4516 = vmatpush1.bf16.msra.mxu0 %v4237
    %4517 = vmatprep.subr.bf16.mxu0 %v4298
    %4518 = vmatpush2.bf16.msra.mxu0 %v4297
    %4519 = vmatprep.subr.bf16.mxu0 %v4294
    %4520 = vmatpush2.bf16.msra.mxu0 %v4293
    %4521 = vmatprep.subr.bf16.mxu0 %v4290
    %4522 = vmatpush2.bf16.msra.mxu0 %v4289
    %4523 = vmatprep.subr.bf16.mxu0 %v4286
    %4524 = vmatpush2.bf16.msra.mxu0 %v4285
    %4525 = vmatprep.subr.bf16.mxu0 %v4282
    %4526 = vmatpush2.bf16.msra.mxu0 %v4281
    %4527 = vmatprep.subr.bf16.mxu0 %v4278
    %4528 = vmatpush2.bf16.msra.mxu0 %v4277
    %4529 = vmatprep.subr.bf16.mxu0 %v4274
    %4530 = vmatpush2.bf16.msra.mxu0 %v4273
    %4531 = vmatprep.subr.bf16.mxu0 %v4270
    %4532 = vmatpush2.bf16.msra.mxu0 %v4269
    %4533 = vmatprep.mubr.bf16.mxu0 %v4494
    %4534 = vmatmul.mubr.bf16.gmra.mxu0 %v4493
    %v4535 = vpop.f32.mrf.mxu0
    %v4536 = vadd.f32 0.0, %v4535
    %v4537 = vpop.f32.mrf.mxu0
    %v4538 = vadd.f32 0.0, %v4537
    %v4539 = vpop.f32.mrf.mxu0
    %v4540 = vadd.f32 0.0, %v4539
    %v4541 = vpop.f32.mrf.mxu0
    %v4542 = vadd.f32 0.0, %v4541
    %4543 = vdwg.mxu0
    %4544 = vmatprep.subr.bf16.mxu0 %v4330
    %4545 = vmatpush1.bf16.msra.mxu0 %v4329
    %4546 = vmatprep.subr.bf16.mxu0 %v4326
    %4547 = vmatpush1.bf16.msra.mxu0 %v4325
    %4548 = vmatprep.subr.bf16.mxu0 %v4322
    %4549 = vmatpush1.bf16.msra.mxu0 %v4321
    %4550 = vmatprep.subr.bf16.mxu0 %v4318
    %4551 = vmatpush1.bf16.msra.mxu0 %v4317
    %4552 = vmatprep.subr.bf16.mxu0 %v4314
    %4553 = vmatpush1.bf16.msra.mxu0 %v4313
    %4554 = vmatprep.subr.bf16.mxu0 %v4310
    %4555 = vmatpush1.bf16.msra.mxu0 %v4309
    %4556 = vmatprep.subr.bf16.mxu0 %v4306
    %4557 = vmatpush1.bf16.msra.mxu0 %v4305
    %4558 = vmatprep.subr.bf16.mxu0 %v4302
    %4559 = vmatpush1.bf16.msra.mxu0 %v4301
    %4560 = vmatprep.subr.bf16.mxu0 %v4362
    %4561 = vmatpush2.bf16.msra.mxu0 %v4361
    %4562 = vmatprep.subr.bf16.mxu0 %v4358
    %4563 = vmatpush2.bf16.msra.mxu0 %v4357
    %4564 = vmatprep.subr.bf16.mxu0 %v4354
    %4565 = vmatpush2.bf16.msra.mxu0 %v4353
    %4566 = vmatprep.subr.bf16.mxu0 %v4350
    %4567 = vmatpush2.bf16.msra.mxu0 %v4349
    %4568 = vmatprep.subr.bf16.mxu0 %v4346
    %4569 = vmatpush2.bf16.msra.mxu0 %v4345
    %4570 = vmatprep.subr.bf16.mxu0 %v4342
    %4571 = vmatpush2.bf16.msra.mxu0 %v4341
    %4572 = vmatprep.subr.bf16.mxu0 %v4338
    %4573 = vmatpush2.bf16.msra.mxu0 %v4337
    %4574 = vmatprep.subr.bf16.mxu0 %v4334
    %4575 = vmatpush2.bf16.msra.mxu0 %v4333
    %4576 = vmatprep.mubr.bf16.mxu0 %v4496
    %4577 = vmatmul.mubr.bf16.gmra.mxu0 %v4495
    %v4578 = vpop.f32.mrf.mxu0
    %v4579 = vadd.f32 %v4536, %v4578
    %v4580 = vpop.f32.mrf.mxu0
    %v4581 = vadd.f32 %v4538, %v4580
    %v4582 = vpop.f32.mrf.mxu0
    %v4583 = vadd.f32 %v4540, %v4582
    %v4584 = vpop.f32.mrf.mxu0
    %v4585 = vadd.f32 %v4542, %v4584
    %4586 = vdwg.mxu0
    %4587 = vmatprep.subr.bf16.mxu0 %v4394
    %4588 = vmatpush1.bf16.msra.mxu0 %v4393
    %4589 = vmatprep.subr.bf16.mxu0 %v4390
    %4590 = vmatpush1.bf16.msra.mxu0 %v4389
    %4591 = vmatprep.subr.bf16.mxu0 %v4386
    %4592 = vmatpush1.bf16.msra.mxu0 %v4385
    %4593 = vmatprep.subr.bf16.mxu0 %v4382
    %4594 = vmatpush1.bf16.msra.mxu0 %v4381
    %4595 = vmatprep.subr.bf16.mxu0 %v4378
    %4596 = vmatpush1.bf16.msra.mxu0 %v4377
    %4597 = vmatprep.subr.bf16.mxu0 %v4374
    %4598 = vmatpush1.bf16.msra.mxu0 %v4373
    %4599 = vmatprep.subr.bf16.mxu0 %v4370
    %4600 = vmatpush1.bf16.msra.mxu0 %v4369
    %4601 = vmatprep.subr.bf16.mxu0 %v4366
    %4602 = vmatpush1.bf16.msra.mxu0 %v4365
    %4603 = vmatprep.subr.bf16.mxu0 %v4426
    %4604 = vmatpush2.bf16.msra.mxu0 %v4425
    %4605 = vmatprep.subr.bf16.mxu0 %v4422
    %4606 = vmatpush2.bf16.msra.mxu0 %v4421
    %4607 = vmatprep.subr.bf16.mxu0 %v4418
    %4608 = vmatpush2.bf16.msra.mxu0 %v4417
    %4609 = vmatprep.subr.bf16.mxu0 %v4414
    %4610 = vmatpush2.bf16.msra.mxu0 %v4413
    %4611 = vmatprep.subr.bf16.mxu0 %v4410
    %4612 = vmatpush2.bf16.msra.mxu0 %v4409
    %4613 = vmatprep.subr.bf16.mxu0 %v4406
    %4614 = vmatpush2.bf16.msra.mxu0 %v4405
    %4615 = vmatprep.subr.bf16.mxu0 %v4402
    %4616 = vmatpush2.bf16.msra.mxu0 %v4401
    %4617 = vmatprep.subr.bf16.mxu0 %v4398
    %4618 = vmatpush2.bf16.msra.mxu0 %v4397
    %4619 = vmatprep.mubr.bf16.mxu0 %v4498
    %4620 = vmatmul.mubr.bf16.gmra.mxu0 %v4497
    %v4621 = vpop.f32.mrf.mxu0
    %v4622 = vadd.f32 %v4579, %v4621
    %v4623 = vpop.f32.mrf.mxu0
    %v4624 = vadd.f32 %v4581, %v4623
    %v4625 = vpop.f32.mrf.mxu0
    %v4626 = vadd.f32 %v4583, %v4625
    %v4627 = vpop.f32.mrf.mxu0
    %v4628 = vadd.f32 %v4585, %v4627
    %4629 = vdwg.mxu0
    %4630 = vmatprep.subr.bf16.mxu0 %v4458
    %4631 = vmatpush1.bf16.msra.mxu0 %v4457
    %4632 = vmatprep.subr.bf16.mxu0 %v4454
    %4633 = vmatpush1.bf16.msra.mxu0 %v4453
    %4634 = vmatprep.subr.bf16.mxu0 %v4450
    %4635 = vmatpush1.bf16.msra.mxu0 %v4449
    %4636 = vmatprep.subr.bf16.mxu0 %v4446
    %4637 = vmatpush1.bf16.msra.mxu0 %v4445
    %4638 = vmatprep.subr.bf16.mxu0 %v4442
    %4639 = vmatpush1.bf16.msra.mxu0 %v4441
    %4640 = vmatprep.subr.bf16.mxu0 %v4438
    %4641 = vmatpush1.bf16.msra.mxu0 %v4437
    %4642 = vmatprep.subr.bf16.mxu0 %v4434
    %4643 = vmatpush1.bf16.msra.mxu0 %v4433
    %4644 = vmatprep.subr.bf16.mxu0 %v4430
    %4645 = vmatpush1.bf16.msra.mxu0 %v4429
    %4646 = vmatprep.subr.bf16.mxu0 %v4490
    %4647 = vmatpush2.bf16.msra.mxu0 %v4489
    %4648 = vmatprep.subr.bf16.mxu0 %v4486
    %4649 = vmatpush2.bf16.msra.mxu0 %v4485
    %4650 = vmatprep.subr.bf16.mxu0 %v4482
    %4651 = vmatpush2.bf16.msra.mxu0 %v4481
    %4652 = vmatprep.subr.bf16.mxu0 %v4478
    %4653 = vmatpush2.bf16.msra.mxu0 %v4477
    %4654 = vmatprep.subr.bf16.mxu0 %v4474
    %4655 = vmatpush2.bf16.msra.mxu0 %v4473
    %4656 = vmatprep.subr.bf16.mxu0 %v4470
    %4657 = vmatpush2.bf16.msra.mxu0 %v4469
    %4658 = vmatprep.subr.bf16.mxu0 %v4466
    %4659 = vmatpush2.bf16.msra.mxu0 %v4465
    %4660 = vmatprep.subr.bf16.mxu0 %v4462
    %4661 = vmatpush2.bf16.msra.mxu0 %v4461
    %4662 = vmatprep.mubr.bf16.mxu0 %v4500
    %4663 = vmatmul.mubr.bf16.gmra.mxu0 %v4499
    %v4664 = vpop.f32.mrf.mxu0
    %v4665 = vadd.f32 %v4622, %v4664
    %v4666 = vpop.f32.mrf.mxu0
    %v4667 = vadd.f32 %v4624, %v4666
    %v4668 = vpop.f32.mrf.mxu0
    %v4669 = vadd.f32 %v4626, %v4668
    %v4670 = vpop.f32.mrf.mxu0
    %v4671 = vadd.f32 %v4628, %v4670
    %4672 = vdwg.mxu0
    %4673 = vmatprep.subr.bf16.mxu0 %v4268
    %4674 = vmatpush1.bf16.msra.mxu0 %v4267
    %4675 = vmatprep.subr.bf16.mxu0 %v4264
    %4676 = vmatpush1.bf16.msra.mxu0 %v4263
    %4677 = vmatprep.subr.bf16.mxu0 %v4260
    %4678 = vmatpush1.bf16.msra.mxu0 %v4259
    %4679 = vmatprep.subr.bf16.mxu0 %v4256
    %4680 = vmatpush1.bf16.msra.mxu0 %v4255
    %4681 = vmatprep.subr.bf16.mxu0 %v4252
    %4682 = vmatpush1.bf16.msra.mxu0 %v4251
    %4683 = vmatprep.subr.bf16.mxu0 %v4248
    %4684 = vmatpush1.bf16.msra.mxu0 %v4247
    %4685 = vmatprep.subr.bf16.mxu0 %v4244
    %4686 = vmatpush1.bf16.msra.mxu0 %v4243
    %4687 = vmatprep.subr.bf16.mxu0 %v4240
    %4688 = vmatpush1.bf16.msra.mxu0 %v4239
    %4689 = vmatprep.subr.bf16.mxu0 %v4300
    %4690 = vmatpush2.bf16.msra.mxu0 %v4299
    %4691 = vmatprep.subr.bf16.mxu0 %v4296
    %4692 = vmatpush2.bf16.msra.mxu0 %v4295
    %4693 = vmatprep.subr.bf16.mxu0 %v4292
    %4694 = vmatpush2.bf16.msra.mxu0 %v4291
    %4695 = vmatprep.subr.bf16.mxu0 %v4288
    %4696 = vmatpush2.bf16.msra.mxu0 %v4287
    %4697 = vmatprep.subr.bf16.mxu0 %v4284
    %4698 = vmatpush2.bf16.msra.mxu0 %v4283
    %4699 = vmatprep.subr.bf16.mxu0 %v4280
    %4700 = vmatpush2.bf16.msra.mxu0 %v4279
    %4701 = vmatprep.subr.bf16.mxu0 %v4276
    %4702 = vmatpush2.bf16.msra.mxu0 %v4275
    %4703 = vmatprep.subr.bf16.mxu0 %v4272
    %4704 = vmatpush2.bf16.msra.mxu0 %v4271
    %4705 = vmatprep.mubr.bf16.mxu0 %v4494
    %4706 = vmatmul.mubr.bf16.gmra.mxu0 %v4493
    %v4707 = vpop.f32.mrf.mxu0
    %v4708 = vadd.f32 0.0, %v4707
    %v4709 = vpop.f32.mrf.mxu0
    %v4710 = vadd.f32 0.0, %v4709
    %v4711 = vpop.f32.mrf.mxu0
    %v4712 = vadd.f32 0.0, %v4711
    %v4713 = vpop.f32.mrf.mxu0
    %v4714 = vadd.f32 0.0, %v4713
    %4715 = vdwg.mxu0
    %4716 = vmatprep.subr.bf16.mxu0 %v4332
    %4717 = vmatpush1.bf16.msra.mxu0 %v4331
    %4718 = vmatprep.subr.bf16.mxu0 %v4328
    %4719 = vmatpush1.bf16.msra.mxu0 %v4327
    %4720 = vmatprep.subr.bf16.mxu0 %v4324
    %4721 = vmatpush1.bf16.msra.mxu0 %v4323
    %4722 = vmatprep.subr.bf16.mxu0 %v4320
    %4723 = vmatpush1.bf16.msra.mxu0 %v4319
    %4724 = vmatprep.subr.bf16.mxu0 %v4316
    %4725 = vmatpush1.bf16.msra.mxu0 %v4315
    %4726 = vmatprep.subr.bf16.mxu0 %v4312
    %4727 = vmatpush1.bf16.msra.mxu0 %v4311
    %4728 = vmatprep.subr.bf16.mxu0 %v4308
    %4729 = vmatpush1.bf16.msra.mxu0 %v4307
    %4730 = vmatprep.subr.bf16.mxu0 %v4304
    %4731 = vmatpush1.bf16.msra.mxu0 %v4303
    %4732 = vmatprep.subr.bf16.mxu0 %v4364
    %4733 = vmatpush2.bf16.msra.mxu0 %v4363
    %4734 = vmatprep.subr.bf16.mxu0 %v4360
    %4735 = vmatpush2.bf16.msra.mxu0 %v4359
    %4736 = vmatprep.subr.bf16.mxu0 %v4356
    %4737 = vmatpush2.bf16.msra.mxu0 %v4355
    %4738 = vmatprep.subr.bf16.mxu0 %v4352
    %4739 = vmatpush2.bf16.msra.mxu0 %v4351
    %4740 = vmatprep.subr.bf16.mxu0 %v4348
    %4741 = vmatpush2.bf16.msra.mxu0 %v4347
    %4742 = vmatprep.subr.bf16.mxu0 %v4344
    %4743 = vmatpush2.bf16.msra.mxu0 %v4343
    %4744 = vmatprep.subr.bf16.mxu0 %v4340
    %4745 = vmatpush2.bf16.msra.mxu0 %v4339
    %4746 = vmatprep.subr.bf16.mxu0 %v4336
    %4747 = vmatpush2.bf16.msra.mxu0 %v4335
    %4748 = vmatprep.mubr.bf16.mxu0 %v4496
    %4749 = vmatmul.mubr.bf16.gmra.mxu0 %v4495
    %v4750 = vpop.f32.mrf.mxu0
    %v4751 = vadd.f32 %v4708, %v4750
    %v4752 = vpop.f32.mrf.mxu0
    %v4753 = vadd.f32 %v4710, %v4752
    %v4754 = vpop.f32.mrf.mxu0
    %v4755 = vadd.f32 %v4712, %v4754
    %v4756 = vpop.f32.mrf.mxu0
    %v4757 = vadd.f32 %v4714, %v4756
    %4758 = vdwg.mxu0
    %4759 = vmatprep.subr.bf16.mxu0 %v4396
    %4760 = vmatpush1.bf16.msra.mxu0 %v4395
    %4761 = vmatprep.subr.bf16.mxu0 %v4392
    %4762 = vmatpush1.bf16.msra.mxu0 %v4391
    %4763 = vmatprep.subr.bf16.mxu0 %v4388
    %4764 = vmatpush1.bf16.msra.mxu0 %v4387
    %4765 = vmatprep.subr.bf16.mxu0 %v4384
    %4766 = vmatpush1.bf16.msra.mxu0 %v4383
    %4767 = vmatprep.subr.bf16.mxu0 %v4380
    %4768 = vmatpush1.bf16.msra.mxu0 %v4379
    %4769 = vmatprep.subr.bf16.mxu0 %v4376
    %4770 = vmatpush1.bf16.msra.mxu0 %v4375
    %4771 = vmatprep.subr.bf16.mxu0 %v4372
    %4772 = vmatpush1.bf16.msra.mxu0 %v4371
    %4773 = vmatprep.subr.bf16.mxu0 %v4368
    %4774 = vmatpush1.bf16.msra.mxu0 %v4367
    %4775 = vmatprep.subr.bf16.mxu0 %v4428
    %4776 = vmatpush2.bf16.msra.mxu0 %v4427
    %4777 = vmatprep.subr.bf16.mxu0 %v4424
    %4778 = vmatpush2.bf16.msra.mxu0 %v4423
    %4779 = vmatprep.subr.bf16.mxu0 %v4420
    %4780 = vmatpush2.bf16.msra.mxu0 %v4419
    %4781 = vmatprep.subr.bf16.mxu0 %v4416
    %4782 = vmatpush2.bf16.msra.mxu0 %v4415
    %4783 = vmatprep.subr.bf16.mxu0 %v4412
    %4784 = vmatpush2.bf16.msra.mxu0 %v4411
    %4785 = vmatprep.subr.bf16.mxu0 %v4408
    %4786 = vmatpush2.bf16.msra.mxu0 %v4407
    %4787 = vmatprep.subr.bf16.mxu0 %v4404
    %4788 = vmatpush2.bf16.msra.mxu0 %v4403
    %4789 = vmatprep.subr.bf16.mxu0 %v4400
    %4790 = vmatpush2.bf16.msra.mxu0 %v4399
    %4791 = vmatprep.mubr.bf16.mxu0 %v4498
    %4792 = vmatmul.mubr.bf16.gmra.mxu0 %v4497
    %v4793 = vpop.f32.mrf.mxu0
    %v4794 = vadd.f32 %v4751, %v4793
    %v4795 = vpop.f32.mrf.mxu0
    %v4796 = vadd.f32 %v4753, %v4795
    %v4797 = vpop.f32.mrf.mxu0
    %v4798 = vadd.f32 %v4755, %v4797
    %v4799 = vpop.f32.mrf.mxu0
    %v4800 = vadd.f32 %v4757, %v4799
    %4801 = vdwg.mxu0
    %4802 = vmatprep.subr.bf16.mxu0 %v4460
    %4803 = vmatpush1.bf16.msra.mxu0 %v4459
    %4804 = vmatprep.subr.bf16.mxu0 %v4456
    %4805 = vmatpush1.bf16.msra.mxu0 %v4455
    %4806 = vmatprep.subr.bf16.mxu0 %v4452
    %4807 = vmatpush1.bf16.msra.mxu0 %v4451
    %4808 = vmatprep.subr.bf16.mxu0 %v4448
    %4809 = vmatpush1.bf16.msra.mxu0 %v4447
    %4810 = vmatprep.subr.bf16.mxu0 %v4444
    %4811 = vmatpush1.bf16.msra.mxu0 %v4443
    %4812 = vmatprep.subr.bf16.mxu0 %v4440
    %4813 = vmatpush1.bf16.msra.mxu0 %v4439
    %4814 = vmatprep.subr.bf16.mxu0 %v4436
    %4815 = vmatpush1.bf16.msra.mxu0 %v4435
    %4816 = vmatprep.subr.bf16.mxu0 %v4432
    %4817 = vmatpush1.bf16.msra.mxu0 %v4431
    %4818 = vmatprep.subr.bf16.mxu0 %v4492
    %4819 = vmatpush2.bf16.msra.mxu0 %v4491
    %4820 = vmatprep.subr.bf16.mxu0 %v4488
    %4821 = vmatpush2.bf16.msra.mxu0 %v4487
    %4822 = vmatprep.subr.bf16.mxu0 %v4484
    %4823 = vmatpush2.bf16.msra.mxu0 %v4483
    %4824 = vmatprep.subr.bf16.mxu0 %v4480
    %4825 = vmatpush2.bf16.msra.mxu0 %v4479
    %4826 = vmatprep.subr.bf16.mxu0 %v4476
    %4827 = vmatpush2.bf16.msra.mxu0 %v4475
    %4828 = vmatprep.subr.bf16.mxu0 %v4472
    %4829 = vmatpush2.bf16.msra.mxu0 %v4471
    %4830 = vmatprep.subr.bf16.mxu0 %v4468
    %4831 = vmatpush2.bf16.msra.mxu0 %v4467
    %4832 = vmatprep.subr.bf16.mxu0 %v4464
    %4833 = vmatpush2.bf16.msra.mxu0 %v4463
    %4834 = vmatprep.mubr.bf16.mxu0 %v4500
    %4835 = vmatmul.mubr.bf16.gmra.mxu0 %v4499
    %v4836 = vpop.f32.mrf.mxu0
    %v4837 = vadd.f32 %v4794, %v4836
    %v4838 = vpop.f32.mrf.mxu0
    %v4839 = vadd.f32 %v4796, %v4838
    %v4840 = vpop.f32.mrf.mxu0
    %v4841 = vadd.f32 %v4798, %v4840
    %v4842 = vpop.f32.mrf.mxu0
    %v4843 = vadd.f32 %v4800, %v4842
    %4844 = vdwg.mxu0
    %v4845 = vld [vmem:[#allocation27] sm:$0xf]
    %v4847 = vlaneseq
    %v4848 = vshrl.u32 %v4847, 7
    %v4849 = vsub.s32 0, %v4848
    %v4850 = vrot.slane %v4845, %v4849
    %v4851 = vlaneseq
    %v4852 = vshrl.u32 %v4851, 7
    %v4853 = vsub.s32 1, %v4852
    %v4854 = vrot.slane %v4845, %v4853
    %v4855 = vlaneseq
    %v4856 = vshrl.u32 %v4855, 7
    %v4857 = vsub.s32 2, %v4856
    %v4858 = vrot.slane %v4845, %v4857
    %v4859 = vlaneseq
    %v4860 = vshrl.u32 %v4859, 7
    %v4861 = vsub.s32 3, %v4860
    %v4862 = vrot.slane %v4845, %v4861
    %v4867 = vmul.f32 %v4665, %v4850
    %v4868 = vmul.f32 %v4667, %v4854
    %v4869 = vmul.f32 %v4837, %v4858
    %v4870 = vmul.f32 %v4839, %v4862
    %v4871 = vmul.f32 %v4669, %v4850
    %v4872 = vmul.f32 %v4671, %v4854
    %v4873 = vmul.f32 %v4841, %v4858
    %v4874 = vmul.f32 %v4843, %v4862
    %v4875 = vld [vmem:[#allocation28] sm:$0xf]
    %v4877 = vlaneseq
    %v4878 = vshrl.u32 %v4877, 7
    %v4879 = vsub.s32 0, %v4878
    %v4880 = vrot.slane %v4875, %v4879
    %v4881 = vlaneseq
    %v4882 = vshrl.u32 %v4881, 7
    %v4883 = vsub.s32 1, %v4882
    %v4884 = vrot.slane %v4875, %v4883
    %v4885 = vlaneseq
    %v4886 = vshrl.u32 %v4885, 7
    %v4887 = vsub.s32 2, %v4886
    %v4888 = vrot.slane %v4875, %v4887
    %v4889 = vlaneseq
    %v4890 = vshrl.u32 %v4889, 7
    %v4891 = vsub.s32 3, %v4890
    %v4892 = vrot.slane %v4875, %v4891
    %v4897 = vadd.f32 %v4867, %v4880
    %v4898 = vadd.f32 %v4868, %v4884
    %v4899 = vadd.f32 %v4869, %v4888
    %v4900 = vadd.f32 %v4870, %v4892
    %v4901 = vadd.f32 %v4871, %v4880
    %v4902 = vadd.f32 %v4872, %v4884
    %v4903 = vadd.f32 %v4873, %v4888
    %v4904 = vadd.f32 %v4874, %v4892
    %vm4905 = vcmp.gt.f32.partialorder %v4897, 0.0
    %vm4906 = vcmp.gt.f32.partialorder %v4898, 0.0
    %vm4907 = vcmp.gt.f32.partialorder %v4899, 0.0
    %vm4908 = vcmp.gt.f32.partialorder %v4900, 0.0
    %vm4909 = vcmp.gt.f32.partialorder %v4901, 0.0
    %vm4910 = vcmp.gt.f32.partialorder %v4902, 0.0
    %vm4911 = vcmp.gt.f32.partialorder %v4903, 0.0
    %vm4912 = vcmp.gt.f32.partialorder %v4904, 0.0
    %v4913 = vstv %s383
    %v4914 = vmul.f32 %v4913, %v4897
    %v4915 = vmul.f32 %v4913, %v4898
    %v4916 = vmul.f32 %v4913, %v4899
    %v4917 = vmul.f32 %v4913, %v4900
    %v4918 = vmul.f32 %v4913, %v4901
    %v4919 = vmul.f32 %v4913, %v4902
    %v4920 = vmul.f32 %v4913, %v4903
    %v4921 = vmul.f32 %v4913, %v4904
    %v4922 = vsel %vm4905, %v4897, %v4914
    %v4923 = vsel %vm4906, %v4898, %v4915
    %v4924 = vsel %vm4907, %v4899, %v4916
    %v4925 = vsel %vm4908, %v4900, %v4917
    %v4926 = vsel %vm4909, %v4901, %v4918
    %v4927 = vsel %vm4910, %v4902, %v4919
    %v4928 = vsel %vm4911, %v4903, %v4920
    %v4929 = vsel %vm4912, %v4904, %v4921
    %v4930 = vld [vmem:[%s41] sm:$0xff]
    %v4931 = vld [vmem:[%s41 + $0x8] sm:$0xff]
    %v4932 = vld [vmem:[%s41 + $0x10] sm:$0xff]
    %v4933 = vld [vmem:[%s41 + $0x18] sm:$0xff]
    %v4934 = vld [vmem:[%s41 + $0x20] sm:$0xff]
    %v4935 = vld [vmem:[%s41 + $0x28] sm:$0xff]
    %v4936 = vld [vmem:[%s41 + $0x30] sm:$0xff]
    %v4937 = vld [vmem:[%s41 + $0x38] sm:$0xff]
    %v4938 = vld [vmem:[%s41 + $0x40] sm:$0xff]
    %v4939 = vld [vmem:[%s41 + $0x48] sm:$0xff]
    %v4940 = vld [vmem:[%s41 + $0x50] sm:$0xff]
    %v4941 = vld [vmem:[%s41 + $0x58] sm:$0xff]
    %v4942 = vld [vmem:[%s41 + $0x60] sm:$0xff]
    %v4943 = vld [vmem:[%s41 + $0x68] sm:$0xff]
    %v4944 = vld [vmem:[%s41 + $0x70] sm:$0xff]
    %v4945 = vld [vmem:[%s41 + $0x78] sm:$0xff]
    %v4946 = vld [vmem:[%s41 + $0x80] sm:$0xff]
    %v4947 = vld [vmem:[%s41 + $0x88] sm:$0xff]
    %v4948 = vld [vmem:[%s41 + $0x90] sm:$0xff]
    %v4949 = vld [vmem:[%s41 + $0x98] sm:$0xff]
    %v4950 = vld [vmem:[%s41 + $0xa0] sm:$0xff]
    %v4951 = vld [vmem:[%s41 + $0xa8] sm:$0xff]
    %v4952 = vld [vmem:[%s41 + $0xb0] sm:$0xff]
    %v4953 = vld [vmem:[%s41 + $0xb8] sm:$0xff]
    %v4954 = vld [vmem:[%s41 + $0xc0] sm:$0xff]
    %v4955 = vld [vmem:[%s41 + $0xc8] sm:$0xff]
    %v4956 = vld [vmem:[%s41 + $0xd0] sm:$0xff]
    %v4957 = vld [vmem:[%s41 + $0xd8] sm:$0xff]
    %v4958 = vld [vmem:[%s41 + $0xe0] sm:$0xff]
    %v4959 = vld [vmem:[%s41 + $0xe8] sm:$0xff]
    %v4960 = vld [vmem:[%s41 + $0xf0] sm:$0xff]
    %v4961 = vld [vmem:[%s41 + $0xf8] sm:$0xff]
    %v4962 = vunpack.c.l.s8.bf16 %v4930
    %v4963 = vunpack.c.l.s8.bf16 %v4931
    %v4964 = vunpack.c.h.s8.bf16 %v4930
    %v4965 = vunpack.c.h.s8.bf16 %v4931
    %v4966 = vunpack.c.l.s8.bf16 %v4932
    %v4967 = vunpack.c.l.s8.bf16 %v4933
    %v4968 = vunpack.c.h.s8.bf16 %v4932
    %v4969 = vunpack.c.h.s8.bf16 %v4933
    %v4970 = vunpack.c.l.s8.bf16 %v4934
    %v4971 = vunpack.c.l.s8.bf16 %v4935
    %v4972 = vunpack.c.h.s8.bf16 %v4934
    %v4973 = vunpack.c.h.s8.bf16 %v4935
    %v4974 = vunpack.c.l.s8.bf16 %v4936
    %v4975 = vunpack.c.l.s8.bf16 %v4937
    %v4976 = vunpack.c.h.s8.bf16 %v4936
    %v4977 = vunpack.c.h.s8.bf16 %v4937
    %v4978 = vunpack.c.l.s8.bf16 %v4938
    %v4979 = vunpack.c.l.s8.bf16 %v4939
    %v4980 = vunpack.c.h.s8.bf16 %v4938
    %v4981 = vunpack.c.h.s8.bf16 %v4939
    %v4982 = vunpack.c.l.s8.bf16 %v4940
    %v4983 = vunpack.c.l.s8.bf16 %v4941
    %v4984 = vunpack.c.h.s8.bf16 %v4940
    %v4985 = vunpack.c.h.s8.bf16 %v4941
    %v4986 = vunpack.c.l.s8.bf16 %v4942
    %v4987 = vunpack.c.l.s8.bf16 %v4943
    %v4988 = vunpack.c.h.s8.bf16 %v4942
    %v4989 = vunpack.c.h.s8.bf16 %v4943
    %v4990 = vunpack.c.l.s8.bf16 %v4944
    %v4991 = vunpack.c.l.s8.bf16 %v4945
    %v4992 = vunpack.c.h.s8.bf16 %v4944
    %v4993 = vunpack.c.h.s8.bf16 %v4945
    %v4994 = vunpack.c.l.s8.bf16 %v4946
    %v4995 = vunpack.c.l.s8.bf16 %v4947
    %v4996 = vunpack.c.h.s8.bf16 %v4946
    %v4997 = vunpack.c.h.s8.bf16 %v4947
    %v4998 = vunpack.c.l.s8.bf16 %v4948
    %v4999 = vunpack.c.l.s8.bf16 %v4949
    %v5000 = vunpack.c.h.s8.bf16 %v4948
    %v5001 = vunpack.c.h.s8.bf16 %v4949
    %v5002 = vunpack.c.l.s8.bf16 %v4950
    %v5003 = vunpack.c.l.s8.bf16 %v4951
    %v5004 = vunpack.c.h.s8.bf16 %v4950
    %v5005 = vunpack.c.h.s8.bf16 %v4951
    %v5006 = vunpack.c.l.s8.bf16 %v4952
    %v5007 = vunpack.c.l.s8.bf16 %v4953
    %v5008 = vunpack.c.h.s8.bf16 %v4952
    %v5009 = vunpack.c.h.s8.bf16 %v4953
    %v5010 = vunpack.c.l.s8.bf16 %v4954
    %v5011 = vunpack.c.l.s8.bf16 %v4955
    %v5012 = vunpack.c.h.s8.bf16 %v4954
    %v5013 = vunpack.c.h.s8.bf16 %v4955
    %v5014 = vunpack.c.l.s8.bf16 %v4956
    %v5015 = vunpack.c.l.s8.bf16 %v4957
    %v5016 = vunpack.c.h.s8.bf16 %v4956
    %v5017 = vunpack.c.h.s8.bf16 %v4957
    %v5018 = vunpack.c.l.s8.bf16 %v4958
    %v5019 = vunpack.c.l.s8.bf16 %v4959
    %v5020 = vunpack.c.h.s8.bf16 %v4958
    %v5021 = vunpack.c.h.s8.bf16 %v4959
    %v5022 = vunpack.c.l.s8.bf16 %v4960
    %v5023 = vunpack.c.l.s8.bf16 %v4961
    %v5024 = vunpack.c.h.s8.bf16 %v4960
    %v5025 = vunpack.c.h.s8.bf16 %v4961
    %v5026 = vpack.c.bf16 %v4926, %v4922
    %v5027 = vpack.c.bf16 %v4927, %v4923
    %v5028 = vpack.c.bf16 %v4928, %v4924
    %v5029 = vpack.c.bf16 %v4929, %v4925
    %5030 = vmatprep.subr.bf16.mxu0 %v4977
    %5031 = vmatpush1.bf16.msra.mxu0 %v4976
    %5032 = vmatprep.subr.bf16.mxu0 %v4975
    %5033 = vmatpush1.bf16.msra.mxu0 %v4974
    %5034 = vmatprep.subr.bf16.mxu0 %v4973
    %5035 = vmatpush1.bf16.msra.mxu0 %v4972
    %5036 = vmatprep.subr.bf16.mxu0 %v4971
    %5037 = vmatpush1.bf16.msra.mxu0 %v4970
    %5038 = vmatprep.subr.bf16.mxu0 %v4969
    %5039 = vmatpush1.bf16.msra.mxu0 %v4968
    %5040 = vmatprep.subr.bf16.mxu0 %v4967
    %5041 = vmatpush1.bf16.msra.mxu0 %v4966
    %5042 = vmatprep.subr.bf16.mxu0 %v4965
    %5043 = vmatpush1.bf16.msra.mxu0 %v4964
    %5044 = vmatprep.subr.bf16.mxu0 %v4963
    %5045 = vmatpush1.bf16.msra.mxu0 %v4962
    %5046 = vmatprep.subr.bf16.mxu0 %v4993
    %5047 = vmatpush2.bf16.msra.mxu0 %v4992
    %5048 = vmatprep.subr.bf16.mxu0 %v4991
    %5049 = vmatpush2.bf16.msra.mxu0 %v4990
    %5050 = vmatprep.subr.bf16.mxu0 %v4989
    %5051 = vmatpush2.bf16.msra.mxu0 %v4988
    %5052 = vmatprep.subr.bf16.mxu0 %v4987
    %5053 = vmatpush2.bf16.msra.mxu0 %v4986
    %5054 = vmatprep.subr.bf16.mxu0 %v4985
    %5055 = vmatpush2.bf16.msra.mxu0 %v4984
    %5056 = vmatprep.subr.bf16.mxu0 %v4983
    %5057 = vmatpush2.bf16.msra.mxu0 %v4982
    %5058 = vmatprep.subr.bf16.mxu0 %v4981
    %5059 = vmatpush2.bf16.msra.mxu0 %v4980
    %5060 = vmatprep.subr.bf16.mxu0 %v4979
    %5061 = vmatpush2.bf16.msra.mxu0 %v4978
    %5062 = vmatprep.mubr.bf16.mxu0 %v5027
    %5063 = vmatmul.mubr.bf16.gmra.mxu0 %v5026
    %v5064 = vpop.f32.mrf.mxu0
    %v5065 = vadd.f32 0.0, %v5064
    %v5066 = vpop.f32.mrf.mxu0
    %v5067 = vadd.f32 0.0, %v5066
    %v5068 = vpop.f32.mrf.mxu0
    %v5069 = vadd.f32 0.0, %v5068
    %v5070 = vpop.f32.mrf.mxu0
    %v5071 = vadd.f32 0.0, %v5070
    %5072 = vdwg.mxu0
    %5073 = vmatprep.subr.bf16.mxu0 %v5009
    %5074 = vmatpush1.bf16.msra.mxu0 %v5008
    %5075 = vmatprep.subr.bf16.mxu0 %v5007
    %5076 = vmatpush1.bf16.msra.mxu0 %v5006
    %5077 = vmatprep.subr.bf16.mxu0 %v5005
    %5078 = vmatpush1.bf16.msra.mxu0 %v5004
    %5079 = vmatprep.subr.bf16.mxu0 %v5003
    %5080 = vmatpush1.bf16.msra.mxu0 %v5002
    %5081 = vmatprep.subr.bf16.mxu0 %v5001
    %5082 = vmatpush1.bf16.msra.mxu0 %v5000
    %5083 = vmatprep.subr.bf16.mxu0 %v4999
    %5084 = vmatpush1.bf16.msra.mxu0 %v4998
    %5085 = vmatprep.subr.bf16.mxu0 %v4997
    %5086 = vmatpush1.bf16.msra.mxu0 %v4996
    %5087 = vmatprep.subr.bf16.mxu0 %v4995
    %5088 = vmatpush1.bf16.msra.mxu0 %v4994
    %5089 = vmatprep.subr.bf16.mxu0 %v5025
    %5090 = vmatpush2.bf16.msra.mxu0 %v5024
    %5091 = vmatprep.subr.bf16.mxu0 %v5023
    %5092 = vmatpush2.bf16.msra.mxu0 %v5022
    %5093 = vmatprep.subr.bf16.mxu0 %v5021
    %5094 = vmatpush2.bf16.msra.mxu0 %v5020
    %5095 = vmatprep.subr.bf16.mxu0 %v5019
    %5096 = vmatpush2.bf16.msra.mxu0 %v5018
    %5097 = vmatprep.subr.bf16.mxu0 %v5017
    %5098 = vmatpush2.bf16.msra.mxu0 %v5016
    %5099 = vmatprep.subr.bf16.mxu0 %v5015
    %5100 = vmatpush2.bf16.msra.mxu0 %v5014
    %5101 = vmatprep.subr.bf16.mxu0 %v5013
    %5102 = vmatpush2.bf16.msra.mxu0 %v5012
    %5103 = vmatprep.subr.bf16.mxu0 %v5011
    %5104 = vmatpush2.bf16.msra.mxu0 %v5010
    %5105 = vmatprep.mubr.bf16.mxu0 %v5029
    %5106 = vmatmul.mubr.bf16.gmra.mxu0 %v5028
    %v5107 = vpop.f32.mrf.mxu0
    %v5108 = vadd.f32 %v5065, %v5107
    %v5109 = vpop.f32.mrf.mxu0
    %v5110 = vadd.f32 %v5067, %v5109
    %v5111 = vpop.f32.mrf.mxu0
    %v5112 = vadd.f32 %v5069, %v5111
    %v5113 = vpop.f32.mrf.mxu0
    %v5114 = vadd.f32 %v5071, %v5113
    %5115 = vdwg.mxu0
    %v5116 = vld [vmem:[#allocation30] sm:$0x3]
    %v5118 = vlaneseq
    %v5119 = vshrl.u32 %v5118, 7
    %v5120 = vsub.s32 0, %v5119
    %v5121 = vrot.slane %v5116, %v5120
    %v5122 = vlaneseq
    %v5123 = vshrl.u32 %v5122, 7
    %v5124 = vsub.s32 1, %v5123
    %v5125 = vrot.slane %v5116, %v5124
    %v5128 = vmul.f32 %v5108, %v5121
    %v5129 = vmul.f32 %v5110, %v5125
    %v5130 = vmul.f32 %v5112, %v5121
    %v5131 = vmul.f32 %v5114, %v5125
    %v5132 = vld [vmem:[#allocation31] sm:$0x3]
    %v5134 = vlaneseq
    %v5135 = vshrl.u32 %v5134, 7
    %v5136 = vsub.s32 0, %v5135
    %v5137 = vrot.slane %v5132, %v5136
    %v5138 = vlaneseq
    %v5139 = vshrl.u32 %v5138, 7
    %v5140 = vsub.s32 1, %v5139
    %v5141 = vrot.slane %v5132, %v5140
    %v5144 = vadd.f32 %v5128, %v5137
    %v5145 = vadd.f32 %v5129, %v5141
    %v5146 = vadd.f32 %v5130, %v5137
    %v5147 = vadd.f32 %v5131, %v5141
    %vm5148 = vcmp.gt.f32.partialorder %v5144, 0.0
    %vm5149 = vcmp.gt.f32.partialorder %v5145, 0.0
    %vm5150 = vcmp.gt.f32.partialorder %v5146, 0.0
    %vm5151 = vcmp.gt.f32.partialorder %v5147, 0.0
    %v5152 = vstv %s384
    %v5153 = vmul.f32 %v5152, %v5144
    %v5154 = vmul.f32 %v5152, %v5145
    %v5155 = vmul.f32 %v5152, %v5146
    %v5156 = vmul.f32 %v5152, %v5147
    %v5157 = vsel %vm5148, %v5144, %v5153
    %v5158 = vsel %vm5149, %v5145, %v5154
    %v5159 = vsel %vm5150, %v5146, %v5155
    %v5160 = vsel %vm5151, %v5147, %v5156
    %v5161 = vld [vmem:[#allocation33] sm:$0xf]
    %v5162 = vld [vmem:[#allocation33 + $0x4] sm:$0xf]
    %v5163 = vld [vmem:[#allocation33 + $0x8] sm:$0xf]
    %v5164 = vld [vmem:[#allocation33 + $0xc] sm:$0xf]
    %v5165 = vld [vmem:[#allocation33 + $0x10] sm:$0xf]
    %v5166 = vld [vmem:[#allocation33 + $0x14] sm:$0xf]
    %v5167 = vld [vmem:[#allocation33 + $0x18] sm:$0xf]
    %v5168 = vld [vmem:[#allocation33 + $0x1c] sm:$0xf]
    %v5169 = vld [vmem:[#allocation33 + $0x20] sm:$0xf]
    %v5170 = vld [vmem:[#allocation33 + $0x24] sm:$0xf]
    %v5171 = vld [vmem:[#allocation33 + $0x28] sm:$0xf]
    %v5172 = vld [vmem:[#allocation33 + $0x2c] sm:$0xf]
    %v5173 = vld [vmem:[#allocation33 + $0x30] sm:$0xf]
    %v5174 = vld [vmem:[#allocation33 + $0x34] sm:$0xf]
    %v5175 = vld [vmem:[#allocation33 + $0x38] sm:$0xf]
    %v5176 = vld [vmem:[#allocation33 + $0x3c] sm:$0xf]
    %v5177 = vld [vmem:[#allocation33 + $0x40] sm:$0xf]
    %v5178 = vld [vmem:[#allocation33 + $0x44] sm:$0xf]
    %v5179 = vld [vmem:[#allocation33 + $0x48] sm:$0xf]
    %v5180 = vld [vmem:[#allocation33 + $0x4c] sm:$0xf]
    %v5181 = vld [vmem:[#allocation33 + $0x50] sm:$0xf]
    %v5182 = vld [vmem:[#allocation33 + $0x54] sm:$0xf]
    %v5183 = vld [vmem:[#allocation33 + $0x58] sm:$0xf]
    %v5184 = vld [vmem:[#allocation33 + $0x5c] sm:$0xf]
    %v5185 = vld [vmem:[#allocation33 + $0x60] sm:$0xf]
    %v5186 = vld [vmem:[#allocation33 + $0x64] sm:$0xf]
    %v5187 = vld [vmem:[#allocation33 + $0x68] sm:$0xf]
    %v5188 = vld [vmem:[#allocation33 + $0x6c] sm:$0xf]
    %v5189 = vld [vmem:[#allocation33 + $0x70] sm:$0xf]
    %v5190 = vld [vmem:[#allocation33 + $0x74] sm:$0xf]
    %v5191 = vld [vmem:[#allocation33 + $0x78] sm:$0xf]
    %v5192 = vld [vmem:[#allocation33 + $0x7c] sm:$0xf]
    %v5193 = vpack.c.bf16 %v5159, %v5157
    %v5194 = vpack.c.bf16 %v5160, %v5158
    %v5195 = vld [vmem:[%s49] sm:$0x1]
    %v5197 = vlaneseq
    %v5198 = vshrl.u32 %v5197, 7
    %v5199 = vsub.s32 0, %v5198
    %v5200 = vrot.slane %v5195, %v5199
    %v5234 = vunpack.c.l.b16 %v5161
    %v5235 = vunpack.c.l.b16 %v5162
    %v5236 = vunpack.c.l.b16 %v5163
    %v5237 = vunpack.c.l.b16 %v5164
    %v5238 = vunpack.c.l.b16 %v5165
    %v5239 = vunpack.c.l.b16 %v5166
    %v5240 = vunpack.c.l.b16 %v5167
    %v5241 = vunpack.c.l.b16 %v5168
    %v5242 = vunpack.c.l.b16 %v5169
    %v5243 = vunpack.c.l.b16 %v5170
    %v5244 = vunpack.c.l.b16 %v5171
    %v5245 = vunpack.c.l.b16 %v5172
    %v5246 = vunpack.c.l.b16 %v5173
    %v5247 = vunpack.c.l.b16 %v5174
    %v5248 = vunpack.c.l.b16 %v5175
    %v5249 = vunpack.c.l.b16 %v5176
    %v5250 = vunpack.c.l.b16 %v5177
    %v5251 = vunpack.c.l.b16 %v5178
    %v5252 = vunpack.c.l.b16 %v5179
    %v5253 = vunpack.c.l.b16 %v5180
    %v5254 = vunpack.c.l.b16 %v5181
    %v5255 = vunpack.c.l.b16 %v5182
    %v5256 = vunpack.c.l.b16 %v5183
    %v5257 = vunpack.c.l.b16 %v5184
    %v5258 = vunpack.c.l.b16 %v5185
    %v5259 = vunpack.c.l.b16 %v5186
    %v5260 = vunpack.c.l.b16 %v5187
    %v5261 = vunpack.c.l.b16 %v5188
    %v5262 = vunpack.c.l.b16 %v5189
    %v5263 = vunpack.c.l.b16 %v5190
    %v5264 = vunpack.c.l.b16 %v5191
    %v5265 = vunpack.c.l.b16 %v5192
    %v5266 = vpack.c.b16 %v5235, %v5234
    %v5267 = vpack.c.b16 %v5237, %v5236
    %v5268 = vpack.c.b16 %v5239, %v5238
    %v5269 = vpack.c.b16 %v5241, %v5240
    %v5270 = vpack.c.b16 %v5243, %v5242
    %v5271 = vpack.c.b16 %v5245, %v5244
    %v5272 = vpack.c.b16 %v5247, %v5246
    %v5273 = vpack.c.b16 %v5249, %v5248
    %v5274 = vpack.c.b16 %v5251, %v5250
    %v5275 = vpack.c.b16 %v5253, %v5252
    %v5276 = vpack.c.b16 %v5255, %v5254
    %v5277 = vpack.c.b16 %v5257, %v5256
    %v5278 = vpack.c.b16 %v5259, %v5258
    %v5279 = vpack.c.b16 %v5261, %v5260
    %v5280 = vpack.c.b16 %v5263, %v5262
    %v5281 = vpack.c.b16 %v5265, %v5264
    %5298 = vmatprep.subr.bf16.mxu0 0
    %5299 = vmatpush1.bf16.msra.mxu0 %v5273
    %5300 = vmatprep.subr.bf16.mxu0 0
    %5301 = vmatpush1.bf16.msra.mxu0 %v5272
    %5302 = vmatprep.subr.bf16.mxu0 0
    %5303 = vmatpush1.bf16.msra.mxu0 %v5271
    %5304 = vmatprep.subr.bf16.mxu0 0
    %5305 = vmatpush1.bf16.msra.mxu0 %v5270
    %5306 = vmatprep.subr.bf16.mxu0 0
    %5307 = vmatpush1.bf16.msra.mxu0 %v5269
    %5308 = vmatprep.subr.bf16.mxu0 0
    %5309 = vmatpush1.bf16.msra.mxu0 %v5268
    %5310 = vmatprep.subr.bf16.mxu0 0
    %5311 = vmatpush1.bf16.msra.mxu0 %v5267
    %5312 = vmatprep.subr.bf16.mxu0 0
    %5313 = vmatpush1.bf16.msra.mxu0 %v5266
    %5314 = vmatprep.subr.bf16.mxu0 0
    %5315 = vmatpush2.bf16.msra.mxu0 %v5281
    %5316 = vmatprep.subr.bf16.mxu0 0
    %5317 = vmatpush2.bf16.msra.mxu0 %v5280
    %5318 = vmatprep.subr.bf16.mxu0 0
    %5319 = vmatpush2.bf16.msra.mxu0 %v5279
    %5320 = vmatprep.subr.bf16.mxu0 0
    %5321 = vmatpush2.bf16.msra.mxu0 %v5278
    %5322 = vmatprep.subr.bf16.mxu0 0
    %5323 = vmatpush2.bf16.msra.mxu0 %v5277
    %5324 = vmatprep.subr.bf16.mxu0 0
    %5325 = vmatpush2.bf16.msra.mxu0 %v5276
    %5326 = vmatprep.subr.bf16.mxu0 0
    %5327 = vmatpush2.bf16.msra.mxu0 %v5275
    %5328 = vmatprep.subr.bf16.mxu0 0
    %5329 = vmatpush2.bf16.msra.mxu0 %v5274
    %5330 = vmatprep.mubr.bf16.mxu0 %v5194
    %5331 = vmatmul.mubr.bf16.gmra.mxu0 %v5193
    %v5332 = vpop.f32.mrf.mxu0
    %v5333 = vadd.f32 %v5200, %v5332
    %v5334 = vpop.f32.mrf.mxu0
    %v5335 = vpop.f32.mrf.mxu0
    %v5336 = vadd.f32 %v5200, %v5335
    %v5337 = vpop.f32.mrf.mxu0
    %5338 = vdwg.mxu0
    %vm5339 = vcmp.gt.f32.partialorder %v5333, 0.0
    %vm5340 = vcmp.gt.f32.partialorder %v5336, 0.0
    %v5341 = vstv %s385
    %v5342 = vmul.f32 %v5341, %v5333
    %v5343 = vmul.f32 %v5341, %v5336
    %v5344 = vsel %vm5339, %v5333, %v5342
    %v5345 = vsel %vm5340, %v5336, %v5343
    %v5346 = vld [vmem:[%s51] sm:$0xf]
    %v5347 = vld [vmem:[%s51 + $0x4] sm:$0xf]
    %v5348 = vld [vmem:[%s51 + $0x8] sm:$0xf]
    %v5349 = vld [vmem:[%s51 + $0xc] sm:$0xf]
    %v5350 = vld [vmem:[%s51 + $0x10] sm:$0xf]
    %v5351 = vld [vmem:[%s51 + $0x14] sm:$0xf]
    %v5352 = vld [vmem:[%s51 + $0x18] sm:$0xf]
    %v5353 = vld [vmem:[%s51 + $0x1c] sm:$0xf]
    %v5354 = vld [vmem:[%s51 + $0x20] sm:$0xf]
    %v5355 = vld [vmem:[%s51 + $0x24] sm:$0xf]
    %v5356 = vld [vmem:[%s51 + $0x28] sm:$0xf]
    %v5357 = vld [vmem:[%s51 + $0x2c] sm:$0xf]
    %v5358 = vld [vmem:[%s51 + $0x30] sm:$0xf]
    %v5359 = vld [vmem:[%s51 + $0x34] sm:$0xf]
    %v5360 = vld [vmem:[%s51 + $0x38] sm:$0xf]
    %v5361 = vld [vmem:[%s51 + $0x3c] sm:$0xf]
    %v5362 = vpack.c.bf16 %v5345, %v5344
    %v5363 = vld [vmem:[%s53] sm:$0x1]
    %v5365 = vlaneseq
    %v5366 = vshrl.u32 %v5365, 7
    %v5367 = vsub.s32 0, %v5366
    %v5368 = vrot.slane %v5363, %v5367
    %v5386 = vunpack.c.l.b16 %v5346
    %v5387 = vunpack.c.l.b16 %v5347
    %v5388 = vunpack.c.l.b16 %v5348
    %v5389 = vunpack.c.l.b16 %v5349
    %v5390 = vunpack.c.l.b16 %v5350
    %v5391 = vunpack.c.l.b16 %v5351
    %v5392 = vunpack.c.l.b16 %v5352
    %v5393 = vunpack.c.l.b16 %v5353
    %v5394 = vunpack.c.l.b16 %v5354
    %v5395 = vunpack.c.l.b16 %v5355
    %v5396 = vunpack.c.l.b16 %v5356
    %v5397 = vunpack.c.l.b16 %v5357
    %v5398 = vunpack.c.l.b16 %v5358
    %v5399 = vunpack.c.l.b16 %v5359
    %v5400 = vunpack.c.l.b16 %v5360
    %v5401 = vunpack.c.l.b16 %v5361
    %v5402 = vpack.c.b16 %v5387, %v5386
    %v5403 = vpack.c.b16 %v5389, %v5388
    %v5404 = vpack.c.b16 %v5391, %v5390
    %v5405 = vpack.c.b16 %v5393, %v5392
    %v5406 = vpack.c.b16 %v5395, %v5394
    %v5407 = vpack.c.b16 %v5397, %v5396
    %v5408 = vpack.c.b16 %v5399, %v5398
    %v5409 = vpack.c.b16 %v5401, %v5400
    %5418 = vmatprep.subr.bf16.mxu0 0
    %5419 = vmatpush1.bf16.msra.mxu0 %v5409
    %5420 = vmatprep.subr.bf16.mxu0 0
    %5421 = vmatpush1.bf16.msra.mxu0 %v5408
    %5422 = vmatprep.subr.bf16.mxu0 0
    %5423 = vmatpush1.bf16.msra.mxu0 %v5407
    %5424 = vmatprep.subr.bf16.mxu0 0
    %5425 = vmatpush1.bf16.msra.mxu0 %v5406
    %5426 = vmatprep.subr.bf16.mxu0 0
    %5427 = vmatpush1.bf16.msra.mxu0 %v5405
    %5428 = vmatprep.subr.bf16.mxu0 0
    %5429 = vmatpush1.bf16.msra.mxu0 %v5404
    %5430 = vmatprep.subr.bf16.mxu0 0
    %5431 = vmatpush1.bf16.msra.mxu0 %v5403
    %5432 = vmatprep.subr.bf16.mxu0 0
    %5433 = vmatpush1.bf16.msra.mxu0 %v5402
    %5434 = vmatprep.subr.bf16.mxu0 0
    %5435 = vmatpush2.bf16.msra.mxu0 0
    %5436 = vmatprep.subr.bf16.mxu0 0
    %5437 = vmatpush2.bf16.msra.mxu0 0
    %5438 = vmatprep.subr.bf16.mxu0 0
    %5439 = vmatpush2.bf16.msra.mxu0 0
    %5440 = vmatprep.subr.bf16.mxu0 0
    %5441 = vmatpush2.bf16.msra.mxu0 0
    %5442 = vmatprep.subr.bf16.mxu0 0
    %5443 = vmatpush2.bf16.msra.mxu0 0
    %5444 = vmatprep.subr.bf16.mxu0 0
    %5445 = vmatpush2.bf16.msra.mxu0 0
    %5446 = vmatprep.subr.bf16.mxu0 0
    %5447 = vmatpush2.bf16.msra.mxu0 0
    %5448 = vmatprep.subr.bf16.mxu0 0
    %5449 = vmatpush2.bf16.msra.mxu0 0
    %5450 = vmatprep.mubr.bf16.mxu0 0
    %5451 = vmatmul.mubr.bf16.gmra.mxu0 %v5362
    %v5452 = vpop.f32.mrf.mxu0
    %v5453 = vadd.f32 %v5368, %v5452
    %v5454 = vpop.f32.mrf.mxu0
    %v5455 = vpop.f32.mrf.mxu0
    %v5456 = vadd.f32 %v5368, %v5455
    %v5457 = vpop.f32.mrf.mxu0
    %5458 = vdwg.mxu0
    %vm5459 = vcmp.gt.f32.partialorder %v5453, 0.0
    %vm5460 = vcmp.gt.f32.partialorder %v5456, 0.0
    %v5461 = vstv %s386
    %v5462 = vmul.f32 %v5461, %v5453
    %v5463 = vmul.f32 %v5461, %v5456
    %v5464 = vsel %vm5459, %v5453, %v5462
    %v5465 = vsel %vm5460, %v5456, %v5463
    %v5466 = vld [vmem:[%s55] sm:$0xf]
    %v5467 = vld [vmem:[%s55 + $0x4] sm:$0xf]
    %v5468 = vld [vmem:[%s55 + $0x8] sm:$0xf]
    %v5469 = vld [vmem:[%s55 + $0xc] sm:$0xf]
    %v5470 = vld [vmem:[%s55 + $0x10] sm:$0xf]
    %v5471 = vld [vmem:[%s55 + $0x14] sm:$0xf]
    %v5472 = vld [vmem:[%s55 + $0x18] sm:$0xf]
    %v5473 = vld [vmem:[%s55 + $0x1c] sm:$0xf]
    %v5474 = vpack.c.bf16 %v5465, %v5464
    %v5475 = vld [vmem:[%s57] sm:$0x1]
    %v5477 = vlaneseq
    %v5478 = vshrl.u32 %v5477, 7
    %v5479 = vsub.s32 0, %v5478
    %v5480 = vrot.slane %v5475, %v5479
    %v5490 = vunpack.c.l.b16 %v5466
    %v5491 = vunpack.c.l.b16 %v5467
    %v5492 = vunpack.c.l.b16 %v5468
    %v5493 = vunpack.c.l.b16 %v5469
    %v5494 = vunpack.c.l.b16 %v5470
    %v5495 = vunpack.c.l.b16 %v5471
    %v5496 = vunpack.c.l.b16 %v5472
    %v5497 = vunpack.c.l.b16 %v5473
    %v5498 = vpack.c.b16 %v5491, %v5490
    %v5499 = vpack.c.b16 %v5493, %v5492
    %v5500 = vpack.c.b16 %v5495, %v5494
    %v5501 = vpack.c.b16 %v5497, %v5496
    %vm5506 = vcmask 523264
    %v5508 = vsel %vm5506, %v5474, 0
    %5510 = vmatprep.subr.bf16.mxu0 0
    %5511 = vmatpush1.bf16.msra.mxu0 0
    %5512 = vmatprep.subr.bf16.mxu0 0
    %5513 = vmatpush1.bf16.msra.mxu0 0
    %5514 = vmatprep.subr.bf16.mxu0 0
    %5515 = vmatpush1.bf16.msra.mxu0 0
    %5516 = vmatprep.subr.bf16.mxu0 0
    %5517 = vmatpush1.bf16.msra.mxu0 0
    %5518 = vmatprep.subr.bf16.mxu0 0
    %5519 = vmatpush1.bf16.msra.mxu0 %v5501
    %5520 = vmatprep.subr.bf16.mxu0 0
    %5521 = vmatpush1.bf16.msra.mxu0 %v5500
    %5522 = vmatprep.subr.bf16.mxu0 0
    %5523 = vmatpush1.bf16.msra.mxu0 %v5499
    %5524 = vmatprep.subr.bf16.mxu0 0
    %5525 = vmatpush1.bf16.msra.mxu0 %v5498
    %5526 = vmatprep.subr.bf16.mxu0 0
    %5527 = vmatpush2.bf16.msra.mxu0 0
    %5528 = vmatprep.subr.bf16.mxu0 0
    %5529 = vmatpush2.bf16.msra.mxu0 0
    %5530 = vmatprep.subr.bf16.mxu0 0
    %5531 = vmatpush2.bf16.msra.mxu0 0
    %5532 = vmatprep.subr.bf16.mxu0 0
    %5533 = vmatpush2.bf16.msra.mxu0 0
    %5534 = vmatprep.subr.bf16.mxu0 0
    %5535 = vmatpush2.bf16.msra.mxu0 0
    %5536 = vmatprep.subr.bf16.mxu0 0
    %5537 = vmatpush2.bf16.msra.mxu0 0
    %5538 = vmatprep.subr.bf16.mxu0 0
    %5539 = vmatpush2.bf16.msra.mxu0 0
    %5540 = vmatprep.subr.bf16.mxu0 0
    %5541 = vmatpush2.bf16.msra.mxu0 0
    %5542 = vmatprep.mubr.bf16.mxu0 0
    %5543 = vmatmul.mubr.bf16.gmra.mxu0 %v5508
    %v5544 = vpop.f32.mrf.mxu0
    %v5545 = vadd.f32 %v5480, %v5544
    %v5546 = vpop.f32.mrf.mxu0
    %v5547 = vpop.f32.mrf.mxu0
    %v5548 = vadd.f32 %v5480, %v5547
    %v5549 = vpop.f32.mrf.mxu0
    %5550 = vdwg.mxu0
    %vm5551 = vcmp.gt.f32.partialorder %v5545, 0.0
    %vm5552 = vcmp.gt.f32.partialorder %v5548, 0.0
    %v5553 = vstv %s387
    %v5554 = vmul.f32 %v5553, %v5545
    %v5555 = vmul.f32 %v5553, %v5548
    %v5556 = vsel %vm5551, %v5545, %v5554
    %v5557 = vsel %vm5552, %v5548, %v5555
    %v5558 = vld [vmem:[%s59] sm:$0xf]
    %v5559 = vld [vmem:[%s59 + $0x4] sm:$0xf]
    %v5560 = vld [vmem:[%s59 + $0x8] sm:$0xf]
    %v5561 = vld [vmem:[%s59 + $0xc] sm:$0xf]
    %v5562 = vpack.c.bf16 %v5557, %v5556
    %v5563 = vld [vmem:[%s61] sm:$0x1]
    %v5565 = vlaneseq
    %v5566 = vshrl.u32 %v5565, 7
    %v5567 = vsub.s32 0, %v5566
    %v5568 = vrot.slane %v5563, %v5567
    %v5574 = vunpack.c.l.b16 %v5558
    %v5575 = vunpack.c.l.b16 %v5559
    %v5576 = vunpack.c.l.b16 %v5560
    %v5577 = vunpack.c.l.b16 %v5561
    %v5578 = vpack.c.b16 %v5575, %v5574
    %v5579 = vpack.c.b16 %v5577, %v5576
    %v5583 = vsel %vm1504, %v5562, 0
    %5585 = vmatprep.subr.bf16.mxu0 0
    %5586 = vmatpush1.bf16.msra.mxu0 0
    %5587 = vmatprep.subr.bf16.mxu0 0
    %5588 = vmatpush1.bf16.msra.mxu0 0
    %5589 = vmatprep.subr.bf16.mxu0 0
    %5590 = vmatpush1.bf16.msra.mxu0 0
    %5591 = vmatprep.subr.bf16.mxu0 0
    %5592 = vmatpush1.bf16.msra.mxu0 0
    %5593 = vmatprep.subr.bf16.mxu0 0
    %5594 = vmatpush1.bf16.msra.mxu0 0
    %5595 = vmatprep.subr.bf16.mxu0 0
    %5596 = vmatpush1.bf16.msra.mxu0 0
    %5597 = vmatprep.subr.bf16.mxu0 0
    %5598 = vmatpush1.bf16.msra.mxu0 %v5579
    %5599 = vmatprep.subr.bf16.mxu0 0
    %5600 = vmatpush1.bf16.msra.mxu0 %v5578
    %5601 = vmatprep.subr.bf16.mxu0 0
    %5602 = vmatpush2.bf16.msra.mxu0 0
    %5603 = vmatprep.subr.bf16.mxu0 0
    %5604 = vmatpush2.bf16.msra.mxu0 0
    %5605 = vmatprep.subr.bf16.mxu0 0
    %5606 = vmatpush2.bf16.msra.mxu0 0
    %5607 = vmatprep.subr.bf16.mxu0 0
    %5608 = vmatpush2.bf16.msra.mxu0 0
    %5609 = vmatprep.subr.bf16.mxu0 0
    %5610 = vmatpush2.bf16.msra.mxu0 0
    %5611 = vmatprep.subr.bf16.mxu0 0
    %5612 = vmatpush2.bf16.msra.mxu0 0
    %5613 = vmatprep.subr.bf16.mxu0 0
    %5614 = vmatpush2.bf16.msra.mxu0 0
    %5615 = vmatprep.subr.bf16.mxu0 0
    %5616 = vmatpush2.bf16.msra.mxu0 0
    %5617 = vmatprep.mubr.bf16.mxu0 0
    %5618 = vmatmul.mubr.bf16.gmra.mxu0 %v5583
    %v5619 = vpop.f32.mrf.mxu0
    %v5620 = vadd.f32 %v5568, %v5619
    %v5621 = vpop.f32.mrf.mxu0
    %v5622 = vpop.f32.mrf.mxu0
    %v5623 = vadd.f32 %v5568, %v5622
    %v5624 = vpop.f32.mrf.mxu0
    %5625 = vdwg.mxu0
    %vm5626 = vcmask 64512
    %5627 = vst.msk [vmem:[%s63] sm:$0xff] %vm5626, %v5620
    %5628 = vst.msk [vmem:[%s63 + $0x8] sm:$0xff] %vm5626, %v5623
    // Predicated region
    $region198: #{tpu_custom_call.1} parent=1 // pred_check
      _
    $region199: #{tpu_custom_call.1} parent=1 // pred_check_branch
      %5630 = sbr.rel (0) target = $region201
    $region200: #{tpu_custom_call.1} parent=1 // pred_region
      _
    $region201: #{tpu_custom_call.1} parent=1 // pred_fallthru
      _
    // Predicated region
    $region202: #{tpu_custom_call.1} parent=1 // pred_check
      _
    $region203: #{tpu_custom_call.1} parent=1 // pred_check_branch
      %5632 = sbr.rel (0) target = $region205
    $region204: #{tpu_custom_call.1} parent=1 // pred_region
      _
    $region205: #{tpu_custom_call.1} parent=1 // pred_fallthru
      _
    %5633 = vsyncpa [#allocation7], 1
    %5634 = vsyncpa [#allocation11], 1
    %5635 = vsyncpa [#allocation14], 1
    %5636 = vsyncpa [#allocation17], 1
    %5637 = vsyncpa [#allocation20], 1
    %5638 = vsyncpa [#allocation23], 1
    %5639 = vsyncpa [#allocation26], 1
    %5640 = vsyncpa [#allocation29], 1
    %5641 = vsyncpa [#allocation32], 1
    %5642 = vsyncpa [#allocation8], 1
  %5643 = vsyncmov [#allocation5]
  %s5644 = vpop.sfrf %5643
  %p5645 = scmp.eq.s32.totalorder %s5644, 0
  %p5646 = pneg %p5645
  %5648 = shalt.err (%p5646)
  %s5649 = scalar_lea.sflag [#allocation5], 1
  %5650 = vsyncmov %s5649
  %s5651 = vpop.sfrf %5650
  %p5652 = scmp.eq.s32.totalorder %s5651, 0
  %p5653 = pneg %p5652
  %5655 = shalt.err (%p5653)
  %s5656 = scalar_lea.sflag [#allocation5], 2
  %5657 = vsyncmov %s5656
  %s5658 = vpop.sfrf %5657
  %p5659 = scmp.eq.s32.totalorder %s5658, 0
  %p5660 = pneg %p5659
  %5662 = shalt.err (%p5660)

</llo_original>
